<compile_context>
chip_gen: v5e
topology: v5e:2x2
jax: 0.10.0
libtpu: 0.0.40
codegen_flags: <defaults>
</compile_context>

<pallas_src>
import numpy as np

import jax
import jax.numpy as jnp
from jax.experimental import pallas as pl
from jax.experimental.pallas import tpu as pltpu

NUM_CLASSES = 10
W_DTYPE = jnp.bfloat16        # MXU operand dtype (accumulation stays f32)


# ---------------------------------------------------------------------------
# Gather ("shift + stride + zero-pad") constants: conv / pool as flat matmuls
# ---------------------------------------------------------------------------
def _make_gather(h, w, stride):
    """G[t, p_out, p_in] = 1 iff input pixel p_in is tap t (= dy*3+dx) of output
    p_out for a 3x3, pad=1 conv with the given stride.  Out-of-bounds taps are
    all-zero rows (== zero padding)."""
    ho = (h + 2 - 3) // stride + 1
    wo = (w + 2 - 3) // stride + 1
    g = np.zeros((9, ho * wo, h * w), np.float32)
    for dy in range(3):
        for dx in range(3):
            t = dy * 3 + dx
            for i in range(ho):
                for j in range(wo):
                    yy = stride * i + dy - 1
                    xx = stride * j + dx - 1
                    if 0 <= yy < h and 0 <= xx < w:
                        g[t, i * wo + j, yy * w + xx] = 1.0
    return jnp.asarray(g, dtype=W_DTYPE)


# ---------------------------------------------------------------------------
# The single fused Pallas kernel (whole network, one image per grid step)
# ---------------------------------------------------------------------------
def _ms_ran_kernel(
    a1_ref,                                                   # [1, 256, 16]  conv1 im2col
    g16s2, g8s1, g8s2, g4s1,                                  # gather constants
    w1, b1,                                                   # conv1 + BN
    r1c1w, r1c1b, r1c2w, r1c2b, r1scw, r1scb,                 # residual block 1
    r2c1w, r2c1b, r2c2w, r2c2b, r2scw, r2scb,                 # residual block 2
    winc1, binc1, wb2b, bb2b, wb3b, bb3b, wb3c, bb3c, wb4, bb4,  # inception
    hw1, hb1, hw2, hb2, hwf, hbf,                             # attention head + fc
    o_ref,                                                    # [1, 1, NUM_CLASSES]
):
    def mm(a, b):
        # bf16 MXU matmul, f32 accumulation.
        return jnp.dot(a.astype(W_DTYPE), b.astype(W_DTYPE),
                       preferred_element_type=jnp.float32)

    def conv3x3(x, g_ref, w_ref, b_ref, residual=None, want_center=False):
        """relu( sum_t (G[t] @ x) @ W[t] + b [+ residual] ) == conv+BN(+skip)+ReLU."""
        acc = None
        center = None
        for t in range(9):
            gx = mm(g_ref[t], x)                 # gathered tap  [P_out, Cin]
            if t == 4:
                center = gx                      # == 1x1 stride-s selection (shortcut)
            y = mm(gx, w_ref[t])                 # [P_out, Cout]
            acc = y if acc is None else acc + y
        acc = acc + b_ref[...]
        if residual is not None:
            acc = acc + residual
        acc = jnp.maximum(acc, 0.0)
        return (acc, center) if want_center else acc

    def maxpool3x3(x, g_ref):
        # x is post-ReLU (>= 0), so the zero rows of G (padding) behave like -inf padding.
        m = None
        for t in range(9):
            gx = mm(g_ref[t], x)
            m = gx if m is None else jnp.maximum(m, gx)
        return m

    # ---- conv1 + BN + ReLU (BN scale folded into w1) ----------------- [256, 32]
    x1 = jnp.maximum(mm(a1_ref[0], w1[...]) + b1[...], 0.0)

    # ---- residual block 1: 32ch @16x16 -> 64ch @8x8 -------------------- [64, 64]
    h, ctr = conv3x3(x1, g16s2, r1c1w, r1c1b, want_center=True)
    sc = mm(ctr, r1scw[...]) + r1scb[...]               # 1x1 stride-2 shortcut + BN
    x2 = conv3x3(h, g8s1, r1c2w, r1c2b, residual=sc)    # conv2+BN, add skip, ReLU

    # ---- residual block 2: 64ch @8x8 -> 128ch @4x4 --------------------- [16, 128]
    h, ctr = conv3x3(x2, g8s2, r2c1w, r2c1b, want_center=True)
    sc = mm(ctr, r2scw[...]) + r2scb[...]
    x3 = conv3x3(h, g4s1, r2c2w, r2c2b, residual=sc)

    # ---- inception: 128 -> 4 branches x 64 ------------------------------
    pre = [jnp.maximum(mm(x3, winc1[t]) + binc1[t], 0.0) for t in range(3)]
    b1o, h2, h3 = pre                                    # branch1 out, branch2/3 1x1 outs
    b2o = conv3x3(h2, g4s1, wb2b, bb2b)
    b3o = conv3x3(conv3x3(h3, g4s1, wb3b, bb3b), g4s1, wb3c, bb3c)
    mp = maxpool3x3(x3, g4s1)                            # MaxPool2d(3, 1, 1)
    b4o = jnp.maximum(mm(mp, wb4[...]) + bb4[...], 0.0)
    branches = (b1o, b2o, b3o, b4o)                      # == torch.cat order (dim=1)

    # ---- GAP + attention + classifier (head weights pre-split per branch) ----
    pooled = [jnp.mean(b, axis=0, keepdims=True) for b in branches]   # 4 x [1, 64]
    h = None
    for i in range(4):
        y = mm(pooled[i], hw1[i])
        h = y if h is None else h + y
    h = jnp.maximum(h + hb1[...], 0.0)                                # [1, 16]

    logits = None
    for i in range(4):
        att = jax.nn.sigmoid(mm(h, hw2[i]) + hb2[i])                  # [1, 64]
        z = pooled[i] * att            # mean_hw(feat * att) == mean_hw(feat) * att
        y = mm(z, hwf[i])
        logits = y if logits is None else logits + y
    logits = logits + hbf[...]                                        # [1, NUM_CLASSES]
    # Dropout(0.5): eval mode -> identity.  # TODO(synk): training-mode dropout omitted.
    o_ref[...] = logits.reshape(o_ref.shape)


# ---------------------------------------------------------------------------
# Wrapper
# ---------------------------------------------------------------------------
_PARAM_KEYS = (
    "g16s2", "g8s1", "g8s2", "g4s1",
    "w1", "b1",
    "r1c1w", "r1c1b", "r1c2w", "r1c2b", "r1scw", "r1scb",
    "r2c1w", "r2c1b", "r2c2w", "r2c2b", "r2scw", "r2scb",
    "winc1", "binc1", "wb2b", "bb2b", "wb3b", "bb3b", "wb3c", "bb3c", "wb4", "bb4",
    "hw1", "hb1", "hw2", "hb2", "hwf", "hbf",
)


def _const_spec(arr):
    """Whole-array VMEM-resident block, same block for every grid step."""
    nd = arr.ndim
    shape = tuple(arr.shape)

    def idx(i):
        return (0,) * nd

    return pl.BlockSpec(shape, idx)


def _conv1_im2col(x_nchw):
    # x: [N, 1, 16, 16] -> conv1 im2col A: [N, 256, 16] (9 taps + 7 zero lanes).
    # Cin == 1 makes the in-kernel gather formulation degenerate, so this tiny
    # (~18 KB) prep runs as one fused XLA prologue feeding the single kernel.
    x = x_nchw[:, 0].astype(jnp.float32)                       # [N, 16, 16]
    xp = jnp.pad(x, ((0, 0), (1, 1), (1, 1)))                  # [N, 18, 18]
    taps = [xp[:, dy:dy + 16, dx:dx + 16] for dy in range(3) for dx in range(3)]
    a1 = jnp.stack(taps, axis=-1).reshape(x.shape[0], 256, 9)  # t = dy*3 + dx
    a1 = jnp.pad(a1, ((0, 0), (0, 0), (0, 7)))                 # K: 9 -> 16
    return a1.astype(W_DTYPE)


def ms_ran_forward(x_nchw, params):
    n = x_nchw.shape[0]
    a1 = _conv1_im2col(x_nchw)
    args = [a1] + [params[k] for k in _PARAM_KEYS]
    in_specs = [pl.BlockSpec((1, 256, 16), lambda i: (i, 0, 0))]
    in_specs += [_const_spec(a) for a in args[1:]]
    out = pl.pallas_call(
        _ms_ran_kernel,
        grid=(n,),
        out_shape=jax.ShapeDtypeStruct((n, 1, NUM_CLASSES), jnp.float32),
        in_specs=in_specs,
        out_specs=pl.BlockSpec((1, 1, NUM_CLASSES), lambda i: (i, 0, 0)),
        compiler_params=pltpu.CompilerParams(
            dimension_semantics=("parallel",),   # batch across TensorCores (v7x)
        ),
    )(*args)
    return out.reshape(n, NUM_CLASSES)


# ---------------------------------------------------------------------------
# Deterministic parameter initialization (BN folded, weights in bf16)
# ---------------------------------------------------------------------------
def conv_bn_params(key, kh, kw, cin, cout, conv_bias=True):
    ks = jax.random.split(key, 6)
    w = jax.random.normal(ks[0], (kh, kw, cin, cout), jnp.float32) * 0.1
    b = (jax.random.normal(ks[1], (cout,), jnp.float32) * 0.05
         if conv_bias else jnp.zeros((cout,), jnp.float32))
    gamma = 1.0 + 0.1 * jax.random.normal(ks[2], (cout,), jnp.float32)
    beta = 0.05 * jax.random.normal(ks[3], (cout,), jnp.float32)
    mean = 0.05 * jax.random.normal(ks[4], (cout,), jnp.float32)
    var = 1.0 + 0.1 * jnp.abs(jax.random.normal(ks[5], (cout,), jnp.float32))
    scale = gamma / jnp.sqrt(var + 1e-5)            # inference-mode BN fold
    bias = beta + scale * (b - mean)                # includes conv bias
    wf = (w * scale).reshape(kh * kw, cin, cout)    # BN scale folded into W
    if kh * kw == 1:
        wf = wf.reshape(cin, cout)
    return wf.astype(W_DTYPE), bias.reshape(1, cout).astype(jnp.float32)


def linear_params(key, fin, fout):
    k1, k2 = jax.random.split(key)
    w = jax.random.normal(k1, (fin, fout), jnp.float32) / jnp.sqrt(fin)
    b = 0.05 * jax.random.normal(k2, (fout,), jnp.float32)
    return w, b


def init_params(key, num_classes=NUM_CLASSES):
    ks = jax.random.split(key, 17)
    p = {}
    # gather constants (conv / pool geometry on the flat spatial layout)
    p["g16s2"] = _make_gather(16, 16, 2)    # [9, 64, 256]  res1 main (+ tap4 = shortcut)
    p["g8s1"] = _make_gather(8, 8, 1)       # [9, 64, 64]   res1 conv2
    p["g8s2"] = _make_gather(8, 8, 2)       # [9, 16, 64]   res2 main (+ tap4 = shortcut)
    p["g4s1"] = _make_gather(4, 4, 1)       # [9, 16, 16]   res2 conv2, inception 3x3s, maxpool
    # conv1 (+BN); weight flattened to [taps, cout] and K padded 9 -> 16
    w1, b1 = conv_bn_params(ks[0], 3, 3, 1, 32, conv_bias=True)
    p["w1"] = jnp.pad(w1.reshape(9, 32), ((0, 7), (0, 0)))
    p["b1"] = b1
    # residual block 1 (32 -> 64, stride 2)
    p["r1c1w"], p["r1c1b"] = conv_bn_params(ks[1], 3, 3, 32, 64, conv_bias=False)
    p["r1c2w"], p["r1c2b"] = conv_bn_params(ks[2], 3, 3, 64, 64, conv_bias=False)
    p["r1scw"], p["r1scb"] = conv_bn_params(ks[3], 1, 1, 32, 64, conv_bias=False)
    # residual block 2 (64 -> 128, stride 2)
    p["r2c1w"], p["r2c1b"] = conv_bn_params(ks[4], 3, 3, 64, 128, conv_bias=False)
    p["r2c2w"], p["r2c2b"] = conv_bn_params(ks[5], 3, 3, 128, 128, conv_bias=False)
    p["r2scw"], p["r2scb"] = conv_bn_params(ks[6], 1, 1, 64, 128, conv_bias=False)
    # inception (128 -> 4 x 64); the three input-side 1x1 convs are stacked
    wb1, bb1 = conv_bn_params(ks[7], 1, 1, 128, 64)
    wb2a, bb2a = conv_bn_params(ks[8], 1, 1, 128, 64)
    wb3a, bb3a = conv_bn_params(ks[10], 1, 1, 128, 64)
    p["winc1"] = jnp.stack([wb1, wb2a, wb3a])           # [3, 128, 64]
    p["binc1"] = jnp.stack([bb1, bb2a, bb3a])           # [3, 1, 64]
    p["wb2b"], p["bb2b"] = conv_bn_params(ks[9], 3, 3, 64, 64)
    p["wb3b"], p["bb3b"] = conv_bn_params(ks[11], 3, 3, 64, 64)
    p["wb3c"], p["bb3c"] = conv_bn_params(ks[12], 3, 3, 64, 64)
    p["wb4"], p["bb4"] = conv_bn_params(ks[13], 1, 1, 128, 64)
    # attention head + classifier, pre-split per inception branch (4 x 64 channels)
    hw1, hb1 = linear_params(ks[14], 256, 16)
    hw2, hb2 = linear_params(ks[15], 16, 256)
    hwf, hbf = linear_params(ks[16], 256, num_classes)
    p["hw1"] = hw1.reshape(4, 64, 16).astype(W_DTYPE)
    p["hb1"] = hb1.reshape(1, 16).astype(jnp.float32)
    p["hw2"] = jnp.transpose(hw2.reshape(16, 4, 64), (1, 0, 2)).astype(W_DTYPE)
    p["hb2"] = hb2.reshape(4, 1, 64).astype(jnp.float32)
    p["hwf"] = hwf.reshape(4, 64, num_classes).astype(W_DTYPE)
    p["hbf"] = hbf.reshape(1, num_classes).astype(jnp.float32)
    return p


# ---------------------------------------------------------------------------
if __name__ == "__main__":
    key = jax.random.PRNGKey(0)
    kx, kp = jax.random.split(key)
    x = jax.random.normal(kx, (2, 1, 16, 16), jnp.float32)   # NCHW, 1-channel input
    params = init_params(kp, num_classes=NUM_CLASSES)

    logits = jax.jit(ms_ran_forward)(x, params)
    jax.block_until_ready(logits)
    assert logits.shape == (2, NUM_CLASSES) and logits.dtype == jnp.float32
    assert bool(jnp.all(jnp.isfinite(logits)))
    print("KERNEL_OK")
</pallas_src>

<mosaic_0001>
module attributes {stable_mosaic.version = 11 : i64} {
  func.func @_ms_ran_kernel(%arg0: i32, %arg1: memref<1x256x16xbf16, #tpu.memory_space<vmem>>, %arg2: memref<9x64x256xbf16, #tpu.memory_space<vmem>>, %arg3: memref<9x64x64xbf16, #tpu.memory_space<vmem>>, %arg4: memref<9x16x64xbf16, #tpu.memory_space<vmem>>, %arg5: memref<9x16x16xbf16, #tpu.memory_space<vmem>>, %arg6: memref<16x32xbf16, #tpu.memory_space<vmem>>, %arg7: memref<1x32xf32, #tpu.memory_space<vmem>>, %arg8: memref<9x32x64xbf16, #tpu.memory_space<vmem>>, %arg9: memref<1x64xf32, #tpu.memory_space<vmem>>, %arg10: memref<9x64x64xbf16, #tpu.memory_space<vmem>>, %arg11: memref<1x64xf32, #tpu.memory_space<vmem>>, %arg12: memref<32x64xbf16, #tpu.memory_space<vmem>>, %arg13: memref<1x64xf32, #tpu.memory_space<vmem>>, %arg14: memref<9x64x128xbf16, #tpu.memory_space<vmem>>, %arg15: memref<1x128xf32, #tpu.memory_space<vmem>>, %arg16: memref<9x128x128xbf16, #tpu.memory_space<vmem>>, %arg17: memref<1x128xf32, #tpu.memory_space<vmem>>, %arg18: memref<64x128xbf16, #tpu.memory_space<vmem>>, %arg19: memref<1x128xf32, #tpu.memory_space<vmem>>, %arg20: memref<3x128x64xbf16, #tpu.memory_space<vmem>>, %arg21: memref<3x1x64xf32, #tpu.memory_space<vmem>>, %arg22: memref<9x64x64xbf16, #tpu.memory_space<vmem>>, %arg23: memref<1x64xf32, #tpu.memory_space<vmem>>, %arg24: memref<9x64x64xbf16, #tpu.memory_space<vmem>>, %arg25: memref<1x64xf32, #tpu.memory_space<vmem>>, %arg26: memref<9x64x64xbf16, #tpu.memory_space<vmem>>, %arg27: memref<1x64xf32, #tpu.memory_space<vmem>>, %arg28: memref<128x64xbf16, #tpu.memory_space<vmem>>, %arg29: memref<1x64xf32, #tpu.memory_space<vmem>>, %arg30: memref<4x64x16xbf16, #tpu.memory_space<vmem>>, %arg31: memref<1x16xf32, #tpu.memory_space<vmem>>, %arg32: memref<4x16x64xbf16, #tpu.memory_space<vmem>>, %arg33: memref<4x1x64xf32, #tpu.memory_space<vmem>>, %arg34: memref<4x64x10xbf16, #tpu.memory_space<vmem>>, %arg35: memref<1x10xf32, #tpu.memory_space<vmem>>, %arg36: memref<1x1x10xf32, #tpu.memory_space<vmem>>) attributes {dimension_semantics = [#tpu.dimension_semantics<parallel>], iteration_bounds = array<i64: 2>, scalar_prefetch = 0 : i64, scratch_operands = 0 : i64, tpu.core_type = #tpu.core_type<tc>, window_params = [{transform_indices = @transform_0, window_bounds = array<i64: 1, 256, 16>}, {pipeline_mode = #tpu.pipeline_mode<synchronous>, transform_indices = @transform_1, window_bounds = array<i64: 9, 64, 256>}, {pipeline_mode = #tpu.pipeline_mode<synchronous>, transform_indices = @transform_2, window_bounds = array<i64: 9, 64, 64>}, {pipeline_mode = #tpu.pipeline_mode<synchronous>, transform_indices = @transform_3, window_bounds = array<i64: 9, 16, 64>}, {pipeline_mode = #tpu.pipeline_mode<synchronous>, transform_indices = @transform_4, window_bounds = array<i64: 9, 16, 16>}, {pipeline_mode = #tpu.pipeline_mode<synchronous>, transform_indices = @transform_5, window_bounds = array<i64: 16, 32>}, {pipeline_mode = #tpu.pipeline_mode<synchronous>, transform_indices = @transform_6, window_bounds = array<i64: 1, 32>}, {pipeline_mode = #tpu.pipeline_mode<synchronous>, transform_indices = @transform_7, window_bounds = array<i64: 9, 32, 64>}, {pipeline_mode = #tpu.pipeline_mode<synchronous>, transform_indices = @transform_8, window_bounds = array<i64: 1, 64>}, {pipeline_mode = #tpu.pipeline_mode<synchronous>, transform_indices = @transform_9, window_bounds = array<i64: 9, 64, 64>}, {pipeline_mode = #tpu.pipeline_mode<synchronous>, transform_indices = @transform_10, window_bounds = array<i64: 1, 64>}, {pipeline_mode = #tpu.pipeline_mode<synchronous>, transform_indices = @transform_11, window_bounds = array<i64: 32, 64>}, {pipeline_mode = #tpu.pipeline_mode<synchronous>, transform_indices = @transform_12, window_bounds = array<i64: 1, 64>}, {pipeline_mode = #tpu.pipeline_mode<synchronous>, transform_indices = @transform_13, window_bounds = array<i64: 9, 64, 128>}, {pipeline_mode = #tpu.pipeline_mode<synchronous>, transform_indices = @transform_14, window_bounds = array<i64: 1, 128>}, {pipeline_mode = #tpu.pipeline_mode<synchronous>, transform_indices = @transform_15, window_bounds = array<i64: 9, 128, 128>}, {pipeline_mode = #tpu.pipeline_mode<synchronous>, transform_indices = @transform_16, window_bounds = array<i64: 1, 128>}, {pipeline_mode = #tpu.pipeline_mode<synchronous>, transform_indices = @transform_17, window_bounds = array<i64: 64, 128>}, {pipeline_mode = #tpu.pipeline_mode<synchronous>, transform_indices = @transform_18, window_bounds = array<i64: 1, 128>}, {pipeline_mode = #tpu.pipeline_mode<synchronous>, transform_indices = @transform_19, window_bounds = array<i64: 3, 128, 64>}, {pipeline_mode = #tpu.pipeline_mode<synchronous>, transform_indices = @transform_20, window_bounds = array<i64: 3, 1, 64>}, {pipeline_mode = #tpu.pipeline_mode<synchronous>, transform_indices = @transform_21, window_bounds = array<i64: 9, 64, 64>}, {pipeline_mode = #tpu.pipeline_mode<synchronous>, transform_indices = @transform_22, window_bounds = array<i64: 1, 64>}, {pipeline_mode = #tpu.pipeline_mode<synchronous>, transform_indices = @transform_23, window_bounds = array<i64: 9, 64, 64>}, {pipeline_mode = #tpu.pipeline_mode<synchronous>, transform_indices = @transform_24, window_bounds = array<i64: 1, 64>}, {pipeline_mode = #tpu.pipeline_mode<synchronous>, transform_indices = @transform_25, window_bounds = array<i64: 9, 64, 64>}, {pipeline_mode = #tpu.pipeline_mode<synchronous>, transform_indices = @transform_26, window_bounds = array<i64: 1, 64>}, {pipeline_mode = #tpu.pipeline_mode<synchronous>, transform_indices = @transform_27, window_bounds = array<i64: 128, 64>}, {pipeline_mode = #tpu.pipeline_mode<synchronous>, transform_indices = @transform_28, window_bounds = array<i64: 1, 64>}, {pipeline_mode = #tpu.pipeline_mode<synchronous>, transform_indices = @transform_29, window_bounds = array<i64: 4, 64, 16>}, {pipeline_mode = #tpu.pipeline_mode<synchronous>, transform_indices = @transform_30, window_bounds = array<i64: 1, 16>}, {pipeline_mode = #tpu.pipeline_mode<synchronous>, transform_indices = @transform_31, window_bounds = array<i64: 4, 16, 64>}, {pipeline_mode = #tpu.pipeline_mode<synchronous>, transform_indices = @transform_32, window_bounds = array<i64: 4, 1, 64>}, {pipeline_mode = #tpu.pipeline_mode<synchronous>, transform_indices = @transform_33, window_bounds = array<i64: 4, 64, 10>}, {pipeline_mode = #tpu.pipeline_mode<synchronous>, transform_indices = @transform_34, window_bounds = array<i64: 1, 10>}, {transform_indices = @transform_35, window_bounds = array<i64: 1, 1, 10>}]} {
    %c0 = arith.constant 0 : index
    %c0_0 = arith.constant 0 : index
    %c0_1 = arith.constant 0 : index
    %0 = vector.load %arg1[%c0, %c0_0, %c0_1] : memref<1x256x16xbf16, #tpu.memory_space<vmem>>, vector<1x256x16xbf16>
    %1 = vector.shape_cast %0 : vector<1x256x16xbf16> to vector<256x16xbf16>
    %c0_2 = arith.constant 0 : index
    %c0_3 = arith.constant 0 : index
    %2 = vector.load %arg6[%c0_2, %c0_3] : memref<16x32xbf16, #tpu.memory_space<vmem>>, vector<16x32xbf16>
    %cst = arith.constant dense<0.000000e+00> : vector<256x32xf32>
    %3 = tpu.matmul %1, %2, %cst {dimension_numbers = #tpu.dot_dimension_numbers<[1], [0], [0], [1], [0, 0, 1, 1], [], []>} : vector<256x16xbf16>, vector<16x32xbf16>, vector<256x32xf32> -> vector<256x32xf32>
    %c0_4 = arith.constant 0 : index
    %c0_5 = arith.constant 0 : index
    %4 = vector.load %arg7[%c0_4, %c0_5] : memref<1x32xf32, #tpu.memory_space<vmem>>, vector<1x32xf32>
    %5 = vector.broadcast %4 : vector<1x32xf32> to vector<256x32xf32>
    %6 = arith.addf %3, %5 : vector<256x32xf32>
    %cst_6 = arith.constant 0.000000e+00 : f32
    %7 = vector.broadcast %cst_6 : f32 to vector<256x32xf32>
    %8 = arith.maximumf %6, %7 : vector<256x32xf32>
    %c0_7 = arith.constant 0 : index
    %c0_8 = arith.constant 0 : index
    %c0_9 = arith.constant 0 : index
    %9 = vector.load %arg2[%c0_7, %c0_8, %c0_9] : memref<9x64x256xbf16, #tpu.memory_space<vmem>>, vector<1x64x256xbf16>
    %10 = vector.shape_cast %9 : vector<1x64x256xbf16> to vector<64x256xbf16>
    %11 = arith.truncf %8 : vector<256x32xf32> to vector<256x32xbf16>
    %cst_10 = arith.constant dense<0.000000e+00> : vector<64x32xf32>
    %12 = tpu.matmul %10, %11, %cst_10 {dimension_numbers = #tpu.dot_dimension_numbers<[1], [0], [0], [1], [0, 0, 1, 1], [], []>} : vector<64x256xbf16>, vector<256x32xbf16>, vector<64x32xf32> -> vector<64x32xf32>
    %c0_11 = arith.constant 0 : index
    %c0_12 = arith.constant 0 : index
    %c0_13 = arith.constant 0 : index
    %13 = vector.load %arg8[%c0_11, %c0_12, %c0_13] : memref<9x32x64xbf16, #tpu.memory_space<vmem>>, vector<1x32x64xbf16>
    %14 = vector.shape_cast %13 : vector<1x32x64xbf16> to vector<32x64xbf16>
    %15 = arith.truncf %12 : vector<64x32xf32> to vector<64x32xbf16>
    %cst_14 = arith.constant dense<0.000000e+00> : vector<64x64xf32>
    %16 = tpu.matmul %15, %14, %cst_14 {dimension_numbers = #tpu.dot_dimension_numbers<[1], [0], [0], [1], [0, 0, 1, 1], [], []>} : vector<64x32xbf16>, vector<32x64xbf16>, vector<64x64xf32> -> vector<64x64xf32>
    %c1 = arith.constant 1 : index
    %c0_15 = arith.constant 0 : index
    %c0_16 = arith.constant 0 : index
    %17 = vector.load %arg2[%c1, %c0_15, %c0_16] : memref<9x64x256xbf16, #tpu.memory_space<vmem>>, vector<1x64x256xbf16>
    %18 = vector.shape_cast %17 : vector<1x64x256xbf16> to vector<64x256xbf16>
    %19 = arith.truncf %8 : vector<256x32xf32> to vector<256x32xbf16>
    %cst_17 = arith.constant dense<0.000000e+00> : vector<64x32xf32>
    %20 = tpu.matmul %18, %19, %cst_17 {dimension_numbers = #tpu.dot_dimension_numbers<[1], [0], [0], [1], [0, 0, 1, 1], [], []>} : vector<64x256xbf16>, vector<256x32xbf16>, vector<64x32xf32> -> vector<64x32xf32>
    %c1_18 = arith.constant 1 : index
    %c0_19 = arith.constant 0 : index
    %c0_20 = arith.constant 0 : index
    %21 = vector.load %arg8[%c1_18, %c0_19, %c0_20] : memref<9x32x64xbf16, #tpu.memory_space<vmem>>, vector<1x32x64xbf16>
    %22 = vector.shape_cast %21 : vector<1x32x64xbf16> to vector<32x64xbf16>
    %23 = arith.truncf %20 : vector<64x32xf32> to vector<64x32xbf16>
    %cst_21 = arith.constant dense<0.000000e+00> : vector<64x64xf32>
    %24 = tpu.matmul %23, %22, %cst_21 {dimension_numbers = #tpu.dot_dimension_numbers<[1], [0], [0], [1], [0, 0, 1, 1], [], []>} : vector<64x32xbf16>, vector<32x64xbf16>, vector<64x64xf32> -> vector<64x64xf32>
    %25 = arith.addf %16, %24 : vector<64x64xf32>
    %c2 = arith.constant 2 : index
    %c0_22 = arith.constant 0 : index
    %c0_23 = arith.constant 0 : index
    %26 = vector.load %arg2[%c2, %c0_22, %c0_23] : memref<9x64x256xbf16, #tpu.memory_space<vmem>>, vector<1x64x256xbf16>
    %27 = vector.shape_cast %26 : vector<1x64x256xbf16> to vector<64x256xbf16>
    %28 = arith.truncf %8 : vector<256x32xf32> to vector<256x32xbf16>
    %cst_24 = arith.constant dense<0.000000e+00> : vector<64x32xf32>
    %29 = tpu.matmul %27, %28, %cst_24 {dimension_numbers = #tpu.dot_dimension_numbers<[1], [0], [0], [1], [0, 0, 1, 1], [], []>} : vector<64x256xbf16>, vector<256x32xbf16>, vector<64x32xf32> -> vector<64x32xf32>
    %c2_25 = arith.constant 2 : index
    %c0_26 = arith.constant 0 : index
    %c0_27 = arith.constant 0 : index
    %30 = vector.load %arg8[%c2_25, %c0_26, %c0_27] : memref<9x32x64xbf16, #tpu.memory_space<vmem>>, vector<1x32x64xbf16>
    %31 = vector.shape_cast %30 : vector<1x32x64xbf16> to vector<32x64xbf16>
    %32 = arith.truncf %29 : vector<64x32xf32> to vector<64x32xbf16>
    %cst_28 = arith.constant dense<0.000000e+00> : vector<64x64xf32>
    %33 = tpu.matmul %32, %31, %cst_28 {dimension_numbers = #tpu.dot_dimension_numbers<[1], [0], [0], [1], [0, 0, 1, 1], [], []>} : vector<64x32xbf16>, vector<32x64xbf16>, vector<64x64xf32> -> vector<64x64xf32>
    %34 = arith.addf %25, %33 : vector<64x64xf32>
    %c3 = arith.constant 3 : index
    %c0_29 = arith.constant 0 : index
    %c0_30 = arith.constant 0 : index
    %35 = vector.load %arg2[%c3, %c0_29, %c0_30] : memref<9x64x256xbf16, #tpu.memory_space<vmem>>, vector<1x64x256xbf16>
    %36 = vector.shape_cast %35 : vector<1x64x256xbf16> to vector<64x256xbf16>
    %37 = arith.truncf %8 : vector<256x32xf32> to vector<256x32xbf16>
    %cst_31 = arith.constant dense<0.000000e+00> : vector<64x32xf32>
    %38 = tpu.matmul %36, %37, %cst_31 {dimension_numbers = #tpu.dot_dimension_numbers<[1], [0], [0], [1], [0, 0, 1, 1], [], []>} : vector<64x256xbf16>, vector<256x32xbf16>, vector<64x32xf32> -> vector<64x32xf32>
    %c3_32 = arith.constant 3 : index
    %c0_33 = arith.constant 0 : index
    %c0_34 = arith.constant 0 : index
    %39 = vector.load %arg8[%c3_32, %c0_33, %c0_34] : memref<9x32x64xbf16, #tpu.memory_space<vmem>>, vector<1x32x64xbf16>
    %40 = vector.shape_cast %39 : vector<1x32x64xbf16> to vector<32x64xbf16>
    %41 = arith.truncf %38 : vector<64x32xf32> to vector<64x32xbf16>
    %cst_35 = arith.constant dense<0.000000e+00> : vector<64x64xf32>
    %42 = tpu.matmul %41, %40, %cst_35 {dimension_numbers = #tpu.dot_dimension_numbers<[1], [0], [0], [1], [0, 0, 1, 1], [], []>} : vector<64x32xbf16>, vector<32x64xbf16>, vector<64x64xf32> -> vector<64x64xf32>
    %43 = arith.addf %34, %42 : vector<64x64xf32>
    %c4 = arith.constant 4 : index
    %c0_36 = arith.constant 0 : index
    %c0_37 = arith.constant 0 : index
    %44 = vector.load %arg2[%c4, %c0_36, %c0_37] : memref<9x64x256xbf16, #tpu.memory_space<vmem>>, vector<1x64x256xbf16>
    %45 = vector.shape_cast %44 : vector<1x64x256xbf16> to vector<64x256xbf16>
    %46 = arith.truncf %8 : vector<256x32xf32> to vector<256x32xbf16>
    %cst_38 = arith.constant dense<0.000000e+00> : vector<64x32xf32>
    %47 = tpu.matmul %45, %46, %cst_38 {dimension_numbers = #tpu.dot_dimension_numbers<[1], [0], [0], [1], [0, 0, 1, 1], [], []>} : vector<64x256xbf16>, vector<256x32xbf16>, vector<64x32xf32> -> vector<64x32xf32>
    %c4_39 = arith.constant 4 : index
    %c0_40 = arith.constant 0 : index
    %c0_41 = arith.constant 0 : index
    %48 = vector.load %arg8[%c4_39, %c0_40, %c0_41] : memref<9x32x64xbf16, #tpu.memory_space<vmem>>, vector<1x32x64xbf16>
    %49 = vector.shape_cast %48 : vector<1x32x64xbf16> to vector<32x64xbf16>
    %50 = arith.truncf %47 : vector<64x32xf32> to vector<64x32xbf16>
    %cst_42 = arith.constant dense<0.000000e+00> : vector<64x64xf32>
    %51 = tpu.matmul %50, %49, %cst_42 {dimension_numbers = #tpu.dot_dimension_numbers<[1], [0], [0], [1], [0, 0, 1, 1], [], []>} : vector<64x32xbf16>, vector<32x64xbf16>, vector<64x64xf32> -> vector<64x64xf32>
    %52 = arith.addf %43, %51 : vector<64x64xf32>
    %c5 = arith.constant 5 : index
    %c0_43 = arith.constant 0 : index
    %c0_44 = arith.constant 0 : index
    %53 = vector.load %arg2[%c5, %c0_43, %c0_44] : memref<9x64x256xbf16, #tpu.memory_space<vmem>>, vector<1x64x256xbf16>
    %54 = vector.shape_cast %53 : vector<1x64x256xbf16> to vector<64x256xbf16>
    %55 = arith.truncf %8 : vector<256x32xf32> to vector<256x32xbf16>
    %cst_45 = arith.constant dense<0.000000e+00> : vector<64x32xf32>
    %56 = tpu.matmul %54, %55, %cst_45 {dimension_numbers = #tpu.dot_dimension_numbers<[1], [0], [0], [1], [0, 0, 1, 1], [], []>} : vector<64x256xbf16>, vector<256x32xbf16>, vector<64x32xf32> -> vector<64x32xf32>
    %c5_46 = arith.constant 5 : index
    %c0_47 = arith.constant 0 : index
    %c0_48 = arith.constant 0 : index
    %57 = vector.load %arg8[%c5_46, %c0_47, %c0_48] : memref<9x32x64xbf16, #tpu.memory_space<vmem>>, vector<1x32x64xbf16>
    %58 = vector.shape_cast %57 : vector<1x32x64xbf16> to vector<32x64xbf16>
    %59 = arith.truncf %56 : vector<64x32xf32> to vector<64x32xbf16>
    %cst_49 = arith.constant dense<0.000000e+00> : vector<64x64xf32>
    %60 = tpu.matmul %59, %58, %cst_49 {dimension_numbers = #tpu.dot_dimension_numbers<[1], [0], [0], [1], [0, 0, 1, 1], [], []>} : vector<64x32xbf16>, vector<32x64xbf16>, vector<64x64xf32> -> vector<64x64xf32>
    %61 = arith.addf %52, %60 : vector<64x64xf32>
    %c6 = arith.constant 6 : index
    %c0_50 = arith.constant 0 : index
    %c0_51 = arith.constant 0 : index
    %62 = vector.load %arg2[%c6, %c0_50, %c0_51] : memref<9x64x256xbf16, #tpu.memory_space<vmem>>, vector<1x64x256xbf16>
    %63 = vector.shape_cast %62 : vector<1x64x256xbf16> to vector<64x256xbf16>
    %64 = arith.truncf %8 : vector<256x32xf32> to vector<256x32xbf16>
    %cst_52 = arith.constant dense<0.000000e+00> : vector<64x32xf32>
    %65 = tpu.matmul %63, %64, %cst_52 {dimension_numbers = #tpu.dot_dimension_numbers<[1], [0], [0], [1], [0, 0, 1, 1], [], []>} : vector<64x256xbf16>, vector<256x32xbf16>, vector<64x32xf32> -> vector<64x32xf32>
    %c6_53 = arith.constant 6 : index
    %c0_54 = arith.constant 0 : index
    %c0_55 = arith.constant 0 : index
    %66 = vector.load %arg8[%c6_53, %c0_54, %c0_55] : memref<9x32x64xbf16, #tpu.memory_space<vmem>>, vector<1x32x64xbf16>
    %67 = vector.shape_cast %66 : vector<1x32x64xbf16> to vector<32x64xbf16>
    %68 = arith.truncf %65 : vector<64x32xf32> to vector<64x32xbf16>
    %cst_56 = arith.constant dense<0.000000e+00> : vector<64x64xf32>
    %69 = tpu.matmul %68, %67, %cst_56 {dimension_numbers = #tpu.dot_dimension_numbers<[1], [0], [0], [1], [0, 0, 1, 1], [], []>} : vector<64x32xbf16>, vector<32x64xbf16>, vector<64x64xf32> -> vector<64x64xf32>
    %70 = arith.addf %61, %69 : vector<64x64xf32>
    %c7 = arith.constant 7 : index
    %c0_57 = arith.constant 0 : index
    %c0_58 = arith.constant 0 : index
    %71 = vector.load %arg2[%c7, %c0_57, %c0_58] : memref<9x64x256xbf16, #tpu.memory_space<vmem>>, vector<1x64x256xbf16>
    %72 = vector.shape_cast %71 : vector<1x64x256xbf16> to vector<64x256xbf16>
    %73 = arith.truncf %8 : vector<256x32xf32> to vector<256x32xbf16>
    %cst_59 = arith.constant dense<0.000000e+00> : vector<64x32xf32>
    %74 = tpu.matmul %72, %73, %cst_59 {dimension_numbers = #tpu.dot_dimension_numbers<[1], [0], [0], [1], [0, 0, 1, 1], [], []>} : vector<64x256xbf16>, vector<256x32xbf16>, vector<64x32xf32> -> vector<64x32xf32>
    %c7_60 = arith.constant 7 : index
    %c0_61 = arith.constant 0 : index
    %c0_62 = arith.constant 0 : index
    %75 = vector.load %arg8[%c7_60, %c0_61, %c0_62] : memref<9x32x64xbf16, #tpu.memory_space<vmem>>, vector<1x32x64xbf16>
    %76 = vector.shape_cast %75 : vector<1x32x64xbf16> to vector<32x64xbf16>
    %77 = arith.truncf %74 : vector<64x32xf32> to vector<64x32xbf16>
    %cst_63 = arith.constant dense<0.000000e+00> : vector<64x64xf32>
    %78 = tpu.matmul %77, %76, %cst_63 {dimension_numbers = #tpu.dot_dimension_numbers<[1], [0], [0], [1], [0, 0, 1, 1], [], []>} : vector<64x32xbf16>, vector<32x64xbf16>, vector<64x64xf32> -> vector<64x64xf32>
    %79 = arith.addf %70, %78 : vector<64x64xf32>
    %c8 = arith.constant 8 : index
    %c0_64 = arith.constant 0 : index
    %c0_65 = arith.constant 0 : index
    %80 = vector.load %arg2[%c8, %c0_64, %c0_65] : memref<9x64x256xbf16, #tpu.memory_space<vmem>>, vector<1x64x256xbf16>
    %81 = vector.shape_cast %80 : vector<1x64x256xbf16> to vector<64x256xbf16>
    %82 = arith.truncf %8 : vector<256x32xf32> to vector<256x32xbf16>
    %cst_66 = arith.constant dense<0.000000e+00> : vector<64x32xf32>
    %83 = tpu.matmul %81, %82, %cst_66 {dimension_numbers = #tpu.dot_dimension_numbers<[1], [0], [0], [1], [0, 0, 1, 1], [], []>} : vector<64x256xbf16>, vector<256x32xbf16>, vector<64x32xf32> -> vector<64x32xf32>
    %c8_67 = arith.constant 8 : index
    %c0_68 = arith.constant 0 : index
    %c0_69 = arith.constant 0 : index
    %84 = vector.load %arg8[%c8_67, %c0_68, %c0_69] : memref<9x32x64xbf16, #tpu.memory_space<vmem>>, vector<1x32x64xbf16>
    %85 = vector.shape_cast %84 : vector<1x32x64xbf16> to vector<32x64xbf16>
    %86 = arith.truncf %83 : vector<64x32xf32> to vector<64x32xbf16>
    %cst_70 = arith.constant dense<0.000000e+00> : vector<64x64xf32>
    %87 = tpu.matmul %86, %85, %cst_70 {dimension_numbers = #tpu.dot_dimension_numbers<[1], [0], [0], [1], [0, 0, 1, 1], [], []>} : vector<64x32xbf16>, vector<32x64xbf16>, vector<64x64xf32> -> vector<64x64xf32>
    %88 = arith.addf %79, %87 : vector<64x64xf32>
    %c0_71 = arith.constant 0 : index
    %c0_72 = arith.constant 0 : index
    %89 = vector.load %arg9[%c0_71, %c0_72] : memref<1x64xf32, #tpu.memory_space<vmem>>, vector<1x64xf32>
    %90 = vector.broadcast %89 : vector<1x64xf32> to vector<64x64xf32>
    %91 = arith.addf %88, %90 : vector<64x64xf32>
    %cst_73 = arith.constant 0.000000e+00 : f32
    %92 = vector.broadcast %cst_73 : f32 to vector<64x64xf32>
    %93 = arith.maximumf %91, %92 : vector<64x64xf32>
    %c0_74 = arith.constant 0 : index
    %c0_75 = arith.constant 0 : index
    %94 = vector.load %arg12[%c0_74, %c0_75] : memref<32x64xbf16, #tpu.memory_space<vmem>>, vector<32x64xbf16>
    %95 = arith.truncf %47 : vector<64x32xf32> to vector<64x32xbf16>
    %cst_76 = arith.constant dense<0.000000e+00> : vector<64x64xf32>
    %96 = tpu.matmul %95, %94, %cst_76 {dimension_numbers = #tpu.dot_dimension_numbers<[1], [0], [0], [1], [0, 0, 1, 1], [], []>} : vector<64x32xbf16>, vector<32x64xbf16>, vector<64x64xf32> -> vector<64x64xf32>
    %c0_77 = arith.constant 0 : index
    %c0_78 = arith.constant 0 : index
    %97 = vector.load %arg13[%c0_77, %c0_78] : memref<1x64xf32, #tpu.memory_space<vmem>>, vector<1x64xf32>
    %98 = vector.broadcast %97 : vector<1x64xf32> to vector<64x64xf32>
    %99 = arith.addf %96, %98 : vector<64x64xf32>
    %c0_79 = arith.constant 0 : index
    %c0_80 = arith.constant 0 : index
    %c0_81 = arith.constant 0 : index
    %100 = vector.load %arg3[%c0_79, %c0_80, %c0_81] : memref<9x64x64xbf16, #tpu.memory_space<vmem>>, vector<1x64x64xbf16>
    %101 = vector.shape_cast %100 : vector<1x64x64xbf16> to vector<64x64xbf16>
    %102 = arith.truncf %93 : vector<64x64xf32> to vector<64x64xbf16>
    %cst_82 = arith.constant dense<0.000000e+00> : vector<64x64xf32>
    %103 = tpu.matmul %101, %102, %cst_82 {dimension_numbers = #tpu.dot_dimension_numbers<[1], [0], [0], [1], [0, 0, 1, 1], [], []>} : vector<64x64xbf16>, vector<64x64xbf16>, vector<64x64xf32> -> vector<64x64xf32>
    %c0_83 = arith.constant 0 : index
    %c0_84 = arith.constant 0 : index
    %c0_85 = arith.constant 0 : index
    %104 = vector.load %arg10[%c0_83, %c0_84, %c0_85] : memref<9x64x64xbf16, #tpu.memory_space<vmem>>, vector<1x64x64xbf16>
    %105 = vector.shape_cast %104 : vector<1x64x64xbf16> to vector<64x64xbf16>
    %106 = arith.truncf %103 : vector<64x64xf32> to vector<64x64xbf16>
    %cst_86 = arith.constant dense<0.000000e+00> : vector<64x64xf32>
    %107 = tpu.matmul %106, %105, %cst_86 {dimension_numbers = #tpu.dot_dimension_numbers<[1], [0], [0], [1], [0, 0, 1, 1], [], []>} : vector<64x64xbf16>, vector<64x64xbf16>, vector<64x64xf32> -> vector<64x64xf32>
    %c1_87 = arith.constant 1 : index
    %c0_88 = arith.constant 0 : index
    %c0_89 = arith.constant 0 : index
    %108 = vector.load %arg3[%c1_87, %c0_88, %c0_89] : memref<9x64x64xbf16, #tpu.memory_space<vmem>>, vector<1x64x64xbf16>
    %109 = vector.shape_cast %108 : vector<1x64x64xbf16> to vector<64x64xbf16>
    %110 = arith.truncf %93 : vector<64x64xf32> to vector<64x64xbf16>
    %cst_90 = arith.constant dense<0.000000e+00> : vector<64x64xf32>
    %111 = tpu.matmul %109, %110, %cst_90 {dimension_numbers = #tpu.dot_dimension_numbers<[1], [0], [0], [1], [0, 0, 1, 1], [], []>} : vector<64x64xbf16>, vector<64x64xbf16>, vector<64x64xf32> -> vector<64x64xf32>
    %c1_91 = arith.constant 1 : index
    %c0_92 = arith.constant 0 : index
    %c0_93 = arith.constant 0 : index
    %112 = vector.load %arg10[%c1_91, %c0_92, %c0_93] : memref<9x64x64xbf16, #tpu.memory_space<vmem>>, vector<1x64x64xbf16>
    %113 = vector.shape_cast %112 : vector<1x64x64xbf16> to vector<64x64xbf16>
    %114 = arith.truncf %111 : vector<64x64xf32> to vector<64x64xbf16>
    %cst_94 = arith.constant dense<0.000000e+00> : vector<64x64xf32>
    %115 = tpu.matmul %114, %113, %cst_94 {dimension_numbers = #tpu.dot_dimension_numbers<[1], [0], [0], [1], [0, 0, 1, 1], [], []>} : vector<64x64xbf16>, vector<64x64xbf16>, vector<64x64xf32> -> vector<64x64xf32>
    %116 = arith.addf %107, %115 : vector<64x64xf32>
    %c2_95 = arith.constant 2 : index
    %c0_96 = arith.constant 0 : index
    %c0_97 = arith.constant 0 : index
    %117 = vector.load %arg3[%c2_95, %c0_96, %c0_97] : memref<9x64x64xbf16, #tpu.memory_space<vmem>>, vector<1x64x64xbf16>
    %118 = vector.shape_cast %117 : vector<1x64x64xbf16> to vector<64x64xbf16>
    %119 = arith.truncf %93 : vector<64x64xf32> to vector<64x64xbf16>
    %cst_98 = arith.constant dense<0.000000e+00> : vector<64x64xf32>
    %120 = tpu.matmul %118, %119, %cst_98 {dimension_numbers = #tpu.dot_dimension_numbers<[1], [0], [0], [1], [0, 0, 1, 1], [], []>} : vector<64x64xbf16>, vector<64x64xbf16>, vector<64x64xf32> -> vector<64x64xf32>
    %c2_99 = arith.constant 2 : index
    %c0_100 = arith.constant 0 : index
    %c0_101 = arith.constant 0 : index
    %121 = vector.load %arg10[%c2_99, %c0_100, %c0_101] : memref<9x64x64xbf16, #tpu.memory_space<vmem>>, vector<1x64x64xbf16>
    %122 = vector.shape_cast %121 : vector<1x64x64xbf16> to vector<64x64xbf16>
    %123 = arith.truncf %120 : vector<64x64xf32> to vector<64x64xbf16>
    %cst_102 = arith.constant dense<0.000000e+00> : vector<64x64xf32>
    %124 = tpu.matmul %123, %122, %cst_102 {dimension_numbers = #tpu.dot_dimension_numbers<[1], [0], [0], [1], [0, 0, 1, 1], [], []>} : vector<64x64xbf16>, vector<64x64xbf16>, vector<64x64xf32> -> vector<64x64xf32>
    %125 = arith.addf %116, %124 : vector<64x64xf32>
    %c3_103 = arith.constant 3 : index
    %c0_104 = arith.constant 0 : index
    %c0_105 = arith.constant 0 : index
    %126 = vector.load %arg3[%c3_103, %c0_104, %c0_105] : memref<9x64x64xbf16, #tpu.memory_space<vmem>>, vector<1x64x64xbf16>
    %127 = vector.shape_cast %126 : vector<1x64x64xbf16> to vector<64x64xbf16>
    %128 = arith.truncf %93 : vector<64x64xf32> to vector<64x64xbf16>
    %cst_106 = arith.constant dense<0.000000e+00> : vector<64x64xf32>
    %129 = tpu.matmul %127, %128, %cst_106 {dimension_numbers = #tpu.dot_dimension_numbers<[1], [0], [0], [1], [0, 0, 1, 1], [], []>} : vector<64x64xbf16>, vector<64x64xbf16>, vector<64x64xf32> -> vector<64x64xf32>
    %c3_107 = arith.constant 3 : index
    %c0_108 = arith.constant 0 : index
    %c0_109 = arith.constant 0 : index
    %130 = vector.load %arg10[%c3_107, %c0_108, %c0_109] : memref<9x64x64xbf16, #tpu.memory_space<vmem>>, vector<1x64x64xbf16>
    %131 = vector.shape_cast %130 : vector<1x64x64xbf16> to vector<64x64xbf16>
    %132 = arith.truncf %129 : vector<64x64xf32> to vector<64x64xbf16>
    %cst_110 = arith.constant dense<0.000000e+00> : vector<64x64xf32>
    %133 = tpu.matmul %132, %131, %cst_110 {dimension_numbers = #tpu.dot_dimension_numbers<[1], [0], [0], [1], [0, 0, 1, 1], [], []>} : vector<64x64xbf16>, vector<64x64xbf16>, vector<64x64xf32> -> vector<64x64xf32>
    %134 = arith.addf %125, %133 : vector<64x64xf32>
    %c4_111 = arith.constant 4 : index
    %c0_112 = arith.constant 0 : index
    %c0_113 = arith.constant 0 : index
    %135 = vector.load %arg3[%c4_111, %c0_112, %c0_113] : memref<9x64x64xbf16, #tpu.memory_space<vmem>>, vector<1x64x64xbf16>
    %136 = vector.shape_cast %135 : vector<1x64x64xbf16> to vector<64x64xbf16>
    %137 = arith.truncf %93 : vector<64x64xf32> to vector<64x64xbf16>
    %cst_114 = arith.constant dense<0.000000e+00> : vector<64x64xf32>
    %138 = tpu.matmul %136, %137, %cst_114 {dimension_numbers = #tpu.dot_dimension_numbers<[1], [0], [0], [1], [0, 0, 1, 1], [], []>} : vector<64x64xbf16>, vector<64x64xbf16>, vector<64x64xf32> -> vector<64x64xf32>
    %c4_115 = arith.constant 4 : index
    %c0_116 = arith.constant 0 : index
    %c0_117 = arith.constant 0 : index
    %139 = vector.load %arg10[%c4_115, %c0_116, %c0_117] : memref<9x64x64xbf16, #tpu.memory_space<vmem>>, vector<1x64x64xbf16>
    %140 = vector.shape_cast %139 : vector<1x64x64xbf16> to vector<64x64xbf16>
    %141 = arith.truncf %138 : vector<64x64xf32> to vector<64x64xbf16>
    %cst_118 = arith.constant dense<0.000000e+00> : vector<64x64xf32>
    %142 = tpu.matmul %141, %140, %cst_118 {dimension_numbers = #tpu.dot_dimension_numbers<[1], [0], [0], [1], [0, 0, 1, 1], [], []>} : vector<64x64xbf16>, vector<64x64xbf16>, vector<64x64xf32> -> vector<64x64xf32>
    %143 = arith.addf %134, %142 : vector<64x64xf32>
    %c5_119 = arith.constant 5 : index
    %c0_120 = arith.constant 0 : index
    %c0_121 = arith.constant 0 : index
    %144 = vector.load %arg3[%c5_119, %c0_120, %c0_121] : memref<9x64x64xbf16, #tpu.memory_space<vmem>>, vector<1x64x64xbf16>
    %145 = vector.shape_cast %144 : vector<1x64x64xbf16> to vector<64x64xbf16>
    %146 = arith.truncf %93 : vector<64x64xf32> to vector<64x64xbf16>
    %cst_122 = arith.constant dense<0.000000e+00> : vector<64x64xf32>
    %147 = tpu.matmul %145, %146, %cst_122 {dimension_numbers = #tpu.dot_dimension_numbers<[1], [0], [0], [1], [0, 0, 1, 1], [], []>} : vector<64x64xbf16>, vector<64x64xbf16>, vector<64x64xf32> -> vector<64x64xf32>
    %c5_123 = arith.constant 5 : index
    %c0_124 = arith.constant 0 : index
    %c0_125 = arith.constant 0 : index
    %148 = vector.load %arg10[%c5_123, %c0_124, %c0_125] : memref<9x64x64xbf16, #tpu.memory_space<vmem>>, vector<1x64x64xbf16>
    %149 = vector.shape_cast %148 : vector<1x64x64xbf16> to vector<64x64xbf16>
    %150 = arith.truncf %147 : vector<64x64xf32> to vector<64x64xbf16>
    %cst_126 = arith.constant dense<0.000000e+00> : vector<64x64xf32>
    %151 = tpu.matmul %150, %149, %cst_126 {dimension_numbers = #tpu.dot_dimension_numbers<[1], [0], [0], [1], [0, 0, 1, 1], [], []>} : vector<64x64xbf16>, vector<64x64xbf16>, vector<64x64xf32> -> vector<64x64xf32>
    %152 = arith.addf %143, %151 : vector<64x64xf32>
    %c6_127 = arith.constant 6 : index
    %c0_128 = arith.constant 0 : index
    %c0_129 = arith.constant 0 : index
    %153 = vector.load %arg3[%c6_127, %c0_128, %c0_129] : memref<9x64x64xbf16, #tpu.memory_space<vmem>>, vector<1x64x64xbf16>
    %154 = vector.shape_cast %153 : vector<1x64x64xbf16> to vector<64x64xbf16>
    %155 = arith.truncf %93 : vector<64x64xf32> to vector<64x64xbf16>
    %cst_130 = arith.constant dense<0.000000e+00> : vector<64x64xf32>
    %156 = tpu.matmul %154, %155, %cst_130 {dimension_numbers = #tpu.dot_dimension_numbers<[1], [0], [0], [1], [0, 0, 1, 1], [], []>} : vector<64x64xbf16>, vector<64x64xbf16>, vector<64x64xf32> -> vector<64x64xf32>
    %c6_131 = arith.constant 6 : index
    %c0_132 = arith.constant 0 : index
    %c0_133 = arith.constant 0 : index
    %157 = vector.load %arg10[%c6_131, %c0_132, %c0_133] : memref<9x64x64xbf16, #tpu.memory_space<vmem>>, vector<1x64x64xbf16>
    %158 = vector.shape_cast %157 : vector<1x64x64xbf16> to vector<64x64xbf16>
    %159 = arith.truncf %156 : vector<64x64xf32> to vector<64x64xbf16>
    %cst_134 = arith.constant dense<0.000000e+00> : vector<64x64xf32>
    %160 = tpu.matmul %159, %158, %cst_134 {dimension_numbers = #tpu.dot_dimension_numbers<[1], [0], [0], [1], [0, 0, 1, 1], [], []>} : vector<64x64xbf16>, vector<64x64xbf16>, vector<64x64xf32> -> vector<64x64xf32>
    %161 = arith.addf %152, %160 : vector<64x64xf32>
    %c7_135 = arith.constant 7 : index
    %c0_136 = arith.constant 0 : index
    %c0_137 = arith.constant 0 : index
    %162 = vector.load %arg3[%c7_135, %c0_136, %c0_137] : memref<9x64x64xbf16, #tpu.memory_space<vmem>>, vector<1x64x64xbf16>
    %163 = vector.shape_cast %162 : vector<1x64x64xbf16> to vector<64x64xbf16>
    %164 = arith.truncf %93 : vector<64x64xf32> to vector<64x64xbf16>
    %cst_138 = arith.constant dense<0.000000e+00> : vector<64x64xf32>
    %165 = tpu.matmul %163, %164, %cst_138 {dimension_numbers = #tpu.dot_dimension_numbers<[1], [0], [0], [1], [0, 0, 1, 1], [], []>} : vector<64x64xbf16>, vector<64x64xbf16>, vector<64x64xf32> -> vector<64x64xf32>
    %c7_139 = arith.constant 7 : index
    %c0_140 = arith.constant 0 : index
    %c0_141 = arith.constant 0 : index
    %166 = vector.load %arg10[%c7_139, %c0_140, %c0_141] : memref<9x64x64xbf16, #tpu.memory_space<vmem>>, vector<1x64x64xbf16>
    %167 = vector.shape_cast %166 : vector<1x64x64xbf16> to vector<64x64xbf16>
    %168 = arith.truncf %165 : vector<64x64xf32> to vector<64x64xbf16>
    %cst_142 = arith.constant dense<0.000000e+00> : vector<64x64xf32>
    %169 = tpu.matmul %168, %167, %cst_142 {dimension_numbers = #tpu.dot_dimension_numbers<[1], [0], [0], [1], [0, 0, 1, 1], [], []>} : vector<64x64xbf16>, vector<64x64xbf16>, vector<64x64xf32> -> vector<64x64xf32>
    %170 = arith.addf %161, %169 : vector<64x64xf32>
    %c8_143 = arith.constant 8 : index
    %c0_144 = arith.constant 0 : index
    %c0_145 = arith.constant 0 : index
    %171 = vector.load %arg3[%c8_143, %c0_144, %c0_145] : memref<9x64x64xbf16, #tpu.memory_space<vmem>>, vector<1x64x64xbf16>
    %172 = vector.shape_cast %171 : vector<1x64x64xbf16> to vector<64x64xbf16>
    %173 = arith.truncf %93 : vector<64x64xf32> to vector<64x64xbf16>
    %cst_146 = arith.constant dense<0.000000e+00> : vector<64x64xf32>
    %174 = tpu.matmul %172, %173, %cst_146 {dimension_numbers = #tpu.dot_dimension_numbers<[1], [0], [0], [1], [0, 0, 1, 1], [], []>} : vector<64x64xbf16>, vector<64x64xbf16>, vector<64x64xf32> -> vector<64x64xf32>
    %c8_147 = arith.constant 8 : index
    %c0_148 = arith.constant 0 : index
    %c0_149 = arith.constant 0 : index
    %175 = vector.load %arg10[%c8_147, %c0_148, %c0_149] : memref<9x64x64xbf16, #tpu.memory_space<vmem>>, vector<1x64x64xbf16>
    %176 = vector.shape_cast %175 : vector<1x64x64xbf16> to vector<64x64xbf16>
    %177 = arith.truncf %174 : vector<64x64xf32> to vector<64x64xbf16>
    %cst_150 = arith.constant dense<0.000000e+00> : vector<64x64xf32>
    %178 = tpu.matmul %177, %176, %cst_150 {dimension_numbers = #tpu.dot_dimension_numbers<[1], [0], [0], [1], [0, 0, 1, 1], [], []>} : vector<64x64xbf16>, vector<64x64xbf16>, vector<64x64xf32> -> vector<64x64xf32>
    %179 = arith.addf %170, %178 : vector<64x64xf32>
    %c0_151 = arith.constant 0 : index
    %c0_152 = arith.constant 0 : index
    %180 = vector.load %arg11[%c0_151, %c0_152] : memref<1x64xf32, #tpu.memory_space<vmem>>, vector<1x64xf32>
    %181 = vector.broadcast %180 : vector<1x64xf32> to vector<64x64xf32>
    %182 = arith.addf %179, %181 : vector<64x64xf32>
    %183 = arith.addf %182, %99 : vector<64x64xf32>
    %cst_153 = arith.constant 0.000000e+00 : f32
    %184 = vector.broadcast %cst_153 : f32 to vector<64x64xf32>
    %185 = arith.maximumf %183, %184 : vector<64x64xf32>
    %c0_154 = arith.constant 0 : index
    %c0_155 = arith.constant 0 : index
    %c0_156 = arith.constant 0 : index
    %186 = vector.load %arg4[%c0_154, %c0_155, %c0_156] : memref<9x16x64xbf16, #tpu.memory_space<vmem>>, vector<1x16x64xbf16>
    %187 = vector.shape_cast %186 : vector<1x16x64xbf16> to vector<16x64xbf16>
    %188 = arith.truncf %185 : vector<64x64xf32> to vector<64x64xbf16>
    %cst_157 = arith.constant dense<0.000000e+00> : vector<16x64xf32>
    %189 = tpu.matmul %187, %188, %cst_157 {dimension_numbers = #tpu.dot_dimension_numbers<[1], [0], [0], [1], [0, 0, 1, 1], [], []>} : vector<16x64xbf16>, vector<64x64xbf16>, vector<16x64xf32> -> vector<16x64xf32>
    %c0_158 = arith.constant 0 : index
    %c0_159 = arith.constant 0 : index
    %c0_160 = arith.constant 0 : index
    %190 = vector.load %arg14[%c0_158, %c0_159, %c0_160] : memref<9x64x128xbf16, #tpu.memory_space<vmem>>, vector<1x64x128xbf16>
    %191 = vector.shape_cast %190 : vector<1x64x128xbf16> to vector<64x128xbf16>
    %192 = arith.truncf %189 : vector<16x64xf32> to vector<16x64xbf16>
    %cst_161 = arith.constant dense<0.000000e+00> : vector<16x128xf32>
    %193 = tpu.matmul %192, %191, %cst_161 {dimension_numbers = #tpu.dot_dimension_numbers<[1], [0], [0], [1], [0, 0, 1, 1], [], []>} : vector<16x64xbf16>, vector<64x128xbf16>, vector<16x128xf32> -> vector<16x128xf32>
    %c1_162 = arith.constant 1 : index
    %c0_163 = arith.constant 0 : index
    %c0_164 = arith.constant 0 : index
    %194 = vector.load %arg4[%c1_162, %c0_163, %c0_164] : memref<9x16x64xbf16, #tpu.memory_space<vmem>>, vector<1x16x64xbf16>
    %195 = vector.shape_cast %194 : vector<1x16x64xbf16> to vector<16x64xbf16>
    %196 = arith.truncf %185 : vector<64x64xf32> to vector<64x64xbf16>
    %cst_165 = arith.constant dense<0.000000e+00> : vector<16x64xf32>
    %197 = tpu.matmul %195, %196, %cst_165 {dimension_numbers = #tpu.dot_dimension_numbers<[1], [0], [0], [1], [0, 0, 1, 1], [], []>} : vector<16x64xbf16>, vector<64x64xbf16>, vector<16x64xf32> -> vector<16x64xf32>
    %c1_166 = arith.constant 1 : index
    %c0_167 = arith.constant 0 : index
    %c0_168 = arith.constant 0 : index
    %198 = vector.load %arg14[%c1_166, %c0_167, %c0_168] : memref<9x64x128xbf16, #tpu.memory_space<vmem>>, vector<1x64x128xbf16>
    %199 = vector.shape_cast %198 : vector<1x64x128xbf16> to vector<64x128xbf16>
    %200 = arith.truncf %197 : vector<16x64xf32> to vector<16x64xbf16>
    %cst_169 = arith.constant dense<0.000000e+00> : vector<16x128xf32>
    %201 = tpu.matmul %200, %199, %cst_169 {dimension_numbers = #tpu.dot_dimension_numbers<[1], [0], [0], [1], [0, 0, 1, 1], [], []>} : vector<16x64xbf16>, vector<64x128xbf16>, vector<16x128xf32> -> vector<16x128xf32>
    %202 = arith.addf %193, %201 : vector<16x128xf32>
    %c2_170 = arith.constant 2 : index
    %c0_171 = arith.constant 0 : index
    %c0_172 = arith.constant 0 : index
    %203 = vector.load %arg4[%c2_170, %c0_171, %c0_172] : memref<9x16x64xbf16, #tpu.memory_space<vmem>>, vector<1x16x64xbf16>
    %204 = vector.shape_cast %203 : vector<1x16x64xbf16> to vector<16x64xbf16>
    %205 = arith.truncf %185 : vector<64x64xf32> to vector<64x64xbf16>
    %cst_173 = arith.constant dense<0.000000e+00> : vector<16x64xf32>
    %206 = tpu.matmul %204, %205, %cst_173 {dimension_numbers = #tpu.dot_dimension_numbers<[1], [0], [0], [1], [0, 0, 1, 1], [], []>} : vector<16x64xbf16>, vector<64x64xbf16>, vector<16x64xf32> -> vector<16x64xf32>
    %c2_174 = arith.constant 2 : index
    %c0_175 = arith.constant 0 : index
    %c0_176 = arith.constant 0 : index
    %207 = vector.load %arg14[%c2_174, %c0_175, %c0_176] : memref<9x64x128xbf16, #tpu.memory_space<vmem>>, vector<1x64x128xbf16>
    %208 = vector.shape_cast %207 : vector<1x64x128xbf16> to vector<64x128xbf16>
    %209 = arith.truncf %206 : vector<16x64xf32> to vector<16x64xbf16>
    %cst_177 = arith.constant dense<0.000000e+00> : vector<16x128xf32>
    %210 = tpu.matmul %209, %208, %cst_177 {dimension_numbers = #tpu.dot_dimension_numbers<[1], [0], [0], [1], [0, 0, 1, 1], [], []>} : vector<16x64xbf16>, vector<64x128xbf16>, vector<16x128xf32> -> vector<16x128xf32>
    %211 = arith.addf %202, %210 : vector<16x128xf32>
    %c3_178 = arith.constant 3 : index
    %c0_179 = arith.constant 0 : index
    %c0_180 = arith.constant 0 : index
    %212 = vector.load %arg4[%c3_178, %c0_179, %c0_180] : memref<9x16x64xbf16, #tpu.memory_space<vmem>>, vector<1x16x64xbf16>
    %213 = vector.shape_cast %212 : vector<1x16x64xbf16> to vector<16x64xbf16>
    %214 = arith.truncf %185 : vector<64x64xf32> to vector<64x64xbf16>
    %cst_181 = arith.constant dense<0.000000e+00> : vector<16x64xf32>
    %215 = tpu.matmul %213, %214, %cst_181 {dimension_numbers = #tpu.dot_dimension_numbers<[1], [0], [0], [1], [0, 0, 1, 1], [], []>} : vector<16x64xbf16>, vector<64x64xbf16>, vector<16x64xf32> -> vector<16x64xf32>
    %c3_182 = arith.constant 3 : index
    %c0_183 = arith.constant 0 : index
    %c0_184 = arith.constant 0 : index
    %216 = vector.load %arg14[%c3_182, %c0_183, %c0_184] : memref<9x64x128xbf16, #tpu.memory_space<vmem>>, vector<1x64x128xbf16>
    %217 = vector.shape_cast %216 : vector<1x64x128xbf16> to vector<64x128xbf16>
    %218 = arith.truncf %215 : vector<16x64xf32> to vector<16x64xbf16>
    %cst_185 = arith.constant dense<0.000000e+00> : vector<16x128xf32>
    %219 = tpu.matmul %218, %217, %cst_185 {dimension_numbers = #tpu.dot_dimension_numbers<[1], [0], [0], [1], [0, 0, 1, 1], [], []>} : vector<16x64xbf16>, vector<64x128xbf16>, vector<16x128xf32> -> vector<16x128xf32>
    %220 = arith.addf %211, %219 : vector<16x128xf32>
    %c4_186 = arith.constant 4 : index
    %c0_187 = arith.constant 0 : index
    %c0_188 = arith.constant 0 : index
    %221 = vector.load %arg4[%c4_186, %c0_187, %c0_188] : memref<9x16x64xbf16, #tpu.memory_space<vmem>>, vector<1x16x64xbf16>
    %222 = vector.shape_cast %221 : vector<1x16x64xbf16> to vector<16x64xbf16>
    %223 = arith.truncf %185 : vector<64x64xf32> to vector<64x64xbf16>
    %cst_189 = arith.constant dense<0.000000e+00> : vector<16x64xf32>
    %224 = tpu.matmul %222, %223, %cst_189 {dimension_numbers = #tpu.dot_dimension_numbers<[1], [0], [0], [1], [0, 0, 1, 1], [], []>} : vector<16x64xbf16>, vector<64x64xbf16>, vector<16x64xf32> -> vector<16x64xf32>
    %c4_190 = arith.constant 4 : index
    %c0_191 = arith.constant 0 : index
    %c0_192 = arith.constant 0 : index
    %225 = vector.load %arg14[%c4_190, %c0_191, %c0_192] : memref<9x64x128xbf16, #tpu.memory_space<vmem>>, vector<1x64x128xbf16>
    %226 = vector.shape_cast %225 : vector<1x64x128xbf16> to vector<64x128xbf16>
    %227 = arith.truncf %224 : vector<16x64xf32> to vector<16x64xbf16>
    %cst_193 = arith.constant dense<0.000000e+00> : vector<16x128xf32>
    %228 = tpu.matmul %227, %226, %cst_193 {dimension_numbers = #tpu.dot_dimension_numbers<[1], [0], [0], [1], [0, 0, 1, 1], [], []>} : vector<16x64xbf16>, vector<64x128xbf16>, vector<16x128xf32> -> vector<16x128xf32>
    %229 = arith.addf %220, %228 : vector<16x128xf32>
    %c5_194 = arith.constant 5 : index
    %c0_195 = arith.constant 0 : index
    %c0_196 = arith.constant 0 : index
    %230 = vector.load %arg4[%c5_194, %c0_195, %c0_196] : memref<9x16x64xbf16, #tpu.memory_space<vmem>>, vector<1x16x64xbf16>
    %231 = vector.shape_cast %230 : vector<1x16x64xbf16> to vector<16x64xbf16>
    %232 = arith.truncf %185 : vector<64x64xf32> to vector<64x64xbf16>
    %cst_197 = arith.constant dense<0.000000e+00> : vector<16x64xf32>
    %233 = tpu.matmul %231, %232, %cst_197 {dimension_numbers = #tpu.dot_dimension_numbers<[1], [0], [0], [1], [0, 0, 1, 1], [], []>} : vector<16x64xbf16>, vector<64x64xbf16>, vector<16x64xf32> -> vector<16x64xf32>
    %c5_198 = arith.constant 5 : index
    %c0_199 = arith.constant 0 : index
    %c0_200 = arith.constant 0 : index
    %234 = vector.load %arg14[%c5_198, %c0_199, %c0_200] : memref<9x64x128xbf16, #tpu.memory_space<vmem>>, vector<1x64x128xbf16>
    %235 = vector.shape_cast %234 : vector<1x64x128xbf16> to vector<64x128xbf16>
    %236 = arith.truncf %233 : vector<16x64xf32> to vector<16x64xbf16>
    %cst_201 = arith.constant dense<0.000000e+00> : vector<16x128xf32>
    %237 = tpu.matmul %236, %235, %cst_201 {dimension_numbers = #tpu.dot_dimension_numbers<[1], [0], [0], [1], [0, 0, 1, 1], [], []>} : vector<16x64xbf16>, vector<64x128xbf16>, vector<16x128xf32> -> vector<16x128xf32>
    %238 = arith.addf %229, %237 : vector<16x128xf32>
    %c6_202 = arith.constant 6 : index
    %c0_203 = arith.constant 0 : index
    %c0_204 = arith.constant 0 : index
    %239 = vector.load %arg4[%c6_202, %c0_203, %c0_204] : memref<9x16x64xbf16, #tpu.memory_space<vmem>>, vector<1x16x64xbf16>
    %240 = vector.shape_cast %239 : vector<1x16x64xbf16> to vector<16x64xbf16>
    %241 = arith.truncf %185 : vector<64x64xf32> to vector<64x64xbf16>
    %cst_205 = arith.constant dense<0.000000e+00> : vector<16x64xf32>
    %242 = tpu.matmul %240, %241, %cst_205 {dimension_numbers = #tpu.dot_dimension_numbers<[1], [0], [0], [1], [0, 0, 1, 1], [], []>} : vector<16x64xbf16>, vector<64x64xbf16>, vector<16x64xf32> -> vector<16x64xf32>
    %c6_206 = arith.constant 6 : index
    %c0_207 = arith.constant 0 : index
    %c0_208 = arith.constant 0 : index
    %243 = vector.load %arg14[%c6_206, %c0_207, %c0_208] : memref<9x64x128xbf16, #tpu.memory_space<vmem>>, vector<1x64x128xbf16>
    %244 = vector.shape_cast %243 : vector<1x64x128xbf16> to vector<64x128xbf16>
    %245 = arith.truncf %242 : vector<16x64xf32> to vector<16x64xbf16>
    %cst_209 = arith.constant dense<0.000000e+00> : vector<16x128xf32>
    %246 = tpu.matmul %245, %244, %cst_209 {dimension_numbers = #tpu.dot_dimension_numbers<[1], [0], [0], [1], [0, 0, 1, 1], [], []>} : vector<16x64xbf16>, vector<64x128xbf16>, vector<16x128xf32> -> vector<16x128xf32>
    %247 = arith.addf %238, %246 : vector<16x128xf32>
    %c7_210 = arith.constant 7 : index
    %c0_211 = arith.constant 0 : index
    %c0_212 = arith.constant 0 : index
    %248 = vector.load %arg4[%c7_210, %c0_211, %c0_212] : memref<9x16x64xbf16, #tpu.memory_space<vmem>>, vector<1x16x64xbf16>
    %249 = vector.shape_cast %248 : vector<1x16x64xbf16> to vector<16x64xbf16>
    %250 = arith.truncf %185 : vector<64x64xf32> to vector<64x64xbf16>
    %cst_213 = arith.constant dense<0.000000e+00> : vector<16x64xf32>
    %251 = tpu.matmul %249, %250, %cst_213 {dimension_numbers = #tpu.dot_dimension_numbers<[1], [0], [0], [1], [0, 0, 1, 1], [], []>} : vector<16x64xbf16>, vector<64x64xbf16>, vector<16x64xf32> -> vector<16x64xf32>
    %c7_214 = arith.constant 7 : index
    %c0_215 = arith.constant 0 : index
    %c0_216 = arith.constant 0 : index
    %252 = vector.load %arg14[%c7_214, %c0_215, %c0_216] : memref<9x64x128xbf16, #tpu.memory_space<vmem>>, vector<1x64x128xbf16>
    %253 = vector.shape_cast %252 : vector<1x64x128xbf16> to vector<64x128xbf16>
    %254 = arith.truncf %251 : vector<16x64xf32> to vector<16x64xbf16>
    %cst_217 = arith.constant dense<0.000000e+00> : vector<16x128xf32>
    %255 = tpu.matmul %254, %253, %cst_217 {dimension_numbers = #tpu.dot_dimension_numbers<[1], [0], [0], [1], [0, 0, 1, 1], [], []>} : vector<16x64xbf16>, vector<64x128xbf16>, vector<16x128xf32> -> vector<16x128xf32>
    %256 = arith.addf %247, %255 : vector<16x128xf32>
    %c8_218 = arith.constant 8 : index
    %c0_219 = arith.constant 0 : index
    %c0_220 = arith.constant 0 : index
    %257 = vector.load %arg4[%c8_218, %c0_219, %c0_220] : memref<9x16x64xbf16, #tpu.memory_space<vmem>>, vector<1x16x64xbf16>
    %258 = vector.shape_cast %257 : vector<1x16x64xbf16> to vector<16x64xbf16>
    %259 = arith.truncf %185 : vector<64x64xf32> to vector<64x64xbf16>
    %cst_221 = arith.constant dense<0.000000e+00> : vector<16x64xf32>
    %260 = tpu.matmul %258, %259, %cst_221 {dimension_numbers = #tpu.dot_dimension_numbers<[1], [0], [0], [1], [0, 0, 1, 1], [], []>} : vector<16x64xbf16>, vector<64x64xbf16>, vector<16x64xf32> -> vector<16x64xf32>
    %c8_222 = arith.constant 8 : index
    %c0_223 = arith.constant 0 : index
    %c0_224 = arith.constant 0 : index
    %261 = vector.load %arg14[%c8_222, %c0_223, %c0_224] : memref<9x64x128xbf16, #tpu.memory_space<vmem>>, vector<1x64x128xbf16>
    %262 = vector.shape_cast %261 : vector<1x64x128xbf16> to vector<64x128xbf16>
    %263 = arith.truncf %260 : vector<16x64xf32> to vector<16x64xbf16>
    %cst_225 = arith.constant dense<0.000000e+00> : vector<16x128xf32>
    %264 = tpu.matmul %263, %262, %cst_225 {dimension_numbers = #tpu.dot_dimension_numbers<[1], [0], [0], [1], [0, 0, 1, 1], [], []>} : vector<16x64xbf16>, vector<64x128xbf16>, vector<16x128xf32> -> vector<16x128xf32>
    %265 = arith.addf %256, %264 : vector<16x128xf32>
    %c0_226 = arith.constant 0 : index
    %c0_227 = arith.constant 0 : index
    %266 = vector.load %arg15[%c0_226, %c0_227] : memref<1x128xf32, #tpu.memory_space<vmem>>, vector<1x128xf32>
    %267 = vector.broadcast %266 : vector<1x128xf32> to vector<16x128xf32>
    %268 = arith.addf %265, %267 : vector<16x128xf32>
    %cst_228 = arith.constant 0.000000e+00 : f32
    %269 = vector.broadcast %cst_228 : f32 to vector<16x128xf32>
    %270 = arith.maximumf %268, %269 : vector<16x128xf32>
    %c0_229 = arith.constant 0 : index
    %c0_230 = arith.constant 0 : index
    %271 = vector.load %arg18[%c0_229, %c0_230] : memref<64x128xbf16, #tpu.memory_space<vmem>>, vector<64x128xbf16>
    %272 = arith.truncf %224 : vector<16x64xf32> to vector<16x64xbf16>
    %cst_231 = arith.constant dense<0.000000e+00> : vector<16x128xf32>
    %273 = tpu.matmul %272, %271, %cst_231 {dimension_numbers = #tpu.dot_dimension_numbers<[1], [0], [0], [1], [0, 0, 1, 1], [], []>} : vector<16x64xbf16>, vector<64x128xbf16>, vector<16x128xf32> -> vector<16x128xf32>
    %c0_232 = arith.constant 0 : index
    %c0_233 = arith.constant 0 : index
    %274 = vector.load %arg19[%c0_232, %c0_233] : memref<1x128xf32, #tpu.memory_space<vmem>>, vector<1x128xf32>
    %275 = vector.broadcast %274 : vector<1x128xf32> to vector<16x128xf32>
    %276 = arith.addf %273, %275 : vector<16x128xf32>
    %c0_234 = arith.constant 0 : index
    %c0_235 = arith.constant 0 : index
    %c0_236 = arith.constant 0 : index
    %277 = vector.load %arg5[%c0_234, %c0_235, %c0_236] : memref<9x16x16xbf16, #tpu.memory_space<vmem>>, vector<1x16x16xbf16>
    %278 = vector.shape_cast %277 : vector<1x16x16xbf16> to vector<16x16xbf16>
    %279 = arith.truncf %270 : vector<16x128xf32> to vector<16x128xbf16>
    %cst_237 = arith.constant dense<0.000000e+00> : vector<16x128xf32>
    %280 = tpu.matmul %278, %279, %cst_237 {dimension_numbers = #tpu.dot_dimension_numbers<[1], [0], [0], [1], [0, 0, 1, 1], [], []>} : vector<16x16xbf16>, vector<16x128xbf16>, vector<16x128xf32> -> vector<16x128xf32>
    %c0_238 = arith.constant 0 : index
    %c0_239 = arith.constant 0 : index
    %c0_240 = arith.constant 0 : index
    %281 = vector.load %arg16[%c0_238, %c0_239, %c0_240] : memref<9x128x128xbf16, #tpu.memory_space<vmem>>, vector<1x128x128xbf16>
    %282 = vector.shape_cast %281 : vector<1x128x128xbf16> to vector<128x128xbf16>
    %283 = arith.truncf %280 : vector<16x128xf32> to vector<16x128xbf16>
    %cst_241 = arith.constant dense<0.000000e+00> : vector<16x128xf32>
    %284 = tpu.matmul %283, %282, %cst_241 {dimension_numbers = #tpu.dot_dimension_numbers<[1], [0], [0], [1], [0, 0, 1, 1], [], []>} : vector<16x128xbf16>, vector<128x128xbf16>, vector<16x128xf32> -> vector<16x128xf32>
    %c1_242 = arith.constant 1 : index
    %c0_243 = arith.constant 0 : index
    %c0_244 = arith.constant 0 : index
    %285 = vector.load %arg5[%c1_242, %c0_243, %c0_244] : memref<9x16x16xbf16, #tpu.memory_space<vmem>>, vector<1x16x16xbf16>
    %286 = vector.shape_cast %285 : vector<1x16x16xbf16> to vector<16x16xbf16>
    %287 = arith.truncf %270 : vector<16x128xf32> to vector<16x128xbf16>
    %cst_245 = arith.constant dense<0.000000e+00> : vector<16x128xf32>
    %288 = tpu.matmul %286, %287, %cst_245 {dimension_numbers = #tpu.dot_dimension_numbers<[1], [0], [0], [1], [0, 0, 1, 1], [], []>} : vector<16x16xbf16>, vector<16x128xbf16>, vector<16x128xf32> -> vector<16x128xf32>
    %c1_246 = arith.constant 1 : index
    %c0_247 = arith.constant 0 : index
    %c0_248 = arith.constant 0 : index
    %289 = vector.load %arg16[%c1_246, %c0_247, %c0_248] : memref<9x128x128xbf16, #tpu.memory_space<vmem>>, vector<1x128x128xbf16>
    %290 = vector.shape_cast %289 : vector<1x128x128xbf16> to vector<128x128xbf16>
    %291 = arith.truncf %288 : vector<16x128xf32> to vector<16x128xbf16>
    %cst_249 = arith.constant dense<0.000000e+00> : vector<16x128xf32>
    %292 = tpu.matmul %291, %290, %cst_249 {dimension_numbers = #tpu.dot_dimension_numbers<[1], [0], [0], [1], [0, 0, 1, 1], [], []>} : vector<16x128xbf16>, vector<128x128xbf16>, vector<16x128xf32> -> vector<16x128xf32>
    %293 = arith.addf %284, %292 : vector<16x128xf32>
    %c2_250 = arith.constant 2 : index
    %c0_251 = arith.constant 0 : index
    %c0_252 = arith.constant 0 : index
    %294 = vector.load %arg5[%c2_250, %c0_251, %c0_252] : memref<9x16x16xbf16, #tpu.memory_space<vmem>>, vector<1x16x16xbf16>
    %295 = vector.shape_cast %294 : vector<1x16x16xbf16> to vector<16x16xbf16>
    %296 = arith.truncf %270 : vector<16x128xf32> to vector<16x128xbf16>
    %cst_253 = arith.constant dense<0.000000e+00> : vector<16x128xf32>
    %297 = tpu.matmul %295, %296, %cst_253 {dimension_numbers = #tpu.dot_dimension_numbers<[1], [0], [0], [1], [0, 0, 1, 1], [], []>} : vector<16x16xbf16>, vector<16x128xbf16>, vector<16x128xf32> -> vector<16x128xf32>
    %c2_254 = arith.constant 2 : index
    %c0_255 = arith.constant 0 : index
    %c0_256 = arith.constant 0 : index
    %298 = vector.load %arg16[%c2_254, %c0_255, %c0_256] : memref<9x128x128xbf16, #tpu.memory_space<vmem>>, vector<1x128x128xbf16>
    %299 = vector.shape_cast %298 : vector<1x128x128xbf16> to vector<128x128xbf16>
    %300 = arith.truncf %297 : vector<16x128xf32> to vector<16x128xbf16>
    %cst_257 = arith.constant dense<0.000000e+00> : vector<16x128xf32>
    %301 = tpu.matmul %300, %299, %cst_257 {dimension_numbers = #tpu.dot_dimension_numbers<[1], [0], [0], [1], [0, 0, 1, 1], [], []>} : vector<16x128xbf16>, vector<128x128xbf16>, vector<16x128xf32> -> vector<16x128xf32>
    %302 = arith.addf %293, %301 : vector<16x128xf32>
    %c3_258 = arith.constant 3 : index
    %c0_259 = arith.constant 0 : index
    %c0_260 = arith.constant 0 : index
    %303 = vector.load %arg5[%c3_258, %c0_259, %c0_260] : memref<9x16x16xbf16, #tpu.memory_space<vmem>>, vector<1x16x16xbf16>
    %304 = vector.shape_cast %303 : vector<1x16x16xbf16> to vector<16x16xbf16>
    %305 = arith.truncf %270 : vector<16x128xf32> to vector<16x128xbf16>
    %cst_261 = arith.constant dense<0.000000e+00> : vector<16x128xf32>
    %306 = tpu.matmul %304, %305, %cst_261 {dimension_numbers = #tpu.dot_dimension_numbers<[1], [0], [0], [1], [0, 0, 1, 1], [], []>} : vector<16x16xbf16>, vector<16x128xbf16>, vector<16x128xf32> -> vector<16x128xf32>
    %c3_262 = arith.constant 3 : index
    %c0_263 = arith.constant 0 : index
    %c0_264 = arith.constant 0 : index
    %307 = vector.load %arg16[%c3_262, %c0_263, %c0_264] : memref<9x128x128xbf16, #tpu.memory_space<vmem>>, vector<1x128x128xbf16>
    %308 = vector.shape_cast %307 : vector<1x128x128xbf16> to vector<128x128xbf16>
    %309 = arith.truncf %306 : vector<16x128xf32> to vector<16x128xbf16>
    %cst_265 = arith.constant dense<0.000000e+00> : vector<16x128xf32>
    %310 = tpu.matmul %309, %308, %cst_265 {dimension_numbers = #tpu.dot_dimension_numbers<[1], [0], [0], [1], [0, 0, 1, 1], [], []>} : vector<16x128xbf16>, vector<128x128xbf16>, vector<16x128xf32> -> vector<16x128xf32>
    %311 = arith.addf %302, %310 : vector<16x128xf32>
    %c4_266 = arith.constant 4 : index
    %c0_267 = arith.constant 0 : index
    %c0_268 = arith.constant 0 : index
    %312 = vector.load %arg5[%c4_266, %c0_267, %c0_268] : memref<9x16x16xbf16, #tpu.memory_space<vmem>>, vector<1x16x16xbf16>
    %313 = vector.shape_cast %312 : vector<1x16x16xbf16> to vector<16x16xbf16>
    %314 = arith.truncf %270 : vector<16x128xf32> to vector<16x128xbf16>
    %cst_269 = arith.constant dense<0.000000e+00> : vector<16x128xf32>
    %315 = tpu.matmul %313, %314, %cst_269 {dimension_numbers = #tpu.dot_dimension_numbers<[1], [0], [0], [1], [0, 0, 1, 1], [], []>} : vector<16x16xbf16>, vector<16x128xbf16>, vector<16x128xf32> -> vector<16x128xf32>
    %c4_270 = arith.constant 4 : index
    %c0_271 = arith.constant 0 : index
    %c0_272 = arith.constant 0 : index
    %316 = vector.load %arg16[%c4_270, %c0_271, %c0_272] : memref<9x128x128xbf16, #tpu.memory_space<vmem>>, vector<1x128x128xbf16>
    %317 = vector.shape_cast %316 : vector<1x128x128xbf16> to vector<128x128xbf16>
    %318 = arith.truncf %315 : vector<16x128xf32> to vector<16x128xbf16>
    %cst_273 = arith.constant dense<0.000000e+00> : vector<16x128xf32>
    %319 = tpu.matmul %318, %317, %cst_273 {dimension_numbers = #tpu.dot_dimension_numbers<[1], [0], [0], [1], [0, 0, 1, 1], [], []>} : vector<16x128xbf16>, vector<128x128xbf16>, vector<16x128xf32> -> vector<16x128xf32>
    %320 = arith.addf %311, %319 : vector<16x128xf32>
    %c5_274 = arith.constant 5 : index
    %c0_275 = arith.constant 0 : index
    %c0_276 = arith.constant 0 : index
    %321 = vector.load %arg5[%c5_274, %c0_275, %c0_276] : memref<9x16x16xbf16, #tpu.memory_space<vmem>>, vector<1x16x16xbf16>
    %322 = vector.shape_cast %321 : vector<1x16x16xbf16> to vector<16x16xbf16>
    %323 = arith.truncf %270 : vector<16x128xf32> to vector<16x128xbf16>
    %cst_277 = arith.constant dense<0.000000e+00> : vector<16x128xf32>
    %324 = tpu.matmul %322, %323, %cst_277 {dimension_numbers = #tpu.dot_dimension_numbers<[1], [0], [0], [1], [0, 0, 1, 1], [], []>} : vector<16x16xbf16>, vector<16x128xbf16>, vector<16x128xf32> -> vector<16x128xf32>
    %c5_278 = arith.constant 5 : index
    %c0_279 = arith.constant 0 : index
    %c0_280 = arith.constant 0 : index
    %325 = vector.load %arg16[%c5_278, %c0_279, %c0_280] : memref<9x128x128xbf16, #tpu.memory_space<vmem>>, vector<1x128x128xbf16>
    %326 = vector.shape_cast %325 : vector<1x128x128xbf16> to vector<128x128xbf16>
    %327 = arith.truncf %324 : vector<16x128xf32> to vector<16x128xbf16>
    %cst_281 = arith.constant dense<0.000000e+00> : vector<16x128xf32>
    %328 = tpu.matmul %327, %326, %cst_281 {dimension_numbers = #tpu.dot_dimension_numbers<[1], [0], [0], [1], [0, 0, 1, 1], [], []>} : vector<16x128xbf16>, vector<128x128xbf16>, vector<16x128xf32> -> vector<16x128xf32>
    %329 = arith.addf %320, %328 : vector<16x128xf32>
    %c6_282 = arith.constant 6 : index
    %c0_283 = arith.constant 0 : index
    %c0_284 = arith.constant 0 : index
    %330 = vector.load %arg5[%c6_282, %c0_283, %c0_284] : memref<9x16x16xbf16, #tpu.memory_space<vmem>>, vector<1x16x16xbf16>
    %331 = vector.shape_cast %330 : vector<1x16x16xbf16> to vector<16x16xbf16>
    %332 = arith.truncf %270 : vector<16x128xf32> to vector<16x128xbf16>
    %cst_285 = arith.constant dense<0.000000e+00> : vector<16x128xf32>
    %333 = tpu.matmul %331, %332, %cst_285 {dimension_numbers = #tpu.dot_dimension_numbers<[1], [0], [0], [1], [0, 0, 1, 1], [], []>} : vector<16x16xbf16>, vector<16x128xbf16>, vector<16x128xf32> -> vector<16x128xf32>
    %c6_286 = arith.constant 6 : index
    %c0_287 = arith.constant 0 : index
    %c0_288 = arith.constant 0 : index
    %334 = vector.load %arg16[%c6_286, %c0_287, %c0_288] : memref<9x128x128xbf16, #tpu.memory_space<vmem>>, vector<1x128x128xbf16>
    %335 = vector.shape_cast %334 : vector<1x128x128xbf16> to vector<128x128xbf16>
    %336 = arith.truncf %333 : vector<16x128xf32> to vector<16x128xbf16>
    %cst_289 = arith.constant dense<0.000000e+00> : vector<16x128xf32>
    %337 = tpu.matmul %336, %335, %cst_289 {dimension_numbers = #tpu.dot_dimension_numbers<[1], [0], [0], [1], [0, 0, 1, 1], [], []>} : vector<16x128xbf16>, vector<128x128xbf16>, vector<16x128xf32> -> vector<16x128xf32>
    %338 = arith.addf %329, %337 : vector<16x128xf32>
    %c7_290 = arith.constant 7 : index
    %c0_291 = arith.constant 0 : index
    %c0_292 = arith.constant 0 : index
    %339 = vector.load %arg5[%c7_290, %c0_291, %c0_292] : memref<9x16x16xbf16, #tpu.memory_space<vmem>>, vector<1x16x16xbf16>
    %340 = vector.shape_cast %339 : vector<1x16x16xbf16> to vector<16x16xbf16>
    %341 = arith.truncf %270 : vector<16x128xf32> to vector<16x128xbf16>
    %cst_293 = arith.constant dense<0.000000e+00> : vector<16x128xf32>
    %342 = tpu.matmul %340, %341, %cst_293 {dimension_numbers = #tpu.dot_dimension_numbers<[1], [0], [0], [1], [0, 0, 1, 1], [], []>} : vector<16x16xbf16>, vector<16x128xbf16>, vector<16x128xf32> -> vector<16x128xf32>
    %c7_294 = arith.constant 7 : index
    %c0_295 = arith.constant 0 : index
    %c0_296 = arith.constant 0 : index
    %343 = vector.load %arg16[%c7_294, %c0_295, %c0_296] : memref<9x128x128xbf16, #tpu.memory_space<vmem>>, vector<1x128x128xbf16>
    %344 = vector.shape_cast %343 : vector<1x128x128xbf16> to vector<128x128xbf16>
    %345 = arith.truncf %342 : vector<16x128xf32> to vector<16x128xbf16>
    %cst_297 = arith.constant dense<0.000000e+00> : vector<16x128xf32>
    %346 = tpu.matmul %345, %344, %cst_297 {dimension_numbers = #tpu.dot_dimension_numbers<[1], [0], [0], [1], [0, 0, 1, 1], [], []>} : vector<16x128xbf16>, vector<128x128xbf16>, vector<16x128xf32> -> vector<16x128xf32>
    %347 = arith.addf %338, %346 : vector<16x128xf32>
    %c8_298 = arith.constant 8 : index
    %c0_299 = arith.constant 0 : index
    %c0_300 = arith.constant 0 : index
    %348 = vector.load %arg5[%c8_298, %c0_299, %c0_300] : memref<9x16x16xbf16, #tpu.memory_space<vmem>>, vector<1x16x16xbf16>
    %349 = vector.shape_cast %348 : vector<1x16x16xbf16> to vector<16x16xbf16>
    %350 = arith.truncf %270 : vector<16x128xf32> to vector<16x128xbf16>
    %cst_301 = arith.constant dense<0.000000e+00> : vector<16x128xf32>
    %351 = tpu.matmul %349, %350, %cst_301 {dimension_numbers = #tpu.dot_dimension_numbers<[1], [0], [0], [1], [0, 0, 1, 1], [], []>} : vector<16x16xbf16>, vector<16x128xbf16>, vector<16x128xf32> -> vector<16x128xf32>
    %c8_302 = arith.constant 8 : index
    %c0_303 = arith.constant 0 : index
    %c0_304 = arith.constant 0 : index
    %352 = vector.load %arg16[%c8_302, %c0_303, %c0_304] : memref<9x128x128xbf16, #tpu.memory_space<vmem>>, vector<1x128x128xbf16>
    %353 = vector.shape_cast %352 : vector<1x128x128xbf16> to vector<128x128xbf16>
    %354 = arith.truncf %351 : vector<16x128xf32> to vector<16x128xbf16>
    %cst_305 = arith.constant dense<0.000000e+00> : vector<16x128xf32>
    %355 = tpu.matmul %354, %353, %cst_305 {dimension_numbers = #tpu.dot_dimension_numbers<[1], [0], [0], [1], [0, 0, 1, 1], [], []>} : vector<16x128xbf16>, vector<128x128xbf16>, vector<16x128xf32> -> vector<16x128xf32>
    %356 = arith.addf %347, %355 : vector<16x128xf32>
    %c0_306 = arith.constant 0 : index
    %c0_307 = arith.constant 0 : index
    %357 = vector.load %arg17[%c0_306, %c0_307] : memref<1x128xf32, #tpu.memory_space<vmem>>, vector<1x128xf32>
    %358 = vector.broadcast %357 : vector<1x128xf32> to vector<16x128xf32>
    %359 = arith.addf %356, %358 : vector<16x128xf32>
    %360 = arith.addf %359, %276 : vector<16x128xf32>
    %cst_308 = arith.constant 0.000000e+00 : f32
    %361 = vector.broadcast %cst_308 : f32 to vector<16x128xf32>
    %362 = arith.maximumf %360, %361 : vector<16x128xf32>
    %c0_309 = arith.constant 0 : index
    %c0_310 = arith.constant 0 : index
    %c0_311 = arith.constant 0 : index
    %363 = vector.load %arg20[%c0_309, %c0_310, %c0_311] : memref<3x128x64xbf16, #tpu.memory_space<vmem>>, vector<1x128x64xbf16>
    %364 = vector.shape_cast %363 : vector<1x128x64xbf16> to vector<128x64xbf16>
    %365 = arith.truncf %362 : vector<16x128xf32> to vector<16x128xbf16>
    %cst_312 = arith.constant dense<0.000000e+00> : vector<16x64xf32>
    %366 = tpu.matmul %365, %364, %cst_312 {dimension_numbers = #tpu.dot_dimension_numbers<[1], [0], [0], [1], [0, 0, 1, 1], [], []>} : vector<16x128xbf16>, vector<128x64xbf16>, vector<16x64xf32> -> vector<16x64xf32>
    %c0_313 = arith.constant 0 : index
    %c0_314 = arith.constant 0 : index
    %c0_315 = arith.constant 0 : index
    %367 = vector.load %arg21[%c0_313, %c0_314, %c0_315] : memref<3x1x64xf32, #tpu.memory_space<vmem>>, vector<1x1x64xf32>
    %368 = vector.shape_cast %367 : vector<1x1x64xf32> to vector<1x64xf32>
    %369 = vector.broadcast %368 : vector<1x64xf32> to vector<16x64xf32>
    %370 = arith.addf %366, %369 : vector<16x64xf32>
    %cst_316 = arith.constant 0.000000e+00 : f32
    %371 = vector.broadcast %cst_316 : f32 to vector<16x64xf32>
    %372 = arith.maximumf %370, %371 : vector<16x64xf32>
    %c1_317 = arith.constant 1 : index
    %c0_318 = arith.constant 0 : index
    %c0_319 = arith.constant 0 : index
    %373 = vector.load %arg20[%c1_317, %c0_318, %c0_319] : memref<3x128x64xbf16, #tpu.memory_space<vmem>>, vector<1x128x64xbf16>
    %374 = vector.shape_cast %373 : vector<1x128x64xbf16> to vector<128x64xbf16>
    %375 = arith.truncf %362 : vector<16x128xf32> to vector<16x128xbf16>
    %cst_320 = arith.constant dense<0.000000e+00> : vector<16x64xf32>
    %376 = tpu.matmul %375, %374, %cst_320 {dimension_numbers = #tpu.dot_dimension_numbers<[1], [0], [0], [1], [0, 0, 1, 1], [], []>} : vector<16x128xbf16>, vector<128x64xbf16>, vector<16x64xf32> -> vector<16x64xf32>
    %c1_321 = arith.constant 1 : index
    %c0_322 = arith.constant 0 : index
    %c0_323 = arith.constant 0 : index
    %377 = vector.load %arg21[%c1_321, %c0_322, %c0_323] : memref<3x1x64xf32, #tpu.memory_space<vmem>>, vector<1x1x64xf32>
    %378 = vector.shape_cast %377 : vector<1x1x64xf32> to vector<1x64xf32>
    %379 = vector.broadcast %378 : vector<1x64xf32> to vector<16x64xf32>
    %380 = arith.addf %376, %379 : vector<16x64xf32>
    %cst_324 = arith.constant 0.000000e+00 : f32
    %381 = vector.broadcast %cst_324 : f32 to vector<16x64xf32>
    %382 = arith.maximumf %380, %381 : vector<16x64xf32>
    %c2_325 = arith.constant 2 : index
    %c0_326 = arith.constant 0 : index
    %c0_327 = arith.constant 0 : index
    %383 = vector.load %arg20[%c2_325, %c0_326, %c0_327] : memref<3x128x64xbf16, #tpu.memory_space<vmem>>, vector<1x128x64xbf16>
    %384 = vector.shape_cast %383 : vector<1x128x64xbf16> to vector<128x64xbf16>
    %385 = arith.truncf %362 : vector<16x128xf32> to vector<16x128xbf16>
    %cst_328 = arith.constant dense<0.000000e+00> : vector<16x64xf32>
    %386 = tpu.matmul %385, %384, %cst_328 {dimension_numbers = #tpu.dot_dimension_numbers<[1], [0], [0], [1], [0, 0, 1, 1], [], []>} : vector<16x128xbf16>, vector<128x64xbf16>, vector<16x64xf32> -> vector<16x64xf32>
    %c2_329 = arith.constant 2 : index
    %c0_330 = arith.constant 0 : index
    %c0_331 = arith.constant 0 : index
    %387 = vector.load %arg21[%c2_329, %c0_330, %c0_331] : memref<3x1x64xf32, #tpu.memory_space<vmem>>, vector<1x1x64xf32>
    %388 = vector.shape_cast %387 : vector<1x1x64xf32> to vector<1x64xf32>
    %389 = vector.broadcast %388 : vector<1x64xf32> to vector<16x64xf32>
    %390 = arith.addf %386, %389 : vector<16x64xf32>
    %cst_332 = arith.constant 0.000000e+00 : f32
    %391 = vector.broadcast %cst_332 : f32 to vector<16x64xf32>
    %392 = arith.maximumf %390, %391 : vector<16x64xf32>
    %c0_333 = arith.constant 0 : index
    %c0_334 = arith.constant 0 : index
    %c0_335 = arith.constant 0 : index
    %393 = vector.load %arg5[%c0_333, %c0_334, %c0_335] : memref<9x16x16xbf16, #tpu.memory_space<vmem>>, vector<1x16x16xbf16>
    %394 = vector.shape_cast %393 : vector<1x16x16xbf16> to vector<16x16xbf16>
    %395 = arith.truncf %382 : vector<16x64xf32> to vector<16x64xbf16>
    %cst_336 = arith.constant dense<0.000000e+00> : vector<16x64xf32>
    %396 = tpu.matmul %394, %395, %cst_336 {dimension_numbers = #tpu.dot_dimension_numbers<[1], [0], [0], [1], [0, 0, 1, 1], [], []>} : vector<16x16xbf16>, vector<16x64xbf16>, vector<16x64xf32> -> vector<16x64xf32>
    %c0_337 = arith.constant 0 : index
    %c0_338 = arith.constant 0 : index
    %c0_339 = arith.constant 0 : index
    %397 = vector.load %arg22[%c0_337, %c0_338, %c0_339] : memref<9x64x64xbf16, #tpu.memory_space<vmem>>, vector<1x64x64xbf16>
    %398 = vector.shape_cast %397 : vector<1x64x64xbf16> to vector<64x64xbf16>
    %399 = arith.truncf %396 : vector<16x64xf32> to vector<16x64xbf16>
    %cst_340 = arith.constant dense<0.000000e+00> : vector<16x64xf32>
    %400 = tpu.matmul %399, %398, %cst_340 {dimension_numbers = #tpu.dot_dimension_numbers<[1], [0], [0], [1], [0, 0, 1, 1], [], []>} : vector<16x64xbf16>, vector<64x64xbf16>, vector<16x64xf32> -> vector<16x64xf32>
    %c1_341 = arith.constant 1 : index
    %c0_342 = arith.constant 0 : index
    %c0_343 = arith.constant 0 : index
    %401 = vector.load %arg5[%c1_341, %c0_342, %c0_343] : memref<9x16x16xbf16, #tpu.memory_space<vmem>>, vector<1x16x16xbf16>
    %402 = vector.shape_cast %401 : vector<1x16x16xbf16> to vector<16x16xbf16>
    %403 = arith.truncf %382 : vector<16x64xf32> to vector<16x64xbf16>
    %cst_344 = arith.constant dense<0.000000e+00> : vector<16x64xf32>
    %404 = tpu.matmul %402, %403, %cst_344 {dimension_numbers = #tpu.dot_dimension_numbers<[1], [0], [0], [1], [0, 0, 1, 1], [], []>} : vector<16x16xbf16>, vector<16x64xbf16>, vector<16x64xf32> -> vector<16x64xf32>
    %c1_345 = arith.constant 1 : index
    %c0_346 = arith.constant 0 : index
    %c0_347 = arith.constant 0 : index
    %405 = vector.load %arg22[%c1_345, %c0_346, %c0_347] : memref<9x64x64xbf16, #tpu.memory_space<vmem>>, vector<1x64x64xbf16>
    %406 = vector.shape_cast %405 : vector<1x64x64xbf16> to vector<64x64xbf16>
    %407 = arith.truncf %404 : vector<16x64xf32> to vector<16x64xbf16>
    %cst_348 = arith.constant dense<0.000000e+00> : vector<16x64xf32>
    %408 = tpu.matmul %407, %406, %cst_348 {dimension_numbers = #tpu.dot_dimension_numbers<[1], [0], [0], [1], [0, 0, 1, 1], [], []>} : vector<16x64xbf16>, vector<64x64xbf16>, vector<16x64xf32> -> vector<16x64xf32>
    %409 = arith.addf %400, %408 : vector<16x64xf32>
    %c2_349 = arith.constant 2 : index
    %c0_350 = arith.constant 0 : index
    %c0_351 = arith.constant 0 : index
    %410 = vector.load %arg5[%c2_349, %c0_350, %c0_351] : memref<9x16x16xbf16, #tpu.memory_space<vmem>>, vector<1x16x16xbf16>
    %411 = vector.shape_cast %410 : vector<1x16x16xbf16> to vector<16x16xbf16>
    %412 = arith.truncf %382 : vector<16x64xf32> to vector<16x64xbf16>
    %cst_352 = arith.constant dense<0.000000e+00> : vector<16x64xf32>
    %413 = tpu.matmul %411, %412, %cst_352 {dimension_numbers = #tpu.dot_dimension_numbers<[1], [0], [0], [1], [0, 0, 1, 1], [], []>} : vector<16x16xbf16>, vector<16x64xbf16>, vector<16x64xf32> -> vector<16x64xf32>
    %c2_353 = arith.constant 2 : index
    %c0_354 = arith.constant 0 : index
    %c0_355 = arith.constant 0 : index
    %414 = vector.load %arg22[%c2_353, %c0_354, %c0_355] : memref<9x64x64xbf16, #tpu.memory_space<vmem>>, vector<1x64x64xbf16>
    %415 = vector.shape_cast %414 : vector<1x64x64xbf16> to vector<64x64xbf16>
    %416 = arith.truncf %413 : vector<16x64xf32> to vector<16x64xbf16>
    %cst_356 = arith.constant dense<0.000000e+00> : vector<16x64xf32>
    %417 = tpu.matmul %416, %415, %cst_356 {dimension_numbers = #tpu.dot_dimension_numbers<[1], [0], [0], [1], [0, 0, 1, 1], [], []>} : vector<16x64xbf16>, vector<64x64xbf16>, vector<16x64xf32> -> vector<16x64xf32>
    %418 = arith.addf %409, %417 : vector<16x64xf32>
    %c3_357 = arith.constant 3 : index
    %c0_358 = arith.constant 0 : index
    %c0_359 = arith.constant 0 : index
    %419 = vector.load %arg5[%c3_357, %c0_358, %c0_359] : memref<9x16x16xbf16, #tpu.memory_space<vmem>>, vector<1x16x16xbf16>
    %420 = vector.shape_cast %419 : vector<1x16x16xbf16> to vector<16x16xbf16>
    %421 = arith.truncf %382 : vector<16x64xf32> to vector<16x64xbf16>
    %cst_360 = arith.constant dense<0.000000e+00> : vector<16x64xf32>
    %422 = tpu.matmul %420, %421, %cst_360 {dimension_numbers = #tpu.dot_dimension_numbers<[1], [0], [0], [1], [0, 0, 1, 1], [], []>} : vector<16x16xbf16>, vector<16x64xbf16>, vector<16x64xf32> -> vector<16x64xf32>
    %c3_361 = arith.constant 3 : index
    %c0_362 = arith.constant 0 : index
    %c0_363 = arith.constant 0 : index
    %423 = vector.load %arg22[%c3_361, %c0_362, %c0_363] : memref<9x64x64xbf16, #tpu.memory_space<vmem>>, vector<1x64x64xbf16>
    %424 = vector.shape_cast %423 : vector<1x64x64xbf16> to vector<64x64xbf16>
    %425 = arith.truncf %422 : vector<16x64xf32> to vector<16x64xbf16>
    %cst_364 = arith.constant dense<0.000000e+00> : vector<16x64xf32>
    %426 = tpu.matmul %425, %424, %cst_364 {dimension_numbers = #tpu.dot_dimension_numbers<[1], [0], [0], [1], [0, 0, 1, 1], [], []>} : vector<16x64xbf16>, vector<64x64xbf16>, vector<16x64xf32> -> vector<16x64xf32>
    %427 = arith.addf %418, %426 : vector<16x64xf32>
    %c4_365 = arith.constant 4 : index
    %c0_366 = arith.constant 0 : index
    %c0_367 = arith.constant 0 : index
    %428 = vector.load %arg5[%c4_365, %c0_366, %c0_367] : memref<9x16x16xbf16, #tpu.memory_space<vmem>>, vector<1x16x16xbf16>
    %429 = vector.shape_cast %428 : vector<1x16x16xbf16> to vector<16x16xbf16>
    %430 = arith.truncf %382 : vector<16x64xf32> to vector<16x64xbf16>
    %cst_368 = arith.constant dense<0.000000e+00> : vector<16x64xf32>
    %431 = tpu.matmul %429, %430, %cst_368 {dimension_numbers = #tpu.dot_dimension_numbers<[1], [0], [0], [1], [0, 0, 1, 1], [], []>} : vector<16x16xbf16>, vector<16x64xbf16>, vector<16x64xf32> -> vector<16x64xf32>
    %c4_369 = arith.constant 4 : index
    %c0_370 = arith.constant 0 : index
    %c0_371 = arith.constant 0 : index
    %432 = vector.load %arg22[%c4_369, %c0_370, %c0_371] : memref<9x64x64xbf16, #tpu.memory_space<vmem>>, vector<1x64x64xbf16>
    %433 = vector.shape_cast %432 : vector<1x64x64xbf16> to vector<64x64xbf16>
    %434 = arith.truncf %431 : vector<16x64xf32> to vector<16x64xbf16>
    %cst_372 = arith.constant dense<0.000000e+00> : vector<16x64xf32>
    %435 = tpu.matmul %434, %433, %cst_372 {dimension_numbers = #tpu.dot_dimension_numbers<[1], [0], [0], [1], [0, 0, 1, 1], [], []>} : vector<16x64xbf16>, vector<64x64xbf16>, vector<16x64xf32> -> vector<16x64xf32>
    %436 = arith.addf %427, %435 : vector<16x64xf32>
    %c5_373 = arith.constant 5 : index
    %c0_374 = arith.constant 0 : index
    %c0_375 = arith.constant 0 : index
    %437 = vector.load %arg5[%c5_373, %c0_374, %c0_375] : memref<9x16x16xbf16, #tpu.memory_space<vmem>>, vector<1x16x16xbf16>
    %438 = vector.shape_cast %437 : vector<1x16x16xbf16> to vector<16x16xbf16>
    %439 = arith.truncf %382 : vector<16x64xf32> to vector<16x64xbf16>
    %cst_376 = arith.constant dense<0.000000e+00> : vector<16x64xf32>
    %440 = tpu.matmul %438, %439, %cst_376 {dimension_numbers = #tpu.dot_dimension_numbers<[1], [0], [0], [1], [0, 0, 1, 1], [], []>} : vector<16x16xbf16>, vector<16x64xbf16>, vector<16x64xf32> -> vector<16x64xf32>
    %c5_377 = arith.constant 5 : index
    %c0_378 = arith.constant 0 : index
    %c0_379 = arith.constant 0 : index
    %441 = vector.load %arg22[%c5_377, %c0_378, %c0_379] : memref<9x64x64xbf16, #tpu.memory_space<vmem>>, vector<1x64x64xbf16>
    %442 = vector.shape_cast %441 : vector<1x64x64xbf16> to vector<64x64xbf16>
    %443 = arith.truncf %440 : vector<16x64xf32> to vector<16x64xbf16>
    %cst_380 = arith.constant dense<0.000000e+00> : vector<16x64xf32>
    %444 = tpu.matmul %443, %442, %cst_380 {dimension_numbers = #tpu.dot_dimension_numbers<[1], [0], [0], [1], [0, 0, 1, 1], [], []>} : vector<16x64xbf16>, vector<64x64xbf16>, vector<16x64xf32> -> vector<16x64xf32>
    %445 = arith.addf %436, %444 : vector<16x64xf32>
    %c6_381 = arith.constant 6 : index
    %c0_382 = arith.constant 0 : index
    %c0_383 = arith.constant 0 : index
    %446 = vector.load %arg5[%c6_381, %c0_382, %c0_383] : memref<9x16x16xbf16, #tpu.memory_space<vmem>>, vector<1x16x16xbf16>
    %447 = vector.shape_cast %446 : vector<1x16x16xbf16> to vector<16x16xbf16>
    %448 = arith.truncf %382 : vector<16x64xf32> to vector<16x64xbf16>
    %cst_384 = arith.constant dense<0.000000e+00> : vector<16x64xf32>
    %449 = tpu.matmul %447, %448, %cst_384 {dimension_numbers = #tpu.dot_dimension_numbers<[1], [0], [0], [1], [0, 0, 1, 1], [], []>} : vector<16x16xbf16>, vector<16x64xbf16>, vector<16x64xf32> -> vector<16x64xf32>
    %c6_385 = arith.constant 6 : index
    %c0_386 = arith.constant 0 : index
    %c0_387 = arith.constant 0 : index
    %450 = vector.load %arg22[%c6_385, %c0_386, %c0_387] : memref<9x64x64xbf16, #tpu.memory_space<vmem>>, vector<1x64x64xbf16>
    %451 = vector.shape_cast %450 : vector<1x64x64xbf16> to vector<64x64xbf16>
    %452 = arith.truncf %449 : vector<16x64xf32> to vector<16x64xbf16>
    %cst_388 = arith.constant dense<0.000000e+00> : vector<16x64xf32>
    %453 = tpu.matmul %452, %451, %cst_388 {dimension_numbers = #tpu.dot_dimension_numbers<[1], [0], [0], [1], [0, 0, 1, 1], [], []>} : vector<16x64xbf16>, vector<64x64xbf16>, vector<16x64xf32> -> vector<16x64xf32>
    %454 = arith.addf %445, %453 : vector<16x64xf32>
    %c7_389 = arith.constant 7 : index
    %c0_390 = arith.constant 0 : index
    %c0_391 = arith.constant 0 : index
    %455 = vector.load %arg5[%c7_389, %c0_390, %c0_391] : memref<9x16x16xbf16, #tpu.memory_space<vmem>>, vector<1x16x16xbf16>
    %456 = vector.shape_cast %455 : vector<1x16x16xbf16> to vector<16x16xbf16>
    %457 = arith.truncf %382 : vector<16x64xf32> to vector<16x64xbf16>
    %cst_392 = arith.constant dense<0.000000e+00> : vector<16x64xf32>
    %458 = tpu.matmul %456, %457, %cst_392 {dimension_numbers = #tpu.dot_dimension_numbers<[1], [0], [0], [1], [0, 0, 1, 1], [], []>} : vector<16x16xbf16>, vector<16x64xbf16>, vector<16x64xf32> -> vector<16x64xf32>
    %c7_393 = arith.constant 7 : index
    %c0_394 = arith.constant 0 : index
    %c0_395 = arith.constant 0 : index
    %459 = vector.load %arg22[%c7_393, %c0_394, %c0_395] : memref<9x64x64xbf16, #tpu.memory_space<vmem>>, vector<1x64x64xbf16>
    %460 = vector.shape_cast %459 : vector<1x64x64xbf16> to vector<64x64xbf16>
    %461 = arith.truncf %458 : vector<16x64xf32> to vector<16x64xbf16>
    %cst_396 = arith.constant dense<0.000000e+00> : vector<16x64xf32>
    %462 = tpu.matmul %461, %460, %cst_396 {dimension_numbers = #tpu.dot_dimension_numbers<[1], [0], [0], [1], [0, 0, 1, 1], [], []>} : vector<16x64xbf16>, vector<64x64xbf16>, vector<16x64xf32> -> vector<16x64xf32>
    %463 = arith.addf %454, %462 : vector<16x64xf32>
    %c8_397 = arith.constant 8 : index
    %c0_398 = arith.constant 0 : index
    %c0_399 = arith.constant 0 : index
    %464 = vector.load %arg5[%c8_397, %c0_398, %c0_399] : memref<9x16x16xbf16, #tpu.memory_space<vmem>>, vector<1x16x16xbf16>
    %465 = vector.shape_cast %464 : vector<1x16x16xbf16> to vector<16x16xbf16>
    %466 = arith.truncf %382 : vector<16x64xf32> to vector<16x64xbf16>
    %cst_400 = arith.constant dense<0.000000e+00> : vector<16x64xf32>
    %467 = tpu.matmul %465, %466, %cst_400 {dimension_numbers = #tpu.dot_dimension_numbers<[1], [0], [0], [1], [0, 0, 1, 1], [], []>} : vector<16x16xbf16>, vector<16x64xbf16>, vector<16x64xf32> -> vector<16x64xf32>
    %c8_401 = arith.constant 8 : index
    %c0_402 = arith.constant 0 : index
    %c0_403 = arith.constant 0 : index
    %468 = vector.load %arg22[%c8_401, %c0_402, %c0_403] : memref<9x64x64xbf16, #tpu.memory_space<vmem>>, vector<1x64x64xbf16>
    %469 = vector.shape_cast %468 : vector<1x64x64xbf16> to vector<64x64xbf16>
    %470 = arith.truncf %467 : vector<16x64xf32> to vector<16x64xbf16>
    %cst_404 = arith.constant dense<0.000000e+00> : vector<16x64xf32>
    %471 = tpu.matmul %470, %469, %cst_404 {dimension_numbers = #tpu.dot_dimension_numbers<[1], [0], [0], [1], [0, 0, 1, 1], [], []>} : vector<16x64xbf16>, vector<64x64xbf16>, vector<16x64xf32> -> vector<16x64xf32>
    %472 = arith.addf %463, %471 : vector<16x64xf32>
    %c0_405 = arith.constant 0 : index
    %c0_406 = arith.constant 0 : index
    %473 = vector.load %arg23[%c0_405, %c0_406] : memref<1x64xf32, #tpu.memory_space<vmem>>, vector<1x64xf32>
    %474 = vector.broadcast %473 : vector<1x64xf32> to vector<16x64xf32>
    %475 = arith.addf %472, %474 : vector<16x64xf32>
    %cst_407 = arith.constant 0.000000e+00 : f32
    %476 = vector.broadcast %cst_407 : f32 to vector<16x64xf32>
    %477 = arith.maximumf %475, %476 : vector<16x64xf32>
    %c0_408 = arith.constant 0 : index
    %c0_409 = arith.constant 0 : index
    %c0_410 = arith.constant 0 : index
    %478 = vector.load %arg5[%c0_408, %c0_409, %c0_410] : memref<9x16x16xbf16, #tpu.memory_space<vmem>>, vector<1x16x16xbf16>
    %479 = vector.shape_cast %478 : vector<1x16x16xbf16> to vector<16x16xbf16>
    %480 = arith.truncf %392 : vector<16x64xf32> to vector<16x64xbf16>
    %cst_411 = arith.constant dense<0.000000e+00> : vector<16x64xf32>
    %481 = tpu.matmul %479, %480, %cst_411 {dimension_numbers = #tpu.dot_dimension_numbers<[1], [0], [0], [1], [0, 0, 1, 1], [], []>} : vector<16x16xbf16>, vector<16x64xbf16>, vector<16x64xf32> -> vector<16x64xf32>
    %c0_412 = arith.constant 0 : index
    %c0_413 = arith.constant 0 : index
    %c0_414 = arith.constant 0 : index
    %482 = vector.load %arg24[%c0_412, %c0_413, %c0_414] : memref<9x64x64xbf16, #tpu.memory_space<vmem>>, vector<1x64x64xbf16>
    %483 = vector.shape_cast %482 : vector<1x64x64xbf16> to vector<64x64xbf16>
    %484 = arith.truncf %481 : vector<16x64xf32> to vector<16x64xbf16>
    %cst_415 = arith.constant dense<0.000000e+00> : vector<16x64xf32>
    %485 = tpu.matmul %484, %483, %cst_415 {dimension_numbers = #tpu.dot_dimension_numbers<[1], [0], [0], [1], [0, 0, 1, 1], [], []>} : vector<16x64xbf16>, vector<64x64xbf16>, vector<16x64xf32> -> vector<16x64xf32>
    %c1_416 = arith.constant 1 : index
    %c0_417 = arith.constant 0 : index
    %c0_418 = arith.constant 0 : index
    %486 = vector.load %arg5[%c1_416, %c0_417, %c0_418] : memref<9x16x16xbf16, #tpu.memory_space<vmem>>, vector<1x16x16xbf16>
    %487 = vector.shape_cast %486 : vector<1x16x16xbf16> to vector<16x16xbf16>
    %488 = arith.truncf %392 : vector<16x64xf32> to vector<16x64xbf16>
    %cst_419 = arith.constant dense<0.000000e+00> : vector<16x64xf32>
    %489 = tpu.matmul %487, %488, %cst_419 {dimension_numbers = #tpu.dot_dimension_numbers<[1], [0], [0], [1], [0, 0, 1, 1], [], []>} : vector<16x16xbf16>, vector<16x64xbf16>, vector<16x64xf32> -> vector<16x64xf32>
    %c1_420 = arith.constant 1 : index
    %c0_421 = arith.constant 0 : index
    %c0_422 = arith.constant 0 : index
    %490 = vector.load %arg24[%c1_420, %c0_421, %c0_422] : memref<9x64x64xbf16, #tpu.memory_space<vmem>>, vector<1x64x64xbf16>
    %491 = vector.shape_cast %490 : vector<1x64x64xbf16> to vector<64x64xbf16>
    %492 = arith.truncf %489 : vector<16x64xf32> to vector<16x64xbf16>
    %cst_423 = arith.constant dense<0.000000e+00> : vector<16x64xf32>
    %493 = tpu.matmul %492, %491, %cst_423 {dimension_numbers = #tpu.dot_dimension_numbers<[1], [0], [0], [1], [0, 0, 1, 1], [], []>} : vector<16x64xbf16>, vector<64x64xbf16>, vector<16x64xf32> -> vector<16x64xf32>
    %494 = arith.addf %485, %493 : vector<16x64xf32>
    %c2_424 = arith.constant 2 : index
    %c0_425 = arith.constant 0 : index
    %c0_426 = arith.constant 0 : index
    %495 = vector.load %arg5[%c2_424, %c0_425, %c0_426] : memref<9x16x16xbf16, #tpu.memory_space<vmem>>, vector<1x16x16xbf16>
    %496 = vector.shape_cast %495 : vector<1x16x16xbf16> to vector<16x16xbf16>
    %497 = arith.truncf %392 : vector<16x64xf32> to vector<16x64xbf16>
    %cst_427 = arith.constant dense<0.000000e+00> : vector<16x64xf32>
    %498 = tpu.matmul %496, %497, %cst_427 {dimension_numbers = #tpu.dot_dimension_numbers<[1], [0], [0], [1], [0, 0, 1, 1], [], []>} : vector<16x16xbf16>, vector<16x64xbf16>, vector<16x64xf32> -> vector<16x64xf32>
    %c2_428 = arith.constant 2 : index
    %c0_429 = arith.constant 0 : index
    %c0_430 = arith.constant 0 : index
    %499 = vector.load %arg24[%c2_428, %c0_429, %c0_430] : memref<9x64x64xbf16, #tpu.memory_space<vmem>>, vector<1x64x64xbf16>
    %500 = vector.shape_cast %499 : vector<1x64x64xbf16> to vector<64x64xbf16>
    %501 = arith.truncf %498 : vector<16x64xf32> to vector<16x64xbf16>
    %cst_431 = arith.constant dense<0.000000e+00> : vector<16x64xf32>
    %502 = tpu.matmul %501, %500, %cst_431 {dimension_numbers = #tpu.dot_dimension_numbers<[1], [0], [0], [1], [0, 0, 1, 1], [], []>} : vector<16x64xbf16>, vector<64x64xbf16>, vector<16x64xf32> -> vector<16x64xf32>
    %503 = arith.addf %494, %502 : vector<16x64xf32>
    %c3_432 = arith.constant 3 : index
    %c0_433 = arith.constant 0 : index
    %c0_434 = arith.constant 0 : index
    %504 = vector.load %arg5[%c3_432, %c0_433, %c0_434] : memref<9x16x16xbf16, #tpu.memory_space<vmem>>, vector<1x16x16xbf16>
    %505 = vector.shape_cast %504 : vector<1x16x16xbf16> to vector<16x16xbf16>
    %506 = arith.truncf %392 : vector<16x64xf32> to vector<16x64xbf16>
    %cst_435 = arith.constant dense<0.000000e+00> : vector<16x64xf32>
    %507 = tpu.matmul %505, %506, %cst_435 {dimension_numbers = #tpu.dot_dimension_numbers<[1], [0], [0], [1], [0, 0, 1, 1], [], []>} : vector<16x16xbf16>, vector<16x64xbf16>, vector<16x64xf32> -> vector<16x64xf32>
    %c3_436 = arith.constant 3 : index
    %c0_437 = arith.constant 0 : index
    %c0_438 = arith.constant 0 : index
    %508 = vector.load %arg24[%c3_436, %c0_437, %c0_438] : memref<9x64x64xbf16, #tpu.memory_space<vmem>>, vector<1x64x64xbf16>
    %509 = vector.shape_cast %508 : vector<1x64x64xbf16> to vector<64x64xbf16>
    %510 = arith.truncf %507 : vector<16x64xf32> to vector<16x64xbf16>
    %cst_439 = arith.constant dense<0.000000e+00> : vector<16x64xf32>
    %511 = tpu.matmul %510, %509, %cst_439 {dimension_numbers = #tpu.dot_dimension_numbers<[1], [0], [0], [1], [0, 0, 1, 1], [], []>} : vector<16x64xbf16>, vector<64x64xbf16>, vector<16x64xf32> -> vector<16x64xf32>
    %512 = arith.addf %503, %511 : vector<16x64xf32>
    %c4_440 = arith.constant 4 : index
    %c0_441 = arith.constant 0 : index
    %c0_442 = arith.constant 0 : index
    %513 = vector.load %arg5[%c4_440, %c0_441, %c0_442] : memref<9x16x16xbf16, #tpu.memory_space<vmem>>, vector<1x16x16xbf16>
    %514 = vector.shape_cast %513 : vector<1x16x16xbf16> to vector<16x16xbf16>
    %515 = arith.truncf %392 : vector<16x64xf32> to vector<16x64xbf16>
    %cst_443 = arith.constant dense<0.000000e+00> : vector<16x64xf32>
    %516 = tpu.matmul %514, %515, %cst_443 {dimension_numbers = #tpu.dot_dimension_numbers<[1], [0], [0], [1], [0, 0, 1, 1], [], []>} : vector<16x16xbf16>, vector<16x64xbf16>, vector<16x64xf32> -> vector<16x64xf32>
    %c4_444 = arith.constant 4 : index
    %c0_445 = arith.constant 0 : index
    %c0_446 = arith.constant 0 : index
    %517 = vector.load %arg24[%c4_444, %c0_445, %c0_446] : memref<9x64x64xbf16, #tpu.memory_space<vmem>>, vector<1x64x64xbf16>
    %518 = vector.shape_cast %517 : vector<1x64x64xbf16> to vector<64x64xbf16>
    %519 = arith.truncf %516 : vector<16x64xf32> to vector<16x64xbf16>
    %cst_447 = arith.constant dense<0.000000e+00> : vector<16x64xf32>
    %520 = tpu.matmul %519, %518, %cst_447 {dimension_numbers = #tpu.dot_dimension_numbers<[1], [0], [0], [1], [0, 0, 1, 1], [], []>} : vector<16x64xbf16>, vector<64x64xbf16>, vector<16x64xf32> -> vector<16x64xf32>
    %521 = arith.addf %512, %520 : vector<16x64xf32>
    %c5_448 = arith.constant 5 : index
    %c0_449 = arith.constant 0 : index
    %c0_450 = arith.constant 0 : index
    %522 = vector.load %arg5[%c5_448, %c0_449, %c0_450] : memref<9x16x16xbf16, #tpu.memory_space<vmem>>, vector<1x16x16xbf16>
    %523 = vector.shape_cast %522 : vector<1x16x16xbf16> to vector<16x16xbf16>
    %524 = arith.truncf %392 : vector<16x64xf32> to vector<16x64xbf16>
    %cst_451 = arith.constant dense<0.000000e+00> : vector<16x64xf32>
    %525 = tpu.matmul %523, %524, %cst_451 {dimension_numbers = #tpu.dot_dimension_numbers<[1], [0], [0], [1], [0, 0, 1, 1], [], []>} : vector<16x16xbf16>, vector<16x64xbf16>, vector<16x64xf32> -> vector<16x64xf32>
    %c5_452 = arith.constant 5 : index
    %c0_453 = arith.constant 0 : index
    %c0_454 = arith.constant 0 : index
    %526 = vector.load %arg24[%c5_452, %c0_453, %c0_454] : memref<9x64x64xbf16, #tpu.memory_space<vmem>>, vector<1x64x64xbf16>
    %527 = vector.shape_cast %526 : vector<1x64x64xbf16> to vector<64x64xbf16>
    %528 = arith.truncf %525 : vector<16x64xf32> to vector<16x64xbf16>
    %cst_455 = arith.constant dense<0.000000e+00> : vector<16x64xf32>
    %529 = tpu.matmul %528, %527, %cst_455 {dimension_numbers = #tpu.dot_dimension_numbers<[1], [0], [0], [1], [0, 0, 1, 1], [], []>} : vector<16x64xbf16>, vector<64x64xbf16>, vector<16x64xf32> -> vector<16x64xf32>
    %530 = arith.addf %521, %529 : vector<16x64xf32>
    %c6_456 = arith.constant 6 : index
    %c0_457 = arith.constant 0 : index
    %c0_458 = arith.constant 0 : index
    %531 = vector.load %arg5[%c6_456, %c0_457, %c0_458] : memref<9x16x16xbf16, #tpu.memory_space<vmem>>, vector<1x16x16xbf16>
    %532 = vector.shape_cast %531 : vector<1x16x16xbf16> to vector<16x16xbf16>
    %533 = arith.truncf %392 : vector<16x64xf32> to vector<16x64xbf16>
    %cst_459 = arith.constant dense<0.000000e+00> : vector<16x64xf32>
    %534 = tpu.matmul %532, %533, %cst_459 {dimension_numbers = #tpu.dot_dimension_numbers<[1], [0], [0], [1], [0, 0, 1, 1], [], []>} : vector<16x16xbf16>, vector<16x64xbf16>, vector<16x64xf32> -> vector<16x64xf32>
    %c6_460 = arith.constant 6 : index
    %c0_461 = arith.constant 0 : index
    %c0_462 = arith.constant 0 : index
    %535 = vector.load %arg24[%c6_460, %c0_461, %c0_462] : memref<9x64x64xbf16, #tpu.memory_space<vmem>>, vector<1x64x64xbf16>
    %536 = vector.shape_cast %535 : vector<1x64x64xbf16> to vector<64x64xbf16>
    %537 = arith.truncf %534 : vector<16x64xf32> to vector<16x64xbf16>
    %cst_463 = arith.constant dense<0.000000e+00> : vector<16x64xf32>
    %538 = tpu.matmul %537, %536, %cst_463 {dimension_numbers = #tpu.dot_dimension_numbers<[1], [0], [0], [1], [0, 0, 1, 1], [], []>} : vector<16x64xbf16>, vector<64x64xbf16>, vector<16x64xf32> -> vector<16x64xf32>
    %539 = arith.addf %530, %538 : vector<16x64xf32>
    %c7_464 = arith.constant 7 : index
    %c0_465 = arith.constant 0 : index
    %c0_466 = arith.constant 0 : index
    %540 = vector.load %arg5[%c7_464, %c0_465, %c0_466] : memref<9x16x16xbf16, #tpu.memory_space<vmem>>, vector<1x16x16xbf16>
    %541 = vector.shape_cast %540 : vector<1x16x16xbf16> to vector<16x16xbf16>
    %542 = arith.truncf %392 : vector<16x64xf32> to vector<16x64xbf16>
    %cst_467 = arith.constant dense<0.000000e+00> : vector<16x64xf32>
    %543 = tpu.matmul %541, %542, %cst_467 {dimension_numbers = #tpu.dot_dimension_numbers<[1], [0], [0], [1], [0, 0, 1, 1], [], []>} : vector<16x16xbf16>, vector<16x64xbf16>, vector<16x64xf32> -> vector<16x64xf32>
    %c7_468 = arith.constant 7 : index
    %c0_469 = arith.constant 0 : index
    %c0_470 = arith.constant 0 : index
    %544 = vector.load %arg24[%c7_468, %c0_469, %c0_470] : memref<9x64x64xbf16, #tpu.memory_space<vmem>>, vector<1x64x64xbf16>
    %545 = vector.shape_cast %544 : vector<1x64x64xbf16> to vector<64x64xbf16>
    %546 = arith.truncf %543 : vector<16x64xf32> to vector<16x64xbf16>
    %cst_471 = arith.constant dense<0.000000e+00> : vector<16x64xf32>
    %547 = tpu.matmul %546, %545, %cst_471 {dimension_numbers = #tpu.dot_dimension_numbers<[1], [0], [0], [1], [0, 0, 1, 1], [], []>} : vector<16x64xbf16>, vector<64x64xbf16>, vector<16x64xf32> -> vector<16x64xf32>
    %548 = arith.addf %539, %547 : vector<16x64xf32>
    %c8_472 = arith.constant 8 : index
    %c0_473 = arith.constant 0 : index
    %c0_474 = arith.constant 0 : index
    %549 = vector.load %arg5[%c8_472, %c0_473, %c0_474] : memref<9x16x16xbf16, #tpu.memory_space<vmem>>, vector<1x16x16xbf16>
    %550 = vector.shape_cast %549 : vector<1x16x16xbf16> to vector<16x16xbf16>
    %551 = arith.truncf %392 : vector<16x64xf32> to vector<16x64xbf16>
    %cst_475 = arith.constant dense<0.000000e+00> : vector<16x64xf32>
    %552 = tpu.matmul %550, %551, %cst_475 {dimension_numbers = #tpu.dot_dimension_numbers<[1], [0], [0], [1], [0, 0, 1, 1], [], []>} : vector<16x16xbf16>, vector<16x64xbf16>, vector<16x64xf32> -> vector<16x64xf32>
    %c8_476 = arith.constant 8 : index
    %c0_477 = arith.constant 0 : index
    %c0_478 = arith.constant 0 : index
    %553 = vector.load %arg24[%c8_476, %c0_477, %c0_478] : memref<9x64x64xbf16, #tpu.memory_space<vmem>>, vector<1x64x64xbf16>
    %554 = vector.shape_cast %553 : vector<1x64x64xbf16> to vector<64x64xbf16>
    %555 = arith.truncf %552 : vector<16x64xf32> to vector<16x64xbf16>
    %cst_479 = arith.constant dense<0.000000e+00> : vector<16x64xf32>
    %556 = tpu.matmul %555, %554, %cst_479 {dimension_numbers = #tpu.dot_dimension_numbers<[1], [0], [0], [1], [0, 0, 1, 1], [], []>} : vector<16x64xbf16>, vector<64x64xbf16>, vector<16x64xf32> -> vector<16x64xf32>
    %557 = arith.addf %548, %556 : vector<16x64xf32>
    %c0_480 = arith.constant 0 : index
    %c0_481 = arith.constant 0 : index
    %558 = vector.load %arg25[%c0_480, %c0_481] : memref<1x64xf32, #tpu.memory_space<vmem>>, vector<1x64xf32>
    %559 = vector.broadcast %558 : vector<1x64xf32> to vector<16x64xf32>
    %560 = arith.addf %557, %559 : vector<16x64xf32>
    %cst_482 = arith.constant 0.000000e+00 : f32
    %561 = vector.broadcast %cst_482 : f32 to vector<16x64xf32>
    %562 = arith.maximumf %560, %561 : vector<16x64xf32>
    %c0_483 = arith.constant 0 : index
    %c0_484 = arith.constant 0 : index
    %c0_485 = arith.constant 0 : index
    %563 = vector.load %arg5[%c0_483, %c0_484, %c0_485] : memref<9x16x16xbf16, #tpu.memory_space<vmem>>, vector<1x16x16xbf16>
    %564 = vector.shape_cast %563 : vector<1x16x16xbf16> to vector<16x16xbf16>
    %565 = arith.truncf %562 : vector<16x64xf32> to vector<16x64xbf16>
    %cst_486 = arith.constant dense<0.000000e+00> : vector<16x64xf32>
    %566 = tpu.matmul %564, %565, %cst_486 {dimension_numbers = #tpu.dot_dimension_numbers<[1], [0], [0], [1], [0, 0, 1, 1], [], []>} : vector<16x16xbf16>, vector<16x64xbf16>, vector<16x64xf32> -> vector<16x64xf32>
    %c0_487 = arith.constant 0 : index
    %c0_488 = arith.constant 0 : index
    %c0_489 = arith.constant 0 : index
    %567 = vector.load %arg26[%c0_487, %c0_488, %c0_489] : memref<9x64x64xbf16, #tpu.memory_space<vmem>>, vector<1x64x64xbf16>
    %568 = vector.shape_cast %567 : vector<1x64x64xbf16> to vector<64x64xbf16>
    %569 = arith.truncf %566 : vector<16x64xf32> to vector<16x64xbf16>
    %cst_490 = arith.constant dense<0.000000e+00> : vector<16x64xf32>
    %570 = tpu.matmul %569, %568, %cst_490 {dimension_numbers = #tpu.dot_dimension_numbers<[1], [0], [0], [1], [0, 0, 1, 1], [], []>} : vector<16x64xbf16>, vector<64x64xbf16>, vector<16x64xf32> -> vector<16x64xf32>
    %c1_491 = arith.constant 1 : index
    %c0_492 = arith.constant 0 : index
    %c0_493 = arith.constant 0 : index
    %571 = vector.load %arg5[%c1_491, %c0_492, %c0_493] : memref<9x16x16xbf16, #tpu.memory_space<vmem>>, vector<1x16x16xbf16>
    %572 = vector.shape_cast %571 : vector<1x16x16xbf16> to vector<16x16xbf16>
    %573 = arith.truncf %562 : vector<16x64xf32> to vector<16x64xbf16>
    %cst_494 = arith.constant dense<0.000000e+00> : vector<16x64xf32>
    %574 = tpu.matmul %572, %573, %cst_494 {dimension_numbers = #tpu.dot_dimension_numbers<[1], [0], [0], [1], [0, 0, 1, 1], [], []>} : vector<16x16xbf16>, vector<16x64xbf16>, vector<16x64xf32> -> vector<16x64xf32>
    %c1_495 = arith.constant 1 : index
    %c0_496 = arith.constant 0 : index
    %c0_497 = arith.constant 0 : index
    %575 = vector.load %arg26[%c1_495, %c0_496, %c0_497] : memref<9x64x64xbf16, #tpu.memory_space<vmem>>, vector<1x64x64xbf16>
    %576 = vector.shape_cast %575 : vector<1x64x64xbf16> to vector<64x64xbf16>
    %577 = arith.truncf %574 : vector<16x64xf32> to vector<16x64xbf16>
    %cst_498 = arith.constant dense<0.000000e+00> : vector<16x64xf32>
    %578 = tpu.matmul %577, %576, %cst_498 {dimension_numbers = #tpu.dot_dimension_numbers<[1], [0], [0], [1], [0, 0, 1, 1], [], []>} : vector<16x64xbf16>, vector<64x64xbf16>, vector<16x64xf32> -> vector<16x64xf32>
    %579 = arith.addf %570, %578 : vector<16x64xf32>
    %c2_499 = arith.constant 2 : index
    %c0_500 = arith.constant 0 : index
    %c0_501 = arith.constant 0 : index
    %580 = vector.load %arg5[%c2_499, %c0_500, %c0_501] : memref<9x16x16xbf16, #tpu.memory_space<vmem>>, vector<1x16x16xbf16>
    %581 = vector.shape_cast %580 : vector<1x16x16xbf16> to vector<16x16xbf16>
    %582 = arith.truncf %562 : vector<16x64xf32> to vector<16x64xbf16>
    %cst_502 = arith.constant dense<0.000000e+00> : vector<16x64xf32>
    %583 = tpu.matmul %581, %582, %cst_502 {dimension_numbers = #tpu.dot_dimension_numbers<[1], [0], [0], [1], [0, 0, 1, 1], [], []>} : vector<16x16xbf16>, vector<16x64xbf16>, vector<16x64xf32> -> vector<16x64xf32>
    %c2_503 = arith.constant 2 : index
    %c0_504 = arith.constant 0 : index
    %c0_505 = arith.constant 0 : index
    %584 = vector.load %arg26[%c2_503, %c0_504, %c0_505] : memref<9x64x64xbf16, #tpu.memory_space<vmem>>, vector<1x64x64xbf16>
    %585 = vector.shape_cast %584 : vector<1x64x64xbf16> to vector<64x64xbf16>
    %586 = arith.truncf %583 : vector<16x64xf32> to vector<16x64xbf16>
    %cst_506 = arith.constant dense<0.000000e+00> : vector<16x64xf32>
    %587 = tpu.matmul %586, %585, %cst_506 {dimension_numbers = #tpu.dot_dimension_numbers<[1], [0], [0], [1], [0, 0, 1, 1], [], []>} : vector<16x64xbf16>, vector<64x64xbf16>, vector<16x64xf32> -> vector<16x64xf32>
    %588 = arith.addf %579, %587 : vector<16x64xf32>
    %c3_507 = arith.constant 3 : index
    %c0_508 = arith.constant 0 : index
    %c0_509 = arith.constant 0 : index
    %589 = vector.load %arg5[%c3_507, %c0_508, %c0_509] : memref<9x16x16xbf16, #tpu.memory_space<vmem>>, vector<1x16x16xbf16>
    %590 = vector.shape_cast %589 : vector<1x16x16xbf16> to vector<16x16xbf16>
    %591 = arith.truncf %562 : vector<16x64xf32> to vector<16x64xbf16>
    %cst_510 = arith.constant dense<0.000000e+00> : vector<16x64xf32>
    %592 = tpu.matmul %590, %591, %cst_510 {dimension_numbers = #tpu.dot_dimension_numbers<[1], [0], [0], [1], [0, 0, 1, 1], [], []>} : vector<16x16xbf16>, vector<16x64xbf16>, vector<16x64xf32> -> vector<16x64xf32>
    %c3_511 = arith.constant 3 : index
    %c0_512 = arith.constant 0 : index
    %c0_513 = arith.constant 0 : index
    %593 = vector.load %arg26[%c3_511, %c0_512, %c0_513] : memref<9x64x64xbf16, #tpu.memory_space<vmem>>, vector<1x64x64xbf16>
    %594 = vector.shape_cast %593 : vector<1x64x64xbf16> to vector<64x64xbf16>
    %595 = arith.truncf %592 : vector<16x64xf32> to vector<16x64xbf16>
    %cst_514 = arith.constant dense<0.000000e+00> : vector<16x64xf32>
    %596 = tpu.matmul %595, %594, %cst_514 {dimension_numbers = #tpu.dot_dimension_numbers<[1], [0], [0], [1], [0, 0, 1, 1], [], []>} : vector<16x64xbf16>, vector<64x64xbf16>, vector<16x64xf32> -> vector<16x64xf32>
    %597 = arith.addf %588, %596 : vector<16x64xf32>
    %c4_515 = arith.constant 4 : index
    %c0_516 = arith.constant 0 : index
    %c0_517 = arith.constant 0 : index
    %598 = vector.load %arg5[%c4_515, %c0_516, %c0_517] : memref<9x16x16xbf16, #tpu.memory_space<vmem>>, vector<1x16x16xbf16>
    %599 = vector.shape_cast %598 : vector<1x16x16xbf16> to vector<16x16xbf16>
    %600 = arith.truncf %562 : vector<16x64xf32> to vector<16x64xbf16>
    %cst_518 = arith.constant dense<0.000000e+00> : vector<16x64xf32>
    %601 = tpu.matmul %599, %600, %cst_518 {dimension_numbers = #tpu.dot_dimension_numbers<[1], [0], [0], [1], [0, 0, 1, 1], [], []>} : vector<16x16xbf16>, vector<16x64xbf16>, vector<16x64xf32> -> vector<16x64xf32>
    %c4_519 = arith.constant 4 : index
    %c0_520 = arith.constant 0 : index
    %c0_521 = arith.constant 0 : index
    %602 = vector.load %arg26[%c4_519, %c0_520, %c0_521] : memref<9x64x64xbf16, #tpu.memory_space<vmem>>, vector<1x64x64xbf16>
    %603 = vector.shape_cast %602 : vector<1x64x64xbf16> to vector<64x64xbf16>
    %604 = arith.truncf %601 : vector<16x64xf32> to vector<16x64xbf16>
    %cst_522 = arith.constant dense<0.000000e+00> : vector<16x64xf32>
    %605 = tpu.matmul %604, %603, %cst_522 {dimension_numbers = #tpu.dot_dimension_numbers<[1], [0], [0], [1], [0, 0, 1, 1], [], []>} : vector<16x64xbf16>, vector<64x64xbf16>, vector<16x64xf32> -> vector<16x64xf32>
    %606 = arith.addf %597, %605 : vector<16x64xf32>
    %c5_523 = arith.constant 5 : index
    %c0_524 = arith.constant 0 : index
    %c0_525 = arith.constant 0 : index
    %607 = vector.load %arg5[%c5_523, %c0_524, %c0_525] : memref<9x16x16xbf16, #tpu.memory_space<vmem>>, vector<1x16x16xbf16>
    %608 = vector.shape_cast %607 : vector<1x16x16xbf16> to vector<16x16xbf16>
    %609 = arith.truncf %562 : vector<16x64xf32> to vector<16x64xbf16>
    %cst_526 = arith.constant dense<0.000000e+00> : vector<16x64xf32>
    %610 = tpu.matmul %608, %609, %cst_526 {dimension_numbers = #tpu.dot_dimension_numbers<[1], [0], [0], [1], [0, 0, 1, 1], [], []>} : vector<16x16xbf16>, vector<16x64xbf16>, vector<16x64xf32> -> vector<16x64xf32>
    %c5_527 = arith.constant 5 : index
    %c0_528 = arith.constant 0 : index
    %c0_529 = arith.constant 0 : index
    %611 = vector.load %arg26[%c5_527, %c0_528, %c0_529] : memref<9x64x64xbf16, #tpu.memory_space<vmem>>, vector<1x64x64xbf16>
    %612 = vector.shape_cast %611 : vector<1x64x64xbf16> to vector<64x64xbf16>
    %613 = arith.truncf %610 : vector<16x64xf32> to vector<16x64xbf16>
    %cst_530 = arith.constant dense<0.000000e+00> : vector<16x64xf32>
    %614 = tpu.matmul %613, %612, %cst_530 {dimension_numbers = #tpu.dot_dimension_numbers<[1], [0], [0], [1], [0, 0, 1, 1], [], []>} : vector<16x64xbf16>, vector<64x64xbf16>, vector<16x64xf32> -> vector<16x64xf32>
    %615 = arith.addf %606, %614 : vector<16x64xf32>
    %c6_531 = arith.constant 6 : index
    %c0_532 = arith.constant 0 : index
    %c0_533 = arith.constant 0 : index
    %616 = vector.load %arg5[%c6_531, %c0_532, %c0_533] : memref<9x16x16xbf16, #tpu.memory_space<vmem>>, vector<1x16x16xbf16>
    %617 = vector.shape_cast %616 : vector<1x16x16xbf16> to vector<16x16xbf16>
    %618 = arith.truncf %562 : vector<16x64xf32> to vector<16x64xbf16>
    %cst_534 = arith.constant dense<0.000000e+00> : vector<16x64xf32>
    %619 = tpu.matmul %617, %618, %cst_534 {dimension_numbers = #tpu.dot_dimension_numbers<[1], [0], [0], [1], [0, 0, 1, 1], [], []>} : vector<16x16xbf16>, vector<16x64xbf16>, vector<16x64xf32> -> vector<16x64xf32>
    %c6_535 = arith.constant 6 : index
    %c0_536 = arith.constant 0 : index
    %c0_537 = arith.constant 0 : index
    %620 = vector.load %arg26[%c6_535, %c0_536, %c0_537] : memref<9x64x64xbf16, #tpu.memory_space<vmem>>, vector<1x64x64xbf16>
    %621 = vector.shape_cast %620 : vector<1x64x64xbf16> to vector<64x64xbf16>
    %622 = arith.truncf %619 : vector<16x64xf32> to vector<16x64xbf16>
    %cst_538 = arith.constant dense<0.000000e+00> : vector<16x64xf32>
    %623 = tpu.matmul %622, %621, %cst_538 {dimension_numbers = #tpu.dot_dimension_numbers<[1], [0], [0], [1], [0, 0, 1, 1], [], []>} : vector<16x64xbf16>, vector<64x64xbf16>, vector<16x64xf32> -> vector<16x64xf32>
    %624 = arith.addf %615, %623 : vector<16x64xf32>
    %c7_539 = arith.constant 7 : index
    %c0_540 = arith.constant 0 : index
    %c0_541 = arith.constant 0 : index
    %625 = vector.load %arg5[%c7_539, %c0_540, %c0_541] : memref<9x16x16xbf16, #tpu.memory_space<vmem>>, vector<1x16x16xbf16>
    %626 = vector.shape_cast %625 : vector<1x16x16xbf16> to vector<16x16xbf16>
    %627 = arith.truncf %562 : vector<16x64xf32> to vector<16x64xbf16>
    %cst_542 = arith.constant dense<0.000000e+00> : vector<16x64xf32>
    %628 = tpu.matmul %626, %627, %cst_542 {dimension_numbers = #tpu.dot_dimension_numbers<[1], [0], [0], [1], [0, 0, 1, 1], [], []>} : vector<16x16xbf16>, vector<16x64xbf16>, vector<16x64xf32> -> vector<16x64xf32>
    %c7_543 = arith.constant 7 : index
    %c0_544 = arith.constant 0 : index
    %c0_545 = arith.constant 0 : index
    %629 = vector.load %arg26[%c7_543, %c0_544, %c0_545] : memref<9x64x64xbf16, #tpu.memory_space<vmem>>, vector<1x64x64xbf16>
    %630 = vector.shape_cast %629 : vector<1x64x64xbf16> to vector<64x64xbf16>
    %631 = arith.truncf %628 : vector<16x64xf32> to vector<16x64xbf16>
    %cst_546 = arith.constant dense<0.000000e+00> : vector<16x64xf32>
    %632 = tpu.matmul %631, %630, %cst_546 {dimension_numbers = #tpu.dot_dimension_numbers<[1], [0], [0], [1], [0, 0, 1, 1], [], []>} : vector<16x64xbf16>, vector<64x64xbf16>, vector<16x64xf32> -> vector<16x64xf32>
    %633 = arith.addf %624, %632 : vector<16x64xf32>
    %c8_547 = arith.constant 8 : index
    %c0_548 = arith.constant 0 : index
    %c0_549 = arith.constant 0 : index
    %634 = vector.load %arg5[%c8_547, %c0_548, %c0_549] : memref<9x16x16xbf16, #tpu.memory_space<vmem>>, vector<1x16x16xbf16>
    %635 = vector.shape_cast %634 : vector<1x16x16xbf16> to vector<16x16xbf16>
    %636 = arith.truncf %562 : vector<16x64xf32> to vector<16x64xbf16>
    %cst_550 = arith.constant dense<0.000000e+00> : vector<16x64xf32>
    %637 = tpu.matmul %635, %636, %cst_550 {dimension_numbers = #tpu.dot_dimension_numbers<[1], [0], [0], [1], [0, 0, 1, 1], [], []>} : vector<16x16xbf16>, vector<16x64xbf16>, vector<16x64xf32> -> vector<16x64xf32>
    %c8_551 = arith.constant 8 : index
    %c0_552 = arith.constant 0 : index
    %c0_553 = arith.constant 0 : index
    %638 = vector.load %arg26[%c8_551, %c0_552, %c0_553] : memref<9x64x64xbf16, #tpu.memory_space<vmem>>, vector<1x64x64xbf16>
    %639 = vector.shape_cast %638 : vector<1x64x64xbf16> to vector<64x64xbf16>
    %640 = arith.truncf %637 : vector<16x64xf32> to vector<16x64xbf16>
    %cst_554 = arith.constant dense<0.000000e+00> : vector<16x64xf32>
    %641 = tpu.matmul %640, %639, %cst_554 {dimension_numbers = #tpu.dot_dimension_numbers<[1], [0], [0], [1], [0, 0, 1, 1], [], []>} : vector<16x64xbf16>, vector<64x64xbf16>, vector<16x64xf32> -> vector<16x64xf32>
    %642 = arith.addf %633, %641 : vector<16x64xf32>
    %c0_555 = arith.constant 0 : index
    %c0_556 = arith.constant 0 : index
    %643 = vector.load %arg27[%c0_555, %c0_556] : memref<1x64xf32, #tpu.memory_space<vmem>>, vector<1x64xf32>
    %644 = vector.broadcast %643 : vector<1x64xf32> to vector<16x64xf32>
    %645 = arith.addf %642, %644 : vector<16x64xf32>
    %cst_557 = arith.constant 0.000000e+00 : f32
    %646 = vector.broadcast %cst_557 : f32 to vector<16x64xf32>
    %647 = arith.maximumf %645, %646 : vector<16x64xf32>
    %c0_558 = arith.constant 0 : index
    %c0_559 = arith.constant 0 : index
    %c0_560 = arith.constant 0 : index
    %648 = vector.load %arg5[%c0_558, %c0_559, %c0_560] : memref<9x16x16xbf16, #tpu.memory_space<vmem>>, vector<1x16x16xbf16>
    %649 = vector.shape_cast %648 : vector<1x16x16xbf16> to vector<16x16xbf16>
    %650 = arith.truncf %362 : vector<16x128xf32> to vector<16x128xbf16>
    %cst_561 = arith.constant dense<0.000000e+00> : vector<16x128xf32>
    %651 = tpu.matmul %649, %650, %cst_561 {dimension_numbers = #tpu.dot_dimension_numbers<[1], [0], [0], [1], [0, 0, 1, 1], [], []>} : vector<16x16xbf16>, vector<16x128xbf16>, vector<16x128xf32> -> vector<16x128xf32>
    %c1_562 = arith.constant 1 : index
    %c0_563 = arith.constant 0 : index
    %c0_564 = arith.constant 0 : index
    %652 = vector.load %arg5[%c1_562, %c0_563, %c0_564] : memref<9x16x16xbf16, #tpu.memory_space<vmem>>, vector<1x16x16xbf16>
    %653 = vector.shape_cast %652 : vector<1x16x16xbf16> to vector<16x16xbf16>
    %654 = arith.truncf %362 : vector<16x128xf32> to vector<16x128xbf16>
    %cst_565 = arith.constant dense<0.000000e+00> : vector<16x128xf32>
    %655 = tpu.matmul %653, %654, %cst_565 {dimension_numbers = #tpu.dot_dimension_numbers<[1], [0], [0], [1], [0, 0, 1, 1], [], []>} : vector<16x16xbf16>, vector<16x128xbf16>, vector<16x128xf32> -> vector<16x128xf32>
    %656 = arith.maximumf %651, %655 : vector<16x128xf32>
    %c2_566 = arith.constant 2 : index
    %c0_567 = arith.constant 0 : index
    %c0_568 = arith.constant 0 : index
    %657 = vector.load %arg5[%c2_566, %c0_567, %c0_568] : memref<9x16x16xbf16, #tpu.memory_space<vmem>>, vector<1x16x16xbf16>
    %658 = vector.shape_cast %657 : vector<1x16x16xbf16> to vector<16x16xbf16>
    %659 = arith.truncf %362 : vector<16x128xf32> to vector<16x128xbf16>
    %cst_569 = arith.constant dense<0.000000e+00> : vector<16x128xf32>
    %660 = tpu.matmul %658, %659, %cst_569 {dimension_numbers = #tpu.dot_dimension_numbers<[1], [0], [0], [1], [0, 0, 1, 1], [], []>} : vector<16x16xbf16>, vector<16x128xbf16>, vector<16x128xf32> -> vector<16x128xf32>
    %661 = arith.maximumf %656, %660 : vector<16x128xf32>
    %c3_570 = arith.constant 3 : index
    %c0_571 = arith.constant 0 : index
    %c0_572 = arith.constant 0 : index
    %662 = vector.load %arg5[%c3_570, %c0_571, %c0_572] : memref<9x16x16xbf16, #tpu.memory_space<vmem>>, vector<1x16x16xbf16>
    %663 = vector.shape_cast %662 : vector<1x16x16xbf16> to vector<16x16xbf16>
    %664 = arith.truncf %362 : vector<16x128xf32> to vector<16x128xbf16>
    %cst_573 = arith.constant dense<0.000000e+00> : vector<16x128xf32>
    %665 = tpu.matmul %663, %664, %cst_573 {dimension_numbers = #tpu.dot_dimension_numbers<[1], [0], [0], [1], [0, 0, 1, 1], [], []>} : vector<16x16xbf16>, vector<16x128xbf16>, vector<16x128xf32> -> vector<16x128xf32>
    %666 = arith.maximumf %661, %665 : vector<16x128xf32>
    %c4_574 = arith.constant 4 : index
    %c0_575 = arith.constant 0 : index
    %c0_576 = arith.constant 0 : index
    %667 = vector.load %arg5[%c4_574, %c0_575, %c0_576] : memref<9x16x16xbf16, #tpu.memory_space<vmem>>, vector<1x16x16xbf16>
    %668 = vector.shape_cast %667 : vector<1x16x16xbf16> to vector<16x16xbf16>
    %669 = arith.truncf %362 : vector<16x128xf32> to vector<16x128xbf16>
    %cst_577 = arith.constant dense<0.000000e+00> : vector<16x128xf32>
    %670 = tpu.matmul %668, %669, %cst_577 {dimension_numbers = #tpu.dot_dimension_numbers<[1], [0], [0], [1], [0, 0, 1, 1], [], []>} : vector<16x16xbf16>, vector<16x128xbf16>, vector<16x128xf32> -> vector<16x128xf32>
    %671 = arith.maximumf %666, %670 : vector<16x128xf32>
    %c5_578 = arith.constant 5 : index
    %c0_579 = arith.constant 0 : index
    %c0_580 = arith.constant 0 : index
    %672 = vector.load %arg5[%c5_578, %c0_579, %c0_580] : memref<9x16x16xbf16, #tpu.memory_space<vmem>>, vector<1x16x16xbf16>
    %673 = vector.shape_cast %672 : vector<1x16x16xbf16> to vector<16x16xbf16>
    %674 = arith.truncf %362 : vector<16x128xf32> to vector<16x128xbf16>
    %cst_581 = arith.constant dense<0.000000e+00> : vector<16x128xf32>
    %675 = tpu.matmul %673, %674, %cst_581 {dimension_numbers = #tpu.dot_dimension_numbers<[1], [0], [0], [1], [0, 0, 1, 1], [], []>} : vector<16x16xbf16>, vector<16x128xbf16>, vector<16x128xf32> -> vector<16x128xf32>
    %676 = arith.maximumf %671, %675 : vector<16x128xf32>
    %c6_582 = arith.constant 6 : index
    %c0_583 = arith.constant 0 : index
    %c0_584 = arith.constant 0 : index
    %677 = vector.load %arg5[%c6_582, %c0_583, %c0_584] : memref<9x16x16xbf16, #tpu.memory_space<vmem>>, vector<1x16x16xbf16>
    %678 = vector.shape_cast %677 : vector<1x16x16xbf16> to vector<16x16xbf16>
    %679 = arith.truncf %362 : vector<16x128xf32> to vector<16x128xbf16>
    %cst_585 = arith.constant dense<0.000000e+00> : vector<16x128xf32>
    %680 = tpu.matmul %678, %679, %cst_585 {dimension_numbers = #tpu.dot_dimension_numbers<[1], [0], [0], [1], [0, 0, 1, 1], [], []>} : vector<16x16xbf16>, vector<16x128xbf16>, vector<16x128xf32> -> vector<16x128xf32>
    %681 = arith.maximumf %676, %680 : vector<16x128xf32>
    %c7_586 = arith.constant 7 : index
    %c0_587 = arith.constant 0 : index
    %c0_588 = arith.constant 0 : index
    %682 = vector.load %arg5[%c7_586, %c0_587, %c0_588] : memref<9x16x16xbf16, #tpu.memory_space<vmem>>, vector<1x16x16xbf16>
    %683 = vector.shape_cast %682 : vector<1x16x16xbf16> to vector<16x16xbf16>
    %684 = arith.truncf %362 : vector<16x128xf32> to vector<16x128xbf16>
    %cst_589 = arith.constant dense<0.000000e+00> : vector<16x128xf32>
    %685 = tpu.matmul %683, %684, %cst_589 {dimension_numbers = #tpu.dot_dimension_numbers<[1], [0], [0], [1], [0, 0, 1, 1], [], []>} : vector<16x16xbf16>, vector<16x128xbf16>, vector<16x128xf32> -> vector<16x128xf32>
    %686 = arith.maximumf %681, %685 : vector<16x128xf32>
    %c8_590 = arith.constant 8 : index
    %c0_591 = arith.constant 0 : index
    %c0_592 = arith.constant 0 : index
    %687 = vector.load %arg5[%c8_590, %c0_591, %c0_592] : memref<9x16x16xbf16, #tpu.memory_space<vmem>>, vector<1x16x16xbf16>
    %688 = vector.shape_cast %687 : vector<1x16x16xbf16> to vector<16x16xbf16>
    %689 = arith.truncf %362 : vector<16x128xf32> to vector<16x128xbf16>
    %cst_593 = arith.constant dense<0.000000e+00> : vector<16x128xf32>
    %690 = tpu.matmul %688, %689, %cst_593 {dimension_numbers = #tpu.dot_dimension_numbers<[1], [0], [0], [1], [0, 0, 1, 1], [], []>} : vector<16x16xbf16>, vector<16x128xbf16>, vector<16x128xf32> -> vector<16x128xf32>
    %691 = arith.maximumf %686, %690 : vector<16x128xf32>
    %c0_594 = arith.constant 0 : index
    %c0_595 = arith.constant 0 : index
    %692 = vector.load %arg28[%c0_594, %c0_595] : memref<128x64xbf16, #tpu.memory_space<vmem>>, vector<128x64xbf16>
    %693 = arith.truncf %691 : vector<16x128xf32> to vector<16x128xbf16>
    %cst_596 = arith.constant dense<0.000000e+00> : vector<16x64xf32>
    %694 = tpu.matmul %693, %692, %cst_596 {dimension_numbers = #tpu.dot_dimension_numbers<[1], [0], [0], [1], [0, 0, 1, 1], [], []>} : vector<16x128xbf16>, vector<128x64xbf16>, vector<16x64xf32> -> vector<16x64xf32>
    %c0_597 = arith.constant 0 : index
    %c0_598 = arith.constant 0 : index
    %695 = vector.load %arg29[%c0_597, %c0_598] : memref<1x64xf32, #tpu.memory_space<vmem>>, vector<1x64xf32>
    %696 = vector.broadcast %695 : vector<1x64xf32> to vector<16x64xf32>
    %697 = arith.addf %694, %696 : vector<16x64xf32>
    %cst_599 = arith.constant 0.000000e+00 : f32
    %698 = vector.broadcast %cst_599 : f32 to vector<16x64xf32>
    %699 = arith.maximumf %697, %698 : vector<16x64xf32>
    %cst_600 = arith.constant dense<0.000000e+00> : vector<64xf32>
    %700 = vector.multi_reduction <add>, %372, %cst_600 [0] : vector<16x64xf32> to vector<64xf32>
    %701 = vector.shape_cast %700 : vector<64xf32> to vector<1x64xf32>
    %cst_601 = arith.constant 1.600000e+01 : f32
    %702 = vector.broadcast %cst_601 : f32 to vector<1x64xf32>
    %703 = arith.divf %701, %702 : vector<1x64xf32>
    %cst_602 = arith.constant dense<0.000000e+00> : vector<64xf32>
    %704 = vector.multi_reduction <add>, %477, %cst_602 [0] : vector<16x64xf32> to vector<64xf32>
    %705 = vector.shape_cast %704 : vector<64xf32> to vector<1x64xf32>
    %cst_603 = arith.constant 1.600000e+01 : f32
    %706 = vector.broadcast %cst_603 : f32 to vector<1x64xf32>
    %707 = arith.divf %705, %706 : vector<1x64xf32>
    %cst_604 = arith.constant dense<0.000000e+00> : vector<64xf32>
    %708 = vector.multi_reduction <add>, %647, %cst_604 [0] : vector<16x64xf32> to vector<64xf32>
    %709 = vector.shape_cast %708 : vector<64xf32> to vector<1x64xf32>
    %cst_605 = arith.constant 1.600000e+01 : f32
    %710 = vector.broadcast %cst_605 : f32 to vector<1x64xf32>
    %711 = arith.divf %709, %710 : vector<1x64xf32>
    %cst_606 = arith.constant dense<0.000000e+00> : vector<64xf32>
    %712 = vector.multi_reduction <add>, %699, %cst_606 [0] : vector<16x64xf32> to vector<64xf32>
    %713 = vector.shape_cast %712 : vector<64xf32> to vector<1x64xf32>
    %cst_607 = arith.constant 1.600000e+01 : f32
    %714 = vector.broadcast %cst_607 : f32 to vector<1x64xf32>
    %715 = arith.divf %713, %714 : vector<1x64xf32>
    %c0_608 = arith.constant 0 : index
    %c0_609 = arith.constant 0 : index
    %c0_610 = arith.constant 0 : index
    %716 = vector.load %arg30[%c0_608, %c0_609, %c0_610] : memref<4x64x16xbf16, #tpu.memory_space<vmem>>, vector<1x64x16xbf16>
    %717 = vector.shape_cast %716 : vector<1x64x16xbf16> to vector<64x16xbf16>
    %718 = arith.truncf %703 : vector<1x64xf32> to vector<1x64xbf16>
    %cst_611 = arith.constant dense<0.000000e+00> : vector<1x16xf32>
    %719 = tpu.matmul %718, %717, %cst_611 {dimension_numbers = #tpu.dot_dimension_numbers<[1], [0], [0], [1], [0, 0, 1, 1], [], []>} : vector<1x64xbf16>, vector<64x16xbf16>, vector<1x16xf32> -> vector<1x16xf32>
    %c1_612 = arith.constant 1 : index
    %c0_613 = arith.constant 0 : index
    %c0_614 = arith.constant 0 : index
    %720 = vector.load %arg30[%c1_612, %c0_613, %c0_614] : memref<4x64x16xbf16, #tpu.memory_space<vmem>>, vector<1x64x16xbf16>
    %721 = vector.shape_cast %720 : vector<1x64x16xbf16> to vector<64x16xbf16>
    %722 = arith.truncf %707 : vector<1x64xf32> to vector<1x64xbf16>
    %cst_615 = arith.constant dense<0.000000e+00> : vector<1x16xf32>
    %723 = tpu.matmul %722, %721, %cst_615 {dimension_numbers = #tpu.dot_dimension_numbers<[1], [0], [0], [1], [0, 0, 1, 1], [], []>} : vector<1x64xbf16>, vector<64x16xbf16>, vector<1x16xf32> -> vector<1x16xf32>
    %724 = arith.addf %719, %723 : vector<1x16xf32>
    %c2_616 = arith.constant 2 : index
    %c0_617 = arith.constant 0 : index
    %c0_618 = arith.constant 0 : index
    %725 = vector.load %arg30[%c2_616, %c0_617, %c0_618] : memref<4x64x16xbf16, #tpu.memory_space<vmem>>, vector<1x64x16xbf16>
    %726 = vector.shape_cast %725 : vector<1x64x16xbf16> to vector<64x16xbf16>
    %727 = arith.truncf %711 : vector<1x64xf32> to vector<1x64xbf16>
    %cst_619 = arith.constant dense<0.000000e+00> : vector<1x16xf32>
    %728 = tpu.matmul %727, %726, %cst_619 {dimension_numbers = #tpu.dot_dimension_numbers<[1], [0], [0], [1], [0, 0, 1, 1], [], []>} : vector<1x64xbf16>, vector<64x16xbf16>, vector<1x16xf32> -> vector<1x16xf32>
    %729 = arith.addf %724, %728 : vector<1x16xf32>
    %c3_620 = arith.constant 3 : index
    %c0_621 = arith.constant 0 : index
    %c0_622 = arith.constant 0 : index
    %730 = vector.load %arg30[%c3_620, %c0_621, %c0_622] : memref<4x64x16xbf16, #tpu.memory_space<vmem>>, vector<1x64x16xbf16>
    %731 = vector.shape_cast %730 : vector<1x64x16xbf16> to vector<64x16xbf16>
    %732 = arith.truncf %715 : vector<1x64xf32> to vector<1x64xbf16>
    %cst_623 = arith.constant dense<0.000000e+00> : vector<1x16xf32>
    %733 = tpu.matmul %732, %731, %cst_623 {dimension_numbers = #tpu.dot_dimension_numbers<[1], [0], [0], [1], [0, 0, 1, 1], [], []>} : vector<1x64xbf16>, vector<64x16xbf16>, vector<1x16xf32> -> vector<1x16xf32>
    %734 = arith.addf %729, %733 : vector<1x16xf32>
    %c0_624 = arith.constant 0 : index
    %c0_625 = arith.constant 0 : index
    %735 = vector.load %arg31[%c0_624, %c0_625] : memref<1x16xf32, #tpu.memory_space<vmem>>, vector<1x16xf32>
    %736 = arith.addf %734, %735 : vector<1x16xf32>
    %cst_626 = arith.constant 0.000000e+00 : f32
    %737 = vector.broadcast %cst_626 : f32 to vector<1x16xf32>
    %738 = arith.maximumf %736, %737 : vector<1x16xf32>
    %c0_627 = arith.constant 0 : index
    %c0_628 = arith.constant 0 : index
    %c0_629 = arith.constant 0 : index
    %739 = vector.load %arg32[%c0_627, %c0_628, %c0_629] : memref<4x16x64xbf16, #tpu.memory_space<vmem>>, vector<1x16x64xbf16>
    %740 = vector.shape_cast %739 : vector<1x16x64xbf16> to vector<16x64xbf16>
    %741 = arith.truncf %738 : vector<1x16xf32> to vector<1x16xbf16>
    %cst_630 = arith.constant dense<0.000000e+00> : vector<1x64xf32>
    %742 = tpu.matmul %741, %740, %cst_630 {dimension_numbers = #tpu.dot_dimension_numbers<[1], [0], [0], [1], [0, 0, 1, 1], [], []>} : vector<1x16xbf16>, vector<16x64xbf16>, vector<1x64xf32> -> vector<1x64xf32>
    %c0_631 = arith.constant 0 : index
    %c0_632 = arith.constant 0 : index
    %c0_633 = arith.constant 0 : index
    %743 = vector.load %arg33[%c0_631, %c0_632, %c0_633] : memref<4x1x64xf32, #tpu.memory_space<vmem>>, vector<1x1x64xf32>
    %744 = vector.shape_cast %743 : vector<1x1x64xf32> to vector<1x64xf32>
    %745 = arith.addf %742, %744 : vector<1x64xf32>
    %746 = arith.negf %745 : vector<1x64xf32>
    %747 = math.exp %746 : vector<1x64xf32>
    %cst_634 = arith.constant 1.000000e+00 : f32
    %748 = vector.broadcast %cst_634 : f32 to vector<1x64xf32>
    %749 = arith.addf %748, %747 : vector<1x64xf32>
    %750 = arith.divf %748, %749 : vector<1x64xf32>
    %751 = arith.mulf %703, %750 : vector<1x64xf32>
    %c0_635 = arith.constant 0 : index
    %c0_636 = arith.constant 0 : index
    %c0_637 = arith.constant 0 : index
    %752 = vector.load %arg34[%c0_635, %c0_636, %c0_637] : memref<4x64x10xbf16, #tpu.memory_space<vmem>>, vector<1x64x10xbf16>
    %753 = vector.shape_cast %752 : vector<1x64x10xbf16> to vector<64x10xbf16>
    %754 = arith.truncf %751 : vector<1x64xf32> to vector<1x64xbf16>
    %cst_638 = arith.constant dense<0.000000e+00> : vector<1x10xf32>
    %755 = tpu.matmul %754, %753, %cst_638 {dimension_numbers = #tpu.dot_dimension_numbers<[1], [0], [0], [1], [0, 0, 1, 1], [], []>} : vector<1x64xbf16>, vector<64x10xbf16>, vector<1x10xf32> -> vector<1x10xf32>
    %c1_639 = arith.constant 1 : index
    %c0_640 = arith.constant 0 : index
    %c0_641 = arith.constant 0 : index
    %756 = vector.load %arg32[%c1_639, %c0_640, %c0_641] : memref<4x16x64xbf16, #tpu.memory_space<vmem>>, vector<1x16x64xbf16>
    %757 = vector.shape_cast %756 : vector<1x16x64xbf16> to vector<16x64xbf16>
    %758 = arith.truncf %738 : vector<1x16xf32> to vector<1x16xbf16>
    %cst_642 = arith.constant dense<0.000000e+00> : vector<1x64xf32>
    %759 = tpu.matmul %758, %757, %cst_642 {dimension_numbers = #tpu.dot_dimension_numbers<[1], [0], [0], [1], [0, 0, 1, 1], [], []>} : vector<1x16xbf16>, vector<16x64xbf16>, vector<1x64xf32> -> vector<1x64xf32>
    %c1_643 = arith.constant 1 : index
    %c0_644 = arith.constant 0 : index
    %c0_645 = arith.constant 0 : index
    %760 = vector.load %arg33[%c1_643, %c0_644, %c0_645] : memref<4x1x64xf32, #tpu.memory_space<vmem>>, vector<1x1x64xf32>
    %761 = vector.shape_cast %760 : vector<1x1x64xf32> to vector<1x64xf32>
    %762 = arith.addf %759, %761 : vector<1x64xf32>
    %763 = arith.negf %762 : vector<1x64xf32>
    %764 = math.exp %763 : vector<1x64xf32>
    %cst_646 = arith.constant 1.000000e+00 : f32
    %765 = vector.broadcast %cst_646 : f32 to vector<1x64xf32>
    %766 = arith.addf %765, %764 : vector<1x64xf32>
    %767 = arith.divf %765, %766 : vector<1x64xf32>
    %768 = arith.mulf %707, %767 : vector<1x64xf32>
    %c1_647 = arith.constant 1 : index
    %c0_648 = arith.constant 0 : index
    %c0_649 = arith.constant 0 : index
    %769 = vector.load %arg34[%c1_647, %c0_648, %c0_649] : memref<4x64x10xbf16, #tpu.memory_space<vmem>>, vector<1x64x10xbf16>
    %770 = vector.shape_cast %769 : vector<1x64x10xbf16> to vector<64x10xbf16>
    %771 = arith.truncf %768 : vector<1x64xf32> to vector<1x64xbf16>
    %cst_650 = arith.constant dense<0.000000e+00> : vector<1x10xf32>
    %772 = tpu.matmul %771, %770, %cst_650 {dimension_numbers = #tpu.dot_dimension_numbers<[1], [0], [0], [1], [0, 0, 1, 1], [], []>} : vector<1x64xbf16>, vector<64x10xbf16>, vector<1x10xf32> -> vector<1x10xf32>
    %773 = arith.addf %755, %772 : vector<1x10xf32>
    %c2_651 = arith.constant 2 : index
    %c0_652 = arith.constant 0 : index
    %c0_653 = arith.constant 0 : index
    %774 = vector.load %arg32[%c2_651, %c0_652, %c0_653] : memref<4x16x64xbf16, #tpu.memory_space<vmem>>, vector<1x16x64xbf16>
    %775 = vector.shape_cast %774 : vector<1x16x64xbf16> to vector<16x64xbf16>
    %776 = arith.truncf %738 : vector<1x16xf32> to vector<1x16xbf16>
    %cst_654 = arith.constant dense<0.000000e+00> : vector<1x64xf32>
    %777 = tpu.matmul %776, %775, %cst_654 {dimension_numbers = #tpu.dot_dimension_numbers<[1], [0], [0], [1], [0, 0, 1, 1], [], []>} : vector<1x16xbf16>, vector<16x64xbf16>, vector<1x64xf32> -> vector<1x64xf32>
    %c2_655 = arith.constant 2 : index
    %c0_656 = arith.constant 0 : index
    %c0_657 = arith.constant 0 : index
    %778 = vector.load %arg33[%c2_655, %c0_656, %c0_657] : memref<4x1x64xf32, #tpu.memory_space<vmem>>, vector<1x1x64xf32>
    %779 = vector.shape_cast %778 : vector<1x1x64xf32> to vector<1x64xf32>
    %780 = arith.addf %777, %779 : vector<1x64xf32>
    %781 = arith.negf %780 : vector<1x64xf32>
    %782 = math.exp %781 : vector<1x64xf32>
    %cst_658 = arith.constant 1.000000e+00 : f32
    %783 = vector.broadcast %cst_658 : f32 to vector<1x64xf32>
    %784 = arith.addf %783, %782 : vector<1x64xf32>
    %785 = arith.divf %783, %784 : vector<1x64xf32>
    %786 = arith.mulf %711, %785 : vector<1x64xf32>
    %c2_659 = arith.constant 2 : index
    %c0_660 = arith.constant 0 : index
    %c0_661 = arith.constant 0 : index
    %787 = vector.load %arg34[%c2_659, %c0_660, %c0_661] : memref<4x64x10xbf16, #tpu.memory_space<vmem>>, vector<1x64x10xbf16>
    %788 = vector.shape_cast %787 : vector<1x64x10xbf16> to vector<64x10xbf16>
    %789 = arith.truncf %786 : vector<1x64xf32> to vector<1x64xbf16>
    %cst_662 = arith.constant dense<0.000000e+00> : vector<1x10xf32>
    %790 = tpu.matmul %789, %788, %cst_662 {dimension_numbers = #tpu.dot_dimension_numbers<[1], [0], [0], [1], [0, 0, 1, 1], [], []>} : vector<1x64xbf16>, vector<64x10xbf16>, vector<1x10xf32> -> vector<1x10xf32>
    %791 = arith.addf %773, %790 : vector<1x10xf32>
    %c3_663 = arith.constant 3 : index
    %c0_664 = arith.constant 0 : index
    %c0_665 = arith.constant 0 : index
    %792 = vector.load %arg32[%c3_663, %c0_664, %c0_665] : memref<4x16x64xbf16, #tpu.memory_space<vmem>>, vector<1x16x64xbf16>
    %793 = vector.shape_cast %792 : vector<1x16x64xbf16> to vector<16x64xbf16>
    %794 = arith.truncf %738 : vector<1x16xf32> to vector<1x16xbf16>
    %cst_666 = arith.constant dense<0.000000e+00> : vector<1x64xf32>
    %795 = tpu.matmul %794, %793, %cst_666 {dimension_numbers = #tpu.dot_dimension_numbers<[1], [0], [0], [1], [0, 0, 1, 1], [], []>} : vector<1x16xbf16>, vector<16x64xbf16>, vector<1x64xf32> -> vector<1x64xf32>
    %c3_667 = arith.constant 3 : index
    %c0_668 = arith.constant 0 : index
    %c0_669 = arith.constant 0 : index
    %796 = vector.load %arg33[%c3_667, %c0_668, %c0_669] : memref<4x1x64xf32, #tpu.memory_space<vmem>>, vector<1x1x64xf32>
    %797 = vector.shape_cast %796 : vector<1x1x64xf32> to vector<1x64xf32>
    %798 = arith.addf %795, %797 : vector<1x64xf32>
    %799 = arith.negf %798 : vector<1x64xf32>
    %800 = math.exp %799 : vector<1x64xf32>
    %cst_670 = arith.constant 1.000000e+00 : f32
    %801 = vector.broadcast %cst_670 : f32 to vector<1x64xf32>
    %802 = arith.addf %801, %800 : vector<1x64xf32>
    %803 = arith.divf %801, %802 : vector<1x64xf32>
    %804 = arith.mulf %715, %803 : vector<1x64xf32>
    %c3_671 = arith.constant 3 : index
    %c0_672 = arith.constant 0 : index
    %c0_673 = arith.constant 0 : index
    %805 = vector.load %arg34[%c3_671, %c0_672, %c0_673] : memref<4x64x10xbf16, #tpu.memory_space<vmem>>, vector<1x64x10xbf16>
    %806 = vector.shape_cast %805 : vector<1x64x10xbf16> to vector<64x10xbf16>
    %807 = arith.truncf %804 : vector<1x64xf32> to vector<1x64xbf16>
    %cst_674 = arith.constant dense<0.000000e+00> : vector<1x10xf32>
    %808 = tpu.matmul %807, %806, %cst_674 {dimension_numbers = #tpu.dot_dimension_numbers<[1], [0], [0], [1], [0, 0, 1, 1], [], []>} : vector<1x64xbf16>, vector<64x10xbf16>, vector<1x10xf32> -> vector<1x10xf32>
    %809 = arith.addf %791, %808 : vector<1x10xf32>
    %c0_675 = arith.constant 0 : index
    %c0_676 = arith.constant 0 : index
    %810 = vector.load %arg35[%c0_675, %c0_676] : memref<1x10xf32, #tpu.memory_space<vmem>>, vector<1x10xf32>
    %811 = arith.addf %809, %810 : vector<1x10xf32>
    %812 = vector.shape_cast %811 : vector<1x10xf32> to vector<1x1x10xf32>
    %c0_677 = arith.constant 0 : index
    %c0_678 = arith.constant 0 : index
    %c0_679 = arith.constant 0 : index
    %813 = vector.load %arg36[%c0_677, %c0_678, %c0_679] : memref<1x1x10xf32, #tpu.memory_space<vmem>>, vector<1x1x10xf32>
    tpu.vector_store %arg36[%c0_677, %c0_678, %c0_679], %812 {strides = array<i32>} : memref<1x1x10xf32, #tpu.memory_space<vmem>>, vector<1x1x10xf32>,
    return
  }
  func.func @transform_0(%arg0: i32) -> (i32, i32, i32) {
    %c0_i32 = arith.constant 0 : i32
    %c0_i32_0 = arith.constant 0 : i32
    %c0_i32_1 = arith.constant 0 : i32
    return %arg0, %c0_i32, %c0_i32_0 : i32, i32, i32
  }
  func.func @transform_1(%arg0: i32) -> (i32, i32, i32) {
    %c0_i32 = arith.constant 0 : i32
    %c0_i32_0 = arith.constant 0 : i32
    %c0_i32_1 = arith.constant 0 : i32
    %c0_i32_2 = arith.constant 0 : i32
    return %c0_i32, %c0_i32_0, %c0_i32_1 : i32, i32, i32
  }
  func.func @transform_2(%arg0: i32) -> (i32, i32, i32) {
    %c0_i32 = arith.constant 0 : i32
    %c0_i32_0 = arith.constant 0 : i32
    %c0_i32_1 = arith.constant 0 : i32
    %c0_i32_2 = arith.constant 0 : i32
    return %c0_i32, %c0_i32_0, %c0_i32_1 : i32, i32, i32
  }
  func.func @transform_3(%arg0: i32) -> (i32, i32, i32) {
    %c0_i32 = arith.constant 0 : i32
    %c0_i32_0 = arith.constant 0 : i32
    %c0_i32_1 = arith.constant 0 : i32
    %c0_i32_2 = arith.constant 0 : i32
    return %c0_i32, %c0_i32_0, %c0_i32_1 : i32, i32, i32
  }
  func.func @transform_4(%arg0: i32) -> (i32, i32, i32) {
    %c0_i32 = arith.constant 0 : i32
    %c0_i32_0 = arith.constant 0 : i32
    %c0_i32_1 = arith.constant 0 : i32
    %c0_i32_2 = arith.constant 0 : i32
    return %c0_i32, %c0_i32_0, %c0_i32_1 : i32, i32, i32
  }
  func.func @transform_5(%arg0: i32) -> (i32, i32) {
    %c0_i32 = arith.constant 0 : i32
    %c0_i32_0 = arith.constant 0 : i32
    %c0_i32_1 = arith.constant 0 : i32
    return %c0_i32, %c0_i32_0 : i32, i32
  }
  func.func @transform_6(%arg0: i32) -> (i32, i32) {
    %c0_i32 = arith.constant 0 : i32
    %c0_i32_0 = arith.constant 0 : i32
    %c0_i32_1 = arith.constant 0 : i32
    return %c0_i32, %c0_i32_0 : i32, i32
  }
  func.func @transform_7(%arg0: i32) -> (i32, i32, i32) {
    %c0_i32 = arith.constant 0 : i32
    %c0_i32_0 = arith.constant 0 : i32
    %c0_i32_1 = arith.constant 0 : i32
    %c0_i32_2 = arith.constant 0 : i32
    return %c0_i32, %c0_i32_0, %c0_i32_1 : i32, i32, i32
  }
  func.func @transform_8(%arg0: i32) -> (i32, i32) {
    %c0_i32 = arith.constant 0 : i32
    %c0_i32_0 = arith.constant 0 : i32
    %c0_i32_1 = arith.constant 0 : i32
    return %c0_i32, %c0_i32_0 : i32, i32
  }
  func.func @transform_9(%arg0: i32) -> (i32, i32, i32) {
    %c0_i32 = arith.constant 0 : i32
    %c0_i32_0 = arith.constant 0 : i32
    %c0_i32_1 = arith.constant 0 : i32
    %c0_i32_2 = arith.constant 0 : i32
    return %c0_i32, %c0_i32_0, %c0_i32_1 : i32, i32, i32
  }
  func.func @transform_10(%arg0: i32) -> (i32, i32) {
    %c0_i32 = arith.constant 0 : i32
    %c0_i32_0 = arith.constant 0 : i32
    %c0_i32_1 = arith.constant 0 : i32
    return %c0_i32, %c0_i32_0 : i32, i32
  }
  func.func @transform_11(%arg0: i32) -> (i32, i32) {
    %c0_i32 = arith.constant 0 : i32
    %c0_i32_0 = arith.constant 0 : i32
    %c0_i32_1 = arith.constant 0 : i32
    return %c0_i32, %c0_i32_0 : i32, i32
  }
  func.func @transform_12(%arg0: i32) -> (i32, i32) {
    %c0_i32 = arith.constant 0 : i32
    %c0_i32_0 = arith.constant 0 : i32
    %c0_i32_1 = arith.constant 0 : i32
    return %c0_i32, %c0_i32_0 : i32, i32
  }
  func.func @transform_13(%arg0: i32) -> (i32, i32, i32) {
    %c0_i32 = arith.constant 0 : i32
    %c0_i32_0 = arith.constant 0 : i32
    %c0_i32_1 = arith.constant 0 : i32
    %c0_i32_2 = arith.constant 0 : i32
    return %c0_i32, %c0_i32_0, %c0_i32_1 : i32, i32, i32
  }
  func.func @transform_14(%arg0: i32) -> (i32, i32) {
    %c0_i32 = arith.constant 0 : i32
    %c0_i32_0 = arith.constant 0 : i32
    %c0_i32_1 = arith.constant 0 : i32
    return %c0_i32, %c0_i32_0 : i32, i32
  }
  func.func @transform_15(%arg0: i32) -> (i32, i32, i32) {
    %c0_i32 = arith.constant 0 : i32
    %c0_i32_0 = arith.constant 0 : i32
    %c0_i32_1 = arith.constant 0 : i32
    %c0_i32_2 = arith.constant 0 : i32
    return %c0_i32, %c0_i32_0, %c0_i32_1 : i32, i32, i32
  }
  func.func @transform_16(%arg0: i32) -> (i32, i32) {
    %c0_i32 = arith.constant 0 : i32
    %c0_i32_0 = arith.constant 0 : i32
    %c0_i32_1 = arith.constant 0 : i32
    return %c0_i32, %c0_i32_0 : i32, i32
  }
  func.func @transform_17(%arg0: i32) -> (i32, i32) {
    %c0_i32 = arith.constant 0 : i32
    %c0_i32_0 = arith.constant 0 : i32
    %c0_i32_1 = arith.constant 0 : i32
    return %c0_i32, %c0_i32_0 : i32, i32
  }
  func.func @transform_18(%arg0: i32) -> (i32, i32) {
    %c0_i32 = arith.constant 0 : i32
    %c0_i32_0 = arith.constant 0 : i32
    %c0_i32_1 = arith.constant 0 : i32
    return %c0_i32, %c0_i32_0 : i32, i32
  }
  func.func @transform_19(%arg0: i32) -> (i32, i32, i32) {
    %c0_i32 = arith.constant 0 : i32
    %c0_i32_0 = arith.constant 0 : i32
    %c0_i32_1 = arith.constant 0 : i32
    %c0_i32_2 = arith.constant 0 : i32
    return %c0_i32, %c0_i32_0, %c0_i32_1 : i32, i32, i32
  }
  func.func @transform_20(%arg0: i32) -> (i32, i32, i32) {
    %c0_i32 = arith.constant 0 : i32
    %c0_i32_0 = arith.constant 0 : i32
    %c0_i32_1 = arith.constant 0 : i32
    %c0_i32_2 = arith.constant 0 : i32
    return %c0_i32, %c0_i32_0, %c0_i32_1 : i32, i32, i32
  }
  func.func @transform_21(%arg0: i32) -> (i32, i32, i32) {
    %c0_i32 = arith.constant 0 : i32
    %c0_i32_0 = arith.constant 0 : i32
    %c0_i32_1 = arith.constant 0 : i32
    %c0_i32_2 = arith.constant 0 : i32
    return %c0_i32, %c0_i32_0, %c0_i32_1 : i32, i32, i32
  }
  func.func @transform_22(%arg0: i32) -> (i32, i32) {
    %c0_i32 = arith.constant 0 : i32
    %c0_i32_0 = arith.constant 0 : i32
    %c0_i32_1 = arith.constant 0 : i32
    return %c0_i32, %c0_i32_0 : i32, i32
  }
  func.func @transform_23(%arg0: i32) -> (i32, i32, i32) {
    %c0_i32 = arith.constant 0 : i32
    %c0_i32_0 = arith.constant 0 : i32
    %c0_i32_1 = arith.constant 0 : i32
    %c0_i32_2 = arith.constant 0 : i32
    return %c0_i32, %c0_i32_0, %c0_i32_1 : i32, i32, i32
  }
  func.func @transform_24(%arg0: i32) -> (i32, i32) {
    %c0_i32 = arith.constant 0 : i32
    %c0_i32_0 = arith.constant 0 : i32
    %c0_i32_1 = arith.constant 0 : i32
    return %c0_i32, %c0_i32_0 : i32, i32
  }
  func.func @transform_25(%arg0: i32) -> (i32, i32, i32) {
    %c0_i32 = arith.constant 0 : i32
    %c0_i32_0 = arith.constant 0 : i32
    %c0_i32_1 = arith.constant 0 : i32
    %c0_i32_2 = arith.constant 0 : i32
    return %c0_i32, %c0_i32_0, %c0_i32_1 : i32, i32, i32
  }
  func.func @transform_26(%arg0: i32) -> (i32, i32) {
    %c0_i32 = arith.constant 0 : i32
    %c0_i32_0 = arith.constant 0 : i32
    %c0_i32_1 = arith.constant 0 : i32
    return %c0_i32, %c0_i32_0 : i32, i32
  }
  func.func @transform_27(%arg0: i32) -> (i32, i32) {
    %c0_i32 = arith.constant 0 : i32
    %c0_i32_0 = arith.constant 0 : i32
    %c0_i32_1 = arith.constant 0 : i32
    return %c0_i32, %c0_i32_0 : i32, i32
  }
  func.func @transform_28(%arg0: i32) -> (i32, i32) {
    %c0_i32 = arith.constant 0 : i32
    %c0_i32_0 = arith.constant 0 : i32
    %c0_i32_1 = arith.constant 0 : i32
    return %c0_i32, %c0_i32_0 : i32, i32
  }
  func.func @transform_29(%arg0: i32) -> (i32, i32, i32) {
    %c0_i32 = arith.constant 0 : i32
    %c0_i32_0 = arith.constant 0 : i32
    %c0_i32_1 = arith.constant 0 : i32
    %c0_i32_2 = arith.constant 0 : i32
    return %c0_i32, %c0_i32_0, %c0_i32_1 : i32, i32, i32
  }
  func.func @transform_30(%arg0: i32) -> (i32, i32) {
    %c0_i32 = arith.constant 0 : i32
    %c0_i32_0 = arith.constant 0 : i32
    %c0_i32_1 = arith.constant 0 : i32
    return %c0_i32, %c0_i32_0 : i32, i32
  }
  func.func @transform_31(%arg0: i32) -> (i32, i32, i32) {
    %c0_i32 = arith.constant 0 : i32
    %c0_i32_0 = arith.constant 0 : i32
    %c0_i32_1 = arith.constant 0 : i32
    %c0_i32_2 = arith.constant 0 : i32
    return %c0_i32, %c0_i32_0, %c0_i32_1 : i32, i32, i32
  }
  func.func @transform_32(%arg0: i32) -> (i32, i32, i32) {
    %c0_i32 = arith.constant 0 : i32
    %c0_i32_0 = arith.constant 0 : i32
    %c0_i32_1 = arith.constant 0 : i32
    %c0_i32_2 = arith.constant 0 : i32
    return %c0_i32, %c0_i32_0, %c0_i32_1 : i32, i32, i32
  }
  func.func @transform_33(%arg0: i32) -> (i32, i32, i32) {
    %c0_i32 = arith.constant 0 : i32
    %c0_i32_0 = arith.constant 0 : i32
    %c0_i32_1 = arith.constant 0 : i32
    %c0_i32_2 = arith.constant 0 : i32
    return %c0_i32, %c0_i32_0, %c0_i32_1 : i32, i32, i32
  }
  func.func @transform_34(%arg0: i32) -> (i32, i32) {
    %c0_i32 = arith.constant 0 : i32
    %c0_i32_0 = arith.constant 0 : i32
    %c0_i32_1 = arith.constant 0 : i32
    return %c0_i32, %c0_i32_0 : i32, i32
  }
  func.func @transform_35(%arg0: i32) -> (i32, i32, i32) {
    %c0_i32 = arith.constant 0 : i32
    %c0_i32_0 = arith.constant 0 : i32
    %c0_i32_1 = arith.constant 0 : i32
    return %arg0, %c0_i32, %c0_i32_0 : i32, i32, i32
  }
}

</mosaic_0001>

<llo_original>
// kernel: ms_ran_forward.1
$region0: #{ms_ran_forward.1}
  #allocation0 [shape = 'u32[]', space=smem, size = 0x4, offset = 0x4, fixed_abs, tag = 'smem constant byte address 0x4 - core index']
  #allocation1 [shape = 'u32[72,128]{1,0:T(1,128)}', space=vmem, size = 0x9000, scoped, tag = 'internal scratch']
  %s0 = inlined_call_operand.smem [shape: u32[36], index: -1, kind: input, shape index: {}]
  %s1 = sld [smem:[%s0]]
  %s2 = scalar_lea.smem %s0, 1
  %s3 = sld [smem:[%s2]]
  %s4 = scalar_lea.smem %s0, 2
  %s5 = sld [smem:[%s4]]
  %s6 = scalar_lea.smem %s0, 3
  %s7 = sld [smem:[%s6]]
  %s8 = scalar_lea.smem %s0, 4
  %s9 = sld [smem:[%s8]]
  %s10 = scalar_lea.smem %s0, 5
  %s11 = sld [smem:[%s10]]
  %s12 = scalar_lea.smem %s0, 6
  %s13 = sld [smem:[%s12]]
  %s14 = scalar_lea.smem %s0, 7
  %s15 = sld [smem:[%s14]]
  %s16 = scalar_lea.smem %s0, 8
  %s17 = sld [smem:[%s16]]
  %s18 = scalar_lea.smem %s0, 9
  %s19 = sld [smem:[%s18]]
  %s20 = scalar_lea.smem %s0, 10
  %s21 = sld [smem:[%s20]]
  %s22 = scalar_lea.smem %s0, 11
  %s23 = sld [smem:[%s22]]
  %s24 = scalar_lea.smem %s0, 12
  %s25 = sld [smem:[%s24]]
  %s26 = scalar_lea.smem %s0, 13
  %s27 = sld [smem:[%s26]]
  %s28 = scalar_lea.smem %s0, 14
  %s29 = sld [smem:[%s28]]
  %s30 = scalar_lea.smem %s0, 15
  %s31 = sld [smem:[%s30]]
  %s32 = scalar_lea.smem %s0, 16
  %s33 = sld [smem:[%s32]]
  %s34 = scalar_lea.smem %s0, 17
  %s35 = sld [smem:[%s34]]
  %s36 = scalar_lea.smem %s0, 18
  %s37 = sld [smem:[%s36]]
  %s38 = scalar_lea.smem %s0, 19
  %s39 = sld [smem:[%s38]]
  %s40 = scalar_lea.smem %s0, 20
  %s41 = sld [smem:[%s40]]
  %s42 = scalar_lea.smem %s0, 21
  %s43 = sld [smem:[%s42]]
  %s44 = scalar_lea.smem %s0, 22
  %s45 = sld [smem:[%s44]]
  %s46 = scalar_lea.smem %s0, 23
  %s47 = sld [smem:[%s46]]
  %s48 = scalar_lea.smem %s0, 24
  %s49 = sld [smem:[%s48]]
  %s50 = scalar_lea.smem %s0, 25
  %s51 = sld [smem:[%s50]]
  %s52 = scalar_lea.smem %s0, 26
  %s53 = sld [smem:[%s52]]
  %s54 = scalar_lea.smem %s0, 27
  %s55 = sld [smem:[%s54]]
  %s56 = scalar_lea.smem %s0, 28
  %s57 = sld [smem:[%s56]]
  %s58 = scalar_lea.smem %s0, 29
  %s59 = sld [smem:[%s58]]
  %s60 = scalar_lea.smem %s0, 30
  %s61 = sld [smem:[%s60]]
  %s62 = scalar_lea.smem %s0, 31
  %s63 = sld [smem:[%s62]]
  %s64 = scalar_lea.smem %s0, 32
  %s65 = sld [smem:[%s64]]
  %s66 = scalar_lea.smem %s0, 33
  %s67 = sld [smem:[%s66]]
  %s68 = scalar_lea.smem %s0, 34
  %s69 = sld [smem:[%s68]]
  %s70 = scalar_lea.smem %s0, 35
  %s71 = sld [smem:[%s70]]
  %s72 = sld [smem:[#allocation0]]
  $region193: #{ms_ran_forward.1} parent=0
    _
  %s74 = ssub.s32 1, %s72
  %s75 = scalar_select 0, %s74, %s72
  $region1: #{ms_ran_forward.1} parent=0
    #allocation2 [shape = 'u8[147456]{0}', space=vmem, size = 0x24000, scoped, tag = 'input window, operand 9, single buffered']
    #allocation3 [shape = 's32[2]{0}', space=sflag, size = 0x8, scoped, tag = 'scoped memory for ms_ran_forward.1']
    #allocation4 [shape = 's32[2]{0}', space=sflag, size = 0x8, scoped, tag = 'scoped memory for ms_ran_forward.1']
    #allocation5 [shape = 'u8[147456]{0}', space=vmem, size = 0x24000, scoped, tag = 'input window, operand 13, single buffered']
    #allocation6 [shape = 's32[1]{0}', space=sflag, size = 0x4, scoped, tag = 'scoped memory for ms_ran_forward.1']
    #allocation7 [shape = 'u8[147456]{0}', space=vmem, size = 0x24000, scoped, tag = 'input window, operand 21, single buffered']
    #allocation8 [shape = 'u8[147456]{0}', space=vmem, size = 0x24000, scoped, tag = 'input window, operand 23, single buffered']
    #allocation9 [shape = 's32[1]{0}', space=sflag, size = 0x4, scoped, tag = 'scoped memory for ms_ran_forward.1']
    #allocation10 [shape = 'u8[147456]{0}', space=vmem, size = 0x24000, scoped, tag = 'input window, operand 25, single buffered']
    #allocation11 [shape = 'u8[1024]{0}', space=vmem, size = 0x400, scoped, tag = 'output window, operand 0']
    %76 = vsyncpa [#allocation3], 0
    %77 = vsyncpa [#allocation6], 0
    %78 = vsyncpa [#allocation9], 0
    %79 = vsyncpa [#allocation4], 0
    %s80 = scalar_lea.sflag [#allocation4], 1
    %81 = vsyncpa %s80, 0
    loop: start=0, step=1, limit=4
    $region2: #{ms_ran_forward.1} parent=1 // loop_pre_header
      _
    $region3: #{ms_ran_forward.1} parent=1 // loop_header
      %s83 = sphi 0, %s87
      %p84 = scmp.ge.s32.totalorder %s83, 4
      %s93 = sphi 0, %s95
      %s96 = sphi 0, %s93
      %s97 = sphi 0, %s96
      %s113 = sphi 0, %s97
      %s117 = sphi 0, %s117
      %s119 = sphi 0, %s117
      %s120 = sphi 0, %s119
      %s134 = sphi 0, %s120
      %s138 = sphi 0, %s138
      %s140 = sphi 0, %s138
      %s141 = sphi 0, %s140
      %s155 = sphi 0, %s141
      %s159 = sphi 0, %s159
      %s161 = sphi 0, %s159
      %s162 = sphi 0, %s161
      %s176 = sphi 0, %s162
      %s180 = sphi 0, %s180
      %s182 = sphi 0, %s180
      %s183 = sphi 0, %s182
      %s197 = sphi 0, %s183
      %s201 = sphi 0, %s201
      %s203 = sphi 0, %s201
      %s204 = sphi 0, %s203
      %s218 = sphi 0, %s204
      %s222 = sphi 0, %s222
      %s224 = sphi 0, %s222
      %s225 = sphi 0, %s224
      %s239 = sphi 0, %s225
      %s243 = sphi 0, %s243
      %s245 = sphi 0, %s243
      %s246 = sphi 0, %s245
      %s260 = sphi 0, %s246
      %s264 = sphi 0, %s264
      %s266 = sphi 0, %s264
      %s267 = sphi 0, %s266
      %s281 = sphi 0, %s267
      %s285 = sphi 0, %s285
      %s287 = sphi 0, %s285
      %s288 = sphi 0, %s287
      %s302 = sphi 0, %s288
      %s306 = sphi 0, %s306
      %s308 = sphi 0, %s306
      %s309 = sphi 0, %s308
      %s323 = sphi 0, %s309
      %s327 = sphi 0, %s327
      %s329 = sphi 0, %s327
      %s330 = sphi 0, %s329
      %s344 = sphi 0, %s330
      %s348 = sphi 0, %s348
      %s350 = sphi 0, %s348
      %s351 = sphi 0, %s350
      %s365 = sphi 0, %s351
      %s369 = sphi 0, %s369
      %s371 = sphi 0, %s369
      %s372 = sphi 0, %s371
      %s386 = sphi 0, %s372
      %s390 = sphi 0, %s390
      %s392 = sphi 0, %s390
      %s393 = sphi 0, %s392
      %s407 = sphi 0, %s393
      %s411 = sphi 0, %s411
      %s413 = sphi 0, %s411
      %s414 = sphi 0, %s413
      %s428 = sphi 0, %s414
      %s432 = sphi 0, %s432
      %s434 = sphi 0, %s432
      %s435 = sphi 0, %s434
      %s449 = sphi 0, %s435
      %s453 = sphi 0, %s453
      %s455 = sphi 0, %s453
      %s456 = sphi 0, %s455
      %s470 = sphi 0, %s456
      %s474 = sphi 0, %s474
      %s476 = sphi 0, %s474
      %s477 = sphi 0, %s476
      %s491 = sphi 0, %s477
      %s495 = sphi 0, %s495
      %s497 = sphi 0, %s495
      %s498 = sphi 0, %s497
      %s512 = sphi 0, %s498
      %s516 = sphi 0, %s516
      %s518 = sphi 0, %s516
      %s519 = sphi 0, %s518
      %s533 = sphi 0, %s519
      %s537 = sphi 0, %s537
      %s539 = sphi 0, %s537
      %s540 = sphi 0, %s539
      %s554 = sphi 0, %s540
      %s558 = sphi 0, %s558
      %s560 = sphi 0, %s558
      %s561 = sphi 0, %s560
      %s575 = sphi 0, %s561
      %s579 = sphi 0, %s579
      %s581 = sphi 0, %s579
      %s582 = sphi 0, %s581
      %s596 = sphi 0, %s582
      %s600 = sphi 0, %s600
      %s602 = sphi 0, %s600
      %s603 = sphi 0, %s602
      %s617 = sphi 0, %s603
      %s621 = sphi 0, %s621
      %s623 = sphi 0, %s621
      %s624 = sphi 0, %s623
      %s638 = sphi 0, %s624
      %s642 = sphi 0, %s642
      %s644 = sphi 0, %s642
      %s645 = sphi 0, %s644
      %s659 = sphi 0, %s645
      %s663 = sphi 0, %s663
      %s665 = sphi 0, %s663
      %s666 = sphi 0, %s665
      %s680 = sphi 0, %s666
      %s684 = sphi 0, %s684
      %s686 = sphi 0, %s684
      %s687 = sphi 0, %s686
      %s701 = sphi 0, %s687
      %s705 = sphi 0, %s705
      %s707 = sphi 0, %s705
      %s708 = sphi 0, %s707
      %s722 = sphi 0, %s708
      %s726 = sphi 0, %s726
      %s728 = sphi 0, %s726
      %s729 = sphi 0, %s728
      %s743 = sphi 0, %s729
      %s747 = sphi 0, %s747
      %s749 = sphi 0, %s747
      %s750 = sphi 0, %s749
      %s764 = sphi 0, %s750
      %s768 = sphi 0, %s768
      %s770 = sphi 0, %s768
      %s771 = sphi 0, %s770
      %s785 = sphi 0, %s771
      %s789 = sphi 0, %s789
      %s791 = sphi 0, %s789
      %s792 = sphi 0, %s791
      %s806 = sphi 0, %s792
      %s810 = sphi 0, %s810
      %s812 = sphi 0, %s810
      %s813 = sphi 0, %s812
      %s827 = sphi 0, %s813
      %s833 = sphi 0, %s835
      %s836 = sphi 0, %s833
      %s837 = sphi 0, %s836
      %s853 = sphi 0, %s837
    $region4: #{ms_ran_forward.1} parent=1 // loop_header_branch
      %86 = sbr.rel (%p84) target = $region8
    $region5: #{ms_ran_forward.1} parent=1 // loop_body
      %s88 = ssub.s32 %s83, 1
      %s89 = ssub.s32 %s83, 2
      %s90 = sadd.s32 %s83, 1
      %s91 = ssub.s32 %s83, %s90
      %p92 = scmp.eq.s32.totalorder %s91, 0
      %s94 = sadd.s32 %s93, 1
      %s95 = scalar_select %p92, %s93, %s94
      %p98 = pneg %p92
      %p99 = scmp.eq.s32.totalorder %s83, 1
      %p100 = por %p98, %p99
      %p101 = scmp.ne.s32.totalorder %s93, %s96
      %p102 = scmp.eq.s32.totalorder %s83, 0
      %p103 = por %p101, %p102
      %p104 = scmp.ne.s32.totalorder %s93, %s96
      %p105 = scmp.eq.s32.totalorder %s88, 1
      %p106 = por %p104, %p105
      %p107 = scmp.ne.s32.totalorder %s96, %s97
      %p108 = scmp.eq.s32.totalorder %s88, 0
      %p109 = por %p107, %p108
      %p110 = scmp.ne.s32.totalorder %s96, %s97
      %p111 = scmp.eq.s32.totalorder %s89, 1
      %p112 = por %p110, %p111
      %p114 = scmp.ne.s32.totalorder %s97, %s113
      %p115 = scmp.eq.s32.totalorder %s89, 0
      %p116 = por %p114, %p115
      %s118 = sadd.s32 %s117, 1
      %p121 = scmp.eq.s32.totalorder %s83, 1
      %p122 = scmp.ne.s32.totalorder %s117, %s119
      %p123 = scmp.eq.s32.totalorder %s83, 0
      %p124 = por %p122, %p123
      %p125 = scmp.ne.s32.totalorder %s117, %s119
      %p126 = scmp.eq.s32.totalorder %s88, 1
      %p127 = por %p125, %p126
      %p128 = scmp.ne.s32.totalorder %s119, %s120
      %p129 = scmp.eq.s32.totalorder %s88, 0
      %p130 = por %p128, %p129
      %p131 = scmp.ne.s32.totalorder %s119, %s120
      %p132 = scmp.eq.s32.totalorder %s89, 1
      %p133 = por %p131, %p132
      %p135 = scmp.ne.s32.totalorder %s120, %s134
      %p136 = scmp.eq.s32.totalorder %s89, 0
      %p137 = por %p135, %p136
      %s139 = sadd.s32 %s138, 1
      %p142 = scmp.eq.s32.totalorder %s83, 1
      %p143 = scmp.ne.s32.totalorder %s138, %s140
      %p144 = scmp.eq.s32.totalorder %s83, 0
      %p145 = por %p143, %p144
      %p146 = scmp.ne.s32.totalorder %s138, %s140
      %p147 = scmp.eq.s32.totalorder %s88, 1
      %p148 = por %p146, %p147
      %p149 = scmp.ne.s32.totalorder %s140, %s141
      %p150 = scmp.eq.s32.totalorder %s88, 0
      %p151 = por %p149, %p150
      %p152 = scmp.ne.s32.totalorder %s140, %s141
      %p153 = scmp.eq.s32.totalorder %s89, 1
      %p154 = por %p152, %p153
      %p156 = scmp.ne.s32.totalorder %s141, %s155
      %p157 = scmp.eq.s32.totalorder %s89, 0
      %p158 = por %p156, %p157
      %s160 = sadd.s32 %s159, 1
      %p163 = scmp.eq.s32.totalorder %s83, 1
      %p164 = scmp.ne.s32.totalorder %s159, %s161
      %p165 = scmp.eq.s32.totalorder %s83, 0
      %p166 = por %p164, %p165
      %p167 = scmp.ne.s32.totalorder %s159, %s161
      %p168 = scmp.eq.s32.totalorder %s88, 1
      %p169 = por %p167, %p168
      %p170 = scmp.ne.s32.totalorder %s161, %s162
      %p171 = scmp.eq.s32.totalorder %s88, 0
      %p172 = por %p170, %p171
      %p173 = scmp.ne.s32.totalorder %s161, %s162
      %p174 = scmp.eq.s32.totalorder %s89, 1
      %p175 = por %p173, %p174
      %p177 = scmp.ne.s32.totalorder %s162, %s176
      %p178 = scmp.eq.s32.totalorder %s89, 0
      %p179 = por %p177, %p178
      %s181 = sadd.s32 %s180, 1
      %p184 = scmp.eq.s32.totalorder %s83, 1
      %p185 = scmp.ne.s32.totalorder %s180, %s182
      %p186 = scmp.eq.s32.totalorder %s83, 0
      %p187 = por %p185, %p186
      %p188 = scmp.ne.s32.totalorder %s180, %s182
      %p189 = scmp.eq.s32.totalorder %s88, 1
      %p190 = por %p188, %p189
      %p191 = scmp.ne.s32.totalorder %s182, %s183
      %p192 = scmp.eq.s32.totalorder %s88, 0
      %p193 = por %p191, %p192
      %p194 = scmp.ne.s32.totalorder %s182, %s183
      %p195 = scmp.eq.s32.totalorder %s89, 1
      %p196 = por %p194, %p195
      %p198 = scmp.ne.s32.totalorder %s183, %s197
      %p199 = scmp.eq.s32.totalorder %s89, 0
      %p200 = por %p198, %p199
      %s202 = sadd.s32 %s201, 1
      %p205 = scmp.eq.s32.totalorder %s83, 1
      %p206 = scmp.ne.s32.totalorder %s201, %s203
      %p207 = scmp.eq.s32.totalorder %s83, 0
      %p208 = por %p206, %p207
      %p209 = scmp.ne.s32.totalorder %s201, %s203
      %p210 = scmp.eq.s32.totalorder %s88, 1
      %p211 = por %p209, %p210
      %p212 = scmp.ne.s32.totalorder %s203, %s204
      %p213 = scmp.eq.s32.totalorder %s88, 0
      %p214 = por %p212, %p213
      %p215 = scmp.ne.s32.totalorder %s203, %s204
      %p216 = scmp.eq.s32.totalorder %s89, 1
      %p217 = por %p215, %p216
      %p219 = scmp.ne.s32.totalorder %s204, %s218
      %p220 = scmp.eq.s32.totalorder %s89, 0
      %p221 = por %p219, %p220
      %s223 = sadd.s32 %s222, 1
      %p226 = scmp.eq.s32.totalorder %s83, 1
      %p227 = scmp.ne.s32.totalorder %s222, %s224
      %p228 = scmp.eq.s32.totalorder %s83, 0
      %p229 = por %p227, %p228
      %p230 = scmp.ne.s32.totalorder %s222, %s224
      %p231 = scmp.eq.s32.totalorder %s88, 1
      %p232 = por %p230, %p231
      %p233 = scmp.ne.s32.totalorder %s224, %s225
      %p234 = scmp.eq.s32.totalorder %s88, 0
      %p235 = por %p233, %p234
      %p236 = scmp.ne.s32.totalorder %s224, %s225
      %p237 = scmp.eq.s32.totalorder %s89, 1
      %p238 = por %p236, %p237
      %p240 = scmp.ne.s32.totalorder %s225, %s239
      %p241 = scmp.eq.s32.totalorder %s89, 0
      %p242 = por %p240, %p241
      %s244 = sadd.s32 %s243, 1
      %p247 = scmp.eq.s32.totalorder %s83, 1
      %p248 = scmp.ne.s32.totalorder %s243, %s245
      %p249 = scmp.eq.s32.totalorder %s83, 0
      %p250 = por %p248, %p249
      %p251 = scmp.ne.s32.totalorder %s243, %s245
      %p252 = scmp.eq.s32.totalorder %s88, 1
      %p253 = por %p251, %p252
      %p254 = scmp.ne.s32.totalorder %s245, %s246
      %p255 = scmp.eq.s32.totalorder %s88, 0
      %p256 = por %p254, %p255
      %p257 = scmp.ne.s32.totalorder %s245, %s246
      %p258 = scmp.eq.s32.totalorder %s89, 1
      %p259 = por %p257, %p258
      %p261 = scmp.ne.s32.totalorder %s246, %s260
      %p262 = scmp.eq.s32.totalorder %s89, 0
      %p263 = por %p261, %p262
      %s265 = sadd.s32 %s264, 1
      %p268 = scmp.eq.s32.totalorder %s83, 1
      %p269 = scmp.ne.s32.totalorder %s264, %s266
      %p270 = scmp.eq.s32.totalorder %s83, 0
      %p271 = por %p269, %p270
      %p272 = scmp.ne.s32.totalorder %s264, %s266
      %p273 = scmp.eq.s32.totalorder %s88, 1
      %p274 = por %p272, %p273
      %p275 = scmp.ne.s32.totalorder %s266, %s267
      %p276 = scmp.eq.s32.totalorder %s88, 0
      %p277 = por %p275, %p276
      %p278 = scmp.ne.s32.totalorder %s266, %s267
      %p279 = scmp.eq.s32.totalorder %s89, 1
      %p280 = por %p278, %p279
      %p282 = scmp.ne.s32.totalorder %s267, %s281
      %p283 = scmp.eq.s32.totalorder %s89, 0
      %p284 = por %p282, %p283
      %s286 = sadd.s32 %s285, 1
      %p289 = scmp.eq.s32.totalorder %s83, 1
      %p290 = scmp.ne.s32.totalorder %s285, %s287
      %p291 = scmp.eq.s32.totalorder %s83, 0
      %p292 = por %p290, %p291
      %p293 = scmp.ne.s32.totalorder %s285, %s287
      %p294 = scmp.eq.s32.totalorder %s88, 1
      %p295 = por %p293, %p294
      %p296 = scmp.ne.s32.totalorder %s287, %s288
      %p297 = scmp.eq.s32.totalorder %s88, 0
      %p298 = por %p296, %p297
      %p299 = scmp.ne.s32.totalorder %s287, %s288
      %p300 = scmp.eq.s32.totalorder %s89, 1
      %p301 = por %p299, %p300
      %p303 = scmp.ne.s32.totalorder %s288, %s302
      %p304 = scmp.eq.s32.totalorder %s89, 0
      %p305 = por %p303, %p304
      %s307 = sadd.s32 %s306, 1
      %p310 = scmp.eq.s32.totalorder %s83, 1
      %p311 = scmp.ne.s32.totalorder %s306, %s308
      %p312 = scmp.eq.s32.totalorder %s83, 0
      %p313 = por %p311, %p312
      %p314 = scmp.ne.s32.totalorder %s306, %s308
      %p315 = scmp.eq.s32.totalorder %s88, 1
      %p316 = por %p314, %p315
      %p317 = scmp.ne.s32.totalorder %s308, %s309
      %p318 = scmp.eq.s32.totalorder %s88, 0
      %p319 = por %p317, %p318
      %p320 = scmp.ne.s32.totalorder %s308, %s309
      %p321 = scmp.eq.s32.totalorder %s89, 1
      %p322 = por %p320, %p321
      %p324 = scmp.ne.s32.totalorder %s309, %s323
      %p325 = scmp.eq.s32.totalorder %s89, 0
      %p326 = por %p324, %p325
      %s328 = sadd.s32 %s327, 1
      %p331 = scmp.eq.s32.totalorder %s83, 1
      %p332 = scmp.ne.s32.totalorder %s327, %s329
      %p333 = scmp.eq.s32.totalorder %s83, 0
      %p334 = por %p332, %p333
      %p335 = scmp.ne.s32.totalorder %s327, %s329
      %p336 = scmp.eq.s32.totalorder %s88, 1
      %p337 = por %p335, %p336
      %p338 = scmp.ne.s32.totalorder %s329, %s330
      %p339 = scmp.eq.s32.totalorder %s88, 0
      %p340 = por %p338, %p339
      %p341 = scmp.ne.s32.totalorder %s329, %s330
      %p342 = scmp.eq.s32.totalorder %s89, 1
      %p343 = por %p341, %p342
      %p345 = scmp.ne.s32.totalorder %s330, %s344
      %p346 = scmp.eq.s32.totalorder %s89, 0
      %p347 = por %p345, %p346
      %s349 = sadd.s32 %s348, 1
      %p352 = scmp.eq.s32.totalorder %s83, 1
      %p353 = scmp.ne.s32.totalorder %s348, %s350
      %p354 = scmp.eq.s32.totalorder %s83, 0
      %p355 = por %p353, %p354
      %p356 = scmp.ne.s32.totalorder %s348, %s350
      %p357 = scmp.eq.s32.totalorder %s88, 1
      %p358 = por %p356, %p357
      %p359 = scmp.ne.s32.totalorder %s350, %s351
      %p360 = scmp.eq.s32.totalorder %s88, 0
      %p361 = por %p359, %p360
      %p362 = scmp.ne.s32.totalorder %s350, %s351
      %p363 = scmp.eq.s32.totalorder %s89, 1
      %p364 = por %p362, %p363
      %p366 = scmp.ne.s32.totalorder %s351, %s365
      %p367 = scmp.eq.s32.totalorder %s89, 0
      %p368 = por %p366, %p367
      %s370 = sadd.s32 %s369, 1
      %p373 = scmp.eq.s32.totalorder %s83, 1
      %p374 = scmp.ne.s32.totalorder %s369, %s371
      %p375 = scmp.eq.s32.totalorder %s83, 0
      %p376 = por %p374, %p375
      %p377 = scmp.ne.s32.totalorder %s369, %s371
      %p378 = scmp.eq.s32.totalorder %s88, 1
      %p379 = por %p377, %p378
      %p380 = scmp.ne.s32.totalorder %s371, %s372
      %p381 = scmp.eq.s32.totalorder %s88, 0
      %p382 = por %p380, %p381
      %p383 = scmp.ne.s32.totalorder %s371, %s372
      %p384 = scmp.eq.s32.totalorder %s89, 1
      %p385 = por %p383, %p384
      %p387 = scmp.ne.s32.totalorder %s372, %s386
      %p388 = scmp.eq.s32.totalorder %s89, 0
      %p389 = por %p387, %p388
      %s391 = sadd.s32 %s390, 1
      %p394 = scmp.eq.s32.totalorder %s83, 1
      %p395 = scmp.ne.s32.totalorder %s390, %s392
      %p396 = scmp.eq.s32.totalorder %s83, 0
      %p397 = por %p395, %p396
      %p398 = scmp.ne.s32.totalorder %s390, %s392
      %p399 = scmp.eq.s32.totalorder %s88, 1
      %p400 = por %p398, %p399
      %p401 = scmp.ne.s32.totalorder %s392, %s393
      %p402 = scmp.eq.s32.totalorder %s88, 0
      %p403 = por %p401, %p402
      %p404 = scmp.ne.s32.totalorder %s392, %s393
      %p405 = scmp.eq.s32.totalorder %s89, 1
      %p406 = por %p404, %p405
      %p408 = scmp.ne.s32.totalorder %s393, %s407
      %p409 = scmp.eq.s32.totalorder %s89, 0
      %p410 = por %p408, %p409
      %s412 = sadd.s32 %s411, 1
      %p415 = scmp.eq.s32.totalorder %s83, 1
      %p416 = scmp.ne.s32.totalorder %s411, %s413
      %p417 = scmp.eq.s32.totalorder %s83, 0
      %p418 = por %p416, %p417
      %p419 = scmp.ne.s32.totalorder %s411, %s413
      %p420 = scmp.eq.s32.totalorder %s88, 1
      %p421 = por %p419, %p420
      %p422 = scmp.ne.s32.totalorder %s413, %s414
      %p423 = scmp.eq.s32.totalorder %s88, 0
      %p424 = por %p422, %p423
      %p425 = scmp.ne.s32.totalorder %s413, %s414
      %p426 = scmp.eq.s32.totalorder %s89, 1
      %p427 = por %p425, %p426
      %p429 = scmp.ne.s32.totalorder %s414, %s428
      %p430 = scmp.eq.s32.totalorder %s89, 0
      %p431 = por %p429, %p430
      %s433 = sadd.s32 %s432, 1
      %p436 = scmp.eq.s32.totalorder %s83, 1
      %p437 = scmp.ne.s32.totalorder %s432, %s434
      %p438 = scmp.eq.s32.totalorder %s83, 0
      %p439 = por %p437, %p438
      %p440 = scmp.ne.s32.totalorder %s432, %s434
      %p441 = scmp.eq.s32.totalorder %s88, 1
      %p442 = por %p440, %p441
      %p443 = scmp.ne.s32.totalorder %s434, %s435
      %p444 = scmp.eq.s32.totalorder %s88, 0
      %p445 = por %p443, %p444
      %p446 = scmp.ne.s32.totalorder %s434, %s435
      %p447 = scmp.eq.s32.totalorder %s89, 1
      %p448 = por %p446, %p447
      %p450 = scmp.ne.s32.totalorder %s435, %s449
      %p451 = scmp.eq.s32.totalorder %s89, 0
      %p452 = por %p450, %p451
      %s454 = sadd.s32 %s453, 1
      %p457 = scmp.eq.s32.totalorder %s83, 1
      %p458 = scmp.ne.s32.totalorder %s453, %s455
      %p459 = scmp.eq.s32.totalorder %s83, 0
      %p460 = por %p458, %p459
      %p461 = scmp.ne.s32.totalorder %s453, %s455
      %p462 = scmp.eq.s32.totalorder %s88, 1
      %p463 = por %p461, %p462
      %p464 = scmp.ne.s32.totalorder %s455, %s456
      %p465 = scmp.eq.s32.totalorder %s88, 0
      %p466 = por %p464, %p465
      %p467 = scmp.ne.s32.totalorder %s455, %s456
      %p468 = scmp.eq.s32.totalorder %s89, 1
      %p469 = por %p467, %p468
      %p471 = scmp.ne.s32.totalorder %s456, %s470
      %p472 = scmp.eq.s32.totalorder %s89, 0
      %p473 = por %p471, %p472
      %s475 = sadd.s32 %s474, 1
      %p478 = scmp.eq.s32.totalorder %s83, 1
      %p479 = scmp.ne.s32.totalorder %s474, %s476
      %p480 = scmp.eq.s32.totalorder %s83, 0
      %p481 = por %p479, %p480
      %p482 = scmp.ne.s32.totalorder %s474, %s476
      %p483 = scmp.eq.s32.totalorder %s88, 1
      %p484 = por %p482, %p483
      %p485 = scmp.ne.s32.totalorder %s476, %s477
      %p486 = scmp.eq.s32.totalorder %s88, 0
      %p487 = por %p485, %p486
      %p488 = scmp.ne.s32.totalorder %s476, %s477
      %p489 = scmp.eq.s32.totalorder %s89, 1
      %p490 = por %p488, %p489
      %p492 = scmp.ne.s32.totalorder %s477, %s491
      %p493 = scmp.eq.s32.totalorder %s89, 0
      %p494 = por %p492, %p493
      %s496 = sadd.s32 %s495, 1
      %p499 = scmp.eq.s32.totalorder %s83, 1
      %p500 = scmp.ne.s32.totalorder %s495, %s497
      %p501 = scmp.eq.s32.totalorder %s83, 0
      %p502 = por %p500, %p501
      %p503 = scmp.ne.s32.totalorder %s495, %s497
      %p504 = scmp.eq.s32.totalorder %s88, 1
      %p505 = por %p503, %p504
      %p506 = scmp.ne.s32.totalorder %s497, %s498
      %p507 = scmp.eq.s32.totalorder %s88, 0
      %p508 = por %p506, %p507
      %p509 = scmp.ne.s32.totalorder %s497, %s498
      %p510 = scmp.eq.s32.totalorder %s89, 1
      %p511 = por %p509, %p510
      %p513 = scmp.ne.s32.totalorder %s498, %s512
      %p514 = scmp.eq.s32.totalorder %s89, 0
      %p515 = por %p513, %p514
      %s517 = sadd.s32 %s516, 1
      %p520 = scmp.eq.s32.totalorder %s83, 1
      %p521 = scmp.ne.s32.totalorder %s516, %s518
      %p522 = scmp.eq.s32.totalorder %s83, 0
      %p523 = por %p521, %p522
      %p524 = scmp.ne.s32.totalorder %s516, %s518
      %p525 = scmp.eq.s32.totalorder %s88, 1
      %p526 = por %p524, %p525
      %p527 = scmp.ne.s32.totalorder %s518, %s519
      %p528 = scmp.eq.s32.totalorder %s88, 0
      %p529 = por %p527, %p528
      %p530 = scmp.ne.s32.totalorder %s518, %s519
      %p531 = scmp.eq.s32.totalorder %s89, 1
      %p532 = por %p530, %p531
      %p534 = scmp.ne.s32.totalorder %s519, %s533
      %p535 = scmp.eq.s32.totalorder %s89, 0
      %p536 = por %p534, %p535
      %s538 = sadd.s32 %s537, 1
      %p541 = scmp.eq.s32.totalorder %s83, 1
      %p542 = scmp.ne.s32.totalorder %s537, %s539
      %p543 = scmp.eq.s32.totalorder %s83, 0
      %p544 = por %p542, %p543
      %p545 = scmp.ne.s32.totalorder %s537, %s539
      %p546 = scmp.eq.s32.totalorder %s88, 1
      %p547 = por %p545, %p546
      %p548 = scmp.ne.s32.totalorder %s539, %s540
      %p549 = scmp.eq.s32.totalorder %s88, 0
      %p550 = por %p548, %p549
      %p551 = scmp.ne.s32.totalorder %s539, %s540
      %p552 = scmp.eq.s32.totalorder %s89, 1
      %p553 = por %p551, %p552
      %p555 = scmp.ne.s32.totalorder %s540, %s554
      %p556 = scmp.eq.s32.totalorder %s89, 0
      %p557 = por %p555, %p556
      %s559 = sadd.s32 %s558, 1
      %p562 = scmp.eq.s32.totalorder %s83, 1
      %p563 = scmp.ne.s32.totalorder %s558, %s560
      %p564 = scmp.eq.s32.totalorder %s83, 0
      %p565 = por %p563, %p564
      %p566 = scmp.ne.s32.totalorder %s558, %s560
      %p567 = scmp.eq.s32.totalorder %s88, 1
      %p568 = por %p566, %p567
      %p569 = scmp.ne.s32.totalorder %s560, %s561
      %p570 = scmp.eq.s32.totalorder %s88, 0
      %p571 = por %p569, %p570
      %p572 = scmp.ne.s32.totalorder %s560, %s561
      %p573 = scmp.eq.s32.totalorder %s89, 1
      %p574 = por %p572, %p573
      %p576 = scmp.ne.s32.totalorder %s561, %s575
      %p577 = scmp.eq.s32.totalorder %s89, 0
      %p578 = por %p576, %p577
      %s580 = sadd.s32 %s579, 1
      %p583 = scmp.eq.s32.totalorder %s83, 1
      %p584 = scmp.ne.s32.totalorder %s579, %s581
      %p585 = scmp.eq.s32.totalorder %s83, 0
      %p586 = por %p584, %p585
      %p587 = scmp.ne.s32.totalorder %s579, %s581
      %p588 = scmp.eq.s32.totalorder %s88, 1
      %p589 = por %p587, %p588
      %p590 = scmp.ne.s32.totalorder %s581, %s582
      %p591 = scmp.eq.s32.totalorder %s88, 0
      %p592 = por %p590, %p591
      %p593 = scmp.ne.s32.totalorder %s581, %s582
      %p594 = scmp.eq.s32.totalorder %s89, 1
      %p595 = por %p593, %p594
      %p597 = scmp.ne.s32.totalorder %s582, %s596
      %p598 = scmp.eq.s32.totalorder %s89, 0
      %p599 = por %p597, %p598
      %s601 = sadd.s32 %s600, 1
      %p604 = scmp.eq.s32.totalorder %s83, 1
      %p605 = scmp.ne.s32.totalorder %s600, %s602
      %p606 = scmp.eq.s32.totalorder %s83, 0
      %p607 = por %p605, %p606
      %p608 = scmp.ne.s32.totalorder %s600, %s602
      %p609 = scmp.eq.s32.totalorder %s88, 1
      %p610 = por %p608, %p609
      %p611 = scmp.ne.s32.totalorder %s602, %s603
      %p612 = scmp.eq.s32.totalorder %s88, 0
      %p613 = por %p611, %p612
      %p614 = scmp.ne.s32.totalorder %s602, %s603
      %p615 = scmp.eq.s32.totalorder %s89, 1
      %p616 = por %p614, %p615
      %p618 = scmp.ne.s32.totalorder %s603, %s617
      %p619 = scmp.eq.s32.totalorder %s89, 0
      %p620 = por %p618, %p619
      %s622 = sadd.s32 %s621, 1
      %p625 = scmp.eq.s32.totalorder %s83, 1
      %p626 = scmp.ne.s32.totalorder %s621, %s623
      %p627 = scmp.eq.s32.totalorder %s83, 0
      %p628 = por %p626, %p627
      %p629 = scmp.ne.s32.totalorder %s621, %s623
      %p630 = scmp.eq.s32.totalorder %s88, 1
      %p631 = por %p629, %p630
      %p632 = scmp.ne.s32.totalorder %s623, %s624
      %p633 = scmp.eq.s32.totalorder %s88, 0
      %p634 = por %p632, %p633
      %p635 = scmp.ne.s32.totalorder %s623, %s624
      %p636 = scmp.eq.s32.totalorder %s89, 1
      %p637 = por %p635, %p636
      %p639 = scmp.ne.s32.totalorder %s624, %s638
      %p640 = scmp.eq.s32.totalorder %s89, 0
      %p641 = por %p639, %p640
      %s643 = sadd.s32 %s642, 1
      %p646 = scmp.eq.s32.totalorder %s83, 1
      %p647 = scmp.ne.s32.totalorder %s642, %s644
      %p648 = scmp.eq.s32.totalorder %s83, 0
      %p649 = por %p647, %p648
      %p650 = scmp.ne.s32.totalorder %s642, %s644
      %p651 = scmp.eq.s32.totalorder %s88, 1
      %p652 = por %p650, %p651
      %p653 = scmp.ne.s32.totalorder %s644, %s645
      %p654 = scmp.eq.s32.totalorder %s88, 0
      %p655 = por %p653, %p654
      %p656 = scmp.ne.s32.totalorder %s644, %s645
      %p657 = scmp.eq.s32.totalorder %s89, 1
      %p658 = por %p656, %p657
      %p660 = scmp.ne.s32.totalorder %s645, %s659
      %p661 = scmp.eq.s32.totalorder %s89, 0
      %p662 = por %p660, %p661
      %s664 = sadd.s32 %s663, 1
      %p667 = scmp.eq.s32.totalorder %s83, 1
      %p668 = scmp.ne.s32.totalorder %s663, %s665
      %p669 = scmp.eq.s32.totalorder %s83, 0
      %p670 = por %p668, %p669
      %p671 = scmp.ne.s32.totalorder %s663, %s665
      %p672 = scmp.eq.s32.totalorder %s88, 1
      %p673 = por %p671, %p672
      %p674 = scmp.ne.s32.totalorder %s665, %s666
      %p675 = scmp.eq.s32.totalorder %s88, 0
      %p676 = por %p674, %p675
      %p677 = scmp.ne.s32.totalorder %s665, %s666
      %p678 = scmp.eq.s32.totalorder %s89, 1
      %p679 = por %p677, %p678
      %p681 = scmp.ne.s32.totalorder %s666, %s680
      %p682 = scmp.eq.s32.totalorder %s89, 0
      %p683 = por %p681, %p682
      %s685 = sadd.s32 %s684, 1
      %p688 = scmp.eq.s32.totalorder %s83, 1
      %p689 = scmp.ne.s32.totalorder %s684, %s686
      %p690 = scmp.eq.s32.totalorder %s83, 0
      %p691 = por %p689, %p690
      %p692 = scmp.ne.s32.totalorder %s684, %s686
      %p693 = scmp.eq.s32.totalorder %s88, 1
      %p694 = por %p692, %p693
      %p695 = scmp.ne.s32.totalorder %s686, %s687
      %p696 = scmp.eq.s32.totalorder %s88, 0
      %p697 = por %p695, %p696
      %p698 = scmp.ne.s32.totalorder %s686, %s687
      %p699 = scmp.eq.s32.totalorder %s89, 1
      %p700 = por %p698, %p699
      %p702 = scmp.ne.s32.totalorder %s687, %s701
      %p703 = scmp.eq.s32.totalorder %s89, 0
      %p704 = por %p702, %p703
      %s706 = sadd.s32 %s705, 1
      %p709 = scmp.eq.s32.totalorder %s83, 1
      %p710 = scmp.ne.s32.totalorder %s705, %s707
      %p711 = scmp.eq.s32.totalorder %s83, 0
      %p712 = por %p710, %p711
      %p713 = scmp.ne.s32.totalorder %s705, %s707
      %p714 = scmp.eq.s32.totalorder %s88, 1
      %p715 = por %p713, %p714
      %p716 = scmp.ne.s32.totalorder %s707, %s708
      %p717 = scmp.eq.s32.totalorder %s88, 0
      %p718 = por %p716, %p717
      %p719 = scmp.ne.s32.totalorder %s707, %s708
      %p720 = scmp.eq.s32.totalorder %s89, 1
      %p721 = por %p719, %p720
      %p723 = scmp.ne.s32.totalorder %s708, %s722
      %p724 = scmp.eq.s32.totalorder %s89, 0
      %p725 = por %p723, %p724
      %s727 = sadd.s32 %s726, 1
      %p730 = scmp.eq.s32.totalorder %s83, 1
      %p731 = scmp.ne.s32.totalorder %s726, %s728
      %p732 = scmp.eq.s32.totalorder %s83, 0
      %p733 = por %p731, %p732
      %p734 = scmp.ne.s32.totalorder %s726, %s728
      %p735 = scmp.eq.s32.totalorder %s88, 1
      %p736 = por %p734, %p735
      %p737 = scmp.ne.s32.totalorder %s728, %s729
      %p738 = scmp.eq.s32.totalorder %s88, 0
      %p739 = por %p737, %p738
      %p740 = scmp.ne.s32.totalorder %s728, %s729
      %p741 = scmp.eq.s32.totalorder %s89, 1
      %p742 = por %p740, %p741
      %p744 = scmp.ne.s32.totalorder %s729, %s743
      %p745 = scmp.eq.s32.totalorder %s89, 0
      %p746 = por %p744, %p745
      %s748 = sadd.s32 %s747, 1
      %p751 = scmp.eq.s32.totalorder %s83, 1
      %p752 = scmp.ne.s32.totalorder %s747, %s749
      %p753 = scmp.eq.s32.totalorder %s83, 0
      %p754 = por %p752, %p753
      %p755 = scmp.ne.s32.totalorder %s747, %s749
      %p756 = scmp.eq.s32.totalorder %s88, 1
      %p757 = por %p755, %p756
      %p758 = scmp.ne.s32.totalorder %s749, %s750
      %p759 = scmp.eq.s32.totalorder %s88, 0
      %p760 = por %p758, %p759
      %p761 = scmp.ne.s32.totalorder %s749, %s750
      %p762 = scmp.eq.s32.totalorder %s89, 1
      %p763 = por %p761, %p762
      %p765 = scmp.ne.s32.totalorder %s750, %s764
      %p766 = scmp.eq.s32.totalorder %s89, 0
      %p767 = por %p765, %p766
      %s769 = sadd.s32 %s768, 1
      %p772 = scmp.eq.s32.totalorder %s83, 1
      %p773 = scmp.ne.s32.totalorder %s768, %s770
      %p774 = scmp.eq.s32.totalorder %s83, 0
      %p775 = por %p773, %p774
      %p776 = scmp.ne.s32.totalorder %s768, %s770
      %p777 = scmp.eq.s32.totalorder %s88, 1
      %p778 = por %p776, %p777
      %p779 = scmp.ne.s32.totalorder %s770, %s771
      %p780 = scmp.eq.s32.totalorder %s88, 0
      %p781 = por %p779, %p780
      %p782 = scmp.ne.s32.totalorder %s770, %s771
      %p783 = scmp.eq.s32.totalorder %s89, 1
      %p784 = por %p782, %p783
      %p786 = scmp.ne.s32.totalorder %s771, %s785
      %p787 = scmp.eq.s32.totalorder %s89, 0
      %p788 = por %p786, %p787
      %s790 = sadd.s32 %s789, 1
      %p793 = scmp.eq.s32.totalorder %s83, 1
      %p794 = scmp.ne.s32.totalorder %s789, %s791
      %p795 = scmp.eq.s32.totalorder %s83, 0
      %p796 = por %p794, %p795
      %p797 = scmp.ne.s32.totalorder %s789, %s791
      %p798 = scmp.eq.s32.totalorder %s88, 1
      %p799 = por %p797, %p798
      %p800 = scmp.ne.s32.totalorder %s791, %s792
      %p801 = scmp.eq.s32.totalorder %s88, 0
      %p802 = por %p800, %p801
      %p803 = scmp.ne.s32.totalorder %s791, %s792
      %p804 = scmp.eq.s32.totalorder %s89, 1
      %p805 = por %p803, %p804
      %p807 = scmp.ne.s32.totalorder %s792, %s806
      %p808 = scmp.eq.s32.totalorder %s89, 0
      %p809 = por %p807, %p808
      %s811 = sadd.s32 %s810, 1
      %p814 = scmp.eq.s32.totalorder %s83, 1
      %p815 = scmp.ne.s32.totalorder %s810, %s812
      %p816 = scmp.eq.s32.totalorder %s83, 0
      %p817 = por %p815, %p816
      %p818 = scmp.ne.s32.totalorder %s810, %s812
      %p819 = scmp.eq.s32.totalorder %s88, 1
      %p820 = por %p818, %p819
      %p821 = scmp.ne.s32.totalorder %s812, %s813
      %p822 = scmp.eq.s32.totalorder %s88, 0
      %p823 = por %p821, %p822
      %p824 = scmp.ne.s32.totalorder %s812, %s813
      %p825 = scmp.eq.s32.totalorder %s89, 1
      %p826 = por %p824, %p825
      %p828 = scmp.ne.s32.totalorder %s813, %s827
      %p829 = scmp.eq.s32.totalorder %s89, 0
      %p830 = por %p828, %p829
      %s831 = ssub.s32 %s83, %s90
      %p832 = scmp.eq.s32.totalorder %s831, 0
      %s834 = sadd.s32 %s833, 1
      %s835 = scalar_select %p832, %s833, %s834
      %p838 = pneg %p832
      %p839 = scmp.eq.s32.totalorder %s83, 1
      %p840 = por %p838, %p839
      %p841 = scmp.ne.s32.totalorder %s833, %s836
      %p842 = scmp.eq.s32.totalorder %s83, 0
      %p843 = por %p841, %p842
      %p844 = scmp.ne.s32.totalorder %s833, %s836
      %p845 = scmp.eq.s32.totalorder %s88, 1
      %p846 = por %p844, %p845
      %p847 = scmp.ne.s32.totalorder %s836, %s837
      %p848 = scmp.eq.s32.totalorder %s88, 0
      %p849 = por %p847, %p848
      %p850 = scmp.ne.s32.totalorder %s836, %s837
      %p851 = scmp.eq.s32.totalorder %s89, 1
      %p852 = por %p850, %p851
      %p854 = scmp.ne.s32.totalorder %s837, %s853
      %p855 = scmp.eq.s32.totalorder %s89, 0
      %p856 = por %p854, %p855
      %p857 = scmp.le.s32.totalorder 1, %s83
      %p858 = scmp.lt.s32.totalorder %s83, 3
      %p859 = pnand %p857, %p858
      %p860 = pneg %p859
      // Predicated region
      $region9: #{ms_ran_forward.1} parent=5 // pred_check
        _
      $region10: #{ms_ran_forward.1} parent=5 // pred_check_branch
        %862 = sbr.rel (%p859) target = $region12
      $region11: #{ms_ran_forward.1} parent=5 // pred_region
        %s863 = ssub.s32 %s83, 1
        // Predicated region
        $region13: #{ms_ran_forward.1} parent=11 // pred_check
          %p864 = pneg %p130
        $region14: #{ms_ran_forward.1} parent=11 // pred_check_branch
          %866 = sbr.rel (%p864) target = $region16
        $region15: #{ms_ran_forward.1} parent=11 // pred_region
          _
        $region16: #{ms_ran_forward.1} parent=11 // pred_fallthru
          _
        // Predicated region
        $region17: #{ms_ran_forward.1} parent=11 // pred_check
          %p867 = pneg %p151
        $region18: #{ms_ran_forward.1} parent=11 // pred_check_branch
          %869 = sbr.rel (%p867) target = $region20
        $region19: #{ms_ran_forward.1} parent=11 // pred_region
          _
        $region20: #{ms_ran_forward.1} parent=11 // pred_fallthru
          _
        // Predicated region
        $region21: #{ms_ran_forward.1} parent=11 // pred_check
          %p870 = pneg %p172
        $region22: #{ms_ran_forward.1} parent=11 // pred_check_branch
          %872 = sbr.rel (%p870) target = $region24
        $region23: #{ms_ran_forward.1} parent=11 // pred_region
          _
        $region24: #{ms_ran_forward.1} parent=11 // pred_fallthru
          _
        // Predicated region
        $region25: #{ms_ran_forward.1} parent=11 // pred_check
          %p873 = pneg %p193
        $region26: #{ms_ran_forward.1} parent=11 // pred_check_branch
          %875 = sbr.rel (%p873) target = $region28
        $region27: #{ms_ran_forward.1} parent=11 // pred_region
          _
        $region28: #{ms_ran_forward.1} parent=11 // pred_fallthru
          _
        // Predicated region
        $region29: #{ms_ran_forward.1} parent=11 // pred_check
          %p876 = pneg %p214
        $region30: #{ms_ran_forward.1} parent=11 // pred_check_branch
          %878 = sbr.rel (%p876) target = $region32
        $region31: #{ms_ran_forward.1} parent=11 // pred_region
          _
        $region32: #{ms_ran_forward.1} parent=11 // pred_fallthru
          _
        // Predicated region
        $region33: #{ms_ran_forward.1} parent=11 // pred_check
          %p879 = pneg %p235
        $region34: #{ms_ran_forward.1} parent=11 // pred_check_branch
          %881 = sbr.rel (%p879) target = $region36
        $region35: #{ms_ran_forward.1} parent=11 // pred_region
          _
        $region36: #{ms_ran_forward.1} parent=11 // pred_fallthru
          _
        // Predicated region
        $region37: #{ms_ran_forward.1} parent=11 // pred_check
          %p882 = pneg %p256
        $region38: #{ms_ran_forward.1} parent=11 // pred_check_branch
          %884 = sbr.rel (%p882) target = $region40
        $region39: #{ms_ran_forward.1} parent=11 // pred_region
          _
        $region40: #{ms_ran_forward.1} parent=11 // pred_fallthru
          _
        // Predicated region
        $region41: #{ms_ran_forward.1} parent=11 // pred_check
          %p885 = pneg %p277
        $region42: #{ms_ran_forward.1} parent=11 // pred_check_branch
          %887 = sbr.rel (%p885) target = $region44
        $region43: #{ms_ran_forward.1} parent=11 // pred_region
          _
        $region44: #{ms_ran_forward.1} parent=11 // pred_fallthru
          _
        // Predicated region
        $region45: #{ms_ran_forward.1} parent=11 // pred_check
          %p888 = pneg %p298
        $region46: #{ms_ran_forward.1} parent=11 // pred_check_branch
          %890 = sbr.rel (%p888) target = $region48
        $region47: #{ms_ran_forward.1} parent=11 // pred_region
          %892 = vsyncadd [#allocation3], 0
          %s893 = sshll.u32 %s19, 4
          %s894 = int_to_ptr.hbm [resolvable:$true] %s893
          %s895 = sshll.u32 [#allocation2], 4
          %s896 = int_to_ptr.vmem [resolvable:$true] %s895
          %901 = dma.hbm_to_vmem [thread:$0]  %s894, 4608, %s896, [#allocation3], 64, 64, 4
        $region48: #{ms_ran_forward.1} parent=11 // pred_fallthru
          _
        // Predicated region
        $region49: #{ms_ran_forward.1} parent=11 // pred_check
          %p902 = pneg %p319
        $region50: #{ms_ran_forward.1} parent=11 // pred_check_branch
          %904 = sbr.rel (%p902) target = $region52
        $region51: #{ms_ran_forward.1} parent=11 // pred_region
          _
        $region52: #{ms_ran_forward.1} parent=11 // pred_fallthru
          _
        // Predicated region
        $region53: #{ms_ran_forward.1} parent=11 // pred_check
          %p905 = pneg %p340
        $region54: #{ms_ran_forward.1} parent=11 // pred_check_branch
          %907 = sbr.rel (%p905) target = $region56
        $region55: #{ms_ran_forward.1} parent=11 // pred_region
          _
        $region56: #{ms_ran_forward.1} parent=11 // pred_fallthru
          _
        // Predicated region
        $region57: #{ms_ran_forward.1} parent=11 // pred_check
          %p908 = pneg %p361
        $region58: #{ms_ran_forward.1} parent=11 // pred_check_branch
          %910 = sbr.rel (%p908) target = $region60
        $region59: #{ms_ran_forward.1} parent=11 // pred_region
          _
        $region60: #{ms_ran_forward.1} parent=11 // pred_fallthru
          _
        // Predicated region
        $region61: #{ms_ran_forward.1} parent=11 // pred_check
          %p911 = pneg %p382
        $region62: #{ms_ran_forward.1} parent=11 // pred_check_branch
          %913 = sbr.rel (%p911) target = $region64
        $region63: #{ms_ran_forward.1} parent=11 // pred_region
          %915 = vsyncadd [#allocation6], 0
          %s916 = sshll.u32 %s27, 4
          %s917 = int_to_ptr.hbm [resolvable:$true] %s916
          %s918 = sshll.u32 [#allocation5], 4
          %s919 = int_to_ptr.vmem [resolvable:$true] %s918
          %924 = dma.hbm_to_vmem [thread:$0]  %s917, 4608, %s919, [#allocation6], 64, 64, 4
        $region64: #{ms_ran_forward.1} parent=11 // pred_fallthru
          _
        // Predicated region
        $region65: #{ms_ran_forward.1} parent=11 // pred_check
          %p925 = pneg %p403
        $region66: #{ms_ran_forward.1} parent=11 // pred_check_branch
          %927 = sbr.rel (%p925) target = $region68
        $region67: #{ms_ran_forward.1} parent=11 // pred_region
          _
        $region68: #{ms_ran_forward.1} parent=11 // pred_fallthru
          _
        // Predicated region
        $region69: #{ms_ran_forward.1} parent=11 // pred_check
          %p928 = pneg %p424
        $region70: #{ms_ran_forward.1} parent=11 // pred_check_branch
          %930 = sbr.rel (%p928) target = $region72
        $region71: #{ms_ran_forward.1} parent=11 // pred_region
          _
        $region72: #{ms_ran_forward.1} parent=11 // pred_fallthru
          _
        // Predicated region
        $region73: #{ms_ran_forward.1} parent=11 // pred_check
          %p931 = pneg %p445
        $region74: #{ms_ran_forward.1} parent=11 // pred_check_branch
          %933 = sbr.rel (%p931) target = $region76
        $region75: #{ms_ran_forward.1} parent=11 // pred_region
          _
        $region76: #{ms_ran_forward.1} parent=11 // pred_fallthru
          _
        // Predicated region
        $region77: #{ms_ran_forward.1} parent=11 // pred_check
          %p934 = pneg %p466
        $region78: #{ms_ran_forward.1} parent=11 // pred_check_branch
          %936 = sbr.rel (%p934) target = $region80
        $region79: #{ms_ran_forward.1} parent=11 // pred_region
          _
        $region80: #{ms_ran_forward.1} parent=11 // pred_fallthru
          _
        // Predicated region
        $region81: #{ms_ran_forward.1} parent=11 // pred_check
          %p937 = pneg %p487
        $region82: #{ms_ran_forward.1} parent=11 // pred_check_branch
          %939 = sbr.rel (%p937) target = $region84
        $region83: #{ms_ran_forward.1} parent=11 // pred_region
          _
        $region84: #{ms_ran_forward.1} parent=11 // pred_fallthru
          _
        // Predicated region
        $region85: #{ms_ran_forward.1} parent=11 // pred_check
          %p940 = pneg %p508
        $region86: #{ms_ran_forward.1} parent=11 // pred_check_branch
          %942 = sbr.rel (%p940) target = $region88
        $region87: #{ms_ran_forward.1} parent=11 // pred_region
          _
        $region88: #{ms_ran_forward.1} parent=11 // pred_fallthru
          _
        // Predicated region
        $region89: #{ms_ran_forward.1} parent=11 // pred_check
          %p943 = pneg %p529
        $region90: #{ms_ran_forward.1} parent=11 // pred_check_branch
          %945 = sbr.rel (%p943) target = $region92
        $region91: #{ms_ran_forward.1} parent=11 // pred_region
          _
        $region92: #{ms_ran_forward.1} parent=11 // pred_fallthru
          _
        // Predicated region
        $region93: #{ms_ran_forward.1} parent=11 // pred_check
          %p946 = pneg %p550
        $region94: #{ms_ran_forward.1} parent=11 // pred_check_branch
          %948 = sbr.rel (%p946) target = $region96
        $region95: #{ms_ran_forward.1} parent=11 // pred_region
          %950 = vsyncadd [#allocation6], 0
          %s951 = sshll.u32 %s43, 4
          %s952 = int_to_ptr.hbm [resolvable:$true] %s951
          %s953 = sshll.u32 [#allocation7], 4
          %s954 = int_to_ptr.vmem [resolvable:$true] %s953
          %959 = dma.hbm_to_vmem [thread:$0]  %s952, 4608, %s954, [#allocation6], 64, 64, 4
        $region96: #{ms_ran_forward.1} parent=11 // pred_fallthru
          _
        // Predicated region
        $region97: #{ms_ran_forward.1} parent=11 // pred_check
          %p960 = pneg %p571
        $region98: #{ms_ran_forward.1} parent=11 // pred_check_branch
          %962 = sbr.rel (%p960) target = $region100
        $region99: #{ms_ran_forward.1} parent=11 // pred_region
          _
        $region100: #{ms_ran_forward.1} parent=11 // pred_fallthru
          _
        // Predicated region
        $region101: #{ms_ran_forward.1} parent=11 // pred_check
          %p963 = pneg %p592
        $region102: #{ms_ran_forward.1} parent=11 // pred_check_branch
          %965 = sbr.rel (%p963) target = $region104
        $region103: #{ms_ran_forward.1} parent=11 // pred_region
          %967 = vsyncadd [#allocation9], 0
          %s968 = sshll.u32 %s47, 4
          %s969 = int_to_ptr.hbm [resolvable:$true] %s968
          %s970 = sshll.u32 [#allocation8], 4
          %s971 = int_to_ptr.vmem [resolvable:$true] %s970
          %976 = dma.hbm_to_vmem [thread:$0]  %s969, 4608, %s971, [#allocation9], 64, 64, 4
        $region104: #{ms_ran_forward.1} parent=11 // pred_fallthru
          _
        // Predicated region
        $region105: #{ms_ran_forward.1} parent=11 // pred_check
          %p977 = pneg %p613
        $region106: #{ms_ran_forward.1} parent=11 // pred_check_branch
          %979 = sbr.rel (%p977) target = $region108
        $region107: #{ms_ran_forward.1} parent=11 // pred_region
          _
        $region108: #{ms_ran_forward.1} parent=11 // pred_fallthru
          _
        // Predicated region
        $region109: #{ms_ran_forward.1} parent=11 // pred_check
          %p980 = pneg %p634
        $region110: #{ms_ran_forward.1} parent=11 // pred_check_branch
          %982 = sbr.rel (%p980) target = $region112
        $region111: #{ms_ran_forward.1} parent=11 // pred_region
          %984 = vsyncadd [#allocation9], 0
          %s985 = sshll.u32 %s51, 4
          %s986 = int_to_ptr.hbm [resolvable:$true] %s985
          %s987 = sshll.u32 [#allocation10], 4
          %s988 = int_to_ptr.vmem [resolvable:$true] %s987
          %993 = dma.hbm_to_vmem [thread:$0]  %s986, 4608, %s988, [#allocation9], 64, 64, 4
        $region112: #{ms_ran_forward.1} parent=11 // pred_fallthru
          _
        // Predicated region
        $region113: #{ms_ran_forward.1} parent=11 // pred_check
          %p994 = pneg %p655
        $region114: #{ms_ran_forward.1} parent=11 // pred_check_branch
          %996 = sbr.rel (%p994) target = $region116
        $region115: #{ms_ran_forward.1} parent=11 // pred_region
          _
        $region116: #{ms_ran_forward.1} parent=11 // pred_fallthru
          _
        // Predicated region
        $region117: #{ms_ran_forward.1} parent=11 // pred_check
          %p997 = pneg %p676
        $region118: #{ms_ran_forward.1} parent=11 // pred_check_branch
          %999 = sbr.rel (%p997) target = $region120
        $region119: #{ms_ran_forward.1} parent=11 // pred_region
          _
        $region120: #{ms_ran_forward.1} parent=11 // pred_fallthru
          _
        // Predicated region
        $region121: #{ms_ran_forward.1} parent=11 // pred_check
          %p1000 = pneg %p697
        $region122: #{ms_ran_forward.1} parent=11 // pred_check_branch
          %1002 = sbr.rel (%p1000) target = $region124
        $region123: #{ms_ran_forward.1} parent=11 // pred_region
          _
        $region124: #{ms_ran_forward.1} parent=11 // pred_fallthru
          _
        // Predicated region
        $region125: #{ms_ran_forward.1} parent=11 // pred_check
          %p1003 = pneg %p718
        $region126: #{ms_ran_forward.1} parent=11 // pred_check_branch
          %1005 = sbr.rel (%p1003) target = $region128
        $region127: #{ms_ran_forward.1} parent=11 // pred_region
          _
        $region128: #{ms_ran_forward.1} parent=11 // pred_fallthru
          _
        // Predicated region
        $region129: #{ms_ran_forward.1} parent=11 // pred_check
          %p1006 = pneg %p739
        $region130: #{ms_ran_forward.1} parent=11 // pred_check_branch
          %1008 = sbr.rel (%p1006) target = $region132
        $region131: #{ms_ran_forward.1} parent=11 // pred_region
          _
        $region132: #{ms_ran_forward.1} parent=11 // pred_fallthru
          _
        // Predicated region
        $region133: #{ms_ran_forward.1} parent=11 // pred_check
          %p1009 = pneg %p760
        $region134: #{ms_ran_forward.1} parent=11 // pred_check_branch
          %1011 = sbr.rel (%p1009) target = $region136
        $region135: #{ms_ran_forward.1} parent=11 // pred_region
          _
        $region136: #{ms_ran_forward.1} parent=11 // pred_fallthru
          _
        // Predicated region
        $region137: #{ms_ran_forward.1} parent=11 // pred_check
          %p1012 = pneg %p781
        $region138: #{ms_ran_forward.1} parent=11 // pred_check_branch
          %1014 = sbr.rel (%p1012) target = $region140
        $region139: #{ms_ran_forward.1} parent=11 // pred_region
          _
        $region140: #{ms_ran_forward.1} parent=11 // pred_fallthru
          _
        // Predicated region
        $region141: #{ms_ran_forward.1} parent=11 // pred_check
          %p1015 = pneg %p802
        $region142: #{ms_ran_forward.1} parent=11 // pred_check_branch
          %1017 = sbr.rel (%p1015) target = $region144
        $region143: #{ms_ran_forward.1} parent=11 // pred_region
          _
        $region144: #{ms_ran_forward.1} parent=11 // pred_fallthru
          _
        // Predicated region
        $region145: #{ms_ran_forward.1} parent=11 // pred_check
          %p1018 = pneg %p823
        $region146: #{ms_ran_forward.1} parent=11 // pred_check_branch
          %1020 = sbr.rel (%p1018) target = $region148
        $region147: #{ms_ran_forward.1} parent=11 // pred_region
          _
        $region148: #{ms_ran_forward.1} parent=11 // pred_fallthru
          _
      $region12: #{ms_ran_forward.1} parent=5 // pred_fallthru
        _
      %p1021 = scmp.lt.s32.totalorder %s83, 2
      // Predicated region
      $region149: #{ms_ran_forward.1} parent=5 // pred_check
        %p1022 = pneg %p1021
      $region150: #{ms_ran_forward.1} parent=5 // pred_check_branch
        %1024 = sbr.rel (%p1022) target = $region152
      $region151: #{ms_ran_forward.1} parent=5 // pred_region
        // Predicated region
        $region153: #{ms_ran_forward.1} parent=151 // pred_check
          %p1025 = pneg %p103
        $region154: #{ms_ran_forward.1} parent=151 // pred_check_branch
          %1027 = sbr.rel (%p1025) target = $region156
        $region155: #{ms_ran_forward.1} parent=151 // pred_region
          %p1028 = scmp.lt.s32.totalorder %s83, 1
          %s1029 = scalar_select %p1028, %s83, 1
          %s1030 = smul.addr %s1029, 32
          %s1031 = smul.addr %s1030, 4
          %s1032 = scalar_lea.vmem %s1, %s1031
        $region156: #{ms_ran_forward.1} parent=151 // pred_fallthru
          _
      $region152: #{ms_ran_forward.1} parent=5 // pred_fallthru
        _
      %p1033 = scmp.le.s32.totalorder 1, %s83
      %p1034 = scmp.lt.s32.totalorder %s83, 3
      %p1035 = pnand %p1033, %p1034
      %p1036 = pneg %p1035
      // Predicated region
      $region157: #{ms_ran_forward.1} parent=5 // pred_check
        _
      $region158: #{ms_ran_forward.1} parent=5 // pred_check_branch
        %1038 = sbr.rel (%p1035) target = $region160
      $region159: #{ms_ran_forward.1} parent=5 // pred_region
        %s1039 = ssub.s32 %s83, 1
        // Predicated region
        $region161: #{ms_ran_forward.1} parent=159 // pred_check
          %p1040 = pneg %p298
        $region162: #{ms_ran_forward.1} parent=159 // pred_check_branch
          %1042 = sbr.rel (%p1040) target = $region164
        $region163: #{ms_ran_forward.1} parent=159 // pred_region
          %1044 = dma.done [#allocation3], 4608
        $region164: #{ms_ran_forward.1} parent=159 // pred_fallthru
          _
        // Predicated region
        $region165: #{ms_ran_forward.1} parent=159 // pred_check
          %p1045 = pneg %p382
        $region166: #{ms_ran_forward.1} parent=159 // pred_check_branch
          %1047 = sbr.rel (%p1045) target = $region168
        $region167: #{ms_ran_forward.1} parent=159 // pred_region
          %1049 = dma.done [#allocation6], 4608
        $region168: #{ms_ran_forward.1} parent=159 // pred_fallthru
          _
        // Predicated region
        $region169: #{ms_ran_forward.1} parent=159 // pred_check
          %p1050 = pneg %p550
        $region170: #{ms_ran_forward.1} parent=159 // pred_check_branch
          %1052 = sbr.rel (%p1050) target = $region172
        $region171: #{ms_ran_forward.1} parent=159 // pred_region
          %1054 = dma.done [#allocation6], 4608
        $region172: #{ms_ran_forward.1} parent=159 // pred_fallthru
          _
        // Predicated region
        $region173: #{ms_ran_forward.1} parent=159 // pred_check
          %p1055 = pneg %p592
        $region174: #{ms_ran_forward.1} parent=159 // pred_check_branch
          %1057 = sbr.rel (%p1055) target = $region176
        $region175: #{ms_ran_forward.1} parent=159 // pred_region
          %1059 = dma.done [#allocation9], 4608
        $region176: #{ms_ran_forward.1} parent=159 // pred_fallthru
          _
        // Predicated region
        $region177: #{ms_ran_forward.1} parent=159 // pred_check
          %p1060 = pneg %p634
        $region178: #{ms_ran_forward.1} parent=159 // pred_check_branch
          %1062 = sbr.rel (%p1060) target = $region180
        $region179: #{ms_ran_forward.1} parent=159 // pred_region
          %1064 = dma.done [#allocation9], 4608
        $region180: #{ms_ran_forward.1} parent=159 // pred_fallthru
          _
        %p1065 = scmp.lt.s32.totalorder %s88, 1
        %s1066 = scalar_select %p1065, %s88, 1
        %s1067 = smul.addr %s1066, 32
        %s1068 = smul.addr %s1067, 4
        %s1069 = scalar_lea.vmem %s1, %s1068
        %p1070 = pneg %p109
        %p1071 = pneg %p106
        %p1072 = pneg %p130
        %p1073 = pneg %p127
        %p1074 = pneg %p151
        %p1075 = pneg %p148
        %p1076 = pneg %p172
        %p1077 = pneg %p169
        %p1078 = pneg %p193
        %p1079 = pneg %p190
        %p1080 = pneg %p214
        %p1081 = pneg %p211
        %p1082 = pneg %p235
        %p1083 = pneg %p232
        %p1084 = pneg %p256
        %p1085 = pneg %p253
        %p1086 = pneg %p277
        %p1087 = pneg %p274
        %p1088 = pneg %p298
        %p1089 = pneg %p295
        %p1090 = pneg %p319
        %p1091 = pneg %p316
        %p1092 = pneg %p340
        %p1093 = pneg %p337
        %p1094 = pneg %p361
        %p1095 = pneg %p358
        %p1096 = pneg %p382
        %p1097 = pneg %p379
        %p1098 = pneg %p403
        %p1099 = pneg %p400
        %p1100 = pneg %p424
        %p1101 = pneg %p421
        %p1102 = pneg %p445
        %p1103 = pneg %p442
        %p1104 = pneg %p466
        %p1105 = pneg %p463
        %p1106 = pneg %p487
        %p1107 = pneg %p484
        %p1108 = pneg %p508
        %p1109 = pneg %p505
        %p1110 = pneg %p529
        %p1111 = pneg %p526
        %p1112 = pneg %p550
        %p1113 = pneg %p547
        %p1114 = pneg %p571
        %p1115 = pneg %p568
        %p1116 = pneg %p592
        %p1117 = pneg %p589
        %p1118 = pneg %p613
        %p1119 = pneg %p610
        %p1120 = pneg %p634
        %p1121 = pneg %p631
        %p1122 = pneg %p655
        %p1123 = pneg %p652
        %p1124 = pneg %p676
        %p1125 = pneg %p673
        %p1126 = pneg %p697
        %p1127 = pneg %p694
        %p1128 = pneg %p718
        %p1129 = pneg %p715
        %p1130 = pneg %p739
        %p1131 = pneg %p736
        %p1132 = pneg %p760
        %p1133 = pneg %p757
        %p1134 = pneg %p781
        %p1135 = pneg %p778
        %p1136 = pneg %p802
        %p1137 = pneg %p799
        %p1138 = pneg %p823
        %p1139 = pneg %p820
        %p1140 = pneg %p849
        %p1141 = pneg %p846
        %s1142 = sand.u32 %s836, 1
        %s1143 = scalar_lea.sflag [#allocation4], %s1142
        %s1144 = sand.u32 %s836, 1
        %s1145 = scalar_lea.vmem [#allocation11], %s1144
        %p1146 = scmp.lt.s32.totalorder %s88, 1
        %s1147 = scalar_select %p1146, %s88, 1
        %s1148 = smul.addr %s1147, 32
        %s1149 = smul.addr %s1148, 4
        %s1150 = scalar_lea.vmem %s1, %s1149
        %v1152 = vld [vmem:[%s1150] sm:$0xf]
        %v1153 = vld [vmem:[%s1150 + $0x4] sm:$0xf]
        %v1154 = vld [vmem:[%s1150 + $0x8] sm:$0xf]
        %v1155 = vld [vmem:[%s1150 + $0xc] sm:$0xf]
        %v1156 = vld [vmem:[%s1150 + $0x10] sm:$0xf]
        %v1157 = vld [vmem:[%s1150 + $0x14] sm:$0xf]
        %v1158 = vld [vmem:[%s1150 + $0x18] sm:$0xf]
        %v1159 = vld [vmem:[%s1150 + $0x1c] sm:$0xf]
        %v1160 = vld [vmem:[%s1150 + $0x20] sm:$0xf]
        %v1161 = vld [vmem:[%s1150 + $0x24] sm:$0xf]
        %v1162 = vld [vmem:[%s1150 + $0x28] sm:$0xf]
        %v1163 = vld [vmem:[%s1150 + $0x2c] sm:$0xf]
        %v1164 = vld [vmem:[%s1150 + $0x30] sm:$0xf]
        %v1165 = vld [vmem:[%s1150 + $0x34] sm:$0xf]
        %v1166 = vld [vmem:[%s1150 + $0x38] sm:$0xf]
        %v1167 = vld [vmem:[%s1150 + $0x3c] sm:$0xf]
        %v1168 = vld [vmem:[%s1150 + $0x40] sm:$0xf]
        %v1169 = vld [vmem:[%s1150 + $0x44] sm:$0xf]
        %v1170 = vld [vmem:[%s1150 + $0x48] sm:$0xf]
        %v1171 = vld [vmem:[%s1150 + $0x4c] sm:$0xf]
        %v1172 = vld [vmem:[%s1150 + $0x50] sm:$0xf]
        %v1173 = vld [vmem:[%s1150 + $0x54] sm:$0xf]
        %v1174 = vld [vmem:[%s1150 + $0x58] sm:$0xf]
        %v1175 = vld [vmem:[%s1150 + $0x5c] sm:$0xf]
        %v1176 = vld [vmem:[%s1150 + $0x60] sm:$0xf]
        %v1177 = vld [vmem:[%s1150 + $0x64] sm:$0xf]
        %v1178 = vld [vmem:[%s1150 + $0x68] sm:$0xf]
        %v1179 = vld [vmem:[%s1150 + $0x6c] sm:$0xf]
        %v1180 = vld [vmem:[%s1150 + $0x70] sm:$0xf]
        %v1181 = vld [vmem:[%s1150 + $0x74] sm:$0xf]
        %v1182 = vld [vmem:[%s1150 + $0x78] sm:$0xf]
        %v1183 = vld [vmem:[%s1150 + $0x7c] sm:$0xf]
        %v1184 = vld [vmem:[%s11] sm:$0xf]
        %v1185 = vld [vmem:[%s11 + $0x4] sm:$0xf]
        %v1186 = vld [vmem:[%s13] sm:$0x1]
        %v1188 = vperm.slane %v1186, 0
        %v1222 = vunpack.c.l.b16 %v1152
        %v1223 = vunpack.c.l.b16 %v1153
        %v1224 = vunpack.c.l.b16 %v1154
        %v1225 = vunpack.c.l.b16 %v1155
        %v1226 = vunpack.c.l.b16 %v1156
        %v1227 = vunpack.c.l.b16 %v1157
        %v1228 = vunpack.c.l.b16 %v1158
        %v1229 = vunpack.c.l.b16 %v1159
        %v1230 = vunpack.c.l.b16 %v1160
        %v1231 = vunpack.c.l.b16 %v1161
        %v1232 = vunpack.c.l.b16 %v1162
        %v1233 = vunpack.c.l.b16 %v1163
        %v1234 = vunpack.c.l.b16 %v1164
        %v1235 = vunpack.c.l.b16 %v1165
        %v1236 = vunpack.c.l.b16 %v1166
        %v1237 = vunpack.c.l.b16 %v1167
        %v1238 = vunpack.c.l.b16 %v1168
        %v1239 = vunpack.c.l.b16 %v1169
        %v1240 = vunpack.c.l.b16 %v1170
        %v1241 = vunpack.c.l.b16 %v1171
        %v1242 = vunpack.c.l.b16 %v1172
        %v1243 = vunpack.c.l.b16 %v1173
        %v1244 = vunpack.c.l.b16 %v1174
        %v1245 = vunpack.c.l.b16 %v1175
        %v1246 = vunpack.c.l.b16 %v1176
        %v1247 = vunpack.c.l.b16 %v1177
        %v1248 = vunpack.c.l.b16 %v1178
        %v1249 = vunpack.c.l.b16 %v1179
        %v1250 = vunpack.c.l.b16 %v1180
        %v1251 = vunpack.c.l.b16 %v1181
        %v1252 = vunpack.c.l.b16 %v1182
        %v1253 = vunpack.c.l.b16 %v1183
        %v1254 = vpack.c.b16 %v1223, %v1222
        %v1255 = vpack.c.b16 %v1225, %v1224
        %v1256 = vpack.c.b16 %v1227, %v1226
        %v1257 = vpack.c.b16 %v1229, %v1228
        %v1258 = vpack.c.b16 %v1231, %v1230
        %v1259 = vpack.c.b16 %v1233, %v1232
        %v1260 = vpack.c.b16 %v1235, %v1234
        %v1261 = vpack.c.b16 %v1237, %v1236
        %v1262 = vpack.c.b16 %v1239, %v1238
        %v1263 = vpack.c.b16 %v1241, %v1240
        %v1264 = vpack.c.b16 %v1243, %v1242
        %v1265 = vpack.c.b16 %v1245, %v1244
        %v1266 = vpack.c.b16 %v1247, %v1246
        %v1267 = vpack.c.b16 %v1249, %v1248
        %v1268 = vpack.c.b16 %v1251, %v1250
        %v1269 = vpack.c.b16 %v1253, %v1252
        %v1272 = vunpack.c.l.b16 %v1184
        %v1273 = vunpack.c.l.b16 %v1185
        %v1274 = vpack.c.b16 %v1273, %v1272
        %vm1276 = vcmask 130048
        %v1278 = vsel %vm1276, %v1254, 0
        %v1281 = vsel %vm1276, %v1255, 0
        %v1284 = vsel %vm1276, %v1256, 0
        %v1287 = vsel %vm1276, %v1257, 0
        %v1290 = vsel %vm1276, %v1258, 0
        %v1293 = vsel %vm1276, %v1259, 0
        %v1296 = vsel %vm1276, %v1260, 0
        %v1299 = vsel %vm1276, %v1261, 0
        %v1302 = vsel %vm1276, %v1262, 0
        %v1305 = vsel %vm1276, %v1263, 0
        %v1308 = vsel %vm1276, %v1264, 0
        %v1311 = vsel %vm1276, %v1265, 0
        %v1314 = vsel %vm1276, %v1266, 0
        %v1317 = vsel %vm1276, %v1267, 0
        %v1320 = vsel %vm1276, %v1268, 0
        %v1323 = vsel %vm1276, %v1269, 0
        %1325 = vmatpush.bf16.msra.mxu0 0
        %1326 = vmatpush.bf16.msra.mxu0 0
        %1327 = vmatpush.bf16.msra.mxu0 0
        %1328 = vmatpush.bf16.msra.mxu0 0
        %1329 = vmatpush.bf16.msra.mxu0 0
        %1330 = vmatpush.bf16.msra.mxu0 0
        %1331 = vmatpush.bf16.msra.mxu0 0
        %1332 = vmatpush.bf16.msra.mxu0 %v1274
        %1333 = vmatmul.bf16.gmra.mxu0 %v1278
        %v1334 = vpop.f32.mrf.mxu0
        %v1335 = vadd.f32 %v1188, %v1334
        %v1336 = vpop.f32.mrf.mxu0
        %v1337 = vadd.f32 %v1188, %v1336
        %1338 = vmatmul.bf16.gmra.mxu0 %v1281
        %v1339 = vpop.f32.mrf.mxu0
        %v1340 = vadd.f32 %v1188, %v1339
        %v1341 = vpop.f32.mrf.mxu0
        %v1342 = vadd.f32 %v1188, %v1341
        %1343 = vmatmul.bf16.gmra.mxu0 %v1284
        %v1344 = vpop.f32.mrf.mxu0
        %v1345 = vadd.f32 %v1188, %v1344
        %v1346 = vpop.f32.mrf.mxu0
        %v1347 = vadd.f32 %v1188, %v1346
        %1348 = vmatmul.bf16.gmra.mxu0 %v1287
        %v1349 = vpop.f32.mrf.mxu0
        %v1350 = vadd.f32 %v1188, %v1349
        %v1351 = vpop.f32.mrf.mxu0
        %v1352 = vadd.f32 %v1188, %v1351
        %1353 = vmatmul.bf16.gmra.mxu0 %v1290
        %v1354 = vpop.f32.mrf.mxu0
        %v1355 = vadd.f32 %v1188, %v1354
        %v1356 = vpop.f32.mrf.mxu0
        %v1357 = vadd.f32 %v1188, %v1356
        %1358 = vmatmul.bf16.gmra.mxu0 %v1293
        %v1359 = vpop.f32.mrf.mxu0
        %v1360 = vadd.f32 %v1188, %v1359
        %v1361 = vpop.f32.mrf.mxu0
        %v1362 = vadd.f32 %v1188, %v1361
        %1363 = vmatmul.bf16.gmra.mxu0 %v1296
        %v1364 = vpop.f32.mrf.mxu0
        %v1365 = vadd.f32 %v1188, %v1364
        %v1366 = vpop.f32.mrf.mxu0
        %v1367 = vadd.f32 %v1188, %v1366
        %1368 = vmatmul.bf16.gmra.mxu0 %v1299
        %v1369 = vpop.f32.mrf.mxu0
        %v1370 = vadd.f32 %v1188, %v1369
        %v1371 = vpop.f32.mrf.mxu0
        %v1372 = vadd.f32 %v1188, %v1371
        %1373 = vmatmul.bf16.gmra.mxu0 %v1302
        %v1374 = vpop.f32.mrf.mxu0
        %v1375 = vadd.f32 %v1188, %v1374
        %v1376 = vpop.f32.mrf.mxu0
        %v1377 = vadd.f32 %v1188, %v1376
        %1378 = vmatmul.bf16.gmra.mxu0 %v1305
        %v1379 = vpop.f32.mrf.mxu0
        %v1380 = vadd.f32 %v1188, %v1379
        %v1381 = vpop.f32.mrf.mxu0
        %v1382 = vadd.f32 %v1188, %v1381
        %1383 = vmatmul.bf16.gmra.mxu0 %v1308
        %v1384 = vpop.f32.mrf.mxu0
        %v1385 = vadd.f32 %v1188, %v1384
        %v1386 = vpop.f32.mrf.mxu0
        %v1387 = vadd.f32 %v1188, %v1386
        %1388 = vmatmul.bf16.gmra.mxu0 %v1311
        %v1389 = vpop.f32.mrf.mxu0
        %v1390 = vadd.f32 %v1188, %v1389
        %v1391 = vpop.f32.mrf.mxu0
        %v1392 = vadd.f32 %v1188, %v1391
        %1393 = vmatmul.bf16.gmra.mxu0 %v1314
        %v1394 = vpop.f32.mrf.mxu0
        %v1395 = vadd.f32 %v1188, %v1394
        %v1396 = vpop.f32.mrf.mxu0
        %v1397 = vadd.f32 %v1188, %v1396
        %1398 = vmatmul.bf16.gmra.mxu0 %v1317
        %v1399 = vpop.f32.mrf.mxu0
        %v1400 = vadd.f32 %v1188, %v1399
        %v1401 = vpop.f32.mrf.mxu0
        %v1402 = vadd.f32 %v1188, %v1401
        %1403 = vmatmul.bf16.gmra.mxu0 %v1320
        %v1404 = vpop.f32.mrf.mxu0
        %v1405 = vadd.f32 %v1188, %v1404
        %v1406 = vpop.f32.mrf.mxu0
        %v1407 = vadd.f32 %v1188, %v1406
        %1408 = vmatmul.bf16.gmra.mxu0 %v1323
        %v1409 = vpop.f32.mrf.mxu0
        %v1410 = vadd.f32 %v1188, %v1409
        %v1411 = vpop.f32.mrf.mxu0
        %v1412 = vadd.f32 %v1188, %v1411
        %1413 = vdwg.mxu0
        %v1414 = vmax.f32 %v1335, 0.0
        %v1415 = vmax.f32 %v1337, 0.0
        %v1416 = vmax.f32 %v1340, 0.0
        %v1417 = vmax.f32 %v1342, 0.0
        %v1418 = vmax.f32 %v1345, 0.0
        %v1419 = vmax.f32 %v1347, 0.0
        %v1420 = vmax.f32 %v1350, 0.0
        %v1421 = vmax.f32 %v1352, 0.0
        %v1422 = vmax.f32 %v1355, 0.0
        %v1423 = vmax.f32 %v1357, 0.0
        %v1424 = vmax.f32 %v1360, 0.0
        %v1425 = vmax.f32 %v1362, 0.0
        %v1426 = vmax.f32 %v1365, 0.0
        %v1427 = vmax.f32 %v1367, 0.0
        %v1428 = vmax.f32 %v1370, 0.0
        %v1429 = vmax.f32 %v1372, 0.0
        %v1430 = vmax.f32 %v1375, 0.0
        %v1431 = vmax.f32 %v1377, 0.0
        %v1432 = vmax.f32 %v1380, 0.0
        %v1433 = vmax.f32 %v1382, 0.0
        %v1434 = vmax.f32 %v1385, 0.0
        %v1435 = vmax.f32 %v1387, 0.0
        %v1436 = vmax.f32 %v1390, 0.0
        %v1437 = vmax.f32 %v1392, 0.0
        %v1438 = vmax.f32 %v1395, 0.0
        %v1439 = vmax.f32 %v1397, 0.0
        %v1440 = vmax.f32 %v1400, 0.0
        %v1441 = vmax.f32 %v1402, 0.0
        %v1442 = vmax.f32 %v1405, 0.0
        %v1443 = vmax.f32 %v1407, 0.0
        %v1444 = vmax.f32 %v1410, 0.0
        %v1445 = vmax.f32 %v1412, 0.0
        %v1446 = vld [vmem:[%s3] sm:$0xff]
        %v1447 = vld [vmem:[%s3 + $0x8] sm:$0xff]
        %v1448 = vld [vmem:[%s3 + $0x10] sm:$0xff]
        %v1449 = vld [vmem:[%s3 + $0x18] sm:$0xff]
        %v1450 = vld [vmem:[%s3 + $0x20] sm:$0xff]
        %v1451 = vld [vmem:[%s3 + $0x28] sm:$0xff]
        %v1452 = vld [vmem:[%s3 + $0x30] sm:$0xff]
        %v1453 = vld [vmem:[%s3 + $0x38] sm:$0xff]
        %v1454 = vpack.c.bf16 %v1415, %v1414
        %v1455 = vpack.c.bf16 %v1417, %v1416
        %v1456 = vpack.c.bf16 %v1419, %v1418
        %v1457 = vpack.c.bf16 %v1421, %v1420
        %v1458 = vpack.c.bf16 %v1423, %v1422
        %v1459 = vpack.c.bf16 %v1425, %v1424
        %v1460 = vpack.c.bf16 %v1427, %v1426
        %v1461 = vpack.c.bf16 %v1429, %v1428
        %v1462 = vpack.c.bf16 %v1431, %v1430
        %v1463 = vpack.c.bf16 %v1433, %v1432
        %v1464 = vpack.c.bf16 %v1435, %v1434
        %v1465 = vpack.c.bf16 %v1437, %v1436
        %v1466 = vpack.c.bf16 %v1439, %v1438
        %v1467 = vpack.c.bf16 %v1441, %v1440
        %v1468 = vpack.c.bf16 %v1443, %v1442
        %v1469 = vpack.c.bf16 %v1445, %v1444
        %v1478 = vunpack.c.l.b16 %v1446
        %v1479 = vunpack.c.h.b16 %v1446
        %v1480 = vunpack.c.l.b16 %v1447
        %v1481 = vunpack.c.h.b16 %v1447
        %v1482 = vunpack.c.l.b16 %v1448
        %v1483 = vunpack.c.h.b16 %v1448
        %v1484 = vunpack.c.l.b16 %v1449
        %v1485 = vunpack.c.h.b16 %v1449
        %v1486 = vunpack.c.l.b16 %v1450
        %v1487 = vunpack.c.h.b16 %v1450
        %v1488 = vunpack.c.l.b16 %v1451
        %v1489 = vunpack.c.h.b16 %v1451
        %v1490 = vunpack.c.l.b16 %v1452
        %v1491 = vunpack.c.h.b16 %v1452
        %v1492 = vunpack.c.l.b16 %v1453
        %v1493 = vunpack.c.h.b16 %v1453
        %v1494 = vpack.c.b16 %v1480, %v1478
        %v1495 = vpack.c.b16 %v1481, %v1479
        %v1496 = vpack.c.b16 %v1484, %v1482
        %v1497 = vpack.c.b16 %v1485, %v1483
        %v1498 = vpack.c.b16 %v1488, %v1486
        %v1499 = vpack.c.b16 %v1489, %v1487
        %v1500 = vpack.c.b16 %v1492, %v1490
        %v1501 = vpack.c.b16 %v1493, %v1491
        %1510 = vmatpush.bf16.msra.mxu0 %v1461
        %1511 = vmatpush.bf16.msra.mxu0 %v1460
        %1512 = vmatpush.bf16.msra.mxu0 %v1459
        %1513 = vmatpush.bf16.msra.mxu0 %v1458
        %1514 = vmatpush.bf16.msra.mxu0 %v1457
        %1515 = vmatpush.bf16.msra.mxu0 %v1456
        %1516 = vmatpush.bf16.msra.mxu0 %v1455
        %1517 = vmatpush.bf16.msra.mxu0 %v1454
        %1518 = vmatmul.bf16.gmra.mxu0 %v1494
        %v1519 = vpop.f32.mrf.mxu0
        %v1520 = vadd.f32 0.0, %v1519
        %v1521 = vpop.f32.mrf.mxu0
        %v1522 = vadd.f32 0.0, %v1521
        %1523 = vmatmul.bf16.gmra.mxu0 %v1496
        %v1524 = vpop.f32.mrf.mxu0
        %v1525 = vadd.f32 0.0, %v1524
        %v1526 = vpop.f32.mrf.mxu0
        %v1527 = vadd.f32 0.0, %v1526
        %1528 = vmatmul.bf16.gmra.mxu0 %v1498
        %v1529 = vpop.f32.mrf.mxu0
        %v1530 = vadd.f32 0.0, %v1529
        %v1531 = vpop.f32.mrf.mxu0
        %v1532 = vadd.f32 0.0, %v1531
        %1533 = vmatmul.bf16.gmra.mxu0 %v1500
        %v1534 = vpop.f32.mrf.mxu0
        %v1535 = vadd.f32 0.0, %v1534
        %v1536 = vpop.f32.mrf.mxu0
        %v1537 = vadd.f32 0.0, %v1536
        %1538 = vdwg.mxu0
        %1539 = vmatpush.bf16.msra.mxu0 %v1469
        %1540 = vmatpush.bf16.msra.mxu0 %v1468
        %1541 = vmatpush.bf16.msra.mxu0 %v1467
        %1542 = vmatpush.bf16.msra.mxu0 %v1466
        %1543 = vmatpush.bf16.msra.mxu0 %v1465
        %1544 = vmatpush.bf16.msra.mxu0 %v1464
        %1545 = vmatpush.bf16.msra.mxu0 %v1463
        %1546 = vmatpush.bf16.msra.mxu0 %v1462
        %1547 = vmatmul.bf16.gmra.mxu0 %v1495
        %v1548 = vpop.f32.mrf.mxu0
        %v1549 = vadd.f32 %v1520, %v1548
        %v1550 = vpop.f32.mrf.mxu0
        %v1551 = vadd.f32 %v1522, %v1550
        %1552 = vmatmul.bf16.gmra.mxu0 %v1497
        %v1553 = vpop.f32.mrf.mxu0
        %v1554 = vadd.f32 %v1525, %v1553
        %v1555 = vpop.f32.mrf.mxu0
        %v1556 = vadd.f32 %v1527, %v1555
        %1557 = vmatmul.bf16.gmra.mxu0 %v1499
        %v1558 = vpop.f32.mrf.mxu0
        %v1559 = vadd.f32 %v1530, %v1558
        %v1560 = vpop.f32.mrf.mxu0
        %v1561 = vadd.f32 %v1532, %v1560
        %1562 = vmatmul.bf16.gmra.mxu0 %v1501
        %v1563 = vpop.f32.mrf.mxu0
        %v1564 = vadd.f32 %v1535, %v1563
        %v1565 = vpop.f32.mrf.mxu0
        %v1566 = vadd.f32 %v1537, %v1565
        %1567 = vdwg.mxu0
        %v1568 = vld [vmem:[%s15] sm:$0xf]
        %v1569 = vld [vmem:[%s15 + $0x4] sm:$0xf]
        %v1570 = vld [vmem:[%s15 + $0x8] sm:$0xf]
        %v1571 = vld [vmem:[%s15 + $0xc] sm:$0xf]
        %v1572 = vpack.c.bf16 %v1551, %v1549
        %v1573 = vpack.c.bf16 %v1556, %v1554
        %v1574 = vpack.c.bf16 %v1561, %v1559
        %v1575 = vpack.c.bf16 %v1566, %v1564
        %s1576 = scalar_lea.vmem %s3, 64
        %v1577 = vld [vmem:[%s1576] sm:$0xff]
        %v1578 = vld [vmem:[%s1576 + $0x8] sm:$0xff]
        %v1579 = vld [vmem:[%s1576 + $0x10] sm:$0xff]
        %v1580 = vld [vmem:[%s1576 + $0x18] sm:$0xff]
        %v1581 = vld [vmem:[%s1576 + $0x20] sm:$0xff]
        %v1582 = vld [vmem:[%s1576 + $0x28] sm:$0xff]
        %v1583 = vld [vmem:[%s1576 + $0x30] sm:$0xff]
        %v1584 = vld [vmem:[%s1576 + $0x38] sm:$0xff]
        %v1593 = vunpack.c.l.b16 %v1577
        %v1594 = vunpack.c.h.b16 %v1577
        %v1595 = vunpack.c.l.b16 %v1578
        %v1596 = vunpack.c.h.b16 %v1578
        %v1597 = vunpack.c.l.b16 %v1579
        %v1598 = vunpack.c.h.b16 %v1579
        %v1599 = vunpack.c.l.b16 %v1580
        %v1600 = vunpack.c.h.b16 %v1580
        %v1601 = vunpack.c.l.b16 %v1581
        %v1602 = vunpack.c.h.b16 %v1581
        %v1603 = vunpack.c.l.b16 %v1582
        %v1604 = vunpack.c.h.b16 %v1582
        %v1605 = vunpack.c.l.b16 %v1583
        %v1606 = vunpack.c.h.b16 %v1583
        %v1607 = vunpack.c.l.b16 %v1584
        %v1608 = vunpack.c.h.b16 %v1584
        %v1609 = vpack.c.b16 %v1595, %v1593
        %v1610 = vpack.c.b16 %v1596, %v1594
        %v1611 = vpack.c.b16 %v1599, %v1597
        %v1612 = vpack.c.b16 %v1600, %v1598
        %v1613 = vpack.c.b16 %v1603, %v1601
        %v1614 = vpack.c.b16 %v1604, %v1602
        %v1615 = vpack.c.b16 %v1607, %v1605
        %v1616 = vpack.c.b16 %v1608, %v1606
        %1625 = vmatpush.bf16.msra.mxu0 %v1461
        %1626 = vmatpush.bf16.msra.mxu0 %v1460
        %1627 = vmatpush.bf16.msra.mxu0 %v1459
        %1628 = vmatpush.bf16.msra.mxu0 %v1458
        %1629 = vmatpush.bf16.msra.mxu0 %v1457
        %1630 = vmatpush.bf16.msra.mxu0 %v1456
        %1631 = vmatpush.bf16.msra.mxu0 %v1455
        %1632 = vmatpush.bf16.msra.mxu0 %v1454
        %1633 = vmatmul.bf16.gmra.mxu0 %v1609
        %v1634 = vpop.f32.mrf.mxu0
        %v1635 = vadd.f32 0.0, %v1634
        %v1636 = vpop.f32.mrf.mxu0
        %v1637 = vadd.f32 0.0, %v1636
        %1638 = vmatmul.bf16.gmra.mxu0 %v1611
        %v1639 = vpop.f32.mrf.mxu0
        %v1640 = vadd.f32 0.0, %v1639
        %v1641 = vpop.f32.mrf.mxu0
        %v1642 = vadd.f32 0.0, %v1641
        %1643 = vmatmul.bf16.gmra.mxu0 %v1613
        %v1644 = vpop.f32.mrf.mxu0
        %v1645 = vadd.f32 0.0, %v1644
        %v1646 = vpop.f32.mrf.mxu0
        %v1647 = vadd.f32 0.0, %v1646
        %1648 = vmatmul.bf16.gmra.mxu0 %v1615
        %v1649 = vpop.f32.mrf.mxu0
        %v1650 = vadd.f32 0.0, %v1649
        %v1651 = vpop.f32.mrf.mxu0
        %v1652 = vadd.f32 0.0, %v1651
        %1653 = vdwg.mxu0
        %1654 = vmatpush.bf16.msra.mxu0 %v1469
        %1655 = vmatpush.bf16.msra.mxu0 %v1468
        %1656 = vmatpush.bf16.msra.mxu0 %v1467
        %1657 = vmatpush.bf16.msra.mxu0 %v1466
        %1658 = vmatpush.bf16.msra.mxu0 %v1465
        %1659 = vmatpush.bf16.msra.mxu0 %v1464
        %1660 = vmatpush.bf16.msra.mxu0 %v1463
        %1661 = vmatpush.bf16.msra.mxu0 %v1462
        %1662 = vmatmul.bf16.gmra.mxu0 %v1610
        %v1663 = vpop.f32.mrf.mxu0
        %v1664 = vadd.f32 %v1635, %v1663
        %v1665 = vpop.f32.mrf.mxu0
        %v1666 = vadd.f32 %v1637, %v1665
        %1667 = vmatmul.bf16.gmra.mxu0 %v1612
        %v1668 = vpop.f32.mrf.mxu0
        %v1669 = vadd.f32 %v1640, %v1668
        %v1670 = vpop.f32.mrf.mxu0
        %v1671 = vadd.f32 %v1642, %v1670
        %1672 = vmatmul.bf16.gmra.mxu0 %v1614
        %v1673 = vpop.f32.mrf.mxu0
        %v1674 = vadd.f32 %v1645, %v1673
        %v1675 = vpop.f32.mrf.mxu0
        %v1676 = vadd.f32 %v1647, %v1675
        %1677 = vmatmul.bf16.gmra.mxu0 %v1616
        %v1678 = vpop.f32.mrf.mxu0
        %v1679 = vadd.f32 %v1650, %v1678
        %v1680 = vpop.f32.mrf.mxu0
        %v1681 = vadd.f32 %v1652, %v1680
        %1682 = vdwg.mxu0
        %s1683 = scalar_lea.vmem %s15, 16
        %v1684 = vld [vmem:[%s1683] sm:$0xf]
        %v1685 = vld [vmem:[%s1683 + $0x4] sm:$0xf]
        %v1686 = vld [vmem:[%s1683 + $0x8] sm:$0xf]
        %v1687 = vld [vmem:[%s1683 + $0xc] sm:$0xf]
        %v1688 = vpack.c.bf16 %v1666, %v1664
        %v1689 = vpack.c.bf16 %v1671, %v1669
        %v1690 = vpack.c.bf16 %v1676, %v1674
        %v1691 = vpack.c.bf16 %v1681, %v1679
        %v1696 = vunpack.c.l.b16 %v1684
        %v1697 = vunpack.c.l.b16 %v1685
        %v1698 = vunpack.c.l.b16 %v1686
        %v1699 = vunpack.c.l.b16 %v1687
        %v1700 = vpack.c.b16 %v1697, %v1696
        %v1701 = vpack.c.b16 %v1699, %v1698
        %vm1704 = vcmask 261120
        %v1706 = vsel %vm1704, %v1688, 0
        %v1709 = vsel %vm1704, %v1689, 0
        %v1712 = vsel %vm1704, %v1690, 0
        %v1715 = vsel %vm1704, %v1691, 0
        %1717 = vmatpush.bf16.msra.mxu0 0
        %1718 = vmatpush.bf16.msra.mxu0 0
        %1719 = vmatpush.bf16.msra.mxu0 0
        %1720 = vmatpush.bf16.msra.mxu0 0
        %1721 = vmatpush.bf16.msra.mxu0 0
        %1722 = vmatpush.bf16.msra.mxu0 0
        %1723 = vmatpush.bf16.msra.mxu0 %v1701
        %1724 = vmatpush.bf16.msra.mxu0 %v1700
        %1725 = vmatmul.bf16.gmra.mxu0 %v1706
        %v1726 = vpop.f32.mrf.mxu0
        %v1727 = vadd.f32 0.0, %v1726
        %v1728 = vpop.f32.mrf.mxu0
        %v1729 = vadd.f32 0.0, %v1728
        %1730 = vmatmul.bf16.gmra.mxu0 %v1709
        %v1731 = vpop.f32.mrf.mxu0
        %v1732 = vadd.f32 0.0, %v1731
        %v1733 = vpop.f32.mrf.mxu0
        %v1734 = vadd.f32 0.0, %v1733
        %1735 = vmatmul.bf16.gmra.mxu0 %v1712
        %v1736 = vpop.f32.mrf.mxu0
        %v1737 = vadd.f32 0.0, %v1736
        %v1738 = vpop.f32.mrf.mxu0
        %v1739 = vadd.f32 0.0, %v1738
        %1740 = vmatmul.bf16.gmra.mxu0 %v1715
        %v1741 = vpop.f32.mrf.mxu0
        %v1742 = vadd.f32 0.0, %v1741
        %v1743 = vpop.f32.mrf.mxu0
        %v1744 = vadd.f32 0.0, %v1743
        %1745 = vdwg.mxu0
        %v1750 = vunpack.c.l.b16 %v1568
        %v1751 = vunpack.c.l.b16 %v1569
        %v1752 = vunpack.c.l.b16 %v1570
        %v1753 = vunpack.c.l.b16 %v1571
        %v1754 = vpack.c.b16 %v1751, %v1750
        %v1755 = vpack.c.b16 %v1753, %v1752
        %v1759 = vsel %vm1704, %v1572, 0
        %v1762 = vsel %vm1704, %v1573, 0
        %v1765 = vsel %vm1704, %v1574, 0
        %v1768 = vsel %vm1704, %v1575, 0
        %1770 = vmatpush.bf16.msra.mxu0 0
        %1771 = vmatpush.bf16.msra.mxu0 0
        %1772 = vmatpush.bf16.msra.mxu0 0
        %1773 = vmatpush.bf16.msra.mxu0 0
        %1774 = vmatpush.bf16.msra.mxu0 0
        %1775 = vmatpush.bf16.msra.mxu0 0
        %1776 = vmatpush.bf16.msra.mxu0 %v1755
        %1777 = vmatpush.bf16.msra.mxu0 %v1754
        %1778 = vmatmul.bf16.gmra.mxu0 %v1759
        %v1779 = vpop.f32.mrf.mxu0
        %v1780 = vadd.f32 %v1727, %v1779
        %v1781 = vpop.f32.mrf.mxu0
        %v1782 = vadd.f32 %v1729, %v1781
        %1783 = vmatmul.bf16.gmra.mxu0 %v1762
        %v1784 = vpop.f32.mrf.mxu0
        %v1785 = vadd.f32 %v1732, %v1784
        %v1786 = vpop.f32.mrf.mxu0
        %v1787 = vadd.f32 %v1734, %v1786
        %1788 = vmatmul.bf16.gmra.mxu0 %v1765
        %v1789 = vpop.f32.mrf.mxu0
        %v1790 = vadd.f32 %v1737, %v1789
        %v1791 = vpop.f32.mrf.mxu0
        %v1792 = vadd.f32 %v1739, %v1791
        %1793 = vmatmul.bf16.gmra.mxu0 %v1768
        %v1794 = vpop.f32.mrf.mxu0
        %v1795 = vadd.f32 %v1742, %v1794
        %v1796 = vpop.f32.mrf.mxu0
        %v1797 = vadd.f32 %v1744, %v1796
        %1798 = vdwg.mxu0
        %s1799 = scalar_lea.vmem %s3, 128
        %v1800 = vld [vmem:[%s1799] sm:$0xff]
        %v1801 = vld [vmem:[%s1799 + $0x8] sm:$0xff]
        %v1802 = vld [vmem:[%s1799 + $0x10] sm:$0xff]
        %v1803 = vld [vmem:[%s1799 + $0x18] sm:$0xff]
        %v1804 = vld [vmem:[%s1799 + $0x20] sm:$0xff]
        %v1805 = vld [vmem:[%s1799 + $0x28] sm:$0xff]
        %v1806 = vld [vmem:[%s1799 + $0x30] sm:$0xff]
        %v1807 = vld [vmem:[%s1799 + $0x38] sm:$0xff]
        %v1816 = vunpack.c.l.b16 %v1800
        %v1817 = vunpack.c.h.b16 %v1800
        %v1818 = vunpack.c.l.b16 %v1801
        %v1819 = vunpack.c.h.b16 %v1801
        %v1820 = vunpack.c.l.b16 %v1802
        %v1821 = vunpack.c.h.b16 %v1802
        %v1822 = vunpack.c.l.b16 %v1803
        %v1823 = vunpack.c.h.b16 %v1803
        %v1824 = vunpack.c.l.b16 %v1804
        %v1825 = vunpack.c.h.b16 %v1804
        %v1826 = vunpack.c.l.b16 %v1805
        %v1827 = vunpack.c.h.b16 %v1805
        %v1828 = vunpack.c.l.b16 %v1806
        %v1829 = vunpack.c.h.b16 %v1806
        %v1830 = vunpack.c.l.b16 %v1807
        %v1831 = vunpack.c.h.b16 %v1807
        %v1832 = vpack.c.b16 %v1818, %v1816
        %v1833 = vpack.c.b16 %v1819, %v1817
        %v1834 = vpack.c.b16 %v1822, %v1820
        %v1835 = vpack.c.b16 %v1823, %v1821
        %v1836 = vpack.c.b16 %v1826, %v1824
        %v1837 = vpack.c.b16 %v1827, %v1825
        %v1838 = vpack.c.b16 %v1830, %v1828
        %v1839 = vpack.c.b16 %v1831, %v1829
        %1848 = vmatpush.bf16.msra.mxu0 %v1461
        %1849 = vmatpush.bf16.msra.mxu0 %v1460
        %1850 = vmatpush.bf16.msra.mxu0 %v1459
        %1851 = vmatpush.bf16.msra.mxu0 %v1458
        %1852 = vmatpush.bf16.msra.mxu0 %v1457
        %1853 = vmatpush.bf16.msra.mxu0 %v1456
        %1854 = vmatpush.bf16.msra.mxu0 %v1455
        %1855 = vmatpush.bf16.msra.mxu0 %v1454
        %1856 = vmatmul.bf16.gmra.mxu0 %v1832
        %v1857 = vpop.f32.mrf.mxu0
        %v1858 = vadd.f32 0.0, %v1857
        %v1859 = vpop.f32.mrf.mxu0
        %v1860 = vadd.f32 0.0, %v1859
        %1861 = vmatmul.bf16.gmra.mxu0 %v1834
        %v1862 = vpop.f32.mrf.mxu0
        %v1863 = vadd.f32 0.0, %v1862
        %v1864 = vpop.f32.mrf.mxu0
        %v1865 = vadd.f32 0.0, %v1864
        %1866 = vmatmul.bf16.gmra.mxu0 %v1836
        %v1867 = vpop.f32.mrf.mxu0
        %v1868 = vadd.f32 0.0, %v1867
        %v1869 = vpop.f32.mrf.mxu0
        %v1870 = vadd.f32 0.0, %v1869
        %1871 = vmatmul.bf16.gmra.mxu0 %v1838
        %v1872 = vpop.f32.mrf.mxu0
        %v1873 = vadd.f32 0.0, %v1872
        %v1874 = vpop.f32.mrf.mxu0
        %v1875 = vadd.f32 0.0, %v1874
        %1876 = vdwg.mxu0
        %1877 = vmatpush.bf16.msra.mxu0 %v1469
        %1878 = vmatpush.bf16.msra.mxu0 %v1468
        %1879 = vmatpush.bf16.msra.mxu0 %v1467
        %1880 = vmatpush.bf16.msra.mxu0 %v1466
        %1881 = vmatpush.bf16.msra.mxu0 %v1465
        %1882 = vmatpush.bf16.msra.mxu0 %v1464
        %1883 = vmatpush.bf16.msra.mxu0 %v1463
        %1884 = vmatpush.bf16.msra.mxu0 %v1462
        %1885 = vmatmul.bf16.gmra.mxu0 %v1833
        %v1886 = vpop.f32.mrf.mxu0
        %v1887 = vadd.f32 %v1858, %v1886
        %v1888 = vpop.f32.mrf.mxu0
        %v1889 = vadd.f32 %v1860, %v1888
        %1890 = vmatmul.bf16.gmra.mxu0 %v1835
        %v1891 = vpop.f32.mrf.mxu0
        %v1892 = vadd.f32 %v1863, %v1891
        %v1893 = vpop.f32.mrf.mxu0
        %v1894 = vadd.f32 %v1865, %v1893
        %1895 = vmatmul.bf16.gmra.mxu0 %v1837
        %v1896 = vpop.f32.mrf.mxu0
        %v1897 = vadd.f32 %v1868, %v1896
        %v1898 = vpop.f32.mrf.mxu0
        %v1899 = vadd.f32 %v1870, %v1898
        %1900 = vmatmul.bf16.gmra.mxu0 %v1839
        %v1901 = vpop.f32.mrf.mxu0
        %v1902 = vadd.f32 %v1873, %v1901
        %v1903 = vpop.f32.mrf.mxu0
        %v1904 = vadd.f32 %v1875, %v1903
        %1905 = vdwg.mxu0
        %s1906 = scalar_lea.vmem %s15, 32
        %v1907 = vld [vmem:[%s1906] sm:$0xf]
        %v1908 = vld [vmem:[%s1906 + $0x4] sm:$0xf]
        %v1909 = vld [vmem:[%s1906 + $0x8] sm:$0xf]
        %v1910 = vld [vmem:[%s1906 + $0xc] sm:$0xf]
        %v1911 = vpack.c.bf16 %v1889, %v1887
        %v1912 = vpack.c.bf16 %v1894, %v1892
        %v1913 = vpack.c.bf16 %v1899, %v1897
        %v1914 = vpack.c.bf16 %v1904, %v1902
        %v1919 = vunpack.c.l.b16 %v1907
        %v1920 = vunpack.c.l.b16 %v1908
        %v1921 = vunpack.c.l.b16 %v1909
        %v1922 = vunpack.c.l.b16 %v1910
        %v1923 = vpack.c.b16 %v1920, %v1919
        %v1924 = vpack.c.b16 %v1922, %v1921
        %v1928 = vsel %vm1704, %v1911, 0
        %v1931 = vsel %vm1704, %v1912, 0
        %v1934 = vsel %vm1704, %v1913, 0
        %v1937 = vsel %vm1704, %v1914, 0
        %1939 = vmatpush.bf16.msra.mxu0 0
        %1940 = vmatpush.bf16.msra.mxu0 0
        %1941 = vmatpush.bf16.msra.mxu0 0
        %1942 = vmatpush.bf16.msra.mxu0 0
        %1943 = vmatpush.bf16.msra.mxu0 0
        %1944 = vmatpush.bf16.msra.mxu0 0
        %1945 = vmatpush.bf16.msra.mxu0 %v1924
        %1946 = vmatpush.bf16.msra.mxu0 %v1923
        %1947 = vmatmul.bf16.gmra.mxu0 %v1928
        %v1948 = vpop.f32.mrf.mxu0
        %v1949 = vadd.f32 0.0, %v1948
        %v1950 = vpop.f32.mrf.mxu0
        %v1951 = vadd.f32 0.0, %v1950
        %1952 = vmatmul.bf16.gmra.mxu0 %v1931
        %v1953 = vpop.f32.mrf.mxu0
        %v1954 = vadd.f32 0.0, %v1953
        %v1955 = vpop.f32.mrf.mxu0
        %v1956 = vadd.f32 0.0, %v1955
        %1957 = vmatmul.bf16.gmra.mxu0 %v1934
        %v1958 = vpop.f32.mrf.mxu0
        %v1959 = vadd.f32 0.0, %v1958
        %v1960 = vpop.f32.mrf.mxu0
        %v1961 = vadd.f32 0.0, %v1960
        %1962 = vmatmul.bf16.gmra.mxu0 %v1937
        %v1963 = vpop.f32.mrf.mxu0
        %v1964 = vadd.f32 0.0, %v1963
        %v1965 = vpop.f32.mrf.mxu0
        %v1966 = vadd.f32 0.0, %v1965
        %1967 = vdwg.mxu0
        %v1968 = vadd.f32 %v1780, %v1949
        %v1969 = vadd.f32 %v1782, %v1951
        %v1970 = vadd.f32 %v1785, %v1954
        %v1971 = vadd.f32 %v1787, %v1956
        %v1972 = vadd.f32 %v1790, %v1959
        %v1973 = vadd.f32 %v1792, %v1961
        %v1974 = vadd.f32 %v1795, %v1964
        %v1975 = vadd.f32 %v1797, %v1966
        %s1976 = scalar_lea.vmem %s3, 192
        %v1977 = vld [vmem:[%s1976] sm:$0xff]
        %v1978 = vld [vmem:[%s1976 + $0x8] sm:$0xff]
        %v1979 = vld [vmem:[%s1976 + $0x10] sm:$0xff]
        %v1980 = vld [vmem:[%s1976 + $0x18] sm:$0xff]
        %v1981 = vld [vmem:[%s1976 + $0x20] sm:$0xff]
        %v1982 = vld [vmem:[%s1976 + $0x28] sm:$0xff]
        %v1983 = vld [vmem:[%s1976 + $0x30] sm:$0xff]
        %v1984 = vld [vmem:[%s1976 + $0x38] sm:$0xff]
        %v1993 = vunpack.c.l.b16 %v1977
        %v1994 = vunpack.c.h.b16 %v1977
        %v1995 = vunpack.c.l.b16 %v1978
        %v1996 = vunpack.c.h.b16 %v1978
        %v1997 = vunpack.c.l.b16 %v1979
        %v1998 = vunpack.c.h.b16 %v1979
        %v1999 = vunpack.c.l.b16 %v1980
        %v2000 = vunpack.c.h.b16 %v1980
        %v2001 = vunpack.c.l.b16 %v1981
        %v2002 = vunpack.c.h.b16 %v1981
        %v2003 = vunpack.c.l.b16 %v1982
        %v2004 = vunpack.c.h.b16 %v1982
        %v2005 = vunpack.c.l.b16 %v1983
        %v2006 = vunpack.c.h.b16 %v1983
        %v2007 = vunpack.c.l.b16 %v1984
        %v2008 = vunpack.c.h.b16 %v1984
        %v2009 = vpack.c.b16 %v1995, %v1993
        %v2010 = vpack.c.b16 %v1996, %v1994
        %v2011 = vpack.c.b16 %v1999, %v1997
        %v2012 = vpack.c.b16 %v2000, %v1998
        %v2013 = vpack.c.b16 %v2003, %v2001
        %v2014 = vpack.c.b16 %v2004, %v2002
        %v2015 = vpack.c.b16 %v2007, %v2005
        %v2016 = vpack.c.b16 %v2008, %v2006
        %2025 = vmatpush.bf16.msra.mxu0 %v1461
        %2026 = vmatpush.bf16.msra.mxu0 %v1460
        %2027 = vmatpush.bf16.msra.mxu0 %v1459
        %2028 = vmatpush.bf16.msra.mxu0 %v1458
        %2029 = vmatpush.bf16.msra.mxu0 %v1457
        %2030 = vmatpush.bf16.msra.mxu0 %v1456
        %2031 = vmatpush.bf16.msra.mxu0 %v1455
        %2032 = vmatpush.bf16.msra.mxu0 %v1454
        %2033 = vmatmul.bf16.gmra.mxu0 %v2009
        %v2034 = vpop.f32.mrf.mxu0
        %v2035 = vadd.f32 0.0, %v2034
        %v2036 = vpop.f32.mrf.mxu0
        %v2037 = vadd.f32 0.0, %v2036
        %2038 = vmatmul.bf16.gmra.mxu0 %v2011
        %v2039 = vpop.f32.mrf.mxu0
        %v2040 = vadd.f32 0.0, %v2039
        %v2041 = vpop.f32.mrf.mxu0
        %v2042 = vadd.f32 0.0, %v2041
        %2043 = vmatmul.bf16.gmra.mxu0 %v2013
        %v2044 = vpop.f32.mrf.mxu0
        %v2045 = vadd.f32 0.0, %v2044
        %v2046 = vpop.f32.mrf.mxu0
        %v2047 = vadd.f32 0.0, %v2046
        %2048 = vmatmul.bf16.gmra.mxu0 %v2015
        %v2049 = vpop.f32.mrf.mxu0
        %v2050 = vadd.f32 0.0, %v2049
        %v2051 = vpop.f32.mrf.mxu0
        %v2052 = vadd.f32 0.0, %v2051
        %2053 = vdwg.mxu0
        %2054 = vmatpush.bf16.msra.mxu0 %v1469
        %2055 = vmatpush.bf16.msra.mxu0 %v1468
        %2056 = vmatpush.bf16.msra.mxu0 %v1467
        %2057 = vmatpush.bf16.msra.mxu0 %v1466
        %2058 = vmatpush.bf16.msra.mxu0 %v1465
        %2059 = vmatpush.bf16.msra.mxu0 %v1464
        %2060 = vmatpush.bf16.msra.mxu0 %v1463
        %2061 = vmatpush.bf16.msra.mxu0 %v1462
        %2062 = vmatmul.bf16.gmra.mxu0 %v2010
        %v2063 = vpop.f32.mrf.mxu0
        %v2064 = vadd.f32 %v2035, %v2063
        %v2065 = vpop.f32.mrf.mxu0
        %v2066 = vadd.f32 %v2037, %v2065
        %2067 = vmatmul.bf16.gmra.mxu0 %v2012
        %v2068 = vpop.f32.mrf.mxu0
        %v2069 = vadd.f32 %v2040, %v2068
        %v2070 = vpop.f32.mrf.mxu0
        %v2071 = vadd.f32 %v2042, %v2070
        %2072 = vmatmul.bf16.gmra.mxu0 %v2014
        %v2073 = vpop.f32.mrf.mxu0
        %v2074 = vadd.f32 %v2045, %v2073
        %v2075 = vpop.f32.mrf.mxu0
        %v2076 = vadd.f32 %v2047, %v2075
        %2077 = vmatmul.bf16.gmra.mxu0 %v2016
        %v2078 = vpop.f32.mrf.mxu0
        %v2079 = vadd.f32 %v2050, %v2078
        %v2080 = vpop.f32.mrf.mxu0
        %v2081 = vadd.f32 %v2052, %v2080
        %2082 = vdwg.mxu0
        %s2083 = scalar_lea.vmem %s15, 48
        %v2084 = vld [vmem:[%s2083] sm:$0xf]
        %v2085 = vld [vmem:[%s2083 + $0x4] sm:$0xf]
        %v2086 = vld [vmem:[%s2083 + $0x8] sm:$0xf]
        %v2087 = vld [vmem:[%s2083 + $0xc] sm:$0xf]
        %v2088 = vpack.c.bf16 %v2066, %v2064
        %v2089 = vpack.c.bf16 %v2071, %v2069
        %v2090 = vpack.c.bf16 %v2076, %v2074
        %v2091 = vpack.c.bf16 %v2081, %v2079
        %v2096 = vunpack.c.l.b16 %v2084
        %v2097 = vunpack.c.l.b16 %v2085
        %v2098 = vunpack.c.l.b16 %v2086
        %v2099 = vunpack.c.l.b16 %v2087
        %v2100 = vpack.c.b16 %v2097, %v2096
        %v2101 = vpack.c.b16 %v2099, %v2098
        %v2105 = vsel %vm1704, %v2088, 0
        %v2108 = vsel %vm1704, %v2089, 0
        %v2111 = vsel %vm1704, %v2090, 0
        %v2114 = vsel %vm1704, %v2091, 0
        %2116 = vmatpush.bf16.msra.mxu0 0
        %2117 = vmatpush.bf16.msra.mxu0 0
        %2118 = vmatpush.bf16.msra.mxu0 0
        %2119 = vmatpush.bf16.msra.mxu0 0
        %2120 = vmatpush.bf16.msra.mxu0 0
        %2121 = vmatpush.bf16.msra.mxu0 0
        %2122 = vmatpush.bf16.msra.mxu0 %v2101
        %2123 = vmatpush.bf16.msra.mxu0 %v2100
        %2124 = vmatmul.bf16.gmra.mxu0 %v2105
        %v2125 = vpop.f32.mrf.mxu0
        %v2126 = vadd.f32 0.0, %v2125
        %v2127 = vpop.f32.mrf.mxu0
        %v2128 = vadd.f32 0.0, %v2127
        %2129 = vmatmul.bf16.gmra.mxu0 %v2108
        %v2130 = vpop.f32.mrf.mxu0
        %v2131 = vadd.f32 0.0, %v2130
        %v2132 = vpop.f32.mrf.mxu0
        %v2133 = vadd.f32 0.0, %v2132
        %2134 = vmatmul.bf16.gmra.mxu0 %v2111
        %v2135 = vpop.f32.mrf.mxu0
        %v2136 = vadd.f32 0.0, %v2135
        %v2137 = vpop.f32.mrf.mxu0
        %v2138 = vadd.f32 0.0, %v2137
        %2139 = vmatmul.bf16.gmra.mxu0 %v2114
        %v2140 = vpop.f32.mrf.mxu0
        %v2141 = vadd.f32 0.0, %v2140
        %v2142 = vpop.f32.mrf.mxu0
        %v2143 = vadd.f32 0.0, %v2142
        %2144 = vdwg.mxu0
        %v2145 = vadd.f32 %v1968, %v2126
        %v2146 = vadd.f32 %v1969, %v2128
        %v2147 = vadd.f32 %v1970, %v2131
        %v2148 = vadd.f32 %v1971, %v2133
        %v2149 = vadd.f32 %v1972, %v2136
        %v2150 = vadd.f32 %v1973, %v2138
        %v2151 = vadd.f32 %v1974, %v2141
        %v2152 = vadd.f32 %v1975, %v2143
        %s2153 = scalar_lea.vmem %s3, 256
        %v2154 = vld [vmem:[%s2153] sm:$0xff]
        %v2155 = vld [vmem:[%s2153 + $0x8] sm:$0xff]
        %v2156 = vld [vmem:[%s2153 + $0x10] sm:$0xff]
        %v2157 = vld [vmem:[%s2153 + $0x18] sm:$0xff]
        %v2158 = vld [vmem:[%s2153 + $0x20] sm:$0xff]
        %v2159 = vld [vmem:[%s2153 + $0x28] sm:$0xff]
        %v2160 = vld [vmem:[%s2153 + $0x30] sm:$0xff]
        %v2161 = vld [vmem:[%s2153 + $0x38] sm:$0xff]
        %v2170 = vunpack.c.l.b16 %v2154
        %v2171 = vunpack.c.h.b16 %v2154
        %v2172 = vunpack.c.l.b16 %v2155
        %v2173 = vunpack.c.h.b16 %v2155
        %v2174 = vunpack.c.l.b16 %v2156
        %v2175 = vunpack.c.h.b16 %v2156
        %v2176 = vunpack.c.l.b16 %v2157
        %v2177 = vunpack.c.h.b16 %v2157
        %v2178 = vunpack.c.l.b16 %v2158
        %v2179 = vunpack.c.h.b16 %v2158
        %v2180 = vunpack.c.l.b16 %v2159
        %v2181 = vunpack.c.h.b16 %v2159
        %v2182 = vunpack.c.l.b16 %v2160
        %v2183 = vunpack.c.h.b16 %v2160
        %v2184 = vunpack.c.l.b16 %v2161
        %v2185 = vunpack.c.h.b16 %v2161
        %v2186 = vpack.c.b16 %v2172, %v2170
        %v2187 = vpack.c.b16 %v2173, %v2171
        %v2188 = vpack.c.b16 %v2176, %v2174
        %v2189 = vpack.c.b16 %v2177, %v2175
        %v2190 = vpack.c.b16 %v2180, %v2178
        %v2191 = vpack.c.b16 %v2181, %v2179
        %v2192 = vpack.c.b16 %v2184, %v2182
        %v2193 = vpack.c.b16 %v2185, %v2183
        %2202 = vmatpush.bf16.msra.mxu0 %v1461
        %2203 = vmatpush.bf16.msra.mxu0 %v1460
        %2204 = vmatpush.bf16.msra.mxu0 %v1459
        %2205 = vmatpush.bf16.msra.mxu0 %v1458
        %2206 = vmatpush.bf16.msra.mxu0 %v1457
        %2207 = vmatpush.bf16.msra.mxu0 %v1456
        %2208 = vmatpush.bf16.msra.mxu0 %v1455
        %2209 = vmatpush.bf16.msra.mxu0 %v1454
        %2210 = vmatmul.bf16.gmra.mxu0 %v2186
        %v2211 = vpop.f32.mrf.mxu0
        %v2212 = vadd.f32 0.0, %v2211
        %v2213 = vpop.f32.mrf.mxu0
        %v2214 = vadd.f32 0.0, %v2213
        %2215 = vmatmul.bf16.gmra.mxu0 %v2188
        %v2216 = vpop.f32.mrf.mxu0
        %v2217 = vadd.f32 0.0, %v2216
        %v2218 = vpop.f32.mrf.mxu0
        %v2219 = vadd.f32 0.0, %v2218
        %2220 = vmatmul.bf16.gmra.mxu0 %v2190
        %v2221 = vpop.f32.mrf.mxu0
        %v2222 = vadd.f32 0.0, %v2221
        %v2223 = vpop.f32.mrf.mxu0
        %v2224 = vadd.f32 0.0, %v2223
        %2225 = vmatmul.bf16.gmra.mxu0 %v2192
        %v2226 = vpop.f32.mrf.mxu0
        %v2227 = vadd.f32 0.0, %v2226
        %v2228 = vpop.f32.mrf.mxu0
        %v2229 = vadd.f32 0.0, %v2228
        %2230 = vdwg.mxu0
        %2231 = vmatpush.bf16.msra.mxu0 %v1469
        %2232 = vmatpush.bf16.msra.mxu0 %v1468
        %2233 = vmatpush.bf16.msra.mxu0 %v1467
        %2234 = vmatpush.bf16.msra.mxu0 %v1466
        %2235 = vmatpush.bf16.msra.mxu0 %v1465
        %2236 = vmatpush.bf16.msra.mxu0 %v1464
        %2237 = vmatpush.bf16.msra.mxu0 %v1463
        %2238 = vmatpush.bf16.msra.mxu0 %v1462
        %2239 = vmatmul.bf16.gmra.mxu0 %v2187
        %v2240 = vpop.f32.mrf.mxu0
        %v2241 = vadd.f32 %v2212, %v2240
        %v2242 = vpop.f32.mrf.mxu0
        %v2243 = vadd.f32 %v2214, %v2242
        %2244 = vmatmul.bf16.gmra.mxu0 %v2189
        %v2245 = vpop.f32.mrf.mxu0
        %v2246 = vadd.f32 %v2217, %v2245
        %v2247 = vpop.f32.mrf.mxu0
        %v2248 = vadd.f32 %v2219, %v2247
        %2249 = vmatmul.bf16.gmra.mxu0 %v2191
        %v2250 = vpop.f32.mrf.mxu0
        %v2251 = vadd.f32 %v2222, %v2250
        %v2252 = vpop.f32.mrf.mxu0
        %v2253 = vadd.f32 %v2224, %v2252
        %2254 = vmatmul.bf16.gmra.mxu0 %v2193
        %v2255 = vpop.f32.mrf.mxu0
        %v2256 = vadd.f32 %v2227, %v2255
        %v2257 = vpop.f32.mrf.mxu0
        %v2258 = vadd.f32 %v2229, %v2257
        %2259 = vdwg.mxu0
        %s2260 = scalar_lea.vmem %s15, 64
        %v2261 = vld [vmem:[%s2260] sm:$0xf]
        %v2262 = vld [vmem:[%s2260 + $0x4] sm:$0xf]
        %v2263 = vld [vmem:[%s2260 + $0x8] sm:$0xf]
        %v2264 = vld [vmem:[%s2260 + $0xc] sm:$0xf]
        %v2265 = vpack.c.bf16 %v2243, %v2241
        %v2266 = vpack.c.bf16 %v2248, %v2246
        %v2267 = vpack.c.bf16 %v2253, %v2251
        %v2268 = vpack.c.bf16 %v2258, %v2256
        %v2273 = vunpack.c.l.b16 %v2261
        %v2274 = vunpack.c.l.b16 %v2262
        %v2275 = vunpack.c.l.b16 %v2263
        %v2276 = vunpack.c.l.b16 %v2264
        %v2277 = vpack.c.b16 %v2274, %v2273
        %v2278 = vpack.c.b16 %v2276, %v2275
        %v2282 = vsel %vm1704, %v2265, 0
        %v2285 = vsel %vm1704, %v2266, 0
        %v2288 = vsel %vm1704, %v2267, 0
        %v2291 = vsel %vm1704, %v2268, 0
        %2293 = vmatpush.bf16.msra.mxu0 0
        %2294 = vmatpush.bf16.msra.mxu0 0
        %2295 = vmatpush.bf16.msra.mxu0 0
        %2296 = vmatpush.bf16.msra.mxu0 0
        %2297 = vmatpush.bf16.msra.mxu0 0
        %2298 = vmatpush.bf16.msra.mxu0 0
        %2299 = vmatpush.bf16.msra.mxu0 %v2278
        %2300 = vmatpush.bf16.msra.mxu0 %v2277
        %2301 = vmatmul.bf16.gmra.mxu0 %v2282
        %v2302 = vpop.f32.mrf.mxu0
        %v2303 = vadd.f32 0.0, %v2302
        %v2304 = vpop.f32.mrf.mxu0
        %v2305 = vadd.f32 0.0, %v2304
        %2306 = vmatmul.bf16.gmra.mxu0 %v2285
        %v2307 = vpop.f32.mrf.mxu0
        %v2308 = vadd.f32 0.0, %v2307
        %v2309 = vpop.f32.mrf.mxu0
        %v2310 = vadd.f32 0.0, %v2309
        %2311 = vmatmul.bf16.gmra.mxu0 %v2288
        %v2312 = vpop.f32.mrf.mxu0
        %v2313 = vadd.f32 0.0, %v2312
        %v2314 = vpop.f32.mrf.mxu0
        %v2315 = vadd.f32 0.0, %v2314
        %2316 = vmatmul.bf16.gmra.mxu0 %v2291
        %v2317 = vpop.f32.mrf.mxu0
        %v2318 = vadd.f32 0.0, %v2317
        %v2319 = vpop.f32.mrf.mxu0
        %v2320 = vadd.f32 0.0, %v2319
        %2321 = vdwg.mxu0
        %v2322 = vadd.f32 %v2145, %v2303
        %v2323 = vadd.f32 %v2146, %v2305
        %v2324 = vadd.f32 %v2147, %v2308
        %v2325 = vadd.f32 %v2148, %v2310
        %v2326 = vadd.f32 %v2149, %v2313
        %v2327 = vadd.f32 %v2150, %v2315
        %v2328 = vadd.f32 %v2151, %v2318
        %v2329 = vadd.f32 %v2152, %v2320
        %s2330 = scalar_lea.vmem %s3, 320
        %v2331 = vld [vmem:[%s2330] sm:$0xff]
        %v2332 = vld [vmem:[%s2330 + $0x8] sm:$0xff]
        %v2333 = vld [vmem:[%s2330 + $0x10] sm:$0xff]
        %v2334 = vld [vmem:[%s2330 + $0x18] sm:$0xff]
        %v2335 = vld [vmem:[%s2330 + $0x20] sm:$0xff]
        %v2336 = vld [vmem:[%s2330 + $0x28] sm:$0xff]
        %v2337 = vld [vmem:[%s2330 + $0x30] sm:$0xff]
        %v2338 = vld [vmem:[%s2330 + $0x38] sm:$0xff]
        %v2347 = vunpack.c.l.b16 %v2331
        %v2348 = vunpack.c.h.b16 %v2331
        %v2349 = vunpack.c.l.b16 %v2332
        %v2350 = vunpack.c.h.b16 %v2332
        %v2351 = vunpack.c.l.b16 %v2333
        %v2352 = vunpack.c.h.b16 %v2333
        %v2353 = vunpack.c.l.b16 %v2334
        %v2354 = vunpack.c.h.b16 %v2334
        %v2355 = vunpack.c.l.b16 %v2335
        %v2356 = vunpack.c.h.b16 %v2335
        %v2357 = vunpack.c.l.b16 %v2336
        %v2358 = vunpack.c.h.b16 %v2336
        %v2359 = vunpack.c.l.b16 %v2337
        %v2360 = vunpack.c.h.b16 %v2337
        %v2361 = vunpack.c.l.b16 %v2338
        %v2362 = vunpack.c.h.b16 %v2338
        %v2363 = vpack.c.b16 %v2349, %v2347
        %v2364 = vpack.c.b16 %v2350, %v2348
        %v2365 = vpack.c.b16 %v2353, %v2351
        %v2366 = vpack.c.b16 %v2354, %v2352
        %v2367 = vpack.c.b16 %v2357, %v2355
        %v2368 = vpack.c.b16 %v2358, %v2356
        %v2369 = vpack.c.b16 %v2361, %v2359
        %v2370 = vpack.c.b16 %v2362, %v2360
        %2379 = vmatpush.bf16.msra.mxu0 %v1461
        %2380 = vmatpush.bf16.msra.mxu0 %v1460
        %2381 = vmatpush.bf16.msra.mxu0 %v1459
        %2382 = vmatpush.bf16.msra.mxu0 %v1458
        %2383 = vmatpush.bf16.msra.mxu0 %v1457
        %2384 = vmatpush.bf16.msra.mxu0 %v1456
        %2385 = vmatpush.bf16.msra.mxu0 %v1455
        %2386 = vmatpush.bf16.msra.mxu0 %v1454
        %2387 = vmatmul.bf16.gmra.mxu0 %v2363
        %v2388 = vpop.f32.mrf.mxu0
        %v2389 = vadd.f32 0.0, %v2388
        %v2390 = vpop.f32.mrf.mxu0
        %v2391 = vadd.f32 0.0, %v2390
        %2392 = vmatmul.bf16.gmra.mxu0 %v2365
        %v2393 = vpop.f32.mrf.mxu0
        %v2394 = vadd.f32 0.0, %v2393
        %v2395 = vpop.f32.mrf.mxu0
        %v2396 = vadd.f32 0.0, %v2395
        %2397 = vmatmul.bf16.gmra.mxu0 %v2367
        %v2398 = vpop.f32.mrf.mxu0
        %v2399 = vadd.f32 0.0, %v2398
        %v2400 = vpop.f32.mrf.mxu0
        %v2401 = vadd.f32 0.0, %v2400
        %2402 = vmatmul.bf16.gmra.mxu0 %v2369
        %v2403 = vpop.f32.mrf.mxu0
        %v2404 = vadd.f32 0.0, %v2403
        %v2405 = vpop.f32.mrf.mxu0
        %v2406 = vadd.f32 0.0, %v2405
        %2407 = vdwg.mxu0
        %2408 = vmatpush.bf16.msra.mxu0 %v1469
        %2409 = vmatpush.bf16.msra.mxu0 %v1468
        %2410 = vmatpush.bf16.msra.mxu0 %v1467
        %2411 = vmatpush.bf16.msra.mxu0 %v1466
        %2412 = vmatpush.bf16.msra.mxu0 %v1465
        %2413 = vmatpush.bf16.msra.mxu0 %v1464
        %2414 = vmatpush.bf16.msra.mxu0 %v1463
        %2415 = vmatpush.bf16.msra.mxu0 %v1462
        %2416 = vmatmul.bf16.gmra.mxu0 %v2364
        %v2417 = vpop.f32.mrf.mxu0
        %v2418 = vadd.f32 %v2389, %v2417
        %v2419 = vpop.f32.mrf.mxu0
        %v2420 = vadd.f32 %v2391, %v2419
        %2421 = vmatmul.bf16.gmra.mxu0 %v2366
        %v2422 = vpop.f32.mrf.mxu0
        %v2423 = vadd.f32 %v2394, %v2422
        %v2424 = vpop.f32.mrf.mxu0
        %v2425 = vadd.f32 %v2396, %v2424
        %2426 = vmatmul.bf16.gmra.mxu0 %v2368
        %v2427 = vpop.f32.mrf.mxu0
        %v2428 = vadd.f32 %v2399, %v2427
        %v2429 = vpop.f32.mrf.mxu0
        %v2430 = vadd.f32 %v2401, %v2429
        %2431 = vmatmul.bf16.gmra.mxu0 %v2370
        %v2432 = vpop.f32.mrf.mxu0
        %v2433 = vadd.f32 %v2404, %v2432
        %v2434 = vpop.f32.mrf.mxu0
        %v2435 = vadd.f32 %v2406, %v2434
        %2436 = vdwg.mxu0
        %s2437 = scalar_lea.vmem %s15, 80
        %v2438 = vld [vmem:[%s2437] sm:$0xf]
        %v2439 = vld [vmem:[%s2437 + $0x4] sm:$0xf]
        %v2440 = vld [vmem:[%s2437 + $0x8] sm:$0xf]
        %v2441 = vld [vmem:[%s2437 + $0xc] sm:$0xf]
        %v2442 = vpack.c.bf16 %v2420, %v2418
        %v2443 = vpack.c.bf16 %v2425, %v2423
        %v2444 = vpack.c.bf16 %v2430, %v2428
        %v2445 = vpack.c.bf16 %v2435, %v2433
        %v2450 = vunpack.c.l.b16 %v2438
        %v2451 = vunpack.c.l.b16 %v2439
        %v2452 = vunpack.c.l.b16 %v2440
        %v2453 = vunpack.c.l.b16 %v2441
        %v2454 = vpack.c.b16 %v2451, %v2450
        %v2455 = vpack.c.b16 %v2453, %v2452
        %v2459 = vsel %vm1704, %v2442, 0
        %v2462 = vsel %vm1704, %v2443, 0
        %v2465 = vsel %vm1704, %v2444, 0
        %v2468 = vsel %vm1704, %v2445, 0
        %2470 = vmatpush.bf16.msra.mxu0 0
        %2471 = vmatpush.bf16.msra.mxu0 0
        %2472 = vmatpush.bf16.msra.mxu0 0
        %2473 = vmatpush.bf16.msra.mxu0 0
        %2474 = vmatpush.bf16.msra.mxu0 0
        %2475 = vmatpush.bf16.msra.mxu0 0
        %2476 = vmatpush.bf16.msra.mxu0 %v2455
        %2477 = vmatpush.bf16.msra.mxu0 %v2454
        %2478 = vmatmul.bf16.gmra.mxu0 %v2459
        %v2479 = vpop.f32.mrf.mxu0
        %v2480 = vadd.f32 0.0, %v2479
        %v2481 = vpop.f32.mrf.mxu0
        %v2482 = vadd.f32 0.0, %v2481
        %2483 = vmatmul.bf16.gmra.mxu0 %v2462
        %v2484 = vpop.f32.mrf.mxu0
        %v2485 = vadd.f32 0.0, %v2484
        %v2486 = vpop.f32.mrf.mxu0
        %v2487 = vadd.f32 0.0, %v2486
        %2488 = vmatmul.bf16.gmra.mxu0 %v2465
        %v2489 = vpop.f32.mrf.mxu0
        %v2490 = vadd.f32 0.0, %v2489
        %v2491 = vpop.f32.mrf.mxu0
        %v2492 = vadd.f32 0.0, %v2491
        %2493 = vmatmul.bf16.gmra.mxu0 %v2468
        %v2494 = vpop.f32.mrf.mxu0
        %v2495 = vadd.f32 0.0, %v2494
        %v2496 = vpop.f32.mrf.mxu0
        %v2497 = vadd.f32 0.0, %v2496
        %2498 = vdwg.mxu0
        %v2499 = vadd.f32 %v2322, %v2480
        %v2500 = vadd.f32 %v2323, %v2482
        %v2501 = vadd.f32 %v2324, %v2485
        %v2502 = vadd.f32 %v2325, %v2487
        %v2503 = vadd.f32 %v2326, %v2490
        %v2504 = vadd.f32 %v2327, %v2492
        %v2505 = vadd.f32 %v2328, %v2495
        %v2506 = vadd.f32 %v2329, %v2497
        %s2507 = scalar_lea.vmem %s3, 384
        %v2508 = vld [vmem:[%s2507] sm:$0xff]
        %v2509 = vld [vmem:[%s2507 + $0x8] sm:$0xff]
        %v2510 = vld [vmem:[%s2507 + $0x10] sm:$0xff]
        %v2511 = vld [vmem:[%s2507 + $0x18] sm:$0xff]
        %v2512 = vld [vmem:[%s2507 + $0x20] sm:$0xff]
        %v2513 = vld [vmem:[%s2507 + $0x28] sm:$0xff]
        %v2514 = vld [vmem:[%s2507 + $0x30] sm:$0xff]
        %v2515 = vld [vmem:[%s2507 + $0x38] sm:$0xff]
        %v2524 = vunpack.c.l.b16 %v2508
        %v2525 = vunpack.c.h.b16 %v2508
        %v2526 = vunpack.c.l.b16 %v2509
        %v2527 = vunpack.c.h.b16 %v2509
        %v2528 = vunpack.c.l.b16 %v2510
        %v2529 = vunpack.c.h.b16 %v2510
        %v2530 = vunpack.c.l.b16 %v2511
        %v2531 = vunpack.c.h.b16 %v2511
        %v2532 = vunpack.c.l.b16 %v2512
        %v2533 = vunpack.c.h.b16 %v2512
        %v2534 = vunpack.c.l.b16 %v2513
        %v2535 = vunpack.c.h.b16 %v2513
        %v2536 = vunpack.c.l.b16 %v2514
        %v2537 = vunpack.c.h.b16 %v2514
        %v2538 = vunpack.c.l.b16 %v2515
        %v2539 = vunpack.c.h.b16 %v2515
        %v2540 = vpack.c.b16 %v2526, %v2524
        %v2541 = vpack.c.b16 %v2527, %v2525
        %v2542 = vpack.c.b16 %v2530, %v2528
        %v2543 = vpack.c.b16 %v2531, %v2529
        %v2544 = vpack.c.b16 %v2534, %v2532
        %v2545 = vpack.c.b16 %v2535, %v2533
        %v2546 = vpack.c.b16 %v2538, %v2536
        %v2547 = vpack.c.b16 %v2539, %v2537
        %2556 = vmatpush.bf16.msra.mxu0 %v1461
        %2557 = vmatpush.bf16.msra.mxu0 %v1460
        %2558 = vmatpush.bf16.msra.mxu0 %v1459
        %2559 = vmatpush.bf16.msra.mxu0 %v1458
        %2560 = vmatpush.bf16.msra.mxu0 %v1457
        %2561 = vmatpush.bf16.msra.mxu0 %v1456
        %2562 = vmatpush.bf16.msra.mxu0 %v1455
        %2563 = vmatpush.bf16.msra.mxu0 %v1454
        %2564 = vmatmul.bf16.gmra.mxu0 %v2540
        %v2565 = vpop.f32.mrf.mxu0
        %v2566 = vadd.f32 0.0, %v2565
        %v2567 = vpop.f32.mrf.mxu0
        %v2568 = vadd.f32 0.0, %v2567
        %2569 = vmatmul.bf16.gmra.mxu0 %v2542
        %v2570 = vpop.f32.mrf.mxu0
        %v2571 = vadd.f32 0.0, %v2570
        %v2572 = vpop.f32.mrf.mxu0
        %v2573 = vadd.f32 0.0, %v2572
        %2574 = vmatmul.bf16.gmra.mxu0 %v2544
        %v2575 = vpop.f32.mrf.mxu0
        %v2576 = vadd.f32 0.0, %v2575
        %v2577 = vpop.f32.mrf.mxu0
        %v2578 = vadd.f32 0.0, %v2577
        %2579 = vmatmul.bf16.gmra.mxu0 %v2546
        %v2580 = vpop.f32.mrf.mxu0
        %v2581 = vadd.f32 0.0, %v2580
        %v2582 = vpop.f32.mrf.mxu0
        %v2583 = vadd.f32 0.0, %v2582
        %2584 = vdwg.mxu0
        %2585 = vmatpush.bf16.msra.mxu0 %v1469
        %2586 = vmatpush.bf16.msra.mxu0 %v1468
        %2587 = vmatpush.bf16.msra.mxu0 %v1467
        %2588 = vmatpush.bf16.msra.mxu0 %v1466
        %2589 = vmatpush.bf16.msra.mxu0 %v1465
        %2590 = vmatpush.bf16.msra.mxu0 %v1464
        %2591 = vmatpush.bf16.msra.mxu0 %v1463
        %2592 = vmatpush.bf16.msra.mxu0 %v1462
        %2593 = vmatmul.bf16.gmra.mxu0 %v2541
        %v2594 = vpop.f32.mrf.mxu0
        %v2595 = vadd.f32 %v2566, %v2594
        %v2596 = vpop.f32.mrf.mxu0
        %v2597 = vadd.f32 %v2568, %v2596
        %2598 = vmatmul.bf16.gmra.mxu0 %v2543
        %v2599 = vpop.f32.mrf.mxu0
        %v2600 = vadd.f32 %v2571, %v2599
        %v2601 = vpop.f32.mrf.mxu0
        %v2602 = vadd.f32 %v2573, %v2601
        %2603 = vmatmul.bf16.gmra.mxu0 %v2545
        %v2604 = vpop.f32.mrf.mxu0
        %v2605 = vadd.f32 %v2576, %v2604
        %v2606 = vpop.f32.mrf.mxu0
        %v2607 = vadd.f32 %v2578, %v2606
        %2608 = vmatmul.bf16.gmra.mxu0 %v2547
        %v2609 = vpop.f32.mrf.mxu0
        %v2610 = vadd.f32 %v2581, %v2609
        %v2611 = vpop.f32.mrf.mxu0
        %v2612 = vadd.f32 %v2583, %v2611
        %2613 = vdwg.mxu0
        %s2614 = scalar_lea.vmem %s15, 96
        %v2615 = vld [vmem:[%s2614] sm:$0xf]
        %v2616 = vld [vmem:[%s2614 + $0x4] sm:$0xf]
        %v2617 = vld [vmem:[%s2614 + $0x8] sm:$0xf]
        %v2618 = vld [vmem:[%s2614 + $0xc] sm:$0xf]
        %v2619 = vpack.c.bf16 %v2597, %v2595
        %v2620 = vpack.c.bf16 %v2602, %v2600
        %v2621 = vpack.c.bf16 %v2607, %v2605
        %v2622 = vpack.c.bf16 %v2612, %v2610
        %v2627 = vunpack.c.l.b16 %v2615
        %v2628 = vunpack.c.l.b16 %v2616
        %v2629 = vunpack.c.l.b16 %v2617
        %v2630 = vunpack.c.l.b16 %v2618
        %v2631 = vpack.c.b16 %v2628, %v2627
        %v2632 = vpack.c.b16 %v2630, %v2629
        %v2636 = vsel %vm1704, %v2619, 0
        %v2639 = vsel %vm1704, %v2620, 0
        %v2642 = vsel %vm1704, %v2621, 0
        %v2645 = vsel %vm1704, %v2622, 0
        %2647 = vmatpush.bf16.msra.mxu0 0
        %2648 = vmatpush.bf16.msra.mxu0 0
        %2649 = vmatpush.bf16.msra.mxu0 0
        %2650 = vmatpush.bf16.msra.mxu0 0
        %2651 = vmatpush.bf16.msra.mxu0 0
        %2652 = vmatpush.bf16.msra.mxu0 0
        %2653 = vmatpush.bf16.msra.mxu0 %v2632
        %2654 = vmatpush.bf16.msra.mxu0 %v2631
        %2655 = vmatmul.bf16.gmra.mxu0 %v2636
        %v2656 = vpop.f32.mrf.mxu0
        %v2657 = vadd.f32 0.0, %v2656
        %v2658 = vpop.f32.mrf.mxu0
        %v2659 = vadd.f32 0.0, %v2658
        %2660 = vmatmul.bf16.gmra.mxu0 %v2639
        %v2661 = vpop.f32.mrf.mxu0
        %v2662 = vadd.f32 0.0, %v2661
        %v2663 = vpop.f32.mrf.mxu0
        %v2664 = vadd.f32 0.0, %v2663
        %2665 = vmatmul.bf16.gmra.mxu0 %v2642
        %v2666 = vpop.f32.mrf.mxu0
        %v2667 = vadd.f32 0.0, %v2666
        %v2668 = vpop.f32.mrf.mxu0
        %v2669 = vadd.f32 0.0, %v2668
        %2670 = vmatmul.bf16.gmra.mxu0 %v2645
        %v2671 = vpop.f32.mrf.mxu0
        %v2672 = vadd.f32 0.0, %v2671
        %v2673 = vpop.f32.mrf.mxu0
        %v2674 = vadd.f32 0.0, %v2673
        %2675 = vdwg.mxu0
        %v2676 = vadd.f32 %v2499, %v2657
        %v2677 = vadd.f32 %v2500, %v2659
        %v2678 = vadd.f32 %v2501, %v2662
        %v2679 = vadd.f32 %v2502, %v2664
        %v2680 = vadd.f32 %v2503, %v2667
        %v2681 = vadd.f32 %v2504, %v2669
        %v2682 = vadd.f32 %v2505, %v2672
        %v2683 = vadd.f32 %v2506, %v2674
        %s2684 = scalar_lea.vmem %s3, 448
        %v2685 = vld [vmem:[%s2684] sm:$0xff]
        %v2686 = vld [vmem:[%s2684 + $0x8] sm:$0xff]
        %v2687 = vld [vmem:[%s2684 + $0x10] sm:$0xff]
        %v2688 = vld [vmem:[%s2684 + $0x18] sm:$0xff]
        %v2689 = vld [vmem:[%s2684 + $0x20] sm:$0xff]
        %v2690 = vld [vmem:[%s2684 + $0x28] sm:$0xff]
        %v2691 = vld [vmem:[%s2684 + $0x30] sm:$0xff]
        %v2692 = vld [vmem:[%s2684 + $0x38] sm:$0xff]
        %v2701 = vunpack.c.l.b16 %v2685
        %v2702 = vunpack.c.h.b16 %v2685
        %v2703 = vunpack.c.l.b16 %v2686
        %v2704 = vunpack.c.h.b16 %v2686
        %v2705 = vunpack.c.l.b16 %v2687
        %v2706 = vunpack.c.h.b16 %v2687
        %v2707 = vunpack.c.l.b16 %v2688
        %v2708 = vunpack.c.h.b16 %v2688
        %v2709 = vunpack.c.l.b16 %v2689
        %v2710 = vunpack.c.h.b16 %v2689
        %v2711 = vunpack.c.l.b16 %v2690
        %v2712 = vunpack.c.h.b16 %v2690
        %v2713 = vunpack.c.l.b16 %v2691
        %v2714 = vunpack.c.h.b16 %v2691
        %v2715 = vunpack.c.l.b16 %v2692
        %v2716 = vunpack.c.h.b16 %v2692
        %v2717 = vpack.c.b16 %v2703, %v2701
        %v2718 = vpack.c.b16 %v2704, %v2702
        %v2719 = vpack.c.b16 %v2707, %v2705
        %v2720 = vpack.c.b16 %v2708, %v2706
        %v2721 = vpack.c.b16 %v2711, %v2709
        %v2722 = vpack.c.b16 %v2712, %v2710
        %v2723 = vpack.c.b16 %v2715, %v2713
        %v2724 = vpack.c.b16 %v2716, %v2714
        %2733 = vmatpush.bf16.msra.mxu0 %v1461
        %2734 = vmatpush.bf16.msra.mxu0 %v1460
        %2735 = vmatpush.bf16.msra.mxu0 %v1459
        %2736 = vmatpush.bf16.msra.mxu0 %v1458
        %2737 = vmatpush.bf16.msra.mxu0 %v1457
        %2738 = vmatpush.bf16.msra.mxu0 %v1456
        %2739 = vmatpush.bf16.msra.mxu0 %v1455
        %2740 = vmatpush.bf16.msra.mxu0 %v1454
        %2741 = vmatmul.bf16.gmra.mxu0 %v2717
        %v2742 = vpop.f32.mrf.mxu0
        %v2743 = vadd.f32 0.0, %v2742
        %v2744 = vpop.f32.mrf.mxu0
        %v2745 = vadd.f32 0.0, %v2744
        %2746 = vmatmul.bf16.gmra.mxu0 %v2719
        %v2747 = vpop.f32.mrf.mxu0
        %v2748 = vadd.f32 0.0, %v2747
        %v2749 = vpop.f32.mrf.mxu0
        %v2750 = vadd.f32 0.0, %v2749
        %2751 = vmatmul.bf16.gmra.mxu0 %v2721
        %v2752 = vpop.f32.mrf.mxu0
        %v2753 = vadd.f32 0.0, %v2752
        %v2754 = vpop.f32.mrf.mxu0
        %v2755 = vadd.f32 0.0, %v2754
        %2756 = vmatmul.bf16.gmra.mxu0 %v2723
        %v2757 = vpop.f32.mrf.mxu0
        %v2758 = vadd.f32 0.0, %v2757
        %v2759 = vpop.f32.mrf.mxu0
        %v2760 = vadd.f32 0.0, %v2759
        %2761 = vdwg.mxu0
        %2762 = vmatpush.bf16.msra.mxu0 %v1469
        %2763 = vmatpush.bf16.msra.mxu0 %v1468
        %2764 = vmatpush.bf16.msra.mxu0 %v1467
        %2765 = vmatpush.bf16.msra.mxu0 %v1466
        %2766 = vmatpush.bf16.msra.mxu0 %v1465
        %2767 = vmatpush.bf16.msra.mxu0 %v1464
        %2768 = vmatpush.bf16.msra.mxu0 %v1463
        %2769 = vmatpush.bf16.msra.mxu0 %v1462
        %2770 = vmatmul.bf16.gmra.mxu0 %v2718
        %v2771 = vpop.f32.mrf.mxu0
        %v2772 = vadd.f32 %v2743, %v2771
        %v2773 = vpop.f32.mrf.mxu0
        %v2774 = vadd.f32 %v2745, %v2773
        %2775 = vmatmul.bf16.gmra.mxu0 %v2720
        %v2776 = vpop.f32.mrf.mxu0
        %v2777 = vadd.f32 %v2748, %v2776
        %v2778 = vpop.f32.mrf.mxu0
        %v2779 = vadd.f32 %v2750, %v2778
        %2780 = vmatmul.bf16.gmra.mxu0 %v2722
        %v2781 = vpop.f32.mrf.mxu0
        %v2782 = vadd.f32 %v2753, %v2781
        %v2783 = vpop.f32.mrf.mxu0
        %v2784 = vadd.f32 %v2755, %v2783
        %2785 = vmatmul.bf16.gmra.mxu0 %v2724
        %v2786 = vpop.f32.mrf.mxu0
        %v2787 = vadd.f32 %v2758, %v2786
        %v2788 = vpop.f32.mrf.mxu0
        %v2789 = vadd.f32 %v2760, %v2788
        %2790 = vdwg.mxu0
        %s2791 = scalar_lea.vmem %s15, 112
        %v2792 = vld [vmem:[%s2791] sm:$0xf]
        %v2793 = vld [vmem:[%s2791 + $0x4] sm:$0xf]
        %v2794 = vld [vmem:[%s2791 + $0x8] sm:$0xf]
        %v2795 = vld [vmem:[%s2791 + $0xc] sm:$0xf]
        %v2796 = vpack.c.bf16 %v2774, %v2772
        %v2797 = vpack.c.bf16 %v2779, %v2777
        %v2798 = vpack.c.bf16 %v2784, %v2782
        %v2799 = vpack.c.bf16 %v2789, %v2787
        %v2804 = vunpack.c.l.b16 %v2792
        %v2805 = vunpack.c.l.b16 %v2793
        %v2806 = vunpack.c.l.b16 %v2794
        %v2807 = vunpack.c.l.b16 %v2795
        %v2808 = vpack.c.b16 %v2805, %v2804
        %v2809 = vpack.c.b16 %v2807, %v2806
        %v2813 = vsel %vm1704, %v2796, 0
        %v2816 = vsel %vm1704, %v2797, 0
        %v2819 = vsel %vm1704, %v2798, 0
        %v2822 = vsel %vm1704, %v2799, 0
        %2824 = vmatpush.bf16.msra.mxu0 0
        %2825 = vmatpush.bf16.msra.mxu0 0
        %2826 = vmatpush.bf16.msra.mxu0 0
        %2827 = vmatpush.bf16.msra.mxu0 0
        %2828 = vmatpush.bf16.msra.mxu0 0
        %2829 = vmatpush.bf16.msra.mxu0 0
        %2830 = vmatpush.bf16.msra.mxu0 %v2809
        %2831 = vmatpush.bf16.msra.mxu0 %v2808
        %2832 = vmatmul.bf16.gmra.mxu0 %v2813
        %v2833 = vpop.f32.mrf.mxu0
        %v2834 = vadd.f32 0.0, %v2833
        %v2835 = vpop.f32.mrf.mxu0
        %v2836 = vadd.f32 0.0, %v2835
        %2837 = vmatmul.bf16.gmra.mxu0 %v2816
        %v2838 = vpop.f32.mrf.mxu0
        %v2839 = vadd.f32 0.0, %v2838
        %v2840 = vpop.f32.mrf.mxu0
        %v2841 = vadd.f32 0.0, %v2840
        %2842 = vmatmul.bf16.gmra.mxu0 %v2819
        %v2843 = vpop.f32.mrf.mxu0
        %v2844 = vadd.f32 0.0, %v2843
        %v2845 = vpop.f32.mrf.mxu0
        %v2846 = vadd.f32 0.0, %v2845
        %2847 = vmatmul.bf16.gmra.mxu0 %v2822
        %v2848 = vpop.f32.mrf.mxu0
        %v2849 = vadd.f32 0.0, %v2848
        %v2850 = vpop.f32.mrf.mxu0
        %v2851 = vadd.f32 0.0, %v2850
        %2852 = vdwg.mxu0
        %v2853 = vadd.f32 %v2676, %v2834
        %v2854 = vadd.f32 %v2677, %v2836
        %v2855 = vadd.f32 %v2678, %v2839
        %v2856 = vadd.f32 %v2679, %v2841
        %v2857 = vadd.f32 %v2680, %v2844
        %v2858 = vadd.f32 %v2681, %v2846
        %v2859 = vadd.f32 %v2682, %v2849
        %v2860 = vadd.f32 %v2683, %v2851
        %s2861 = scalar_lea.vmem %s3, 512
        %v2862 = vld [vmem:[%s2861] sm:$0xff]
        %v2863 = vld [vmem:[%s2861 + $0x8] sm:$0xff]
        %v2864 = vld [vmem:[%s2861 + $0x10] sm:$0xff]
        %v2865 = vld [vmem:[%s2861 + $0x18] sm:$0xff]
        %v2866 = vld [vmem:[%s2861 + $0x20] sm:$0xff]
        %v2867 = vld [vmem:[%s2861 + $0x28] sm:$0xff]
        %v2868 = vld [vmem:[%s2861 + $0x30] sm:$0xff]
        %v2869 = vld [vmem:[%s2861 + $0x38] sm:$0xff]
        %v2878 = vunpack.c.l.b16 %v2862
        %v2879 = vunpack.c.h.b16 %v2862
        %v2880 = vunpack.c.l.b16 %v2863
        %v2881 = vunpack.c.h.b16 %v2863
        %v2882 = vunpack.c.l.b16 %v2864
        %v2883 = vunpack.c.h.b16 %v2864
        %v2884 = vunpack.c.l.b16 %v2865
        %v2885 = vunpack.c.h.b16 %v2865
        %v2886 = vunpack.c.l.b16 %v2866
        %v2887 = vunpack.c.h.b16 %v2866
        %v2888 = vunpack.c.l.b16 %v2867
        %v2889 = vunpack.c.h.b16 %v2867
        %v2890 = vunpack.c.l.b16 %v2868
        %v2891 = vunpack.c.h.b16 %v2868
        %v2892 = vunpack.c.l.b16 %v2869
        %v2893 = vunpack.c.h.b16 %v2869
        %v2894 = vpack.c.b16 %v2880, %v2878
        %v2895 = vpack.c.b16 %v2881, %v2879
        %v2896 = vpack.c.b16 %v2884, %v2882
        %v2897 = vpack.c.b16 %v2885, %v2883
        %v2898 = vpack.c.b16 %v2888, %v2886
        %v2899 = vpack.c.b16 %v2889, %v2887
        %v2900 = vpack.c.b16 %v2892, %v2890
        %v2901 = vpack.c.b16 %v2893, %v2891
        %2910 = vmatpush.bf16.msra.mxu0 %v1461
        %2911 = vmatpush.bf16.msra.mxu0 %v1460
        %2912 = vmatpush.bf16.msra.mxu0 %v1459
        %2913 = vmatpush.bf16.msra.mxu0 %v1458
        %2914 = vmatpush.bf16.msra.mxu0 %v1457
        %2915 = vmatpush.bf16.msra.mxu0 %v1456
        %2916 = vmatpush.bf16.msra.mxu0 %v1455
        %2917 = vmatpush.bf16.msra.mxu0 %v1454
        %2918 = vmatmul.bf16.gmra.mxu0 %v2894
        %v2919 = vpop.f32.mrf.mxu0
        %v2920 = vadd.f32 0.0, %v2919
        %v2921 = vpop.f32.mrf.mxu0
        %v2922 = vadd.f32 0.0, %v2921
        %2923 = vmatmul.bf16.gmra.mxu0 %v2896
        %v2924 = vpop.f32.mrf.mxu0
        %v2925 = vadd.f32 0.0, %v2924
        %v2926 = vpop.f32.mrf.mxu0
        %v2927 = vadd.f32 0.0, %v2926
        %2928 = vmatmul.bf16.gmra.mxu0 %v2898
        %v2929 = vpop.f32.mrf.mxu0
        %v2930 = vadd.f32 0.0, %v2929
        %v2931 = vpop.f32.mrf.mxu0
        %v2932 = vadd.f32 0.0, %v2931
        %2933 = vmatmul.bf16.gmra.mxu0 %v2900
        %v2934 = vpop.f32.mrf.mxu0
        %v2935 = vadd.f32 0.0, %v2934
        %v2936 = vpop.f32.mrf.mxu0
        %v2937 = vadd.f32 0.0, %v2936
        %2938 = vdwg.mxu0
        %2939 = vmatpush.bf16.msra.mxu0 %v1469
        %2940 = vmatpush.bf16.msra.mxu0 %v1468
        %2941 = vmatpush.bf16.msra.mxu0 %v1467
        %2942 = vmatpush.bf16.msra.mxu0 %v1466
        %2943 = vmatpush.bf16.msra.mxu0 %v1465
        %2944 = vmatpush.bf16.msra.mxu0 %v1464
        %2945 = vmatpush.bf16.msra.mxu0 %v1463
        %2946 = vmatpush.bf16.msra.mxu0 %v1462
        %2947 = vmatmul.bf16.gmra.mxu0 %v2895
        %v2948 = vpop.f32.mrf.mxu0
        %v2949 = vadd.f32 %v2920, %v2948
        %v2950 = vpop.f32.mrf.mxu0
        %v2951 = vadd.f32 %v2922, %v2950
        %2952 = vmatmul.bf16.gmra.mxu0 %v2897
        %v2953 = vpop.f32.mrf.mxu0
        %v2954 = vadd.f32 %v2925, %v2953
        %v2955 = vpop.f32.mrf.mxu0
        %v2956 = vadd.f32 %v2927, %v2955
        %2957 = vmatmul.bf16.gmra.mxu0 %v2899
        %v2958 = vpop.f32.mrf.mxu0
        %v2959 = vadd.f32 %v2930, %v2958
        %v2960 = vpop.f32.mrf.mxu0
        %v2961 = vadd.f32 %v2932, %v2960
        %2962 = vmatmul.bf16.gmra.mxu0 %v2901
        %v2963 = vpop.f32.mrf.mxu0
        %v2964 = vadd.f32 %v2935, %v2963
        %v2965 = vpop.f32.mrf.mxu0
        %v2966 = vadd.f32 %v2937, %v2965
        %2967 = vdwg.mxu0
        %s2968 = scalar_lea.vmem %s15, 128
        %v2969 = vld [vmem:[%s2968] sm:$0xf]
        %v2970 = vld [vmem:[%s2968 + $0x4] sm:$0xf]
        %v2971 = vld [vmem:[%s2968 + $0x8] sm:$0xf]
        %v2972 = vld [vmem:[%s2968 + $0xc] sm:$0xf]
        %v2973 = vpack.c.bf16 %v2951, %v2949
        %v2974 = vpack.c.bf16 %v2956, %v2954
        %v2975 = vpack.c.bf16 %v2961, %v2959
        %v2976 = vpack.c.bf16 %v2966, %v2964
        %v2981 = vunpack.c.l.b16 %v2969
        %v2982 = vunpack.c.l.b16 %v2970
        %v2983 = vunpack.c.l.b16 %v2971
        %v2984 = vunpack.c.l.b16 %v2972
        %v2985 = vpack.c.b16 %v2982, %v2981
        %v2986 = vpack.c.b16 %v2984, %v2983
        %v2990 = vsel %vm1704, %v2973, 0
        %v2993 = vsel %vm1704, %v2974, 0
        %v2996 = vsel %vm1704, %v2975, 0
        %v2999 = vsel %vm1704, %v2976, 0
        %3001 = vmatpush.bf16.msra.mxu0 0
        %3002 = vmatpush.bf16.msra.mxu0 0
        %3003 = vmatpush.bf16.msra.mxu0 0
        %3004 = vmatpush.bf16.msra.mxu0 0
        %3005 = vmatpush.bf16.msra.mxu0 0
        %3006 = vmatpush.bf16.msra.mxu0 0
        %3007 = vmatpush.bf16.msra.mxu0 %v2986
        %3008 = vmatpush.bf16.msra.mxu0 %v2985
        %3009 = vmatmul.bf16.gmra.mxu0 %v2990
        %v3010 = vpop.f32.mrf.mxu0
        %v3011 = vadd.f32 0.0, %v3010
        %v3012 = vpop.f32.mrf.mxu0
        %v3013 = vadd.f32 0.0, %v3012
        %3014 = vmatmul.bf16.gmra.mxu0 %v2993
        %v3015 = vpop.f32.mrf.mxu0
        %v3016 = vadd.f32 0.0, %v3015
        %v3017 = vpop.f32.mrf.mxu0
        %v3018 = vadd.f32 0.0, %v3017
        %3019 = vmatmul.bf16.gmra.mxu0 %v2996
        %v3020 = vpop.f32.mrf.mxu0
        %v3021 = vadd.f32 0.0, %v3020
        %v3022 = vpop.f32.mrf.mxu0
        %v3023 = vadd.f32 0.0, %v3022
        %3024 = vmatmul.bf16.gmra.mxu0 %v2999
        %v3025 = vpop.f32.mrf.mxu0
        %v3026 = vadd.f32 0.0, %v3025
        %v3027 = vpop.f32.mrf.mxu0
        %v3028 = vadd.f32 0.0, %v3027
        %3029 = vdwg.mxu0
        %v3030 = vadd.f32 %v2853, %v3011
        %v3031 = vadd.f32 %v2854, %v3013
        %v3032 = vadd.f32 %v2855, %v3016
        %v3033 = vadd.f32 %v2856, %v3018
        %v3034 = vadd.f32 %v2857, %v3021
        %v3035 = vadd.f32 %v2858, %v3023
        %v3036 = vadd.f32 %v2859, %v3026
        %v3037 = vadd.f32 %v2860, %v3028
        %v3038 = vld [vmem:[%s17] sm:$0x1]
        %v3040 = vperm.slane %v3038, 0
        %v3042 = vadd.f32 %v3030, %v3040
        %v3043 = vadd.f32 %v3031, %v3040
        %v3044 = vadd.f32 %v3032, %v3040
        %v3045 = vadd.f32 %v3033, %v3040
        %v3046 = vadd.f32 %v3034, %v3040
        %v3047 = vadd.f32 %v3035, %v3040
        %v3048 = vadd.f32 %v3036, %v3040
        %v3049 = vadd.f32 %v3037, %v3040
        %v3050 = vmax.f32 %v3042, 0.0
        %v3051 = vmax.f32 %v3043, 0.0
        %v3052 = vmax.f32 %v3044, 0.0
        %v3053 = vmax.f32 %v3045, 0.0
        %v3054 = vmax.f32 %v3046, 0.0
        %v3055 = vmax.f32 %v3047, 0.0
        %v3056 = vmax.f32 %v3048, 0.0
        %v3057 = vmax.f32 %v3049, 0.0
        %v3058 = vld [vmem:[%s23] sm:$0xf]
        %v3059 = vld [vmem:[%s23 + $0x4] sm:$0xf]
        %v3060 = vld [vmem:[%s23 + $0x8] sm:$0xf]
        %v3061 = vld [vmem:[%s23 + $0xc] sm:$0xf]
        %v3062 = vld [vmem:[%s25] sm:$0x1]
        %v3064 = vperm.slane %v3062, 0
        %v3070 = vunpack.c.l.b16 %v3058
        %v3071 = vunpack.c.l.b16 %v3059
        %v3072 = vunpack.c.l.b16 %v3060
        %v3073 = vunpack.c.l.b16 %v3061
        %v3074 = vpack.c.b16 %v3071, %v3070
        %v3075 = vpack.c.b16 %v3073, %v3072
        %3078 = vmatpush.bf16.msra.mxu0 0
        %3079 = vmatpush.bf16.msra.mxu0 0
        %3080 = vmatpush.bf16.msra.mxu0 0
        %3081 = vmatpush.bf16.msra.mxu0 0
        %3082 = vmatpush.bf16.msra.mxu0 0
        %3083 = vmatpush.bf16.msra.mxu0 0
        %3084 = vmatpush.bf16.msra.mxu0 %v3075
        %3085 = vmatpush.bf16.msra.mxu0 %v3074
        %3086 = vmatmul.bf16.gmra.mxu0 %v2282
        %v3087 = vpop.f32.mrf.mxu0
        %v3088 = vadd.f32 %v3064, %v3087
        %v3089 = vpop.f32.mrf.mxu0
        %v3090 = vadd.f32 %v3064, %v3089
        %3091 = vmatmul.bf16.gmra.mxu0 %v2285
        %v3092 = vpop.f32.mrf.mxu0
        %v3093 = vadd.f32 %v3064, %v3092
        %v3094 = vpop.f32.mrf.mxu0
        %v3095 = vadd.f32 %v3064, %v3094
        %3096 = vmatmul.bf16.gmra.mxu0 %v2288
        %v3097 = vpop.f32.mrf.mxu0
        %v3098 = vadd.f32 %v3064, %v3097
        %v3099 = vpop.f32.mrf.mxu0
        %v3100 = vadd.f32 %v3064, %v3099
        %3101 = vmatmul.bf16.gmra.mxu0 %v2291
        %v3102 = vpop.f32.mrf.mxu0
        %v3103 = vadd.f32 %v3064, %v3102
        %v3104 = vpop.f32.mrf.mxu0
        %v3105 = vadd.f32 %v3064, %v3104
        %3106 = vdwg.mxu0
        %v3107 = vld [vmem:[%s5] sm:$0xf]
        %v3108 = vld [vmem:[%s5 + $0x4] sm:$0xf]
        %v3109 = vld [vmem:[%s5 + $0x8] sm:$0xf]
        %v3110 = vld [vmem:[%s5 + $0xc] sm:$0xf]
        %v3111 = vld [vmem:[%s5 + $0x10] sm:$0xf]
        %v3112 = vld [vmem:[%s5 + $0x14] sm:$0xf]
        %v3113 = vld [vmem:[%s5 + $0x18] sm:$0xf]
        %v3114 = vld [vmem:[%s5 + $0x1c] sm:$0xf]
        %v3115 = vpack.c.bf16 %v3051, %v3050
        %v3116 = vpack.c.bf16 %v3053, %v3052
        %v3117 = vpack.c.bf16 %v3055, %v3054
        %v3118 = vpack.c.bf16 %v3057, %v3056
        %v3127 = vunpack.c.l.b16 %v3107
        %v3128 = vunpack.c.l.b16 %v3108
        %v3129 = vunpack.c.l.b16 %v3109
        %v3130 = vunpack.c.l.b16 %v3110
        %v3131 = vunpack.c.l.b16 %v3111
        %v3132 = vunpack.c.l.b16 %v3112
        %v3133 = vunpack.c.l.b16 %v3113
        %v3134 = vunpack.c.l.b16 %v3114
        %v3135 = vpack.c.b16 %v3128, %v3127
        %v3136 = vpack.c.b16 %v3130, %v3129
        %v3137 = vpack.c.b16 %v3132, %v3131
        %v3138 = vpack.c.b16 %v3134, %v3133
        %vm3139 = vcmask 523264
        %v3141 = vsel %vm3139, %v3135, 0
        %v3144 = vsel %vm3139, %v3136, 0
        %v3147 = vsel %vm3139, %v3137, 0
        %v3150 = vsel %vm3139, %v3138, 0
        %3152 = vmatpush.bf16.msra.mxu0 0
        %3153 = vmatpush.bf16.msra.mxu0 0
        %3154 = vmatpush.bf16.msra.mxu0 0
        %3155 = vmatpush.bf16.msra.mxu0 0
        %3156 = vmatpush.bf16.msra.mxu0 %v3118
        %3157 = vmatpush.bf16.msra.mxu0 %v3117
        %3158 = vmatpush.bf16.msra.mxu0 %v3116
        %3159 = vmatpush.bf16.msra.mxu0 %v3115
        %3160 = vmatmul.bf16.gmra.mxu0 %v3141
        %v3161 = vpop.f32.mrf.mxu0
        %v3162 = vadd.f32 0.0, %v3161
        %v3163 = vpop.f32.mrf.mxu0
        %v3164 = vadd.f32 0.0, %v3163
        %3165 = vmatmul.bf16.gmra.mxu0 %v3144
        %v3166 = vpop.f32.mrf.mxu0
        %v3167 = vadd.f32 0.0, %v3166
        %v3168 = vpop.f32.mrf.mxu0
        %v3169 = vadd.f32 0.0, %v3168
        %3170 = vmatmul.bf16.gmra.mxu0 %v3147
        %v3171 = vpop.f32.mrf.mxu0
        %v3172 = vadd.f32 0.0, %v3171
        %v3173 = vpop.f32.mrf.mxu0
        %v3174 = vadd.f32 0.0, %v3173
        %3175 = vmatmul.bf16.gmra.mxu0 %v3150
        %v3176 = vpop.f32.mrf.mxu0
        %v3177 = vadd.f32 0.0, %v3176
        %v3178 = vpop.f32.mrf.mxu0
        %v3179 = vadd.f32 0.0, %v3178
        %3180 = vdwg.mxu0
        %v3181 = vld [vmem:[#allocation2] sm:$0xf]
        %v3182 = vld [vmem:[#allocation2 + $0x4] sm:$0xf]
        %v3183 = vld [vmem:[#allocation2 + $0x8] sm:$0xf]
        %v3184 = vld [vmem:[#allocation2 + $0xc] sm:$0xf]
        %v3185 = vld [vmem:[#allocation2 + $0x10] sm:$0xf]
        %v3186 = vld [vmem:[#allocation2 + $0x14] sm:$0xf]
        %v3187 = vld [vmem:[#allocation2 + $0x18] sm:$0xf]
        %v3188 = vld [vmem:[#allocation2 + $0x1c] sm:$0xf]
        %v3189 = vpack.c.bf16 %v3164, %v3162
        %v3190 = vpack.c.bf16 %v3169, %v3167
        %v3191 = vpack.c.bf16 %v3174, %v3172
        %v3192 = vpack.c.bf16 %v3179, %v3177
        %s3193 = scalar_lea.vmem %s5, 32
        %v3194 = vld [vmem:[%s3193] sm:$0xf]
        %v3195 = vld [vmem:[%s3193 + $0x4] sm:$0xf]
        %v3196 = vld [vmem:[%s3193 + $0x8] sm:$0xf]
        %v3197 = vld [vmem:[%s3193 + $0xc] sm:$0xf]
        %v3198 = vld [vmem:[%s3193 + $0x10] sm:$0xf]
        %v3199 = vld [vmem:[%s3193 + $0x14] sm:$0xf]
        %v3200 = vld [vmem:[%s3193 + $0x18] sm:$0xf]
        %v3201 = vld [vmem:[%s3193 + $0x1c] sm:$0xf]
        %v3210 = vunpack.c.l.b16 %v3194
        %v3211 = vunpack.c.l.b16 %v3195
        %v3212 = vunpack.c.l.b16 %v3196
        %v3213 = vunpack.c.l.b16 %v3197
        %v3214 = vunpack.c.l.b16 %v3198
        %v3215 = vunpack.c.l.b16 %v3199
        %v3216 = vunpack.c.l.b16 %v3200
        %v3217 = vunpack.c.l.b16 %v3201
        %v3218 = vpack.c.b16 %v3211, %v3210
        %v3219 = vpack.c.b16 %v3213, %v3212
        %v3220 = vpack.c.b16 %v3215, %v3214
        %v3221 = vpack.c.b16 %v3217, %v3216
        %v3223 = vsel %vm3139, %v3218, 0
        %v3226 = vsel %vm3139, %v3219, 0
        %v3229 = vsel %vm3139, %v3220, 0
        %v3232 = vsel %vm3139, %v3221, 0
        %3234 = vmatpush.bf16.msra.mxu0 0
        %3235 = vmatpush.bf16.msra.mxu0 0
        %3236 = vmatpush.bf16.msra.mxu0 0
        %3237 = vmatpush.bf16.msra.mxu0 0
        %3238 = vmatpush.bf16.msra.mxu0 %v3118
        %3239 = vmatpush.bf16.msra.mxu0 %v3117
        %3240 = vmatpush.bf16.msra.mxu0 %v3116
        %3241 = vmatpush.bf16.msra.mxu0 %v3115
        %3242 = vmatmul.bf16.gmra.mxu0 %v3223
        %v3243 = vpop.f32.mrf.mxu0
        %v3244 = vadd.f32 0.0, %v3243
        %v3245 = vpop.f32.mrf.mxu0
        %v3246 = vadd.f32 0.0, %v3245
        %3247 = vmatmul.bf16.gmra.mxu0 %v3226
        %v3248 = vpop.f32.mrf.mxu0
        %v3249 = vadd.f32 0.0, %v3248
        %v3250 = vpop.f32.mrf.mxu0
        %v3251 = vadd.f32 0.0, %v3250
        %3252 = vmatmul.bf16.gmra.mxu0 %v3229
        %v3253 = vpop.f32.mrf.mxu0
        %v3254 = vadd.f32 0.0, %v3253
        %v3255 = vpop.f32.mrf.mxu0
        %v3256 = vadd.f32 0.0, %v3255
        %3257 = vmatmul.bf16.gmra.mxu0 %v3232
        %v3258 = vpop.f32.mrf.mxu0
        %v3259 = vadd.f32 0.0, %v3258
        %v3260 = vpop.f32.mrf.mxu0
        %v3261 = vadd.f32 0.0, %v3260
        %3262 = vdwg.mxu0
        %s3263 = scalar_lea.vmem [#allocation2], 32
        %v3264 = vld [vmem:[%s3263] sm:$0xf]
        %v3265 = vld [vmem:[%s3263 + $0x4] sm:$0xf]
        %v3266 = vld [vmem:[%s3263 + $0x8] sm:$0xf]
        %v3267 = vld [vmem:[%s3263 + $0xc] sm:$0xf]
        %v3268 = vld [vmem:[%s3263 + $0x10] sm:$0xf]
        %v3269 = vld [vmem:[%s3263 + $0x14] sm:$0xf]
        %v3270 = vld [vmem:[%s3263 + $0x18] sm:$0xf]
        %v3271 = vld [vmem:[%s3263 + $0x1c] sm:$0xf]
        %v3272 = vpack.c.bf16 %v3246, %v3244
        %v3273 = vpack.c.bf16 %v3251, %v3249
        %v3274 = vpack.c.bf16 %v3256, %v3254
        %v3275 = vpack.c.bf16 %v3261, %v3259
        %v3284 = vunpack.c.l.b16 %v3264
        %v3285 = vunpack.c.l.b16 %v3265
        %v3286 = vunpack.c.l.b16 %v3266
        %v3287 = vunpack.c.l.b16 %v3267
        %v3288 = vunpack.c.l.b16 %v3268
        %v3289 = vunpack.c.l.b16 %v3269
        %v3290 = vunpack.c.l.b16 %v3270
        %v3291 = vunpack.c.l.b16 %v3271
        %v3292 = vpack.c.b16 %v3285, %v3284
        %v3293 = vpack.c.b16 %v3287, %v3286
        %v3294 = vpack.c.b16 %v3289, %v3288
        %v3295 = vpack.c.b16 %v3291, %v3290
        %v3301 = vsel %vm3139, %v3272, 0
        %v3304 = vsel %vm3139, %v3273, 0
        %v3307 = vsel %vm3139, %v3274, 0
        %v3310 = vsel %vm3139, %v3275, 0
        %3312 = vmatpush.bf16.msra.mxu0 0
        %3313 = vmatpush.bf16.msra.mxu0 0
        %3314 = vmatpush.bf16.msra.mxu0 0
        %3315 = vmatpush.bf16.msra.mxu0 0
        %3316 = vmatpush.bf16.msra.mxu0 %v3295
        %3317 = vmatpush.bf16.msra.mxu0 %v3294
        %3318 = vmatpush.bf16.msra.mxu0 %v3293
        %3319 = vmatpush.bf16.msra.mxu0 %v3292
        %3320 = vmatmul.bf16.gmra.mxu0 %v3301
        %v3321 = vpop.f32.mrf.mxu0
        %v3322 = vadd.f32 0.0, %v3321
        %v3323 = vpop.f32.mrf.mxu0
        %v3324 = vadd.f32 0.0, %v3323
        %3325 = vmatmul.bf16.gmra.mxu0 %v3304
        %v3326 = vpop.f32.mrf.mxu0
        %v3327 = vadd.f32 0.0, %v3326
        %v3328 = vpop.f32.mrf.mxu0
        %v3329 = vadd.f32 0.0, %v3328
        %3330 = vmatmul.bf16.gmra.mxu0 %v3307
        %v3331 = vpop.f32.mrf.mxu0
        %v3332 = vadd.f32 0.0, %v3331
        %v3333 = vpop.f32.mrf.mxu0
        %v3334 = vadd.f32 0.0, %v3333
        %3335 = vmatmul.bf16.gmra.mxu0 %v3310
        %v3336 = vpop.f32.mrf.mxu0
        %v3337 = vadd.f32 0.0, %v3336
        %v3338 = vpop.f32.mrf.mxu0
        %v3339 = vadd.f32 0.0, %v3338
        %3340 = vdwg.mxu0
        %v3349 = vunpack.c.l.b16 %v3181
        %v3350 = vunpack.c.l.b16 %v3182
        %v3351 = vunpack.c.l.b16 %v3183
        %v3352 = vunpack.c.l.b16 %v3184
        %v3353 = vunpack.c.l.b16 %v3185
        %v3354 = vunpack.c.l.b16 %v3186
        %v3355 = vunpack.c.l.b16 %v3187
        %v3356 = vunpack.c.l.b16 %v3188
        %v3357 = vpack.c.b16 %v3350, %v3349
        %v3358 = vpack.c.b16 %v3352, %v3351
        %v3359 = vpack.c.b16 %v3354, %v3353
        %v3360 = vpack.c.b16 %v3356, %v3355
        %v3366 = vsel %vm3139, %v3189, 0
        %v3369 = vsel %vm3139, %v3190, 0
        %v3372 = vsel %vm3139, %v3191, 0
        %v3375 = vsel %vm3139, %v3192, 0
        %3377 = vmatpush.bf16.msra.mxu0 0
        %3378 = vmatpush.bf16.msra.mxu0 0
        %3379 = vmatpush.bf16.msra.mxu0 0
        %3380 = vmatpush.bf16.msra.mxu0 0
        %3381 = vmatpush.bf16.msra.mxu0 %v3360
        %3382 = vmatpush.bf16.msra.mxu0 %v3359
        %3383 = vmatpush.bf16.msra.mxu0 %v3358
        %3384 = vmatpush.bf16.msra.mxu0 %v3357
        %3385 = vmatmul.bf16.gmra.mxu0 %v3366
        %v3386 = vpop.f32.mrf.mxu0
        %v3387 = vadd.f32 %v3322, %v3386
        %v3388 = vpop.f32.mrf.mxu0
        %v3389 = vadd.f32 %v3324, %v3388
        %3390 = vmatmul.bf16.gmra.mxu0 %v3369
        %v3391 = vpop.f32.mrf.mxu0
        %v3392 = vadd.f32 %v3327, %v3391
        %v3393 = vpop.f32.mrf.mxu0
        %v3394 = vadd.f32 %v3329, %v3393
        %3395 = vmatmul.bf16.gmra.mxu0 %v3372
        %v3396 = vpop.f32.mrf.mxu0
        %v3397 = vadd.f32 %v3332, %v3396
        %v3398 = vpop.f32.mrf.mxu0
        %v3399 = vadd.f32 %v3334, %v3398
        %3400 = vmatmul.bf16.gmra.mxu0 %v3375
        %v3401 = vpop.f32.mrf.mxu0
        %v3402 = vadd.f32 %v3337, %v3401
        %v3403 = vpop.f32.mrf.mxu0
        %v3404 = vadd.f32 %v3339, %v3403
        %3405 = vdwg.mxu0
        %s3406 = scalar_lea.vmem %s5, 64
        %v3407 = vld [vmem:[%s3406] sm:$0xf]
        %v3408 = vld [vmem:[%s3406 + $0x4] sm:$0xf]
        %v3409 = vld [vmem:[%s3406 + $0x8] sm:$0xf]
        %v3410 = vld [vmem:[%s3406 + $0xc] sm:$0xf]
        %v3411 = vld [vmem:[%s3406 + $0x10] sm:$0xf]
        %v3412 = vld [vmem:[%s3406 + $0x14] sm:$0xf]
        %v3413 = vld [vmem:[%s3406 + $0x18] sm:$0xf]
        %v3414 = vld [vmem:[%s3406 + $0x1c] sm:$0xf]
        %v3423 = vunpack.c.l.b16 %v3407
        %v3424 = vunpack.c.l.b16 %v3408
        %v3425 = vunpack.c.l.b16 %v3409
        %v3426 = vunpack.c.l.b16 %v3410
        %v3427 = vunpack.c.l.b16 %v3411
        %v3428 = vunpack.c.l.b16 %v3412
        %v3429 = vunpack.c.l.b16 %v3413
        %v3430 = vunpack.c.l.b16 %v3414
        %v3431 = vpack.c.b16 %v3424, %v3423
        %v3432 = vpack.c.b16 %v3426, %v3425
        %v3433 = vpack.c.b16 %v3428, %v3427
        %v3434 = vpack.c.b16 %v3430, %v3429
        %v3436 = vsel %vm3139, %v3431, 0
        %v3439 = vsel %vm3139, %v3432, 0
        %v3442 = vsel %vm3139, %v3433, 0
        %v3445 = vsel %vm3139, %v3434, 0
        %3447 = vmatpush.bf16.msra.mxu0 0
        %3448 = vmatpush.bf16.msra.mxu0 0
        %3449 = vmatpush.bf16.msra.mxu0 0
        %3450 = vmatpush.bf16.msra.mxu0 0
        %3451 = vmatpush.bf16.msra.mxu0 %v3118
        %3452 = vmatpush.bf16.msra.mxu0 %v3117
        %3453 = vmatpush.bf16.msra.mxu0 %v3116
        %3454 = vmatpush.bf16.msra.mxu0 %v3115
        %3455 = vmatmul.bf16.gmra.mxu0 %v3436
        %v3456 = vpop.f32.mrf.mxu0
        %v3457 = vadd.f32 0.0, %v3456
        %v3458 = vpop.f32.mrf.mxu0
        %v3459 = vadd.f32 0.0, %v3458
        %3460 = vmatmul.bf16.gmra.mxu0 %v3439
        %v3461 = vpop.f32.mrf.mxu0
        %v3462 = vadd.f32 0.0, %v3461
        %v3463 = vpop.f32.mrf.mxu0
        %v3464 = vadd.f32 0.0, %v3463
        %3465 = vmatmul.bf16.gmra.mxu0 %v3442
        %v3466 = vpop.f32.mrf.mxu0
        %v3467 = vadd.f32 0.0, %v3466
        %v3468 = vpop.f32.mrf.mxu0
        %v3469 = vadd.f32 0.0, %v3468
        %3470 = vmatmul.bf16.gmra.mxu0 %v3445
        %v3471 = vpop.f32.mrf.mxu0
        %v3472 = vadd.f32 0.0, %v3471
        %v3473 = vpop.f32.mrf.mxu0
        %v3474 = vadd.f32 0.0, %v3473
        %3475 = vdwg.mxu0
        %s3476 = scalar_lea.vmem [#allocation2], 64
        %v3477 = vld [vmem:[%s3476] sm:$0xf]
        %v3478 = vld [vmem:[%s3476 + $0x4] sm:$0xf]
        %v3479 = vld [vmem:[%s3476 + $0x8] sm:$0xf]
        %v3480 = vld [vmem:[%s3476 + $0xc] sm:$0xf]
        %v3481 = vld [vmem:[%s3476 + $0x10] sm:$0xf]
        %v3482 = vld [vmem:[%s3476 + $0x14] sm:$0xf]
        %v3483 = vld [vmem:[%s3476 + $0x18] sm:$0xf]
        %v3484 = vld [vmem:[%s3476 + $0x1c] sm:$0xf]
        %v3485 = vpack.c.bf16 %v3459, %v3457
        %v3486 = vpack.c.bf16 %v3464, %v3462
        %v3487 = vpack.c.bf16 %v3469, %v3467
        %v3488 = vpack.c.bf16 %v3474, %v3472
        %v3497 = vunpack.c.l.b16 %v3477
        %v3498 = vunpack.c.l.b16 %v3478
        %v3499 = vunpack.c.l.b16 %v3479
        %v3500 = vunpack.c.l.b16 %v3480
        %v3501 = vunpack.c.l.b16 %v3481
        %v3502 = vunpack.c.l.b16 %v3482
        %v3503 = vunpack.c.l.b16 %v3483
        %v3504 = vunpack.c.l.b16 %v3484
        %v3505 = vpack.c.b16 %v3498, %v3497
        %v3506 = vpack.c.b16 %v3500, %v3499
        %v3507 = vpack.c.b16 %v3502, %v3501
        %v3508 = vpack.c.b16 %v3504, %v3503
        %v3514 = vsel %vm3139, %v3485, 0
        %v3517 = vsel %vm3139, %v3486, 0
        %v3520 = vsel %vm3139, %v3487, 0
        %v3523 = vsel %vm3139, %v3488, 0
        %3525 = vmatpush.bf16.msra.mxu0 0
        %3526 = vmatpush.bf16.msra.mxu0 0
        %3527 = vmatpush.bf16.msra.mxu0 0
        %3528 = vmatpush.bf16.msra.mxu0 0
        %3529 = vmatpush.bf16.msra.mxu0 %v3508
        %3530 = vmatpush.bf16.msra.mxu0 %v3507
        %3531 = vmatpush.bf16.msra.mxu0 %v3506
        %3532 = vmatpush.bf16.msra.mxu0 %v3505
        %3533 = vmatmul.bf16.gmra.mxu0 %v3514
        %v3534 = vpop.f32.mrf.mxu0
        %v3535 = vadd.f32 0.0, %v3534
        %v3536 = vpop.f32.mrf.mxu0
        %v3537 = vadd.f32 0.0, %v3536
        %3538 = vmatmul.bf16.gmra.mxu0 %v3517
        %v3539 = vpop.f32.mrf.mxu0
        %v3540 = vadd.f32 0.0, %v3539
        %v3541 = vpop.f32.mrf.mxu0
        %v3542 = vadd.f32 0.0, %v3541
        %3543 = vmatmul.bf16.gmra.mxu0 %v3520
        %v3544 = vpop.f32.mrf.mxu0
        %v3545 = vadd.f32 0.0, %v3544
        %v3546 = vpop.f32.mrf.mxu0
        %v3547 = vadd.f32 0.0, %v3546
        %3548 = vmatmul.bf16.gmra.mxu0 %v3523
        %v3549 = vpop.f32.mrf.mxu0
        %v3550 = vadd.f32 0.0, %v3549
        %v3551 = vpop.f32.mrf.mxu0
        %v3552 = vadd.f32 0.0, %v3551
        %3553 = vdwg.mxu0
        %v3554 = vadd.f32 %v3387, %v3535
        %v3555 = vadd.f32 %v3389, %v3537
        %v3556 = vadd.f32 %v3392, %v3540
        %v3557 = vadd.f32 %v3394, %v3542
        %v3558 = vadd.f32 %v3397, %v3545
        %v3559 = vadd.f32 %v3399, %v3547
        %v3560 = vadd.f32 %v3402, %v3550
        %v3561 = vadd.f32 %v3404, %v3552
        %s3562 = scalar_lea.vmem %s5, 96
        %v3563 = vld [vmem:[%s3562] sm:$0xf]
        %v3564 = vld [vmem:[%s3562 + $0x4] sm:$0xf]
        %v3565 = vld [vmem:[%s3562 + $0x8] sm:$0xf]
        %v3566 = vld [vmem:[%s3562 + $0xc] sm:$0xf]
        %v3567 = vld [vmem:[%s3562 + $0x10] sm:$0xf]
        %v3568 = vld [vmem:[%s3562 + $0x14] sm:$0xf]
        %v3569 = vld [vmem:[%s3562 + $0x18] sm:$0xf]
        %v3570 = vld [vmem:[%s3562 + $0x1c] sm:$0xf]
        %v3579 = vunpack.c.l.b16 %v3563
        %v3580 = vunpack.c.l.b16 %v3564
        %v3581 = vunpack.c.l.b16 %v3565
        %v3582 = vunpack.c.l.b16 %v3566
        %v3583 = vunpack.c.l.b16 %v3567
        %v3584 = vunpack.c.l.b16 %v3568
        %v3585 = vunpack.c.l.b16 %v3569
        %v3586 = vunpack.c.l.b16 %v3570
        %v3587 = vpack.c.b16 %v3580, %v3579
        %v3588 = vpack.c.b16 %v3582, %v3581
        %v3589 = vpack.c.b16 %v3584, %v3583
        %v3590 = vpack.c.b16 %v3586, %v3585
        %v3592 = vsel %vm3139, %v3587, 0
        %v3595 = vsel %vm3139, %v3588, 0
        %v3598 = vsel %vm3139, %v3589, 0
        %v3601 = vsel %vm3139, %v3590, 0
        %3603 = vmatpush.bf16.msra.mxu0 0
        %3604 = vmatpush.bf16.msra.mxu0 0
        %3605 = vmatpush.bf16.msra.mxu0 0
        %3606 = vmatpush.bf16.msra.mxu0 0
        %3607 = vmatpush.bf16.msra.mxu0 %v3118
        %3608 = vmatpush.bf16.msra.mxu0 %v3117
        %3609 = vmatpush.bf16.msra.mxu0 %v3116
        %3610 = vmatpush.bf16.msra.mxu0 %v3115
        %3611 = vmatmul.bf16.gmra.mxu0 %v3592
        %v3612 = vpop.f32.mrf.mxu0
        %v3613 = vadd.f32 0.0, %v3612
        %v3614 = vpop.f32.mrf.mxu0
        %v3615 = vadd.f32 0.0, %v3614
        %3616 = vmatmul.bf16.gmra.mxu0 %v3595
        %v3617 = vpop.f32.mrf.mxu0
        %v3618 = vadd.f32 0.0, %v3617
        %v3619 = vpop.f32.mrf.mxu0
        %v3620 = vadd.f32 0.0, %v3619
        %3621 = vmatmul.bf16.gmra.mxu0 %v3598
        %v3622 = vpop.f32.mrf.mxu0
        %v3623 = vadd.f32 0.0, %v3622
        %v3624 = vpop.f32.mrf.mxu0
        %v3625 = vadd.f32 0.0, %v3624
        %3626 = vmatmul.bf16.gmra.mxu0 %v3601
        %v3627 = vpop.f32.mrf.mxu0
        %v3628 = vadd.f32 0.0, %v3627
        %v3629 = vpop.f32.mrf.mxu0
        %v3630 = vadd.f32 0.0, %v3629
        %3631 = vdwg.mxu0
        %s3632 = scalar_lea.vmem [#allocation2], 96
        %v3633 = vld [vmem:[%s3632] sm:$0xf]
        %v3634 = vld [vmem:[%s3632 + $0x4] sm:$0xf]
        %v3635 = vld [vmem:[%s3632 + $0x8] sm:$0xf]
        %v3636 = vld [vmem:[%s3632 + $0xc] sm:$0xf]
        %v3637 = vld [vmem:[%s3632 + $0x10] sm:$0xf]
        %v3638 = vld [vmem:[%s3632 + $0x14] sm:$0xf]
        %v3639 = vld [vmem:[%s3632 + $0x18] sm:$0xf]
        %v3640 = vld [vmem:[%s3632 + $0x1c] sm:$0xf]
        %v3641 = vpack.c.bf16 %v3615, %v3613
        %v3642 = vpack.c.bf16 %v3620, %v3618
        %v3643 = vpack.c.bf16 %v3625, %v3623
        %v3644 = vpack.c.bf16 %v3630, %v3628
        %v3653 = vunpack.c.l.b16 %v3633
        %v3654 = vunpack.c.l.b16 %v3634
        %v3655 = vunpack.c.l.b16 %v3635
        %v3656 = vunpack.c.l.b16 %v3636
        %v3657 = vunpack.c.l.b16 %v3637
        %v3658 = vunpack.c.l.b16 %v3638
        %v3659 = vunpack.c.l.b16 %v3639
        %v3660 = vunpack.c.l.b16 %v3640
        %v3661 = vpack.c.b16 %v3654, %v3653
        %v3662 = vpack.c.b16 %v3656, %v3655
        %v3663 = vpack.c.b16 %v3658, %v3657
        %v3664 = vpack.c.b16 %v3660, %v3659
        %v3670 = vsel %vm3139, %v3641, 0
        %v3673 = vsel %vm3139, %v3642, 0
        %v3676 = vsel %vm3139, %v3643, 0
        %v3679 = vsel %vm3139, %v3644, 0
        %3681 = vmatpush.bf16.msra.mxu0 0
        %3682 = vmatpush.bf16.msra.mxu0 0
        %3683 = vmatpush.bf16.msra.mxu0 0
        %3684 = vmatpush.bf16.msra.mxu0 0
        %3685 = vmatpush.bf16.msra.mxu0 %v3664
        %3686 = vmatpush.bf16.msra.mxu0 %v3663
        %3687 = vmatpush.bf16.msra.mxu0 %v3662
        %3688 = vmatpush.bf16.msra.mxu0 %v3661
        %3689 = vmatmul.bf16.gmra.mxu0 %v3670
        %v3690 = vpop.f32.mrf.mxu0
        %v3691 = vadd.f32 0.0, %v3690
        %v3692 = vpop.f32.mrf.mxu0
        %v3693 = vadd.f32 0.0, %v3692
        %3694 = vmatmul.bf16.gmra.mxu0 %v3673
        %v3695 = vpop.f32.mrf.mxu0
        %v3696 = vadd.f32 0.0, %v3695
        %v3697 = vpop.f32.mrf.mxu0
        %v3698 = vadd.f32 0.0, %v3697
        %3699 = vmatmul.bf16.gmra.mxu0 %v3676
        %v3700 = vpop.f32.mrf.mxu0
        %v3701 = vadd.f32 0.0, %v3700
        %v3702 = vpop.f32.mrf.mxu0
        %v3703 = vadd.f32 0.0, %v3702
        %3704 = vmatmul.bf16.gmra.mxu0 %v3679
        %v3705 = vpop.f32.mrf.mxu0
        %v3706 = vadd.f32 0.0, %v3705
        %v3707 = vpop.f32.mrf.mxu0
        %v3708 = vadd.f32 0.0, %v3707
        %3709 = vdwg.mxu0
        %v3710 = vadd.f32 %v3554, %v3691
        %v3711 = vadd.f32 %v3555, %v3693
        %v3712 = vadd.f32 %v3556, %v3696
        %v3713 = vadd.f32 %v3557, %v3698
        %v3714 = vadd.f32 %v3558, %v3701
        %v3715 = vadd.f32 %v3559, %v3703
        %v3716 = vadd.f32 %v3560, %v3706
        %v3717 = vadd.f32 %v3561, %v3708
        %s3718 = scalar_lea.vmem %s5, 128
        %v3719 = vld [vmem:[%s3718] sm:$0xf]
        %v3720 = vld [vmem:[%s3718 + $0x4] sm:$0xf]
        %v3721 = vld [vmem:[%s3718 + $0x8] sm:$0xf]
        %v3722 = vld [vmem:[%s3718 + $0xc] sm:$0xf]
        %v3723 = vld [vmem:[%s3718 + $0x10] sm:$0xf]
        %v3724 = vld [vmem:[%s3718 + $0x14] sm:$0xf]
        %v3725 = vld [vmem:[%s3718 + $0x18] sm:$0xf]
        %v3726 = vld [vmem:[%s3718 + $0x1c] sm:$0xf]
        %v3735 = vunpack.c.l.b16 %v3719
        %v3736 = vunpack.c.l.b16 %v3720
        %v3737 = vunpack.c.l.b16 %v3721
        %v3738 = vunpack.c.l.b16 %v3722
        %v3739 = vunpack.c.l.b16 %v3723
        %v3740 = vunpack.c.l.b16 %v3724
        %v3741 = vunpack.c.l.b16 %v3725
        %v3742 = vunpack.c.l.b16 %v3726
        %v3743 = vpack.c.b16 %v3736, %v3735
        %v3744 = vpack.c.b16 %v3738, %v3737
        %v3745 = vpack.c.b16 %v3740, %v3739
        %v3746 = vpack.c.b16 %v3742, %v3741
        %v3748 = vsel %vm3139, %v3743, 0
        %v3751 = vsel %vm3139, %v3744, 0
        %v3754 = vsel %vm3139, %v3745, 0
        %v3757 = vsel %vm3139, %v3746, 0
        %3759 = vmatpush.bf16.msra.mxu0 0
        %3760 = vmatpush.bf16.msra.mxu0 0
        %3761 = vmatpush.bf16.msra.mxu0 0
        %3762 = vmatpush.bf16.msra.mxu0 0
        %3763 = vmatpush.bf16.msra.mxu0 %v3118
        %3764 = vmatpush.bf16.msra.mxu0 %v3117
        %3765 = vmatpush.bf16.msra.mxu0 %v3116
        %3766 = vmatpush.bf16.msra.mxu0 %v3115
        %3767 = vmatmul.bf16.gmra.mxu0 %v3748
        %v3768 = vpop.f32.mrf.mxu0
        %v3769 = vadd.f32 0.0, %v3768
        %v3770 = vpop.f32.mrf.mxu0
        %v3771 = vadd.f32 0.0, %v3770
        %3772 = vmatmul.bf16.gmra.mxu0 %v3751
        %v3773 = vpop.f32.mrf.mxu0
        %v3774 = vadd.f32 0.0, %v3773
        %v3775 = vpop.f32.mrf.mxu0
        %v3776 = vadd.f32 0.0, %v3775
        %3777 = vmatmul.bf16.gmra.mxu0 %v3754
        %v3778 = vpop.f32.mrf.mxu0
        %v3779 = vadd.f32 0.0, %v3778
        %v3780 = vpop.f32.mrf.mxu0
        %v3781 = vadd.f32 0.0, %v3780
        %3782 = vmatmul.bf16.gmra.mxu0 %v3757
        %v3783 = vpop.f32.mrf.mxu0
        %v3784 = vadd.f32 0.0, %v3783
        %v3785 = vpop.f32.mrf.mxu0
        %v3786 = vadd.f32 0.0, %v3785
        %3787 = vdwg.mxu0
        %s3788 = scalar_lea.vmem [#allocation2], 128
        %v3789 = vld [vmem:[%s3788] sm:$0xf]
        %v3790 = vld [vmem:[%s3788 + $0x4] sm:$0xf]
        %v3791 = vld [vmem:[%s3788 + $0x8] sm:$0xf]
        %v3792 = vld [vmem:[%s3788 + $0xc] sm:$0xf]
        %v3793 = vld [vmem:[%s3788 + $0x10] sm:$0xf]
        %v3794 = vld [vmem:[%s3788 + $0x14] sm:$0xf]
        %v3795 = vld [vmem:[%s3788 + $0x18] sm:$0xf]
        %v3796 = vld [vmem:[%s3788 + $0x1c] sm:$0xf]
        %v3797 = vpack.c.bf16 %v3771, %v3769
        %v3798 = vpack.c.bf16 %v3776, %v3774
        %v3799 = vpack.c.bf16 %v3781, %v3779
        %v3800 = vpack.c.bf16 %v3786, %v3784
        %v3809 = vunpack.c.l.b16 %v3789
        %v3810 = vunpack.c.l.b16 %v3790
        %v3811 = vunpack.c.l.b16 %v3791
        %v3812 = vunpack.c.l.b16 %v3792
        %v3813 = vunpack.c.l.b16 %v3793
        %v3814 = vunpack.c.l.b16 %v3794
        %v3815 = vunpack.c.l.b16 %v3795
        %v3816 = vunpack.c.l.b16 %v3796
        %v3817 = vpack.c.b16 %v3810, %v3809
        %v3818 = vpack.c.b16 %v3812, %v3811
        %v3819 = vpack.c.b16 %v3814, %v3813
        %v3820 = vpack.c.b16 %v3816, %v3815
        %v3826 = vsel %vm3139, %v3797, 0
        %v3829 = vsel %vm3139, %v3798, 0
        %v3832 = vsel %vm3139, %v3799, 0
        %v3835 = vsel %vm3139, %v3800, 0
        %3837 = vmatpush.bf16.msra.mxu0 0
        %3838 = vmatpush.bf16.msra.mxu0 0
        %3839 = vmatpush.bf16.msra.mxu0 0
        %3840 = vmatpush.bf16.msra.mxu0 0
        %3841 = vmatpush.bf16.msra.mxu0 %v3820
        %3842 = vmatpush.bf16.msra.mxu0 %v3819
        %3843 = vmatpush.bf16.msra.mxu0 %v3818
        %3844 = vmatpush.bf16.msra.mxu0 %v3817
        %3845 = vmatmul.bf16.gmra.mxu0 %v3826
        %v3846 = vpop.f32.mrf.mxu0
        %v3847 = vadd.f32 0.0, %v3846
        %v3848 = vpop.f32.mrf.mxu0
        %v3849 = vadd.f32 0.0, %v3848
        %3850 = vmatmul.bf16.gmra.mxu0 %v3829
        %v3851 = vpop.f32.mrf.mxu0
        %v3852 = vadd.f32 0.0, %v3851
        %v3853 = vpop.f32.mrf.mxu0
        %v3854 = vadd.f32 0.0, %v3853
        %3855 = vmatmul.bf16.gmra.mxu0 %v3832
        %v3856 = vpop.f32.mrf.mxu0
        %v3857 = vadd.f32 0.0, %v3856
        %v3858 = vpop.f32.mrf.mxu0
        %v3859 = vadd.f32 0.0, %v3858
        %3860 = vmatmul.bf16.gmra.mxu0 %v3835
        %v3861 = vpop.f32.mrf.mxu0
        %v3862 = vadd.f32 0.0, %v3861
        %v3863 = vpop.f32.mrf.mxu0
        %v3864 = vadd.f32 0.0, %v3863
        %3865 = vdwg.mxu0
        %v3866 = vadd.f32 %v3710, %v3847
        %v3867 = vadd.f32 %v3711, %v3849
        %v3868 = vadd.f32 %v3712, %v3852
        %v3869 = vadd.f32 %v3713, %v3854
        %v3870 = vadd.f32 %v3714, %v3857
        %v3871 = vadd.f32 %v3715, %v3859
        %v3872 = vadd.f32 %v3716, %v3862
        %v3873 = vadd.f32 %v3717, %v3864
        %s3874 = scalar_lea.vmem %s5, 160
        %v3875 = vld [vmem:[%s3874] sm:$0xf]
        %v3876 = vld [vmem:[%s3874 + $0x4] sm:$0xf]
        %v3877 = vld [vmem:[%s3874 + $0x8] sm:$0xf]
        %v3878 = vld [vmem:[%s3874 + $0xc] sm:$0xf]
        %v3879 = vld [vmem:[%s3874 + $0x10] sm:$0xf]
        %v3880 = vld [vmem:[%s3874 + $0x14] sm:$0xf]
        %v3881 = vld [vmem:[%s3874 + $0x18] sm:$0xf]
        %v3882 = vld [vmem:[%s3874 + $0x1c] sm:$0xf]
        %v3891 = vunpack.c.l.b16 %v3875
        %v3892 = vunpack.c.l.b16 %v3876
        %v3893 = vunpack.c.l.b16 %v3877
        %v3894 = vunpack.c.l.b16 %v3878
        %v3895 = vunpack.c.l.b16 %v3879
        %v3896 = vunpack.c.l.b16 %v3880
        %v3897 = vunpack.c.l.b16 %v3881
        %v3898 = vunpack.c.l.b16 %v3882
        %v3899 = vpack.c.b16 %v3892, %v3891
        %v3900 = vpack.c.b16 %v3894, %v3893
        %v3901 = vpack.c.b16 %v3896, %v3895
        %v3902 = vpack.c.b16 %v3898, %v3897
        %v3904 = vsel %vm3139, %v3899, 0
        %v3907 = vsel %vm3139, %v3900, 0
        %v3910 = vsel %vm3139, %v3901, 0
        %v3913 = vsel %vm3139, %v3902, 0
        %3915 = vmatpush.bf16.msra.mxu0 0
        %3916 = vmatpush.bf16.msra.mxu0 0
        %3917 = vmatpush.bf16.msra.mxu0 0
        %3918 = vmatpush.bf16.msra.mxu0 0
        %3919 = vmatpush.bf16.msra.mxu0 %v3118
        %3920 = vmatpush.bf16.msra.mxu0 %v3117
        %3921 = vmatpush.bf16.msra.mxu0 %v3116
        %3922 = vmatpush.bf16.msra.mxu0 %v3115
        %3923 = vmatmul.bf16.gmra.mxu0 %v3904
        %v3924 = vpop.f32.mrf.mxu0
        %v3925 = vadd.f32 0.0, %v3924
        %v3926 = vpop.f32.mrf.mxu0
        %v3927 = vadd.f32 0.0, %v3926
        %3928 = vmatmul.bf16.gmra.mxu0 %v3907
        %v3929 = vpop.f32.mrf.mxu0
        %v3930 = vadd.f32 0.0, %v3929
        %v3931 = vpop.f32.mrf.mxu0
        %v3932 = vadd.f32 0.0, %v3931
        %3933 = vmatmul.bf16.gmra.mxu0 %v3910
        %v3934 = vpop.f32.mrf.mxu0
        %v3935 = vadd.f32 0.0, %v3934
        %v3936 = vpop.f32.mrf.mxu0
        %v3937 = vadd.f32 0.0, %v3936
        %3938 = vmatmul.bf16.gmra.mxu0 %v3913
        %v3939 = vpop.f32.mrf.mxu0
        %v3940 = vadd.f32 0.0, %v3939
        %v3941 = vpop.f32.mrf.mxu0
        %v3942 = vadd.f32 0.0, %v3941
        %3943 = vdwg.mxu0
        %s3944 = scalar_lea.vmem [#allocation2], 160
        %v3945 = vld [vmem:[%s3944] sm:$0xf]
        %v3946 = vld [vmem:[%s3944 + $0x4] sm:$0xf]
        %v3947 = vld [vmem:[%s3944 + $0x8] sm:$0xf]
        %v3948 = vld [vmem:[%s3944 + $0xc] sm:$0xf]
        %v3949 = vld [vmem:[%s3944 + $0x10] sm:$0xf]
        %v3950 = vld [vmem:[%s3944 + $0x14] sm:$0xf]
        %v3951 = vld [vmem:[%s3944 + $0x18] sm:$0xf]
        %v3952 = vld [vmem:[%s3944 + $0x1c] sm:$0xf]
        %v3953 = vpack.c.bf16 %v3927, %v3925
        %v3954 = vpack.c.bf16 %v3932, %v3930
        %v3955 = vpack.c.bf16 %v3937, %v3935
        %v3956 = vpack.c.bf16 %v3942, %v3940
        %v3965 = vunpack.c.l.b16 %v3945
        %v3966 = vunpack.c.l.b16 %v3946
        %v3967 = vunpack.c.l.b16 %v3947
        %v3968 = vunpack.c.l.b16 %v3948
        %v3969 = vunpack.c.l.b16 %v3949
        %v3970 = vunpack.c.l.b16 %v3950
        %v3971 = vunpack.c.l.b16 %v3951
        %v3972 = vunpack.c.l.b16 %v3952
        %v3973 = vpack.c.b16 %v3966, %v3965
        %v3974 = vpack.c.b16 %v3968, %v3967
        %v3975 = vpack.c.b16 %v3970, %v3969
        %v3976 = vpack.c.b16 %v3972, %v3971
        %v3982 = vsel %vm3139, %v3953, 0
        %v3985 = vsel %vm3139, %v3954, 0
        %v3988 = vsel %vm3139, %v3955, 0
        %v3991 = vsel %vm3139, %v3956, 0
        %3993 = vmatpush.bf16.msra.mxu0 0
        %3994 = vmatpush.bf16.msra.mxu0 0
        %3995 = vmatpush.bf16.msra.mxu0 0
        %3996 = vmatpush.bf16.msra.mxu0 0
        %3997 = vmatpush.bf16.msra.mxu0 %v3976
        %3998 = vmatpush.bf16.msra.mxu0 %v3975
        %3999 = vmatpush.bf16.msra.mxu0 %v3974
        %4000 = vmatpush.bf16.msra.mxu0 %v3973
        %4001 = vmatmul.bf16.gmra.mxu0 %v3982
        %v4002 = vpop.f32.mrf.mxu0
        %v4003 = vadd.f32 0.0, %v4002
        %v4004 = vpop.f32.mrf.mxu0
        %v4005 = vadd.f32 0.0, %v4004
        %4006 = vmatmul.bf16.gmra.mxu0 %v3985
        %v4007 = vpop.f32.mrf.mxu0
        %v4008 = vadd.f32 0.0, %v4007
        %v4009 = vpop.f32.mrf.mxu0
        %v4010 = vadd.f32 0.0, %v4009
        %4011 = vmatmul.bf16.gmra.mxu0 %v3988
        %v4012 = vpop.f32.mrf.mxu0
        %v4013 = vadd.f32 0.0, %v4012
        %v4014 = vpop.f32.mrf.mxu0
        %v4015 = vadd.f32 0.0, %v4014
        %4016 = vmatmul.bf16.gmra.mxu0 %v3991
        %v4017 = vpop.f32.mrf.mxu0
        %v4018 = vadd.f32 0.0, %v4017
        %v4019 = vpop.f32.mrf.mxu0
        %v4020 = vadd.f32 0.0, %v4019
        %4021 = vdwg.mxu0
        %v4022 = vadd.f32 %v3866, %v4003
        %v4023 = vadd.f32 %v3867, %v4005
        %v4024 = vadd.f32 %v3868, %v4008
        %v4025 = vadd.f32 %v3869, %v4010
        %v4026 = vadd.f32 %v3870, %v4013
        %v4027 = vadd.f32 %v3871, %v4015
        %v4028 = vadd.f32 %v3872, %v4018
        %v4029 = vadd.f32 %v3873, %v4020
        %s4030 = scalar_lea.vmem %s5, 192
        %v4031 = vld [vmem:[%s4030] sm:$0xf]
        %v4032 = vld [vmem:[%s4030 + $0x4] sm:$0xf]
        %v4033 = vld [vmem:[%s4030 + $0x8] sm:$0xf]
        %v4034 = vld [vmem:[%s4030 + $0xc] sm:$0xf]
        %v4035 = vld [vmem:[%s4030 + $0x10] sm:$0xf]
        %v4036 = vld [vmem:[%s4030 + $0x14] sm:$0xf]
        %v4037 = vld [vmem:[%s4030 + $0x18] sm:$0xf]
        %v4038 = vld [vmem:[%s4030 + $0x1c] sm:$0xf]
        %v4047 = vunpack.c.l.b16 %v4031
        %v4048 = vunpack.c.l.b16 %v4032
        %v4049 = vunpack.c.l.b16 %v4033
        %v4050 = vunpack.c.l.b16 %v4034
        %v4051 = vunpack.c.l.b16 %v4035
        %v4052 = vunpack.c.l.b16 %v4036
        %v4053 = vunpack.c.l.b16 %v4037
        %v4054 = vunpack.c.l.b16 %v4038
        %v4055 = vpack.c.b16 %v4048, %v4047
        %v4056 = vpack.c.b16 %v4050, %v4049
        %v4057 = vpack.c.b16 %v4052, %v4051
        %v4058 = vpack.c.b16 %v4054, %v4053
        %v4060 = vsel %vm3139, %v4055, 0
        %v4063 = vsel %vm3139, %v4056, 0
        %v4066 = vsel %vm3139, %v4057, 0
        %v4069 = vsel %vm3139, %v4058, 0
        %4071 = vmatpush.bf16.msra.mxu0 0
        %4072 = vmatpush.bf16.msra.mxu0 0
        %4073 = vmatpush.bf16.msra.mxu0 0
        %4074 = vmatpush.bf16.msra.mxu0 0
        %4075 = vmatpush.bf16.msra.mxu0 %v3118
        %4076 = vmatpush.bf16.msra.mxu0 %v3117
        %4077 = vmatpush.bf16.msra.mxu0 %v3116
        %4078 = vmatpush.bf16.msra.mxu0 %v3115
        %4079 = vmatmul.bf16.gmra.mxu0 %v4060
        %v4080 = vpop.f32.mrf.mxu0
        %v4081 = vadd.f32 0.0, %v4080
        %v4082 = vpop.f32.mrf.mxu0
        %v4083 = vadd.f32 0.0, %v4082
        %4084 = vmatmul.bf16.gmra.mxu0 %v4063
        %v4085 = vpop.f32.mrf.mxu0
        %v4086 = vadd.f32 0.0, %v4085
        %v4087 = vpop.f32.mrf.mxu0
        %v4088 = vadd.f32 0.0, %v4087
        %4089 = vmatmul.bf16.gmra.mxu0 %v4066
        %v4090 = vpop.f32.mrf.mxu0
        %v4091 = vadd.f32 0.0, %v4090
        %v4092 = vpop.f32.mrf.mxu0
        %v4093 = vadd.f32 0.0, %v4092
        %4094 = vmatmul.bf16.gmra.mxu0 %v4069
        %v4095 = vpop.f32.mrf.mxu0
        %v4096 = vadd.f32 0.0, %v4095
        %v4097 = vpop.f32.mrf.mxu0
        %v4098 = vadd.f32 0.0, %v4097
        %4099 = vdwg.mxu0
        %s4100 = scalar_lea.vmem [#allocation2], 192
        %v4101 = vld [vmem:[%s4100] sm:$0xf]
        %v4102 = vld [vmem:[%s4100 + $0x4] sm:$0xf]
        %v4103 = vld [vmem:[%s4100 + $0x8] sm:$0xf]
        %v4104 = vld [vmem:[%s4100 + $0xc] sm:$0xf]
        %v4105 = vld [vmem:[%s4100 + $0x10] sm:$0xf]
        %v4106 = vld [vmem:[%s4100 + $0x14] sm:$0xf]
        %v4107 = vld [vmem:[%s4100 + $0x18] sm:$0xf]
        %v4108 = vld [vmem:[%s4100 + $0x1c] sm:$0xf]
        %v4109 = vpack.c.bf16 %v4083, %v4081
        %v4110 = vpack.c.bf16 %v4088, %v4086
        %v4111 = vpack.c.bf16 %v4093, %v4091
        %v4112 = vpack.c.bf16 %v4098, %v4096
        %v4121 = vunpack.c.l.b16 %v4101
        %v4122 = vunpack.c.l.b16 %v4102
        %v4123 = vunpack.c.l.b16 %v4103
        %v4124 = vunpack.c.l.b16 %v4104
        %v4125 = vunpack.c.l.b16 %v4105
        %v4126 = vunpack.c.l.b16 %v4106
        %v4127 = vunpack.c.l.b16 %v4107
        %v4128 = vunpack.c.l.b16 %v4108
        %v4129 = vpack.c.b16 %v4122, %v4121
        %v4130 = vpack.c.b16 %v4124, %v4123
        %v4131 = vpack.c.b16 %v4126, %v4125
        %v4132 = vpack.c.b16 %v4128, %v4127
        %v4138 = vsel %vm3139, %v4109, 0
        %v4141 = vsel %vm3139, %v4110, 0
        %v4144 = vsel %vm3139, %v4111, 0
        %v4147 = vsel %vm3139, %v4112, 0
        %4149 = vmatpush.bf16.msra.mxu0 0
        %4150 = vmatpush.bf16.msra.mxu0 0
        %4151 = vmatpush.bf16.msra.mxu0 0
        %4152 = vmatpush.bf16.msra.mxu0 0
        %4153 = vmatpush.bf16.msra.mxu0 %v4132
        %4154 = vmatpush.bf16.msra.mxu0 %v4131
        %4155 = vmatpush.bf16.msra.mxu0 %v4130
        %4156 = vmatpush.bf16.msra.mxu0 %v4129
        %4157 = vmatmul.bf16.gmra.mxu0 %v4138
        %v4158 = vpop.f32.mrf.mxu0
        %v4159 = vadd.f32 0.0, %v4158
        %v4160 = vpop.f32.mrf.mxu0
        %v4161 = vadd.f32 0.0, %v4160
        %4162 = vmatmul.bf16.gmra.mxu0 %v4141
        %v4163 = vpop.f32.mrf.mxu0
        %v4164 = vadd.f32 0.0, %v4163
        %v4165 = vpop.f32.mrf.mxu0
        %v4166 = vadd.f32 0.0, %v4165
        %4167 = vmatmul.bf16.gmra.mxu0 %v4144
        %v4168 = vpop.f32.mrf.mxu0
        %v4169 = vadd.f32 0.0, %v4168
        %v4170 = vpop.f32.mrf.mxu0
        %v4171 = vadd.f32 0.0, %v4170
        %4172 = vmatmul.bf16.gmra.mxu0 %v4147
        %v4173 = vpop.f32.mrf.mxu0
        %v4174 = vadd.f32 0.0, %v4173
        %v4175 = vpop.f32.mrf.mxu0
        %v4176 = vadd.f32 0.0, %v4175
        %4177 = vdwg.mxu0
        %v4178 = vadd.f32 %v4022, %v4159
        %v4179 = vadd.f32 %v4023, %v4161
        %v4180 = vadd.f32 %v4024, %v4164
        %v4181 = vadd.f32 %v4025, %v4166
        %v4182 = vadd.f32 %v4026, %v4169
        %v4183 = vadd.f32 %v4027, %v4171
        %v4184 = vadd.f32 %v4028, %v4174
        %v4185 = vadd.f32 %v4029, %v4176
        %s4186 = scalar_lea.vmem %s5, 224
        %v4187 = vld [vmem:[%s4186] sm:$0xf]
        %v4188 = vld [vmem:[%s4186 + $0x4] sm:$0xf]
        %v4189 = vld [vmem:[%s4186 + $0x8] sm:$0xf]
        %v4190 = vld [vmem:[%s4186 + $0xc] sm:$0xf]
        %v4191 = vld [vmem:[%s4186 + $0x10] sm:$0xf]
        %v4192 = vld [vmem:[%s4186 + $0x14] sm:$0xf]
        %v4193 = vld [vmem:[%s4186 + $0x18] sm:$0xf]
        %v4194 = vld [vmem:[%s4186 + $0x1c] sm:$0xf]
        %v4203 = vunpack.c.l.b16 %v4187
        %v4204 = vunpack.c.l.b16 %v4188
        %v4205 = vunpack.c.l.b16 %v4189
        %v4206 = vunpack.c.l.b16 %v4190
        %v4207 = vunpack.c.l.b16 %v4191
        %v4208 = vunpack.c.l.b16 %v4192
        %v4209 = vunpack.c.l.b16 %v4193
        %v4210 = vunpack.c.l.b16 %v4194
        %v4211 = vpack.c.b16 %v4204, %v4203
        %v4212 = vpack.c.b16 %v4206, %v4205
        %v4213 = vpack.c.b16 %v4208, %v4207
        %v4214 = vpack.c.b16 %v4210, %v4209
        %v4216 = vsel %vm3139, %v4211, 0
        %v4219 = vsel %vm3139, %v4212, 0
        %v4222 = vsel %vm3139, %v4213, 0
        %v4225 = vsel %vm3139, %v4214, 0
        %4227 = vmatpush.bf16.msra.mxu0 0
        %4228 = vmatpush.bf16.msra.mxu0 0
        %4229 = vmatpush.bf16.msra.mxu0 0
        %4230 = vmatpush.bf16.msra.mxu0 0
        %4231 = vmatpush.bf16.msra.mxu0 %v3118
        %4232 = vmatpush.bf16.msra.mxu0 %v3117
        %4233 = vmatpush.bf16.msra.mxu0 %v3116
        %4234 = vmatpush.bf16.msra.mxu0 %v3115
        %4235 = vmatmul.bf16.gmra.mxu0 %v4216
        %v4236 = vpop.f32.mrf.mxu0
        %v4237 = vadd.f32 0.0, %v4236
        %v4238 = vpop.f32.mrf.mxu0
        %v4239 = vadd.f32 0.0, %v4238
        %4240 = vmatmul.bf16.gmra.mxu0 %v4219
        %v4241 = vpop.f32.mrf.mxu0
        %v4242 = vadd.f32 0.0, %v4241
        %v4243 = vpop.f32.mrf.mxu0
        %v4244 = vadd.f32 0.0, %v4243
        %4245 = vmatmul.bf16.gmra.mxu0 %v4222
        %v4246 = vpop.f32.mrf.mxu0
        %v4247 = vadd.f32 0.0, %v4246
        %v4248 = vpop.f32.mrf.mxu0
        %v4249 = vadd.f32 0.0, %v4248
        %4250 = vmatmul.bf16.gmra.mxu0 %v4225
        %v4251 = vpop.f32.mrf.mxu0
        %v4252 = vadd.f32 0.0, %v4251
        %v4253 = vpop.f32.mrf.mxu0
        %v4254 = vadd.f32 0.0, %v4253
        %4255 = vdwg.mxu0
        %s4256 = scalar_lea.vmem [#allocation2], 224
        %v4257 = vld [vmem:[%s4256] sm:$0xf]
        %v4258 = vld [vmem:[%s4256 + $0x4] sm:$0xf]
        %v4259 = vld [vmem:[%s4256 + $0x8] sm:$0xf]
        %v4260 = vld [vmem:[%s4256 + $0xc] sm:$0xf]
        %v4261 = vld [vmem:[%s4256 + $0x10] sm:$0xf]
        %v4262 = vld [vmem:[%s4256 + $0x14] sm:$0xf]
        %v4263 = vld [vmem:[%s4256 + $0x18] sm:$0xf]
        %v4264 = vld [vmem:[%s4256 + $0x1c] sm:$0xf]
        %v4265 = vpack.c.bf16 %v4239, %v4237
        %v4266 = vpack.c.bf16 %v4244, %v4242
        %v4267 = vpack.c.bf16 %v4249, %v4247
        %v4268 = vpack.c.bf16 %v4254, %v4252
        %v4277 = vunpack.c.l.b16 %v4257
        %v4278 = vunpack.c.l.b16 %v4258
        %v4279 = vunpack.c.l.b16 %v4259
        %v4280 = vunpack.c.l.b16 %v4260
        %v4281 = vunpack.c.l.b16 %v4261
        %v4282 = vunpack.c.l.b16 %v4262
        %v4283 = vunpack.c.l.b16 %v4263
        %v4284 = vunpack.c.l.b16 %v4264
        %v4285 = vpack.c.b16 %v4278, %v4277
        %v4286 = vpack.c.b16 %v4280, %v4279
        %v4287 = vpack.c.b16 %v4282, %v4281
        %v4288 = vpack.c.b16 %v4284, %v4283
        %v4294 = vsel %vm3139, %v4265, 0
        %v4297 = vsel %vm3139, %v4266, 0
        %v4300 = vsel %vm3139, %v4267, 0
        %v4303 = vsel %vm3139, %v4268, 0
        %4305 = vmatpush.bf16.msra.mxu0 0
        %4306 = vmatpush.bf16.msra.mxu0 0
        %4307 = vmatpush.bf16.msra.mxu0 0
        %4308 = vmatpush.bf16.msra.mxu0 0
        %4309 = vmatpush.bf16.msra.mxu0 %v4288
        %4310 = vmatpush.bf16.msra.mxu0 %v4287
        %4311 = vmatpush.bf16.msra.mxu0 %v4286
        %4312 = vmatpush.bf16.msra.mxu0 %v4285
        %4313 = vmatmul.bf16.gmra.mxu0 %v4294
        %v4314 = vpop.f32.mrf.mxu0
        %v4315 = vadd.f32 0.0, %v4314
        %v4316 = vpop.f32.mrf.mxu0
        %v4317 = vadd.f32 0.0, %v4316
        %4318 = vmatmul.bf16.gmra.mxu0 %v4297
        %v4319 = vpop.f32.mrf.mxu0
        %v4320 = vadd.f32 0.0, %v4319
        %v4321 = vpop.f32.mrf.mxu0
        %v4322 = vadd.f32 0.0, %v4321
        %4323 = vmatmul.bf16.gmra.mxu0 %v4300
        %v4324 = vpop.f32.mrf.mxu0
        %v4325 = vadd.f32 0.0, %v4324
        %v4326 = vpop.f32.mrf.mxu0
        %v4327 = vadd.f32 0.0, %v4326
        %4328 = vmatmul.bf16.gmra.mxu0 %v4303
        %v4329 = vpop.f32.mrf.mxu0
        %v4330 = vadd.f32 0.0, %v4329
        %v4331 = vpop.f32.mrf.mxu0
        %v4332 = vadd.f32 0.0, %v4331
        %4333 = vdwg.mxu0
        %v4334 = vadd.f32 %v4178, %v4315
        %v4335 = vadd.f32 %v4179, %v4317
        %v4336 = vadd.f32 %v4180, %v4320
        %v4337 = vadd.f32 %v4181, %v4322
        %v4338 = vadd.f32 %v4182, %v4325
        %v4339 = vadd.f32 %v4183, %v4327
        %v4340 = vadd.f32 %v4184, %v4330
        %v4341 = vadd.f32 %v4185, %v4332
        %s4342 = scalar_lea.vmem %s5, 256
        %v4343 = vld [vmem:[%s4342] sm:$0xf]
        %v4344 = vld [vmem:[%s4342 + $0x4] sm:$0xf]
        %v4345 = vld [vmem:[%s4342 + $0x8] sm:$0xf]
        %v4346 = vld [vmem:[%s4342 + $0xc] sm:$0xf]
        %v4347 = vld [vmem:[%s4342 + $0x10] sm:$0xf]
        %v4348 = vld [vmem:[%s4342 + $0x14] sm:$0xf]
        %v4349 = vld [vmem:[%s4342 + $0x18] sm:$0xf]
        %v4350 = vld [vmem:[%s4342 + $0x1c] sm:$0xf]
        %v4359 = vunpack.c.l.b16 %v4343
        %v4360 = vunpack.c.l.b16 %v4344
        %v4361 = vunpack.c.l.b16 %v4345
        %v4362 = vunpack.c.l.b16 %v4346
        %v4363 = vunpack.c.l.b16 %v4347
        %v4364 = vunpack.c.l.b16 %v4348
        %v4365 = vunpack.c.l.b16 %v4349
        %v4366 = vunpack.c.l.b16 %v4350
        %v4367 = vpack.c.b16 %v4360, %v4359
        %v4368 = vpack.c.b16 %v4362, %v4361
        %v4369 = vpack.c.b16 %v4364, %v4363
        %v4370 = vpack.c.b16 %v4366, %v4365
        %v4372 = vsel %vm3139, %v4367, 0
        %v4375 = vsel %vm3139, %v4368, 0
        %v4378 = vsel %vm3139, %v4369, 0
        %v4381 = vsel %vm3139, %v4370, 0
        %4383 = vmatpush.bf16.msra.mxu0 0
        %4384 = vmatpush.bf16.msra.mxu0 0
        %4385 = vmatpush.bf16.msra.mxu0 0
        %4386 = vmatpush.bf16.msra.mxu0 0
        %4387 = vmatpush.bf16.msra.mxu0 %v3118
        %4388 = vmatpush.bf16.msra.mxu0 %v3117
        %4389 = vmatpush.bf16.msra.mxu0 %v3116
        %4390 = vmatpush.bf16.msra.mxu0 %v3115
        %4391 = vmatmul.bf16.gmra.mxu0 %v4372
        %v4392 = vpop.f32.mrf.mxu0
        %v4393 = vadd.f32 0.0, %v4392
        %v4394 = vpop.f32.mrf.mxu0
        %v4395 = vadd.f32 0.0, %v4394
        %4396 = vmatmul.bf16.gmra.mxu0 %v4375
        %v4397 = vpop.f32.mrf.mxu0
        %v4398 = vadd.f32 0.0, %v4397
        %v4399 = vpop.f32.mrf.mxu0
        %v4400 = vadd.f32 0.0, %v4399
        %4401 = vmatmul.bf16.gmra.mxu0 %v4378
        %v4402 = vpop.f32.mrf.mxu0
        %v4403 = vadd.f32 0.0, %v4402
        %v4404 = vpop.f32.mrf.mxu0
        %v4405 = vadd.f32 0.0, %v4404
        %4406 = vmatmul.bf16.gmra.mxu0 %v4381
        %v4407 = vpop.f32.mrf.mxu0
        %v4408 = vadd.f32 0.0, %v4407
        %v4409 = vpop.f32.mrf.mxu0
        %v4410 = vadd.f32 0.0, %v4409
        %4411 = vdwg.mxu0
        %s4412 = scalar_lea.vmem [#allocation2], 256
        %v4413 = vld [vmem:[%s4412] sm:$0xf]
        %v4414 = vld [vmem:[%s4412 + $0x4] sm:$0xf]
        %v4415 = vld [vmem:[%s4412 + $0x8] sm:$0xf]
        %v4416 = vld [vmem:[%s4412 + $0xc] sm:$0xf]
        %v4417 = vld [vmem:[%s4412 + $0x10] sm:$0xf]
        %v4418 = vld [vmem:[%s4412 + $0x14] sm:$0xf]
        %v4419 = vld [vmem:[%s4412 + $0x18] sm:$0xf]
        %v4420 = vld [vmem:[%s4412 + $0x1c] sm:$0xf]
        %v4421 = vpack.c.bf16 %v4395, %v4393
        %v4422 = vpack.c.bf16 %v4400, %v4398
        %v4423 = vpack.c.bf16 %v4405, %v4403
        %v4424 = vpack.c.bf16 %v4410, %v4408
        %v4433 = vunpack.c.l.b16 %v4413
        %v4434 = vunpack.c.l.b16 %v4414
        %v4435 = vunpack.c.l.b16 %v4415
        %v4436 = vunpack.c.l.b16 %v4416
        %v4437 = vunpack.c.l.b16 %v4417
        %v4438 = vunpack.c.l.b16 %v4418
        %v4439 = vunpack.c.l.b16 %v4419
        %v4440 = vunpack.c.l.b16 %v4420
        %v4441 = vpack.c.b16 %v4434, %v4433
        %v4442 = vpack.c.b16 %v4436, %v4435
        %v4443 = vpack.c.b16 %v4438, %v4437
        %v4444 = vpack.c.b16 %v4440, %v4439
        %v4450 = vsel %vm3139, %v4421, 0
        %v4453 = vsel %vm3139, %v4422, 0
        %v4456 = vsel %vm3139, %v4423, 0
        %v4459 = vsel %vm3139, %v4424, 0
        %4461 = vmatpush.bf16.msra.mxu0 0
        %4462 = vmatpush.bf16.msra.mxu0 0
        %4463 = vmatpush.bf16.msra.mxu0 0
        %4464 = vmatpush.bf16.msra.mxu0 0
        %4465 = vmatpush.bf16.msra.mxu0 %v4444
        %4466 = vmatpush.bf16.msra.mxu0 %v4443
        %4467 = vmatpush.bf16.msra.mxu0 %v4442
        %4468 = vmatpush.bf16.msra.mxu0 %v4441
        %4469 = vmatmul.bf16.gmra.mxu0 %v4450
        %v4470 = vpop.f32.mrf.mxu0
        %v4471 = vadd.f32 0.0, %v4470
        %v4472 = vpop.f32.mrf.mxu0
        %v4473 = vadd.f32 0.0, %v4472
        %4474 = vmatmul.bf16.gmra.mxu0 %v4453
        %v4475 = vpop.f32.mrf.mxu0
        %v4476 = vadd.f32 0.0, %v4475
        %v4477 = vpop.f32.mrf.mxu0
        %v4478 = vadd.f32 0.0, %v4477
        %4479 = vmatmul.bf16.gmra.mxu0 %v4456
        %v4480 = vpop.f32.mrf.mxu0
        %v4481 = vadd.f32 0.0, %v4480
        %v4482 = vpop.f32.mrf.mxu0
        %v4483 = vadd.f32 0.0, %v4482
        %4484 = vmatmul.bf16.gmra.mxu0 %v4459
        %v4485 = vpop.f32.mrf.mxu0
        %v4486 = vadd.f32 0.0, %v4485
        %v4487 = vpop.f32.mrf.mxu0
        %v4488 = vadd.f32 0.0, %v4487
        %4489 = vdwg.mxu0
        %v4490 = vadd.f32 %v4334, %v4471
        %v4491 = vadd.f32 %v4335, %v4473
        %v4492 = vadd.f32 %v4336, %v4476
        %v4493 = vadd.f32 %v4337, %v4478
        %v4494 = vadd.f32 %v4338, %v4481
        %v4495 = vadd.f32 %v4339, %v4483
        %v4496 = vadd.f32 %v4340, %v4486
        %v4497 = vadd.f32 %v4341, %v4488
        %v4498 = vld [vmem:[%s21] sm:$0x1]
        %v4500 = vperm.slane %v4498, 0
        %v4502 = vadd.f32 %v4490, %v4500
        %v4503 = vadd.f32 %v4491, %v4500
        %v4504 = vadd.f32 %v4492, %v4500
        %v4505 = vadd.f32 %v4493, %v4500
        %v4506 = vadd.f32 %v4494, %v4500
        %v4507 = vadd.f32 %v4495, %v4500
        %v4508 = vadd.f32 %v4496, %v4500
        %v4509 = vadd.f32 %v4497, %v4500
        %v4510 = vadd.f32 %v4502, %v3088
        %v4511 = vadd.f32 %v4503, %v3090
        %v4512 = vadd.f32 %v4504, %v3093
        %v4513 = vadd.f32 %v4505, %v3095
        %v4514 = vadd.f32 %v4506, %v3098
        %v4515 = vadd.f32 %v4507, %v3100
        %v4516 = vadd.f32 %v4508, %v3103
        %v4517 = vadd.f32 %v4509, %v3105
        %v4518 = vmax.f32 %v4510, 0.0
        %v4519 = vmax.f32 %v4511, 0.0
        %v4520 = vmax.f32 %v4512, 0.0
        %v4521 = vmax.f32 %v4513, 0.0
        %v4522 = vmax.f32 %v4514, 0.0
        %v4523 = vmax.f32 %v4515, 0.0
        %v4524 = vmax.f32 %v4516, 0.0
        %v4525 = vmax.f32 %v4517, 0.0
        %v4526 = vld [vmem:[%s7] sm:$0xf]
        %v4527 = vld [vmem:[%s7 + $0x4] sm:$0xf]
        %v4528 = vpack.c.bf16 %v4519, %v4518
        %v4529 = vpack.c.bf16 %v4521, %v4520
        %v4530 = vpack.c.bf16 %v4523, %v4522
        %v4531 = vpack.c.bf16 %v4525, %v4524
        %v4534 = vunpack.c.l.b16 %v4526
        %v4535 = vunpack.c.l.b16 %v4527
        %v4536 = vpack.c.b16 %v4535, %v4534
        %v4538 = vsel %vm3139, %v4536, 0
        %4540 = vmatpush.bf16.msra.mxu0 0
        %4541 = vmatpush.bf16.msra.mxu0 0
        %4542 = vmatpush.bf16.msra.mxu0 0
        %4543 = vmatpush.bf16.msra.mxu0 0
        %4544 = vmatpush.bf16.msra.mxu0 %v4531
        %4545 = vmatpush.bf16.msra.mxu0 %v4530
        %4546 = vmatpush.bf16.msra.mxu0 %v4529
        %4547 = vmatpush.bf16.msra.mxu0 %v4528
        %4548 = vmatmul.bf16.gmra.mxu0 %v4538
        %v4549 = vpop.f32.mrf.mxu0
        %v4550 = vadd.f32 0.0, %v4549
        %v4551 = vpop.f32.mrf.mxu0
        %v4552 = vadd.f32 0.0, %v4551
        %4553 = vdwg.mxu0
        %v4554 = vld [vmem:[#allocation5] sm:$0xf]
        %v4555 = vld [vmem:[#allocation5 + $0x4] sm:$0xf]
        %v4556 = vld [vmem:[#allocation5 + $0x8] sm:$0xf]
        %v4557 = vld [vmem:[#allocation5 + $0xc] sm:$0xf]
        %v4558 = vld [vmem:[#allocation5 + $0x10] sm:$0xf]
        %v4559 = vld [vmem:[#allocation5 + $0x14] sm:$0xf]
        %v4560 = vld [vmem:[#allocation5 + $0x18] sm:$0xf]
        %v4561 = vld [vmem:[#allocation5 + $0x1c] sm:$0xf]
        %v4562 = vpack.c.bf16 %v4552, %v4550
        %s4563 = scalar_lea.vmem %s7, 8
        %v4564 = vld [vmem:[%s4563] sm:$0xf]
        %v4565 = vld [vmem:[%s4563 + $0x4] sm:$0xf]
        %v4568 = vunpack.c.l.b16 %v4564
        %v4569 = vunpack.c.l.b16 %v4565
        %v4570 = vpack.c.b16 %v4569, %v4568
        %v4572 = vsel %vm3139, %v4570, 0
        %4574 = vmatpush.bf16.msra.mxu0 0
        %4575 = vmatpush.bf16.msra.mxu0 0
        %4576 = vmatpush.bf16.msra.mxu0 0
        %4577 = vmatpush.bf16.msra.mxu0 0
        %4578 = vmatpush.bf16.msra.mxu0 %v4531
        %4579 = vmatpush.bf16.msra.mxu0 %v4530
        %4580 = vmatpush.bf16.msra.mxu0 %v4529
        %4581 = vmatpush.bf16.msra.mxu0 %v4528
        %4582 = vmatmul.bf16.gmra.mxu0 %v4572
        %v4583 = vpop.f32.mrf.mxu0
        %v4584 = vadd.f32 0.0, %v4583
        %v4585 = vpop.f32.mrf.mxu0
        %v4586 = vadd.f32 0.0, %v4585
        %4587 = vdwg.mxu0
        %s4588 = scalar_lea.vmem [#allocation5], 32
        %v4589 = vld [vmem:[%s4588] sm:$0xf]
        %v4590 = vld [vmem:[%s4588 + $0x4] sm:$0xf]
        %v4591 = vld [vmem:[%s4588 + $0x8] sm:$0xf]
        %v4592 = vld [vmem:[%s4588 + $0xc] sm:$0xf]
        %v4593 = vld [vmem:[%s4588 + $0x10] sm:$0xf]
        %v4594 = vld [vmem:[%s4588 + $0x14] sm:$0xf]
        %v4595 = vld [vmem:[%s4588 + $0x18] sm:$0xf]
        %v4596 = vld [vmem:[%s4588 + $0x1c] sm:$0xf]
        %v4597 = vpack.c.bf16 %v4586, %v4584
        %v4606 = vunpack.c.l.b16 %v4589
        %v4607 = vunpack.c.l.b16 %v4590
        %v4608 = vunpack.c.l.b16 %v4591
        %v4609 = vunpack.c.l.b16 %v4592
        %v4610 = vunpack.c.l.b16 %v4593
        %v4611 = vunpack.c.l.b16 %v4594
        %v4612 = vunpack.c.l.b16 %v4595
        %v4613 = vunpack.c.l.b16 %v4596
        %v4614 = vpack.c.b16 %v4607, %v4606
        %v4615 = vpack.c.b16 %v4609, %v4608
        %v4616 = vpack.c.b16 %v4611, %v4610
        %v4617 = vpack.c.b16 %v4613, %v4612
        %v4623 = vsel %vm3139, %v4597, 0
        %4625 = vmatpush.bf16.msra.mxu0 0
        %4626 = vmatpush.bf16.msra.mxu0 0
        %4627 = vmatpush.bf16.msra.mxu0 0
        %4628 = vmatpush.bf16.msra.mxu0 0
        %4629 = vmatpush.bf16.msra.mxu0 %v4617
        %4630 = vmatpush.bf16.msra.mxu0 %v4616
        %4631 = vmatpush.bf16.msra.mxu0 %v4615
        %4632 = vmatpush.bf16.msra.mxu0 %v4614
        %4633 = vmatmul.bf16.gmra.mxu0 %v4623
        %v4634 = vpop.f32.mrf.mxu0
        %v4635 = vadd.f32 0.0, %v4634
        %v4636 = vpop.f32.mrf.mxu0
        %v4637 = vadd.f32 0.0, %v4636
        %4638 = vdwg.mxu0
        %v4647 = vunpack.c.l.b16 %v4554
        %v4648 = vunpack.c.l.b16 %v4555
        %v4649 = vunpack.c.l.b16 %v4556
        %v4650 = vunpack.c.l.b16 %v4557
        %v4651 = vunpack.c.l.b16 %v4558
        %v4652 = vunpack.c.l.b16 %v4559
        %v4653 = vunpack.c.l.b16 %v4560
        %v4654 = vunpack.c.l.b16 %v4561
        %v4655 = vpack.c.b16 %v4648, %v4647
        %v4656 = vpack.c.b16 %v4650, %v4649
        %v4657 = vpack.c.b16 %v4652, %v4651
        %v4658 = vpack.c.b16 %v4654, %v4653
        %v4664 = vsel %vm3139, %v4562, 0
        %4666 = vmatpush.bf16.msra.mxu0 0
        %4667 = vmatpush.bf16.msra.mxu0 0
        %4668 = vmatpush.bf16.msra.mxu0 0
        %4669 = vmatpush.bf16.msra.mxu0 0
        %4670 = vmatpush.bf16.msra.mxu0 %v4658
        %4671 = vmatpush.bf16.msra.mxu0 %v4657
        %4672 = vmatpush.bf16.msra.mxu0 %v4656
        %4673 = vmatpush.bf16.msra.mxu0 %v4655
        %4674 = vmatmul.bf16.gmra.mxu0 %v4664
        %v4675 = vpop.f32.mrf.mxu0
        %v4676 = vadd.f32 %v4635, %v4675
        %v4677 = vpop.f32.mrf.mxu0
        %v4678 = vadd.f32 %v4637, %v4677
        %4679 = vdwg.mxu0
        %s4680 = scalar_lea.vmem %s7, 16
        %v4681 = vld [vmem:[%s4680] sm:$0xf]
        %v4682 = vld [vmem:[%s4680 + $0x4] sm:$0xf]
        %v4685 = vunpack.c.l.b16 %v4681
        %v4686 = vunpack.c.l.b16 %v4682
        %v4687 = vpack.c.b16 %v4686, %v4685
        %v4689 = vsel %vm3139, %v4687, 0
        %4691 = vmatpush.bf16.msra.mxu0 0
        %4692 = vmatpush.bf16.msra.mxu0 0
        %4693 = vmatpush.bf16.msra.mxu0 0
        %4694 = vmatpush.bf16.msra.mxu0 0
        %4695 = vmatpush.bf16.msra.mxu0 %v4531
        %4696 = vmatpush.bf16.msra.mxu0 %v4530
        %4697 = vmatpush.bf16.msra.mxu0 %v4529
        %4698 = vmatpush.bf16.msra.mxu0 %v4528
        %4699 = vmatmul.bf16.gmra.mxu0 %v4689
        %v4700 = vpop.f32.mrf.mxu0
        %v4701 = vadd.f32 0.0, %v4700
        %v4702 = vpop.f32.mrf.mxu0
        %v4703 = vadd.f32 0.0, %v4702
        %4704 = vdwg.mxu0
        %s4705 = scalar_lea.vmem [#allocation5], 64
        %v4706 = vld [vmem:[%s4705] sm:$0xf]
        %v4707 = vld [vmem:[%s4705 + $0x4] sm:$0xf]
        %v4708 = vld [vmem:[%s4705 + $0x8] sm:$0xf]
        %v4709 = vld [vmem:[%s4705 + $0xc] sm:$0xf]
        %v4710 = vld [vmem:[%s4705 + $0x10] sm:$0xf]
        %v4711 = vld [vmem:[%s4705 + $0x14] sm:$0xf]
        %v4712 = vld [vmem:[%s4705 + $0x18] sm:$0xf]
        %v4713 = vld [vmem:[%s4705 + $0x1c] sm:$0xf]
        %v4714 = vpack.c.bf16 %v4703, %v4701
        %v4723 = vunpack.c.l.b16 %v4706
        %v4724 = vunpack.c.l.b16 %v4707
        %v4725 = vunpack.c.l.b16 %v4708
        %v4726 = vunpack.c.l.b16 %v4709
        %v4727 = vunpack.c.l.b16 %v4710
        %v4728 = vunpack.c.l.b16 %v4711
        %v4729 = vunpack.c.l.b16 %v4712
        %v4730 = vunpack.c.l.b16 %v4713
        %v4731 = vpack.c.b16 %v4724, %v4723
        %v4732 = vpack.c.b16 %v4726, %v4725
        %v4733 = vpack.c.b16 %v4728, %v4727
        %v4734 = vpack.c.b16 %v4730, %v4729
        %v4740 = vsel %vm3139, %v4714, 0
        %4742 = vmatpush.bf16.msra.mxu0 0
        %4743 = vmatpush.bf16.msra.mxu0 0
        %4744 = vmatpush.bf16.msra.mxu0 0
        %4745 = vmatpush.bf16.msra.mxu0 0
        %4746 = vmatpush.bf16.msra.mxu0 %v4734
        %4747 = vmatpush.bf16.msra.mxu0 %v4733
        %4748 = vmatpush.bf16.msra.mxu0 %v4732
        %4749 = vmatpush.bf16.msra.mxu0 %v4731
        %4750 = vmatmul.bf16.gmra.mxu0 %v4740
        %v4751 = vpop.f32.mrf.mxu0
        %v4752 = vadd.f32 0.0, %v4751
        %v4753 = vpop.f32.mrf.mxu0
        %v4754 = vadd.f32 0.0, %v4753
        %4755 = vdwg.mxu0
        %v4756 = vadd.f32 %v4676, %v4752
        %v4757 = vadd.f32 %v4678, %v4754
        %s4758 = scalar_lea.vmem %s7, 24
        %v4759 = vld [vmem:[%s4758] sm:$0xf]
        %v4760 = vld [vmem:[%s4758 + $0x4] sm:$0xf]
        %v4763 = vunpack.c.l.b16 %v4759
        %v4764 = vunpack.c.l.b16 %v4760
        %v4765 = vpack.c.b16 %v4764, %v4763
        %v4767 = vsel %vm3139, %v4765, 0
        %4769 = vmatpush.bf16.msra.mxu0 0
        %4770 = vmatpush.bf16.msra.mxu0 0
        %4771 = vmatpush.bf16.msra.mxu0 0
        %4772 = vmatpush.bf16.msra.mxu0 0
        %4773 = vmatpush.bf16.msra.mxu0 %v4531
        %4774 = vmatpush.bf16.msra.mxu0 %v4530
        %4775 = vmatpush.bf16.msra.mxu0 %v4529
        %4776 = vmatpush.bf16.msra.mxu0 %v4528
        %4777 = vmatmul.bf16.gmra.mxu0 %v4767
        %v4778 = vpop.f32.mrf.mxu0
        %v4779 = vadd.f32 0.0, %v4778
        %v4780 = vpop.f32.mrf.mxu0
        %v4781 = vadd.f32 0.0, %v4780
        %4782 = vdwg.mxu0
        %s4783 = scalar_lea.vmem [#allocation5], 96
        %v4784 = vld [vmem:[%s4783] sm:$0xf]
        %v4785 = vld [vmem:[%s4783 + $0x4] sm:$0xf]
        %v4786 = vld [vmem:[%s4783 + $0x8] sm:$0xf]
        %v4787 = vld [vmem:[%s4783 + $0xc] sm:$0xf]
        %v4788 = vld [vmem:[%s4783 + $0x10] sm:$0xf]
        %v4789 = vld [vmem:[%s4783 + $0x14] sm:$0xf]
        %v4790 = vld [vmem:[%s4783 + $0x18] sm:$0xf]
        %v4791 = vld [vmem:[%s4783 + $0x1c] sm:$0xf]
        %v4792 = vpack.c.bf16 %v4781, %v4779
        %v4801 = vunpack.c.l.b16 %v4784
        %v4802 = vunpack.c.l.b16 %v4785
        %v4803 = vunpack.c.l.b16 %v4786
        %v4804 = vunpack.c.l.b16 %v4787
        %v4805 = vunpack.c.l.b16 %v4788
        %v4806 = vunpack.c.l.b16 %v4789
        %v4807 = vunpack.c.l.b16 %v4790
        %v4808 = vunpack.c.l.b16 %v4791
        %v4809 = vpack.c.b16 %v4802, %v4801
        %v4810 = vpack.c.b16 %v4804, %v4803
        %v4811 = vpack.c.b16 %v4806, %v4805
        %v4812 = vpack.c.b16 %v4808, %v4807
        %v4818 = vsel %vm3139, %v4792, 0
        %4820 = vmatpush.bf16.msra.mxu0 0
        %4821 = vmatpush.bf16.msra.mxu0 0
        %4822 = vmatpush.bf16.msra.mxu0 0
        %4823 = vmatpush.bf16.msra.mxu0 0
        %4824 = vmatpush.bf16.msra.mxu0 %v4812
        %4825 = vmatpush.bf16.msra.mxu0 %v4811
        %4826 = vmatpush.bf16.msra.mxu0 %v4810
        %4827 = vmatpush.bf16.msra.mxu0 %v4809
        %4828 = vmatmul.bf16.gmra.mxu0 %v4818
        %v4829 = vpop.f32.mrf.mxu0
        %v4830 = vadd.f32 0.0, %v4829
        %v4831 = vpop.f32.mrf.mxu0
        %v4832 = vadd.f32 0.0, %v4831
        %4833 = vdwg.mxu0
        %v4834 = vadd.f32 %v4756, %v4830
        %v4835 = vadd.f32 %v4757, %v4832
        %s4836 = scalar_lea.vmem %s7, 32
        %v4837 = vld [vmem:[%s4836] sm:$0xf]
        %v4838 = vld [vmem:[%s4836 + $0x4] sm:$0xf]
        %v4841 = vunpack.c.l.b16 %v4837
        %v4842 = vunpack.c.l.b16 %v4838
        %v4843 = vpack.c.b16 %v4842, %v4841
        %v4845 = vsel %vm3139, %v4843, 0
        %4847 = vmatpush.bf16.msra.mxu0 0
        %4848 = vmatpush.bf16.msra.mxu0 0
        %4849 = vmatpush.bf16.msra.mxu0 0
        %4850 = vmatpush.bf16.msra.mxu0 0
        %4851 = vmatpush.bf16.msra.mxu0 %v4531
        %4852 = vmatpush.bf16.msra.mxu0 %v4530
        %4853 = vmatpush.bf16.msra.mxu0 %v4529
        %4854 = vmatpush.bf16.msra.mxu0 %v4528
        %4855 = vmatmul.bf16.gmra.mxu0 %v4845
        %v4856 = vpop.f32.mrf.mxu0
        %v4857 = vadd.f32 0.0, %v4856
        %v4858 = vpop.f32.mrf.mxu0
        %v4859 = vadd.f32 0.0, %v4858
        %4860 = vdwg.mxu0
        %s4861 = scalar_lea.vmem [#allocation5], 128
        %v4862 = vld [vmem:[%s4861] sm:$0xf]
        %v4863 = vld [vmem:[%s4861 + $0x4] sm:$0xf]
        %v4864 = vld [vmem:[%s4861 + $0x8] sm:$0xf]
        %v4865 = vld [vmem:[%s4861 + $0xc] sm:$0xf]
        %v4866 = vld [vmem:[%s4861 + $0x10] sm:$0xf]
        %v4867 = vld [vmem:[%s4861 + $0x14] sm:$0xf]
        %v4868 = vld [vmem:[%s4861 + $0x18] sm:$0xf]
        %v4869 = vld [vmem:[%s4861 + $0x1c] sm:$0xf]
        %v4870 = vpack.c.bf16 %v4859, %v4857
        %v4879 = vunpack.c.l.b16 %v4862
        %v4880 = vunpack.c.l.b16 %v4863
        %v4881 = vunpack.c.l.b16 %v4864
        %v4882 = vunpack.c.l.b16 %v4865
        %v4883 = vunpack.c.l.b16 %v4866
        %v4884 = vunpack.c.l.b16 %v4867
        %v4885 = vunpack.c.l.b16 %v4868
        %v4886 = vunpack.c.l.b16 %v4869
        %v4887 = vpack.c.b16 %v4880, %v4879
        %v4888 = vpack.c.b16 %v4882, %v4881
        %v4889 = vpack.c.b16 %v4884, %v4883
        %v4890 = vpack.c.b16 %v4886, %v4885
        %v4896 = vsel %vm3139, %v4870, 0
        %4898 = vmatpush.bf16.msra.mxu0 0
        %4899 = vmatpush.bf16.msra.mxu0 0
        %4900 = vmatpush.bf16.msra.mxu0 0
        %4901 = vmatpush.bf16.msra.mxu0 0
        %4902 = vmatpush.bf16.msra.mxu0 %v4890
        %4903 = vmatpush.bf16.msra.mxu0 %v4889
        %4904 = vmatpush.bf16.msra.mxu0 %v4888
        %4905 = vmatpush.bf16.msra.mxu0 %v4887
        %4906 = vmatmul.bf16.gmra.mxu0 %v4896
        %v4907 = vpop.f32.mrf.mxu0
        %v4908 = vadd.f32 0.0, %v4907
        %v4909 = vpop.f32.mrf.mxu0
        %v4910 = vadd.f32 0.0, %v4909
        %4911 = vdwg.mxu0
        %v4912 = vadd.f32 %v4834, %v4908
        %v4913 = vadd.f32 %v4835, %v4910
        %s4914 = scalar_lea.vmem %s7, 40
        %v4915 = vld [vmem:[%s4914] sm:$0xf]
        %v4916 = vld [vmem:[%s4914 + $0x4] sm:$0xf]
        %v4919 = vunpack.c.l.b16 %v4915
        %v4920 = vunpack.c.l.b16 %v4916
        %v4921 = vpack.c.b16 %v4920, %v4919
        %v4923 = vsel %vm3139, %v4921, 0
        %4925 = vmatpush.bf16.msra.mxu0 0
        %4926 = vmatpush.bf16.msra.mxu0 0
        %4927 = vmatpush.bf16.msra.mxu0 0
        %4928 = vmatpush.bf16.msra.mxu0 0
        %4929 = vmatpush.bf16.msra.mxu0 %v4531
        %4930 = vmatpush.bf16.msra.mxu0 %v4530
        %4931 = vmatpush.bf16.msra.mxu0 %v4529
        %4932 = vmatpush.bf16.msra.mxu0 %v4528
        %4933 = vmatmul.bf16.gmra.mxu0 %v4923
        %v4934 = vpop.f32.mrf.mxu0
        %v4935 = vadd.f32 0.0, %v4934
        %v4936 = vpop.f32.mrf.mxu0
        %v4937 = vadd.f32 0.0, %v4936
        %4938 = vdwg.mxu0
        %s4939 = scalar_lea.vmem [#allocation5], 160
        %v4940 = vld [vmem:[%s4939] sm:$0xf]
        %v4941 = vld [vmem:[%s4939 + $0x4] sm:$0xf]
        %v4942 = vld [vmem:[%s4939 + $0x8] sm:$0xf]
        %v4943 = vld [vmem:[%s4939 + $0xc] sm:$0xf]
        %v4944 = vld [vmem:[%s4939 + $0x10] sm:$0xf]
        %v4945 = vld [vmem:[%s4939 + $0x14] sm:$0xf]
        %v4946 = vld [vmem:[%s4939 + $0x18] sm:$0xf]
        %v4947 = vld [vmem:[%s4939 + $0x1c] sm:$0xf]
        %v4948 = vpack.c.bf16 %v4937, %v4935
        %v4957 = vunpack.c.l.b16 %v4940
        %v4958 = vunpack.c.l.b16 %v4941
        %v4959 = vunpack.c.l.b16 %v4942
        %v4960 = vunpack.c.l.b16 %v4943
        %v4961 = vunpack.c.l.b16 %v4944
        %v4962 = vunpack.c.l.b16 %v4945
        %v4963 = vunpack.c.l.b16 %v4946
        %v4964 = vunpack.c.l.b16 %v4947
        %v4965 = vpack.c.b16 %v4958, %v4957
        %v4966 = vpack.c.b16 %v4960, %v4959
        %v4967 = vpack.c.b16 %v4962, %v4961
        %v4968 = vpack.c.b16 %v4964, %v4963
        %v4974 = vsel %vm3139, %v4948, 0
        %4976 = vmatpush.bf16.msra.mxu0 0
        %4977 = vmatpush.bf16.msra.mxu0 0
        %4978 = vmatpush.bf16.msra.mxu0 0
        %4979 = vmatpush.bf16.msra.mxu0 0
        %4980 = vmatpush.bf16.msra.mxu0 %v4968
        %4981 = vmatpush.bf16.msra.mxu0 %v4967
        %4982 = vmatpush.bf16.msra.mxu0 %v4966
        %4983 = vmatpush.bf16.msra.mxu0 %v4965
        %4984 = vmatmul.bf16.gmra.mxu0 %v4974
        %v4985 = vpop.f32.mrf.mxu0
        %v4986 = vadd.f32 0.0, %v4985
        %v4987 = vpop.f32.mrf.mxu0
        %v4988 = vadd.f32 0.0, %v4987
        %4989 = vdwg.mxu0
        %v4990 = vadd.f32 %v4912, %v4986
        %v4991 = vadd.f32 %v4913, %v4988
        %s4992 = scalar_lea.vmem %s7, 48
        %v4993 = vld [vmem:[%s4992] sm:$0xf]
        %v4994 = vld [vmem:[%s4992 + $0x4] sm:$0xf]
        %v4997 = vunpack.c.l.b16 %v4993
        %v4998 = vunpack.c.l.b16 %v4994
        %v4999 = vpack.c.b16 %v4998, %v4997
        %v5001 = vsel %vm3139, %v4999, 0
        %5003 = vmatpush.bf16.msra.mxu0 0
        %5004 = vmatpush.bf16.msra.mxu0 0
        %5005 = vmatpush.bf16.msra.mxu0 0
        %5006 = vmatpush.bf16.msra.mxu0 0
        %5007 = vmatpush.bf16.msra.mxu0 %v4531
        %5008 = vmatpush.bf16.msra.mxu0 %v4530
        %5009 = vmatpush.bf16.msra.mxu0 %v4529
        %5010 = vmatpush.bf16.msra.mxu0 %v4528
        %5011 = vmatmul.bf16.gmra.mxu0 %v5001
        %v5012 = vpop.f32.mrf.mxu0
        %v5013 = vadd.f32 0.0, %v5012
        %v5014 = vpop.f32.mrf.mxu0
        %v5015 = vadd.f32 0.0, %v5014
        %5016 = vdwg.mxu0
        %s5017 = scalar_lea.vmem [#allocation5], 192
        %v5018 = vld [vmem:[%s5017] sm:$0xf]
        %v5019 = vld [vmem:[%s5017 + $0x4] sm:$0xf]
        %v5020 = vld [vmem:[%s5017 + $0x8] sm:$0xf]
        %v5021 = vld [vmem:[%s5017 + $0xc] sm:$0xf]
        %v5022 = vld [vmem:[%s5017 + $0x10] sm:$0xf]
        %v5023 = vld [vmem:[%s5017 + $0x14] sm:$0xf]
        %v5024 = vld [vmem:[%s5017 + $0x18] sm:$0xf]
        %v5025 = vld [vmem:[%s5017 + $0x1c] sm:$0xf]
        %v5026 = vpack.c.bf16 %v5015, %v5013
        %v5035 = vunpack.c.l.b16 %v5018
        %v5036 = vunpack.c.l.b16 %v5019
        %v5037 = vunpack.c.l.b16 %v5020
        %v5038 = vunpack.c.l.b16 %v5021
        %v5039 = vunpack.c.l.b16 %v5022
        %v5040 = vunpack.c.l.b16 %v5023
        %v5041 = vunpack.c.l.b16 %v5024
        %v5042 = vunpack.c.l.b16 %v5025
        %v5043 = vpack.c.b16 %v5036, %v5035
        %v5044 = vpack.c.b16 %v5038, %v5037
        %v5045 = vpack.c.b16 %v5040, %v5039
        %v5046 = vpack.c.b16 %v5042, %v5041
        %v5052 = vsel %vm3139, %v5026, 0
        %5054 = vmatpush.bf16.msra.mxu0 0
        %5055 = vmatpush.bf16.msra.mxu0 0
        %5056 = vmatpush.bf16.msra.mxu0 0
        %5057 = vmatpush.bf16.msra.mxu0 0
        %5058 = vmatpush.bf16.msra.mxu0 %v5046
        %5059 = vmatpush.bf16.msra.mxu0 %v5045
        %5060 = vmatpush.bf16.msra.mxu0 %v5044
        %5061 = vmatpush.bf16.msra.mxu0 %v5043
        %5062 = vmatmul.bf16.gmra.mxu0 %v5052
        %v5063 = vpop.f32.mrf.mxu0
        %v5064 = vadd.f32 0.0, %v5063
        %v5065 = vpop.f32.mrf.mxu0
        %v5066 = vadd.f32 0.0, %v5065
        %5067 = vdwg.mxu0
        %v5068 = vadd.f32 %v4990, %v5064
        %v5069 = vadd.f32 %v4991, %v5066
        %s5070 = scalar_lea.vmem %s7, 56
        %v5071 = vld [vmem:[%s5070] sm:$0xf]
        %v5072 = vld [vmem:[%s5070 + $0x4] sm:$0xf]
        %v5075 = vunpack.c.l.b16 %v5071
        %v5076 = vunpack.c.l.b16 %v5072
        %v5077 = vpack.c.b16 %v5076, %v5075
        %v5079 = vsel %vm3139, %v5077, 0
        %5081 = vmatpush.bf16.msra.mxu0 0
        %5082 = vmatpush.bf16.msra.mxu0 0
        %5083 = vmatpush.bf16.msra.mxu0 0
        %5084 = vmatpush.bf16.msra.mxu0 0
        %5085 = vmatpush.bf16.msra.mxu0 %v4531
        %5086 = vmatpush.bf16.msra.mxu0 %v4530
        %5087 = vmatpush.bf16.msra.mxu0 %v4529
        %5088 = vmatpush.bf16.msra.mxu0 %v4528
        %5089 = vmatmul.bf16.gmra.mxu0 %v5079
        %v5090 = vpop.f32.mrf.mxu0
        %v5091 = vadd.f32 0.0, %v5090
        %v5092 = vpop.f32.mrf.mxu0
        %v5093 = vadd.f32 0.0, %v5092
        %5094 = vdwg.mxu0
        %s5095 = scalar_lea.vmem [#allocation5], 224
        %v5096 = vld [vmem:[%s5095] sm:$0xf]
        %v5097 = vld [vmem:[%s5095 + $0x4] sm:$0xf]
        %v5098 = vld [vmem:[%s5095 + $0x8] sm:$0xf]
        %v5099 = vld [vmem:[%s5095 + $0xc] sm:$0xf]
        %v5100 = vld [vmem:[%s5095 + $0x10] sm:$0xf]
        %v5101 = vld [vmem:[%s5095 + $0x14] sm:$0xf]
        %v5102 = vld [vmem:[%s5095 + $0x18] sm:$0xf]
        %v5103 = vld [vmem:[%s5095 + $0x1c] sm:$0xf]
        %v5104 = vpack.c.bf16 %v5093, %v5091
        %v5113 = vunpack.c.l.b16 %v5096
        %v5114 = vunpack.c.l.b16 %v5097
        %v5115 = vunpack.c.l.b16 %v5098
        %v5116 = vunpack.c.l.b16 %v5099
        %v5117 = vunpack.c.l.b16 %v5100
        %v5118 = vunpack.c.l.b16 %v5101
        %v5119 = vunpack.c.l.b16 %v5102
        %v5120 = vunpack.c.l.b16 %v5103
        %v5121 = vpack.c.b16 %v5114, %v5113
        %v5122 = vpack.c.b16 %v5116, %v5115
        %v5123 = vpack.c.b16 %v5118, %v5117
        %v5124 = vpack.c.b16 %v5120, %v5119
        %v5130 = vsel %vm3139, %v5104, 0
        %5132 = vmatpush.bf16.msra.mxu0 0
        %5133 = vmatpush.bf16.msra.mxu0 0
        %5134 = vmatpush.bf16.msra.mxu0 0
        %5135 = vmatpush.bf16.msra.mxu0 0
        %5136 = vmatpush.bf16.msra.mxu0 %v5124
        %5137 = vmatpush.bf16.msra.mxu0 %v5123
        %5138 = vmatpush.bf16.msra.mxu0 %v5122
        %5139 = vmatpush.bf16.msra.mxu0 %v5121
        %5140 = vmatmul.bf16.gmra.mxu0 %v5130
        %v5141 = vpop.f32.mrf.mxu0
        %v5142 = vadd.f32 0.0, %v5141
        %v5143 = vpop.f32.mrf.mxu0
        %v5144 = vadd.f32 0.0, %v5143
        %5145 = vdwg.mxu0
        %v5146 = vadd.f32 %v5068, %v5142
        %v5147 = vadd.f32 %v5069, %v5144
        %s5148 = scalar_lea.vmem %s7, 64
        %v5149 = vld [vmem:[%s5148] sm:$0xf]
        %v5150 = vld [vmem:[%s5148 + $0x4] sm:$0xf]
        %v5153 = vunpack.c.l.b16 %v5149
        %v5154 = vunpack.c.l.b16 %v5150
        %v5155 = vpack.c.b16 %v5154, %v5153
        %v5157 = vsel %vm3139, %v5155, 0
        %5159 = vmatpush.bf16.msra.mxu0 0
        %5160 = vmatpush.bf16.msra.mxu0 0
        %5161 = vmatpush.bf16.msra.mxu0 0
        %5162 = vmatpush.bf16.msra.mxu0 0
        %5163 = vmatpush.bf16.msra.mxu0 %v4531
        %5164 = vmatpush.bf16.msra.mxu0 %v4530
        %5165 = vmatpush.bf16.msra.mxu0 %v4529
        %5166 = vmatpush.bf16.msra.mxu0 %v4528
        %5167 = vmatmul.bf16.gmra.mxu0 %v5157
        %v5168 = vpop.f32.mrf.mxu0
        %v5169 = vadd.f32 0.0, %v5168
        %v5170 = vpop.f32.mrf.mxu0
        %v5171 = vadd.f32 0.0, %v5170
        %5172 = vdwg.mxu0
        %s5173 = scalar_lea.vmem [#allocation5], 256
        %v5174 = vld [vmem:[%s5173] sm:$0xf]
        %v5175 = vld [vmem:[%s5173 + $0x4] sm:$0xf]
        %v5176 = vld [vmem:[%s5173 + $0x8] sm:$0xf]
        %v5177 = vld [vmem:[%s5173 + $0xc] sm:$0xf]
        %v5178 = vld [vmem:[%s5173 + $0x10] sm:$0xf]
        %v5179 = vld [vmem:[%s5173 + $0x14] sm:$0xf]
        %v5180 = vld [vmem:[%s5173 + $0x18] sm:$0xf]
        %v5181 = vld [vmem:[%s5173 + $0x1c] sm:$0xf]
        %v5182 = vpack.c.bf16 %v5171, %v5169
        %v5191 = vunpack.c.l.b16 %v5174
        %v5192 = vunpack.c.l.b16 %v5175
        %v5193 = vunpack.c.l.b16 %v5176
        %v5194 = vunpack.c.l.b16 %v5177
        %v5195 = vunpack.c.l.b16 %v5178
        %v5196 = vunpack.c.l.b16 %v5179
        %v5197 = vunpack.c.l.b16 %v5180
        %v5198 = vunpack.c.l.b16 %v5181
        %v5199 = vpack.c.b16 %v5192, %v5191
        %v5200 = vpack.c.b16 %v5194, %v5193
        %v5201 = vpack.c.b16 %v5196, %v5195
        %v5202 = vpack.c.b16 %v5198, %v5197
        %v5208 = vsel %vm3139, %v5182, 0
        %5210 = vmatpush.bf16.msra.mxu0 0
        %5211 = vmatpush.bf16.msra.mxu0 0
        %5212 = vmatpush.bf16.msra.mxu0 0
        %5213 = vmatpush.bf16.msra.mxu0 0
        %5214 = vmatpush.bf16.msra.mxu0 %v5202
        %5215 = vmatpush.bf16.msra.mxu0 %v5201
        %5216 = vmatpush.bf16.msra.mxu0 %v5200
        %5217 = vmatpush.bf16.msra.mxu0 %v5199
        %5218 = vmatmul.bf16.gmra.mxu0 %v5208
        %v5219 = vpop.f32.mrf.mxu0
        %v5220 = vadd.f32 0.0, %v5219
        %v5221 = vpop.f32.mrf.mxu0
        %v5222 = vadd.f32 0.0, %v5221
        %5223 = vdwg.mxu0
        %v5224 = vadd.f32 %v5146, %v5220
        %v5225 = vadd.f32 %v5147, %v5222
        %v5226 = vld [vmem:[%s29] sm:$0x1]
        %v5228 = vperm.slane %v5226, 0
        %v5230 = vadd.f32 %v5224, %v5228
        %v5231 = vadd.f32 %v5225, %v5228
        %v5232 = vmax.f32 %v5230, 0.0
        %v5233 = vmax.f32 %v5231, 0.0
        %v5234 = vld [vmem:[%s35] sm:$0xf]
        %v5235 = vld [vmem:[%s35 + $0x4] sm:$0xf]
        %v5236 = vld [vmem:[%s35 + $0x8] sm:$0xf]
        %v5237 = vld [vmem:[%s35 + $0xc] sm:$0xf]
        %v5238 = vld [vmem:[%s35 + $0x10] sm:$0xf]
        %v5239 = vld [vmem:[%s35 + $0x14] sm:$0xf]
        %v5240 = vld [vmem:[%s35 + $0x18] sm:$0xf]
        %v5241 = vld [vmem:[%s35 + $0x1c] sm:$0xf]
        %v5242 = vld [vmem:[%s37] sm:$0x1]
        %v5244 = vperm.slane %v5242, 0
        %v5254 = vunpack.c.l.b16 %v5234
        %v5255 = vunpack.c.l.b16 %v5235
        %v5256 = vunpack.c.l.b16 %v5236
        %v5257 = vunpack.c.l.b16 %v5237
        %v5258 = vunpack.c.l.b16 %v5238
        %v5259 = vunpack.c.l.b16 %v5239
        %v5260 = vunpack.c.l.b16 %v5240
        %v5261 = vunpack.c.l.b16 %v5241
        %v5262 = vpack.c.b16 %v5255, %v5254
        %v5263 = vpack.c.b16 %v5257, %v5256
        %v5264 = vpack.c.b16 %v5259, %v5258
        %v5265 = vpack.c.b16 %v5261, %v5260
        %5270 = vmatpush.bf16.msra.mxu0 0
        %5271 = vmatpush.bf16.msra.mxu0 0
        %5272 = vmatpush.bf16.msra.mxu0 0
        %5273 = vmatpush.bf16.msra.mxu0 0
        %5274 = vmatpush.bf16.msra.mxu0 %v5265
        %5275 = vmatpush.bf16.msra.mxu0 %v5264
        %5276 = vmatpush.bf16.msra.mxu0 %v5263
        %5277 = vmatpush.bf16.msra.mxu0 %v5262
        %5278 = vmatmul.bf16.gmra.mxu0 %v4896
        %v5279 = vpop.f32.mrf.mxu0
        %v5280 = vadd.f32 %v5244, %v5279
        %v5281 = vpop.f32.mrf.mxu0
        %v5282 = vadd.f32 %v5244, %v5281
        %5283 = vdwg.mxu0
        %v5284 = vld [vmem:[%s9] sm:$0xf]
        %v5285 = vld [vmem:[%s9 + $0x4] sm:$0xf]
        %v5286 = vpack.c.bf16 %v5233, %v5232
        %v5289 = vunpack.c.l.b16 %v5284
        %v5290 = vunpack.c.l.b16 %v5285
        %v5291 = vpack.c.b16 %v5290, %v5289
        %v5293 = vsel %vm1276, %v5291, 0
        %5295 = vmatpush.bf16.msra.mxu0 0
        %5296 = vmatpush.bf16.msra.mxu0 0
        %5297 = vmatpush.bf16.msra.mxu0 0
        %5298 = vmatpush.bf16.msra.mxu0 0
        %5299 = vmatpush.bf16.msra.mxu0 0
        %5300 = vmatpush.bf16.msra.mxu0 0
        %5301 = vmatpush.bf16.msra.mxu0 0
        %5302 = vmatpush.bf16.msra.mxu0 %v5286
        %5303 = vmatmul.bf16.gmra.mxu0 %v5293
        %v5304 = vpop.f32.mrf.mxu0
        %v5305 = vadd.f32 0.0, %v5304
        %v5306 = vpop.f32.mrf.mxu0
        %v5307 = vadd.f32 0.0, %v5306
        %5308 = vdwg.mxu0
        %v5309 = vld [vmem:[%s31] sm:$0xf]
        %v5310 = vld [vmem:[%s31 + $0x4] sm:$0xf]
        %v5311 = vld [vmem:[%s31 + $0x8] sm:$0xf]
        %v5312 = vld [vmem:[%s31 + $0xc] sm:$0xf]
        %v5313 = vld [vmem:[%s31 + $0x10] sm:$0xf]
        %v5314 = vld [vmem:[%s31 + $0x14] sm:$0xf]
        %v5315 = vld [vmem:[%s31 + $0x18] sm:$0xf]
        %v5316 = vld [vmem:[%s31 + $0x1c] sm:$0xf]
        %v5317 = vld [vmem:[%s31 + $0x20] sm:$0xf]
        %v5318 = vld [vmem:[%s31 + $0x24] sm:$0xf]
        %v5319 = vld [vmem:[%s31 + $0x28] sm:$0xf]
        %v5320 = vld [vmem:[%s31 + $0x2c] sm:$0xf]
        %v5321 = vld [vmem:[%s31 + $0x30] sm:$0xf]
        %v5322 = vld [vmem:[%s31 + $0x34] sm:$0xf]
        %v5323 = vld [vmem:[%s31 + $0x38] sm:$0xf]
        %v5324 = vld [vmem:[%s31 + $0x3c] sm:$0xf]
        %v5325 = vpack.c.bf16 %v5307, %v5305
        %s5326 = scalar_lea.vmem %s9, 8
        %v5327 = vld [vmem:[%s5326] sm:$0xf]
        %v5328 = vld [vmem:[%s5326 + $0x4] sm:$0xf]
        %v5331 = vunpack.c.l.b16 %v5327
        %v5332 = vunpack.c.l.b16 %v5328
        %v5333 = vpack.c.b16 %v5332, %v5331
        %v5335 = vsel %vm1276, %v5333, 0
        %5337 = vmatpush.bf16.msra.mxu0 0
        %5338 = vmatpush.bf16.msra.mxu0 0
        %5339 = vmatpush.bf16.msra.mxu0 0
        %5340 = vmatpush.bf16.msra.mxu0 0
        %5341 = vmatpush.bf16.msra.mxu0 0
        %5342 = vmatpush.bf16.msra.mxu0 0
        %5343 = vmatpush.bf16.msra.mxu0 0
        %5344 = vmatpush.bf16.msra.mxu0 %v5286
        %5345 = vmatmul.bf16.gmra.mxu0 %v5335
        %v5346 = vpop.f32.mrf.mxu0
        %v5347 = vadd.f32 0.0, %v5346
        %v5348 = vpop.f32.mrf.mxu0
        %v5349 = vadd.f32 0.0, %v5348
        %5350 = vdwg.mxu0
        %s5351 = scalar_lea.vmem %s31, 64
        %v5352 = vld [vmem:[%s5351] sm:$0xf]
        %v5353 = vld [vmem:[%s5351 + $0x4] sm:$0xf]
        %v5354 = vld [vmem:[%s5351 + $0x8] sm:$0xf]
        %v5355 = vld [vmem:[%s5351 + $0xc] sm:$0xf]
        %v5356 = vld [vmem:[%s5351 + $0x10] sm:$0xf]
        %v5357 = vld [vmem:[%s5351 + $0x14] sm:$0xf]
        %v5358 = vld [vmem:[%s5351 + $0x18] sm:$0xf]
        %v5359 = vld [vmem:[%s5351 + $0x1c] sm:$0xf]
        %v5360 = vld [vmem:[%s5351 + $0x20] sm:$0xf]
        %v5361 = vld [vmem:[%s5351 + $0x24] sm:$0xf]
        %v5362 = vld [vmem:[%s5351 + $0x28] sm:$0xf]
        %v5363 = vld [vmem:[%s5351 + $0x2c] sm:$0xf]
        %v5364 = vld [vmem:[%s5351 + $0x30] sm:$0xf]
        %v5365 = vld [vmem:[%s5351 + $0x34] sm:$0xf]
        %v5366 = vld [vmem:[%s5351 + $0x38] sm:$0xf]
        %v5367 = vld [vmem:[%s5351 + $0x3c] sm:$0xf]
        %v5368 = vpack.c.bf16 %v5349, %v5347
        %v5385 = vunpack.c.l.b16 %v5352
        %v5386 = vunpack.c.l.b16 %v5353
        %v5387 = vunpack.c.l.b16 %v5354
        %v5388 = vunpack.c.l.b16 %v5355
        %v5389 = vunpack.c.l.b16 %v5356
        %v5390 = vunpack.c.l.b16 %v5357
        %v5391 = vunpack.c.l.b16 %v5358
        %v5392 = vunpack.c.l.b16 %v5359
        %v5393 = vunpack.c.l.b16 %v5360
        %v5394 = vunpack.c.l.b16 %v5361
        %v5395 = vunpack.c.l.b16 %v5362
        %v5396 = vunpack.c.l.b16 %v5363
        %v5397 = vunpack.c.l.b16 %v5364
        %v5398 = vunpack.c.l.b16 %v5365
        %v5399 = vunpack.c.l.b16 %v5366
        %v5400 = vunpack.c.l.b16 %v5367
        %v5401 = vpack.c.b16 %v5386, %v5385
        %v5402 = vpack.c.b16 %v5388, %v5387
        %v5403 = vpack.c.b16 %v5390, %v5389
        %v5404 = vpack.c.b16 %v5392, %v5391
        %v5405 = vpack.c.b16 %v5394, %v5393
        %v5406 = vpack.c.b16 %v5396, %v5395
        %v5407 = vpack.c.b16 %v5398, %v5397
        %v5408 = vpack.c.b16 %v5400, %v5399
        %5417 = vmatpush.bf16.msra.mxu0 %v5408
        %5418 = vmatpush.bf16.msra.mxu0 %v5407
        %5419 = vmatpush.bf16.msra.mxu0 %v5406
        %5420 = vmatpush.bf16.msra.mxu0 %v5405
        %5421 = vmatpush.bf16.msra.mxu0 %v5404
        %5422 = vmatpush.bf16.msra.mxu0 %v5403
        %5423 = vmatpush.bf16.msra.mxu0 %v5402
        %5424 = vmatpush.bf16.msra.mxu0 %v5401
        %5425 = vmatmul.bf16.gmra.mxu0 %v5368
        %v5426 = vpop.f32.mrf.mxu0
        %v5427 = vadd.f32 0.0, %v5426
        %v5428 = vpop.f32.mrf.mxu0
        %v5429 = vadd.f32 0.0, %v5428
        %5430 = vdwg.mxu0
        %v5447 = vunpack.c.l.b16 %v5309
        %v5448 = vunpack.c.l.b16 %v5310
        %v5449 = vunpack.c.l.b16 %v5311
        %v5450 = vunpack.c.l.b16 %v5312
        %v5451 = vunpack.c.l.b16 %v5313
        %v5452 = vunpack.c.l.b16 %v5314
        %v5453 = vunpack.c.l.b16 %v5315
        %v5454 = vunpack.c.l.b16 %v5316
        %v5455 = vunpack.c.l.b16 %v5317
        %v5456 = vunpack.c.l.b16 %v5318
        %v5457 = vunpack.c.l.b16 %v5319
        %v5458 = vunpack.c.l.b16 %v5320
        %v5459 = vunpack.c.l.b16 %v5321
        %v5460 = vunpack.c.l.b16 %v5322
        %v5461 = vunpack.c.l.b16 %v5323
        %v5462 = vunpack.c.l.b16 %v5324
        %v5463 = vpack.c.b16 %v5448, %v5447
        %v5464 = vpack.c.b16 %v5450, %v5449
        %v5465 = vpack.c.b16 %v5452, %v5451
        %v5466 = vpack.c.b16 %v5454, %v5453
        %v5467 = vpack.c.b16 %v5456, %v5455
        %v5468 = vpack.c.b16 %v5458, %v5457
        %v5469 = vpack.c.b16 %v5460, %v5459
        %v5470 = vpack.c.b16 %v5462, %v5461
        %5479 = vmatpush.bf16.msra.mxu0 %v5470
        %5480 = vmatpush.bf16.msra.mxu0 %v5469
        %5481 = vmatpush.bf16.msra.mxu0 %v5468
        %5482 = vmatpush.bf16.msra.mxu0 %v5467
        %5483 = vmatpush.bf16.msra.mxu0 %v5466
        %5484 = vmatpush.bf16.msra.mxu0 %v5465
        %5485 = vmatpush.bf16.msra.mxu0 %v5464
        %5486 = vmatpush.bf16.msra.mxu0 %v5463
        %5487 = vmatmul.bf16.gmra.mxu0 %v5325
        %v5488 = vpop.f32.mrf.mxu0
        %v5489 = vadd.f32 %v5427, %v5488
        %v5490 = vpop.f32.mrf.mxu0
        %v5491 = vadd.f32 %v5429, %v5490
        %5492 = vdwg.mxu0
        %s5493 = scalar_lea.vmem %s9, 16
        %v5494 = vld [vmem:[%s5493] sm:$0xf]
        %v5495 = vld [vmem:[%s5493 + $0x4] sm:$0xf]
        %v5498 = vunpack.c.l.b16 %v5494
        %v5499 = vunpack.c.l.b16 %v5495
        %v5500 = vpack.c.b16 %v5499, %v5498
        %v5502 = vsel %vm1276, %v5500, 0
        %5504 = vmatpush.bf16.msra.mxu0 0
        %5505 = vmatpush.bf16.msra.mxu0 0
        %5506 = vmatpush.bf16.msra.mxu0 0
        %5507 = vmatpush.bf16.msra.mxu0 0
        %5508 = vmatpush.bf16.msra.mxu0 0
        %5509 = vmatpush.bf16.msra.mxu0 0
        %5510 = vmatpush.bf16.msra.mxu0 0
        %5511 = vmatpush.bf16.msra.mxu0 %v5286
        %5512 = vmatmul.bf16.gmra.mxu0 %v5502
        %v5513 = vpop.f32.mrf.mxu0
        %v5514 = vadd.f32 0.0, %v5513
        %v5515 = vpop.f32.mrf.mxu0
        %v5516 = vadd.f32 0.0, %v5515
        %5517 = vdwg.mxu0
        %s5518 = scalar_lea.vmem %s31, 128
        %v5519 = vld [vmem:[%s5518] sm:$0xf]
        %v5520 = vld [vmem:[%s5518 + $0x4] sm:$0xf]
        %v5521 = vld [vmem:[%s5518 + $0x8] sm:$0xf]
        %v5522 = vld [vmem:[%s5518 + $0xc] sm:$0xf]
        %v5523 = vld [vmem:[%s5518 + $0x10] sm:$0xf]
        %v5524 = vld [vmem:[%s5518 + $0x14] sm:$0xf]
        %v5525 = vld [vmem:[%s5518 + $0x18] sm:$0xf]
        %v5526 = vld [vmem:[%s5518 + $0x1c] sm:$0xf]
        %v5527 = vld [vmem:[%s5518 + $0x20] sm:$0xf]
        %v5528 = vld [vmem:[%s5518 + $0x24] sm:$0xf]
        %v5529 = vld [vmem:[%s5518 + $0x28] sm:$0xf]
        %v5530 = vld [vmem:[%s5518 + $0x2c] sm:$0xf]
        %v5531 = vld [vmem:[%s5518 + $0x30] sm:$0xf]
        %v5532 = vld [vmem:[%s5518 + $0x34] sm:$0xf]
        %v5533 = vld [vmem:[%s5518 + $0x38] sm:$0xf]
        %v5534 = vld [vmem:[%s5518 + $0x3c] sm:$0xf]
        %v5535 = vpack.c.bf16 %v5516, %v5514
        %v5552 = vunpack.c.l.b16 %v5519
        %v5553 = vunpack.c.l.b16 %v5520
        %v5554 = vunpack.c.l.b16 %v5521
        %v5555 = vunpack.c.l.b16 %v5522
        %v5556 = vunpack.c.l.b16 %v5523
        %v5557 = vunpack.c.l.b16 %v5524
        %v5558 = vunpack.c.l.b16 %v5525
        %v5559 = vunpack.c.l.b16 %v5526
        %v5560 = vunpack.c.l.b16 %v5527
        %v5561 = vunpack.c.l.b16 %v5528
        %v5562 = vunpack.c.l.b16 %v5529
        %v5563 = vunpack.c.l.b16 %v5530
        %v5564 = vunpack.c.l.b16 %v5531
        %v5565 = vunpack.c.l.b16 %v5532
        %v5566 = vunpack.c.l.b16 %v5533
        %v5567 = vunpack.c.l.b16 %v5534
        %v5568 = vpack.c.b16 %v5553, %v5552
        %v5569 = vpack.c.b16 %v5555, %v5554
        %v5570 = vpack.c.b16 %v5557, %v5556
        %v5571 = vpack.c.b16 %v5559, %v5558
        %v5572 = vpack.c.b16 %v5561, %v5560
        %v5573 = vpack.c.b16 %v5563, %v5562
        %v5574 = vpack.c.b16 %v5565, %v5564
        %v5575 = vpack.c.b16 %v5567, %v5566
        %5584 = vmatpush.bf16.msra.mxu0 %v5575
        %5585 = vmatpush.bf16.msra.mxu0 %v5574
        %5586 = vmatpush.bf16.msra.mxu0 %v5573
        %5587 = vmatpush.bf16.msra.mxu0 %v5572
        %5588 = vmatpush.bf16.msra.mxu0 %v5571
        %5589 = vmatpush.bf16.msra.mxu0 %v5570
        %5590 = vmatpush.bf16.msra.mxu0 %v5569
        %5591 = vmatpush.bf16.msra.mxu0 %v5568
        %5592 = vmatmul.bf16.gmra.mxu0 %v5535
        %v5593 = vpop.f32.mrf.mxu0
        %v5594 = vadd.f32 0.0, %v5593
        %v5595 = vpop.f32.mrf.mxu0
        %v5596 = vadd.f32 0.0, %v5595
        %5597 = vdwg.mxu0
        %v5598 = vadd.f32 %v5489, %v5594
        %v5599 = vadd.f32 %v5491, %v5596
        %s5600 = scalar_lea.vmem %s9, 24
        %v5601 = vld [vmem:[%s5600] sm:$0xf]
        %v5602 = vld [vmem:[%s5600 + $0x4] sm:$0xf]
        %v5605 = vunpack.c.l.b16 %v5601
        %v5606 = vunpack.c.l.b16 %v5602
        %v5607 = vpack.c.b16 %v5606, %v5605
        %v5609 = vsel %vm1276, %v5607, 0
        %5611 = vmatpush.bf16.msra.mxu0 0
        %5612 = vmatpush.bf16.msra.mxu0 0
        %5613 = vmatpush.bf16.msra.mxu0 0
        %5614 = vmatpush.bf16.msra.mxu0 0
        %5615 = vmatpush.bf16.msra.mxu0 0
        %5616 = vmatpush.bf16.msra.mxu0 0
        %5617 = vmatpush.bf16.msra.mxu0 0
        %5618 = vmatpush.bf16.msra.mxu0 %v5286
        %5619 = vmatmul.bf16.gmra.mxu0 %v5609
        %v5620 = vpop.f32.mrf.mxu0
        %v5621 = vadd.f32 0.0, %v5620
        %v5622 = vpop.f32.mrf.mxu0
        %v5623 = vadd.f32 0.0, %v5622
        %5624 = vdwg.mxu0
        %s5625 = scalar_lea.vmem %s31, 192
        %v5626 = vld [vmem:[%s5625] sm:$0xf]
        %v5627 = vld [vmem:[%s5625 + $0x4] sm:$0xf]
        %v5628 = vld [vmem:[%s5625 + $0x8] sm:$0xf]
        %v5629 = vld [vmem:[%s5625 + $0xc] sm:$0xf]
        %v5630 = vld [vmem:[%s5625 + $0x10] sm:$0xf]
        %v5631 = vld [vmem:[%s5625 + $0x14] sm:$0xf]
        %v5632 = vld [vmem:[%s5625 + $0x18] sm:$0xf]
        %v5633 = vld [vmem:[%s5625 + $0x1c] sm:$0xf]
        %v5634 = vld [vmem:[%s5625 + $0x20] sm:$0xf]
        %v5635 = vld [vmem:[%s5625 + $0x24] sm:$0xf]
        %v5636 = vld [vmem:[%s5625 + $0x28] sm:$0xf]
        %v5637 = vld [vmem:[%s5625 + $0x2c] sm:$0xf]
        %v5638 = vld [vmem:[%s5625 + $0x30] sm:$0xf]
        %v5639 = vld [vmem:[%s5625 + $0x34] sm:$0xf]
        %v5640 = vld [vmem:[%s5625 + $0x38] sm:$0xf]
        %v5641 = vld [vmem:[%s5625 + $0x3c] sm:$0xf]
        %v5642 = vpack.c.bf16 %v5623, %v5621
        %v5659 = vunpack.c.l.b16 %v5626
        %v5660 = vunpack.c.l.b16 %v5627
        %v5661 = vunpack.c.l.b16 %v5628
        %v5662 = vunpack.c.l.b16 %v5629
        %v5663 = vunpack.c.l.b16 %v5630
        %v5664 = vunpack.c.l.b16 %v5631
        %v5665 = vunpack.c.l.b16 %v5632
        %v5666 = vunpack.c.l.b16 %v5633
        %v5667 = vunpack.c.l.b16 %v5634
        %v5668 = vunpack.c.l.b16 %v5635
        %v5669 = vunpack.c.l.b16 %v5636
        %v5670 = vunpack.c.l.b16 %v5637
        %v5671 = vunpack.c.l.b16 %v5638
        %v5672 = vunpack.c.l.b16 %v5639
        %v5673 = vunpack.c.l.b16 %v5640
        %v5674 = vunpack.c.l.b16 %v5641
        %v5675 = vpack.c.b16 %v5660, %v5659
        %v5676 = vpack.c.b16 %v5662, %v5661
        %v5677 = vpack.c.b16 %v5664, %v5663
        %v5678 = vpack.c.b16 %v5666, %v5665
        %v5679 = vpack.c.b16 %v5668, %v5667
        %v5680 = vpack.c.b16 %v5670, %v5669
        %v5681 = vpack.c.b16 %v5672, %v5671
        %v5682 = vpack.c.b16 %v5674, %v5673
        %5691 = vmatpush.bf16.msra.mxu0 %v5682
        %5692 = vmatpush.bf16.msra.mxu0 %v5681
        %5693 = vmatpush.bf16.msra.mxu0 %v5680
        %5694 = vmatpush.bf16.msra.mxu0 %v5679
        %5695 = vmatpush.bf16.msra.mxu0 %v5678
        %5696 = vmatpush.bf16.msra.mxu0 %v5677
        %5697 = vmatpush.bf16.msra.mxu0 %v5676
        %5698 = vmatpush.bf16.msra.mxu0 %v5675
        %5699 = vmatmul.bf16.gmra.mxu0 %v5642
        %v5700 = vpop.f32.mrf.mxu0
        %v5701 = vadd.f32 0.0, %v5700
        %v5702 = vpop.f32.mrf.mxu0
        %v5703 = vadd.f32 0.0, %v5702
        %5704 = vdwg.mxu0
        %v5705 = vadd.f32 %v5598, %v5701
        %v5706 = vadd.f32 %v5599, %v5703
        %s5707 = scalar_lea.vmem %s9, 32
        %v5708 = vld [vmem:[%s5707] sm:$0xf]
        %v5709 = vld [vmem:[%s5707 + $0x4] sm:$0xf]
        %v5712 = vunpack.c.l.b16 %v5708
        %v5713 = vunpack.c.l.b16 %v5709
        %v5714 = vpack.c.b16 %v5713, %v5712
        %v5716 = vsel %vm1276, %v5714, 0
        %5718 = vmatpush.bf16.msra.mxu0 0
        %5719 = vmatpush.bf16.msra.mxu0 0
        %5720 = vmatpush.bf16.msra.mxu0 0
        %5721 = vmatpush.bf16.msra.mxu0 0
        %5722 = vmatpush.bf16.msra.mxu0 0
        %5723 = vmatpush.bf16.msra.mxu0 0
        %5724 = vmatpush.bf16.msra.mxu0 0
        %5725 = vmatpush.bf16.msra.mxu0 %v5286
        %5726 = vmatmul.bf16.gmra.mxu0 %v5716
        %v5727 = vpop.f32.mrf.mxu0
        %v5728 = vadd.f32 0.0, %v5727
        %v5729 = vpop.f32.mrf.mxu0
        %v5730 = vadd.f32 0.0, %v5729
        %5731 = vdwg.mxu0
        %s5732 = scalar_lea.vmem %s31, 256
        %v5733 = vld [vmem:[%s5732] sm:$0xf]
        %v5734 = vld [vmem:[%s5732 + $0x4] sm:$0xf]
        %v5735 = vld [vmem:[%s5732 + $0x8] sm:$0xf]
        %v5736 = vld [vmem:[%s5732 + $0xc] sm:$0xf]
        %v5737 = vld [vmem:[%s5732 + $0x10] sm:$0xf]
        %v5738 = vld [vmem:[%s5732 + $0x14] sm:$0xf]
        %v5739 = vld [vmem:[%s5732 + $0x18] sm:$0xf]
        %v5740 = vld [vmem:[%s5732 + $0x1c] sm:$0xf]
        %v5741 = vld [vmem:[%s5732 + $0x20] sm:$0xf]
        %v5742 = vld [vmem:[%s5732 + $0x24] sm:$0xf]
        %v5743 = vld [vmem:[%s5732 + $0x28] sm:$0xf]
        %v5744 = vld [vmem:[%s5732 + $0x2c] sm:$0xf]
        %v5745 = vld [vmem:[%s5732 + $0x30] sm:$0xf]
        %v5746 = vld [vmem:[%s5732 + $0x34] sm:$0xf]
        %v5747 = vld [vmem:[%s5732 + $0x38] sm:$0xf]
        %v5748 = vld [vmem:[%s5732 + $0x3c] sm:$0xf]
        %v5749 = vpack.c.bf16 %v5730, %v5728
        %v5766 = vunpack.c.l.b16 %v5733
        %v5767 = vunpack.c.l.b16 %v5734
        %v5768 = vunpack.c.l.b16 %v5735
        %v5769 = vunpack.c.l.b16 %v5736
        %v5770 = vunpack.c.l.b16 %v5737
        %v5771 = vunpack.c.l.b16 %v5738
        %v5772 = vunpack.c.l.b16 %v5739
        %v5773 = vunpack.c.l.b16 %v5740
        %v5774 = vunpack.c.l.b16 %v5741
        %v5775 = vunpack.c.l.b16 %v5742
        %v5776 = vunpack.c.l.b16 %v5743
        %v5777 = vunpack.c.l.b16 %v5744
        %v5778 = vunpack.c.l.b16 %v5745
        %v5779 = vunpack.c.l.b16 %v5746
        %v5780 = vunpack.c.l.b16 %v5747
        %v5781 = vunpack.c.l.b16 %v5748
        %v5782 = vpack.c.b16 %v5767, %v5766
        %v5783 = vpack.c.b16 %v5769, %v5768
        %v5784 = vpack.c.b16 %v5771, %v5770
        %v5785 = vpack.c.b16 %v5773, %v5772
        %v5786 = vpack.c.b16 %v5775, %v5774
        %v5787 = vpack.c.b16 %v5777, %v5776
        %v5788 = vpack.c.b16 %v5779, %v5778
        %v5789 = vpack.c.b16 %v5781, %v5780
        %5798 = vmatpush.bf16.msra.mxu0 %v5789
        %5799 = vmatpush.bf16.msra.mxu0 %v5788
        %5800 = vmatpush.bf16.msra.mxu0 %v5787
        %5801 = vmatpush.bf16.msra.mxu0 %v5786
        %5802 = vmatpush.bf16.msra.mxu0 %v5785
        %5803 = vmatpush.bf16.msra.mxu0 %v5784
        %5804 = vmatpush.bf16.msra.mxu0 %v5783
        %5805 = vmatpush.bf16.msra.mxu0 %v5782
        %5806 = vmatmul.bf16.gmra.mxu0 %v5749
        %v5807 = vpop.f32.mrf.mxu0
        %v5808 = vadd.f32 0.0, %v5807
        %v5809 = vpop.f32.mrf.mxu0
        %v5810 = vadd.f32 0.0, %v5809
        %5811 = vdwg.mxu0
        %v5812 = vadd.f32 %v5705, %v5808
        %v5813 = vadd.f32 %v5706, %v5810
        %s5814 = scalar_lea.vmem %s9, 40
        %v5815 = vld [vmem:[%s5814] sm:$0xf]
        %v5816 = vld [vmem:[%s5814 + $0x4] sm:$0xf]
        %v5819 = vunpack.c.l.b16 %v5815
        %v5820 = vunpack.c.l.b16 %v5816
        %v5821 = vpack.c.b16 %v5820, %v5819
        %v5823 = vsel %vm1276, %v5821, 0
        %5825 = vmatpush.bf16.msra.mxu0 0
        %5826 = vmatpush.bf16.msra.mxu0 0
        %5827 = vmatpush.bf16.msra.mxu0 0
        %5828 = vmatpush.bf16.msra.mxu0 0
        %5829 = vmatpush.bf16.msra.mxu0 0
        %5830 = vmatpush.bf16.msra.mxu0 0
        %5831 = vmatpush.bf16.msra.mxu0 0
        %5832 = vmatpush.bf16.msra.mxu0 %v5286
        %5833 = vmatmul.bf16.gmra.mxu0 %v5823
        %v5834 = vpop.f32.mrf.mxu0
        %v5835 = vadd.f32 0.0, %v5834
        %v5836 = vpop.f32.mrf.mxu0
        %v5837 = vadd.f32 0.0, %v5836
        %5838 = vdwg.mxu0
        %s5839 = scalar_lea.vmem %s31, 320
        %v5840 = vld [vmem:[%s5839] sm:$0xf]
        %v5841 = vld [vmem:[%s5839 + $0x4] sm:$0xf]
        %v5842 = vld [vmem:[%s5839 + $0x8] sm:$0xf]
        %v5843 = vld [vmem:[%s5839 + $0xc] sm:$0xf]
        %v5844 = vld [vmem:[%s5839 + $0x10] sm:$0xf]
        %v5845 = vld [vmem:[%s5839 + $0x14] sm:$0xf]
        %v5846 = vld [vmem:[%s5839 + $0x18] sm:$0xf]
        %v5847 = vld [vmem:[%s5839 + $0x1c] sm:$0xf]
        %v5848 = vld [vmem:[%s5839 + $0x20] sm:$0xf]
        %v5849 = vld [vmem:[%s5839 + $0x24] sm:$0xf]
        %v5850 = vld [vmem:[%s5839 + $0x28] sm:$0xf]
        %v5851 = vld [vmem:[%s5839 + $0x2c] sm:$0xf]
        %v5852 = vld [vmem:[%s5839 + $0x30] sm:$0xf]
        %v5853 = vld [vmem:[%s5839 + $0x34] sm:$0xf]
        %v5854 = vld [vmem:[%s5839 + $0x38] sm:$0xf]
        %v5855 = vld [vmem:[%s5839 + $0x3c] sm:$0xf]
        %v5856 = vpack.c.bf16 %v5837, %v5835
        %v5873 = vunpack.c.l.b16 %v5840
        %v5874 = vunpack.c.l.b16 %v5841
        %v5875 = vunpack.c.l.b16 %v5842
        %v5876 = vunpack.c.l.b16 %v5843
        %v5877 = vunpack.c.l.b16 %v5844
        %v5878 = vunpack.c.l.b16 %v5845
        %v5879 = vunpack.c.l.b16 %v5846
        %v5880 = vunpack.c.l.b16 %v5847
        %v5881 = vunpack.c.l.b16 %v5848
        %v5882 = vunpack.c.l.b16 %v5849
        %v5883 = vunpack.c.l.b16 %v5850
        %v5884 = vunpack.c.l.b16 %v5851
        %v5885 = vunpack.c.l.b16 %v5852
        %v5886 = vunpack.c.l.b16 %v5853
        %v5887 = vunpack.c.l.b16 %v5854
        %v5888 = vunpack.c.l.b16 %v5855
        %v5889 = vpack.c.b16 %v5874, %v5873
        %v5890 = vpack.c.b16 %v5876, %v5875
        %v5891 = vpack.c.b16 %v5878, %v5877
        %v5892 = vpack.c.b16 %v5880, %v5879
        %v5893 = vpack.c.b16 %v5882, %v5881
        %v5894 = vpack.c.b16 %v5884, %v5883
        %v5895 = vpack.c.b16 %v5886, %v5885
        %v5896 = vpack.c.b16 %v5888, %v5887
        %5905 = vmatpush.bf16.msra.mxu0 %v5896
        %5906 = vmatpush.bf16.msra.mxu0 %v5895
        %5907 = vmatpush.bf16.msra.mxu0 %v5894
        %5908 = vmatpush.bf16.msra.mxu0 %v5893
        %5909 = vmatpush.bf16.msra.mxu0 %v5892
        %5910 = vmatpush.bf16.msra.mxu0 %v5891
        %5911 = vmatpush.bf16.msra.mxu0 %v5890
        %5912 = vmatpush.bf16.msra.mxu0 %v5889
        %5913 = vmatmul.bf16.gmra.mxu0 %v5856
        %v5914 = vpop.f32.mrf.mxu0
        %v5915 = vadd.f32 0.0, %v5914
        %v5916 = vpop.f32.mrf.mxu0
        %v5917 = vadd.f32 0.0, %v5916
        %5918 = vdwg.mxu0
        %v5919 = vadd.f32 %v5812, %v5915
        %v5920 = vadd.f32 %v5813, %v5917
        %s5921 = scalar_lea.vmem %s9, 48
        %v5922 = vld [vmem:[%s5921] sm:$0xf]
        %v5923 = vld [vmem:[%s5921 + $0x4] sm:$0xf]
        %v5926 = vunpack.c.l.b16 %v5922
        %v5927 = vunpack.c.l.b16 %v5923
        %v5928 = vpack.c.b16 %v5927, %v5926
        %v5930 = vsel %vm1276, %v5928, 0
        %5932 = vmatpush.bf16.msra.mxu0 0
        %5933 = vmatpush.bf16.msra.mxu0 0
        %5934 = vmatpush.bf16.msra.mxu0 0
        %5935 = vmatpush.bf16.msra.mxu0 0
        %5936 = vmatpush.bf16.msra.mxu0 0
        %5937 = vmatpush.bf16.msra.mxu0 0
        %5938 = vmatpush.bf16.msra.mxu0 0
        %5939 = vmatpush.bf16.msra.mxu0 %v5286
        %5940 = vmatmul.bf16.gmra.mxu0 %v5930
        %v5941 = vpop.f32.mrf.mxu0
        %v5942 = vadd.f32 0.0, %v5941
        %v5943 = vpop.f32.mrf.mxu0
        %v5944 = vadd.f32 0.0, %v5943
        %5945 = vdwg.mxu0
        %s5946 = scalar_lea.vmem %s31, 384
        %v5947 = vld [vmem:[%s5946] sm:$0xf]
        %v5948 = vld [vmem:[%s5946 + $0x4] sm:$0xf]
        %v5949 = vld [vmem:[%s5946 + $0x8] sm:$0xf]
        %v5950 = vld [vmem:[%s5946 + $0xc] sm:$0xf]
        %v5951 = vld [vmem:[%s5946 + $0x10] sm:$0xf]
        %v5952 = vld [vmem:[%s5946 + $0x14] sm:$0xf]
        %v5953 = vld [vmem:[%s5946 + $0x18] sm:$0xf]
        %v5954 = vld [vmem:[%s5946 + $0x1c] sm:$0xf]
        %v5955 = vld [vmem:[%s5946 + $0x20] sm:$0xf]
        %v5956 = vld [vmem:[%s5946 + $0x24] sm:$0xf]
        %v5957 = vld [vmem:[%s5946 + $0x28] sm:$0xf]
        %v5958 = vld [vmem:[%s5946 + $0x2c] sm:$0xf]
        %v5959 = vld [vmem:[%s5946 + $0x30] sm:$0xf]
        %v5960 = vld [vmem:[%s5946 + $0x34] sm:$0xf]
        %v5961 = vld [vmem:[%s5946 + $0x38] sm:$0xf]
        %v5962 = vld [vmem:[%s5946 + $0x3c] sm:$0xf]
        %v5963 = vpack.c.bf16 %v5944, %v5942
        %v5980 = vunpack.c.l.b16 %v5947
        %v5981 = vunpack.c.l.b16 %v5948
        %v5982 = vunpack.c.l.b16 %v5949
        %v5983 = vunpack.c.l.b16 %v5950
        %v5984 = vunpack.c.l.b16 %v5951
        %v5985 = vunpack.c.l.b16 %v5952
        %v5986 = vunpack.c.l.b16 %v5953
        %v5987 = vunpack.c.l.b16 %v5954
        %v5988 = vunpack.c.l.b16 %v5955
        %v5989 = vunpack.c.l.b16 %v5956
        %v5990 = vunpack.c.l.b16 %v5957
        %v5991 = vunpack.c.l.b16 %v5958
        %v5992 = vunpack.c.l.b16 %v5959
        %v5993 = vunpack.c.l.b16 %v5960
        %v5994 = vunpack.c.l.b16 %v5961
        %v5995 = vunpack.c.l.b16 %v5962
        %v5996 = vpack.c.b16 %v5981, %v5980
        %v5997 = vpack.c.b16 %v5983, %v5982
        %v5998 = vpack.c.b16 %v5985, %v5984
        %v5999 = vpack.c.b16 %v5987, %v5986
        %v6000 = vpack.c.b16 %v5989, %v5988
        %v6001 = vpack.c.b16 %v5991, %v5990
        %v6002 = vpack.c.b16 %v5993, %v5992
        %v6003 = vpack.c.b16 %v5995, %v5994
        %6012 = vmatpush.bf16.msra.mxu0 %v6003
        %6013 = vmatpush.bf16.msra.mxu0 %v6002
        %6014 = vmatpush.bf16.msra.mxu0 %v6001
        %6015 = vmatpush.bf16.msra.mxu0 %v6000
        %6016 = vmatpush.bf16.msra.mxu0 %v5999
        %6017 = vmatpush.bf16.msra.mxu0 %v5998
        %6018 = vmatpush.bf16.msra.mxu0 %v5997
        %6019 = vmatpush.bf16.msra.mxu0 %v5996
        %6020 = vmatmul.bf16.gmra.mxu0 %v5963
        %v6021 = vpop.f32.mrf.mxu0
        %v6022 = vadd.f32 0.0, %v6021
        %v6023 = vpop.f32.mrf.mxu0
        %v6024 = vadd.f32 0.0, %v6023
        %6025 = vdwg.mxu0
        %v6026 = vadd.f32 %v5919, %v6022
        %v6027 = vadd.f32 %v5920, %v6024
        %s6028 = scalar_lea.vmem %s9, 56
        %v6029 = vld [vmem:[%s6028] sm:$0xf]
        %v6030 = vld [vmem:[%s6028 + $0x4] sm:$0xf]
        %v6033 = vunpack.c.l.b16 %v6029
        %v6034 = vunpack.c.l.b16 %v6030
        %v6035 = vpack.c.b16 %v6034, %v6033
        %v6037 = vsel %vm1276, %v6035, 0
        %6039 = vmatpush.bf16.msra.mxu0 0
        %6040 = vmatpush.bf16.msra.mxu0 0
        %6041 = vmatpush.bf16.msra.mxu0 0
        %6042 = vmatpush.bf16.msra.mxu0 0
        %6043 = vmatpush.bf16.msra.mxu0 0
        %6044 = vmatpush.bf16.msra.mxu0 0
        %6045 = vmatpush.bf16.msra.mxu0 0
        %6046 = vmatpush.bf16.msra.mxu0 %v5286
        %6047 = vmatmul.bf16.gmra.mxu0 %v6037
        %v6048 = vpop.f32.mrf.mxu0
        %v6049 = vadd.f32 0.0, %v6048
        %v6050 = vpop.f32.mrf.mxu0
        %v6051 = vadd.f32 0.0, %v6050
        %6052 = vdwg.mxu0
        %s6053 = scalar_lea.vmem %s31, 448
        %v6054 = vld [vmem:[%s6053] sm:$0xf]
        %v6055 = vld [vmem:[%s6053 + $0x4] sm:$0xf]
        %v6056 = vld [vmem:[%s6053 + $0x8] sm:$0xf]
        %v6057 = vld [vmem:[%s6053 + $0xc] sm:$0xf]
        %v6058 = vld [vmem:[%s6053 + $0x10] sm:$0xf]
        %v6059 = vld [vmem:[%s6053 + $0x14] sm:$0xf]
        %v6060 = vld [vmem:[%s6053 + $0x18] sm:$0xf]
        %v6061 = vld [vmem:[%s6053 + $0x1c] sm:$0xf]
        %v6062 = vld [vmem:[%s6053 + $0x20] sm:$0xf]
        %v6063 = vld [vmem:[%s6053 + $0x24] sm:$0xf]
        %v6064 = vld [vmem:[%s6053 + $0x28] sm:$0xf]
        %v6065 = vld [vmem:[%s6053 + $0x2c] sm:$0xf]
        %v6066 = vld [vmem:[%s6053 + $0x30] sm:$0xf]
        %v6067 = vld [vmem:[%s6053 + $0x34] sm:$0xf]
        %v6068 = vld [vmem:[%s6053 + $0x38] sm:$0xf]
        %v6069 = vld [vmem:[%s6053 + $0x3c] sm:$0xf]
        %v6070 = vpack.c.bf16 %v6051, %v6049
        %v6087 = vunpack.c.l.b16 %v6054
        %v6088 = vunpack.c.l.b16 %v6055
        %v6089 = vunpack.c.l.b16 %v6056
        %v6090 = vunpack.c.l.b16 %v6057
        %v6091 = vunpack.c.l.b16 %v6058
        %v6092 = vunpack.c.l.b16 %v6059
        %v6093 = vunpack.c.l.b16 %v6060
        %v6094 = vunpack.c.l.b16 %v6061
        %v6095 = vunpack.c.l.b16 %v6062
        %v6096 = vunpack.c.l.b16 %v6063
        %v6097 = vunpack.c.l.b16 %v6064
        %v6098 = vunpack.c.l.b16 %v6065
        %v6099 = vunpack.c.l.b16 %v6066
        %v6100 = vunpack.c.l.b16 %v6067
        %v6101 = vunpack.c.l.b16 %v6068
        %v6102 = vunpack.c.l.b16 %v6069
        %v6103 = vpack.c.b16 %v6088, %v6087
        %v6104 = vpack.c.b16 %v6090, %v6089
        %v6105 = vpack.c.b16 %v6092, %v6091
        %v6106 = vpack.c.b16 %v6094, %v6093
        %v6107 = vpack.c.b16 %v6096, %v6095
        %v6108 = vpack.c.b16 %v6098, %v6097
        %v6109 = vpack.c.b16 %v6100, %v6099
        %v6110 = vpack.c.b16 %v6102, %v6101
        %6119 = vmatpush.bf16.msra.mxu0 %v6110
        %6120 = vmatpush.bf16.msra.mxu0 %v6109
        %6121 = vmatpush.bf16.msra.mxu0 %v6108
        %6122 = vmatpush.bf16.msra.mxu0 %v6107
        %6123 = vmatpush.bf16.msra.mxu0 %v6106
        %6124 = vmatpush.bf16.msra.mxu0 %v6105
        %6125 = vmatpush.bf16.msra.mxu0 %v6104
        %6126 = vmatpush.bf16.msra.mxu0 %v6103
        %6127 = vmatmul.bf16.gmra.mxu0 %v6070
        %v6128 = vpop.f32.mrf.mxu0
        %v6129 = vadd.f32 0.0, %v6128
        %v6130 = vpop.f32.mrf.mxu0
        %v6131 = vadd.f32 0.0, %v6130
        %6132 = vdwg.mxu0
        %v6133 = vadd.f32 %v6026, %v6129
        %v6134 = vadd.f32 %v6027, %v6131
        %s6135 = scalar_lea.vmem %s9, 64
        %v6136 = vld [vmem:[%s6135] sm:$0xf]
        %v6137 = vld [vmem:[%s6135 + $0x4] sm:$0xf]
        %v6140 = vunpack.c.l.b16 %v6136
        %v6141 = vunpack.c.l.b16 %v6137
        %v6142 = vpack.c.b16 %v6141, %v6140
        %v6144 = vsel %vm1276, %v6142, 0
        %6146 = vmatpush.bf16.msra.mxu0 0
        %6147 = vmatpush.bf16.msra.mxu0 0
        %6148 = vmatpush.bf16.msra.mxu0 0
        %6149 = vmatpush.bf16.msra.mxu0 0
        %6150 = vmatpush.bf16.msra.mxu0 0
        %6151 = vmatpush.bf16.msra.mxu0 0
        %6152 = vmatpush.bf16.msra.mxu0 0
        %6153 = vmatpush.bf16.msra.mxu0 %v5286
        %6154 = vmatmul.bf16.gmra.mxu0 %v6144
        %v6155 = vpop.f32.mrf.mxu0
        %v6156 = vadd.f32 0.0, %v6155
        %v6157 = vpop.f32.mrf.mxu0
        %v6158 = vadd.f32 0.0, %v6157
        %6159 = vdwg.mxu0
        %s6160 = scalar_lea.vmem %s31, 512
        %v6161 = vld [vmem:[%s6160] sm:$0xf]
        %v6162 = vld [vmem:[%s6160 + $0x4] sm:$0xf]
        %v6163 = vld [vmem:[%s6160 + $0x8] sm:$0xf]
        %v6164 = vld [vmem:[%s6160 + $0xc] sm:$0xf]
        %v6165 = vld [vmem:[%s6160 + $0x10] sm:$0xf]
        %v6166 = vld [vmem:[%s6160 + $0x14] sm:$0xf]
        %v6167 = vld [vmem:[%s6160 + $0x18] sm:$0xf]
        %v6168 = vld [vmem:[%s6160 + $0x1c] sm:$0xf]
        %v6169 = vld [vmem:[%s6160 + $0x20] sm:$0xf]
        %v6170 = vld [vmem:[%s6160 + $0x24] sm:$0xf]
        %v6171 = vld [vmem:[%s6160 + $0x28] sm:$0xf]
        %v6172 = vld [vmem:[%s6160 + $0x2c] sm:$0xf]
        %v6173 = vld [vmem:[%s6160 + $0x30] sm:$0xf]
        %v6174 = vld [vmem:[%s6160 + $0x34] sm:$0xf]
        %v6175 = vld [vmem:[%s6160 + $0x38] sm:$0xf]
        %v6176 = vld [vmem:[%s6160 + $0x3c] sm:$0xf]
        %v6177 = vpack.c.bf16 %v6158, %v6156
        %v6194 = vunpack.c.l.b16 %v6161
        %v6195 = vunpack.c.l.b16 %v6162
        %v6196 = vunpack.c.l.b16 %v6163
        %v6197 = vunpack.c.l.b16 %v6164
        %v6198 = vunpack.c.l.b16 %v6165
        %v6199 = vunpack.c.l.b16 %v6166
        %v6200 = vunpack.c.l.b16 %v6167
        %v6201 = vunpack.c.l.b16 %v6168
        %v6202 = vunpack.c.l.b16 %v6169
        %v6203 = vunpack.c.l.b16 %v6170
        %v6204 = vunpack.c.l.b16 %v6171
        %v6205 = vunpack.c.l.b16 %v6172
        %v6206 = vunpack.c.l.b16 %v6173
        %v6207 = vunpack.c.l.b16 %v6174
        %v6208 = vunpack.c.l.b16 %v6175
        %v6209 = vunpack.c.l.b16 %v6176
        %v6210 = vpack.c.b16 %v6195, %v6194
        %v6211 = vpack.c.b16 %v6197, %v6196
        %v6212 = vpack.c.b16 %v6199, %v6198
        %v6213 = vpack.c.b16 %v6201, %v6200
        %v6214 = vpack.c.b16 %v6203, %v6202
        %v6215 = vpack.c.b16 %v6205, %v6204
        %v6216 = vpack.c.b16 %v6207, %v6206
        %v6217 = vpack.c.b16 %v6209, %v6208
        %6226 = vmatpush.bf16.msra.mxu0 %v6217
        %6227 = vmatpush.bf16.msra.mxu0 %v6216
        %6228 = vmatpush.bf16.msra.mxu0 %v6215
        %6229 = vmatpush.bf16.msra.mxu0 %v6214
        %6230 = vmatpush.bf16.msra.mxu0 %v6213
        %6231 = vmatpush.bf16.msra.mxu0 %v6212
        %6232 = vmatpush.bf16.msra.mxu0 %v6211
        %6233 = vmatpush.bf16.msra.mxu0 %v6210
        %6234 = vmatmul.bf16.gmra.mxu0 %v6177
        %v6235 = vpop.f32.mrf.mxu0
        %v6236 = vadd.f32 0.0, %v6235
        %v6237 = vpop.f32.mrf.mxu0
        %v6238 = vadd.f32 0.0, %v6237
        %6239 = vdwg.mxu0
        %v6240 = vadd.f32 %v6133, %v6236
        %v6241 = vadd.f32 %v6134, %v6238
        %v6242 = vld [vmem:[%s33] sm:$0x1]
        %v6244 = vperm.slane %v6242, 0
        %v6246 = vadd.f32 %v6240, %v6244
        %v6247 = vadd.f32 %v6241, %v6244
        %v6248 = vadd.f32 %v6246, %v5280
        %v6249 = vadd.f32 %v6247, %v5282
        %v6250 = vmax.f32 %v6248, 0.0
        %v6251 = vmax.f32 %v6249, 0.0
        %v6252 = vld [vmem:[%s39] sm:$0xf]
        %v6253 = vld [vmem:[%s39 + $0x4] sm:$0xf]
        %v6254 = vld [vmem:[%s39 + $0x8] sm:$0xf]
        %v6255 = vld [vmem:[%s39 + $0xc] sm:$0xf]
        %v6256 = vld [vmem:[%s39 + $0x10] sm:$0xf]
        %v6257 = vld [vmem:[%s39 + $0x14] sm:$0xf]
        %v6258 = vld [vmem:[%s39 + $0x18] sm:$0xf]
        %v6259 = vld [vmem:[%s39 + $0x1c] sm:$0xf]
        %v6260 = vld [vmem:[%s39 + $0x20] sm:$0xf]
        %v6261 = vld [vmem:[%s39 + $0x24] sm:$0xf]
        %v6262 = vld [vmem:[%s39 + $0x28] sm:$0xf]
        %v6263 = vld [vmem:[%s39 + $0x2c] sm:$0xf]
        %v6264 = vld [vmem:[%s39 + $0x30] sm:$0xf]
        %v6265 = vld [vmem:[%s39 + $0x34] sm:$0xf]
        %v6266 = vld [vmem:[%s39 + $0x38] sm:$0xf]
        %v6267 = vld [vmem:[%s39 + $0x3c] sm:$0xf]
        %v6268 = vpack.c.bf16 %v6251, %v6250
        %v6269 = vld [vmem:[%s41] sm:$0x1]
        %v6271 = vperm.slane %v6269, 0
        %v6289 = vunpack.c.l.b16 %v6252
        %v6290 = vunpack.c.l.b16 %v6253
        %v6291 = vunpack.c.l.b16 %v6254
        %v6292 = vunpack.c.l.b16 %v6255
        %v6293 = vunpack.c.l.b16 %v6256
        %v6294 = vunpack.c.l.b16 %v6257
        %v6295 = vunpack.c.l.b16 %v6258
        %v6296 = vunpack.c.l.b16 %v6259
        %v6297 = vunpack.c.l.b16 %v6260
        %v6298 = vunpack.c.l.b16 %v6261
        %v6299 = vunpack.c.l.b16 %v6262
        %v6300 = vunpack.c.l.b16 %v6263
        %v6301 = vunpack.c.l.b16 %v6264
        %v6302 = vunpack.c.l.b16 %v6265
        %v6303 = vunpack.c.l.b16 %v6266
        %v6304 = vunpack.c.l.b16 %v6267
        %v6305 = vpack.c.b16 %v6290, %v6289
        %v6306 = vpack.c.b16 %v6292, %v6291
        %v6307 = vpack.c.b16 %v6294, %v6293
        %v6308 = vpack.c.b16 %v6296, %v6295
        %v6309 = vpack.c.b16 %v6298, %v6297
        %v6310 = vpack.c.b16 %v6300, %v6299
        %v6311 = vpack.c.b16 %v6302, %v6301
        %v6312 = vpack.c.b16 %v6304, %v6303
        %6321 = vmatpush.bf16.msra.mxu0 %v6312
        %6322 = vmatpush.bf16.msra.mxu0 %v6311
        %6323 = vmatpush.bf16.msra.mxu0 %v6310
        %6324 = vmatpush.bf16.msra.mxu0 %v6309
        %6325 = vmatpush.bf16.msra.mxu0 %v6308
        %6326 = vmatpush.bf16.msra.mxu0 %v6307
        %6327 = vmatpush.bf16.msra.mxu0 %v6306
        %6328 = vmatpush.bf16.msra.mxu0 %v6305
        %6329 = vmatmul.bf16.gmra.mxu0 %v6268
        %v6330 = vpop.f32.mrf.mxu0
        %v6331 = vadd.f32 %v6271, %v6330
        %v6332 = vpop.f32.mrf.mxu0
        %v6333 = vadd.f32 %v6271, %v6332
        %6334 = vdwg.mxu0
        %v6335 = vmax.f32 %v6331, 0.0
        %v6336 = vmax.f32 %v6333, 0.0
        %s6337 = scalar_lea.vmem %s39, 64
        %v6338 = vld [vmem:[%s6337] sm:$0xf]
        %v6339 = vld [vmem:[%s6337 + $0x4] sm:$0xf]
        %v6340 = vld [vmem:[%s6337 + $0x8] sm:$0xf]
        %v6341 = vld [vmem:[%s6337 + $0xc] sm:$0xf]
        %v6342 = vld [vmem:[%s6337 + $0x10] sm:$0xf]
        %v6343 = vld [vmem:[%s6337 + $0x14] sm:$0xf]
        %v6344 = vld [vmem:[%s6337 + $0x18] sm:$0xf]
        %v6345 = vld [vmem:[%s6337 + $0x1c] sm:$0xf]
        %v6346 = vld [vmem:[%s6337 + $0x20] sm:$0xf]
        %v6347 = vld [vmem:[%s6337 + $0x24] sm:$0xf]
        %v6348 = vld [vmem:[%s6337 + $0x28] sm:$0xf]
        %v6349 = vld [vmem:[%s6337 + $0x2c] sm:$0xf]
        %v6350 = vld [vmem:[%s6337 + $0x30] sm:$0xf]
        %v6351 = vld [vmem:[%s6337 + $0x34] sm:$0xf]
        %v6352 = vld [vmem:[%s6337 + $0x38] sm:$0xf]
        %v6353 = vld [vmem:[%s6337 + $0x3c] sm:$0xf]
        %s6354 = scalar_lea.vmem %s41, 1
        %v6355 = vld [vmem:[%s6354] sm:$0x1]
        %v6357 = vperm.slane %v6355, 0
        %v6375 = vunpack.c.l.b16 %v6338
        %v6376 = vunpack.c.l.b16 %v6339
        %v6377 = vunpack.c.l.b16 %v6340
        %v6378 = vunpack.c.l.b16 %v6341
        %v6379 = vunpack.c.l.b16 %v6342
        %v6380 = vunpack.c.l.b16 %v6343
        %v6381 = vunpack.c.l.b16 %v6344
        %v6382 = vunpack.c.l.b16 %v6345
        %v6383 = vunpack.c.l.b16 %v6346
        %v6384 = vunpack.c.l.b16 %v6347
        %v6385 = vunpack.c.l.b16 %v6348
        %v6386 = vunpack.c.l.b16 %v6349
        %v6387 = vunpack.c.l.b16 %v6350
        %v6388 = vunpack.c.l.b16 %v6351
        %v6389 = vunpack.c.l.b16 %v6352
        %v6390 = vunpack.c.l.b16 %v6353
        %v6391 = vpack.c.b16 %v6376, %v6375
        %v6392 = vpack.c.b16 %v6378, %v6377
        %v6393 = vpack.c.b16 %v6380, %v6379
        %v6394 = vpack.c.b16 %v6382, %v6381
        %v6395 = vpack.c.b16 %v6384, %v6383
        %v6396 = vpack.c.b16 %v6386, %v6385
        %v6397 = vpack.c.b16 %v6388, %v6387
        %v6398 = vpack.c.b16 %v6390, %v6389
        %6407 = vmatpush.bf16.msra.mxu0 %v6398
        %6408 = vmatpush.bf16.msra.mxu0 %v6397
        %6409 = vmatpush.bf16.msra.mxu0 %v6396
        %6410 = vmatpush.bf16.msra.mxu0 %v6395
        %6411 = vmatpush.bf16.msra.mxu0 %v6394
        %6412 = vmatpush.bf16.msra.mxu0 %v6393
        %6413 = vmatpush.bf16.msra.mxu0 %v6392
        %6414 = vmatpush.bf16.msra.mxu0 %v6391
        %6415 = vmatmul.bf16.gmra.mxu0 %v6268
        %v6416 = vpop.f32.mrf.mxu0
        %v6417 = vadd.f32 %v6357, %v6416
        %v6418 = vpop.f32.mrf.mxu0
        %v6419 = vadd.f32 %v6357, %v6418
        %6420 = vdwg.mxu0
        %v6421 = vmax.f32 %v6417, 0.0
        %v6422 = vmax.f32 %v6419, 0.0
        %s6423 = scalar_lea.vmem %s39, 128
        %v6424 = vld [vmem:[%s6423] sm:$0xf]
        %v6425 = vld [vmem:[%s6423 + $0x4] sm:$0xf]
        %v6426 = vld [vmem:[%s6423 + $0x8] sm:$0xf]
        %v6427 = vld [vmem:[%s6423 + $0xc] sm:$0xf]
        %v6428 = vld [vmem:[%s6423 + $0x10] sm:$0xf]
        %v6429 = vld [vmem:[%s6423 + $0x14] sm:$0xf]
        %v6430 = vld [vmem:[%s6423 + $0x18] sm:$0xf]
        %v6431 = vld [vmem:[%s6423 + $0x1c] sm:$0xf]
        %v6432 = vld [vmem:[%s6423 + $0x20] sm:$0xf]
        %v6433 = vld [vmem:[%s6423 + $0x24] sm:$0xf]
        %v6434 = vld [vmem:[%s6423 + $0x28] sm:$0xf]
        %v6435 = vld [vmem:[%s6423 + $0x2c] sm:$0xf]
        %v6436 = vld [vmem:[%s6423 + $0x30] sm:$0xf]
        %v6437 = vld [vmem:[%s6423 + $0x34] sm:$0xf]
        %v6438 = vld [vmem:[%s6423 + $0x38] sm:$0xf]
        %v6439 = vld [vmem:[%s6423 + $0x3c] sm:$0xf]
        %s6440 = scalar_lea.vmem %s41, 2
        %v6441 = vld [vmem:[%s6440] sm:$0x1]
        %v6443 = vperm.slane %v6441, 0
        %v6461 = vunpack.c.l.b16 %v6424
        %v6462 = vunpack.c.l.b16 %v6425
        %v6463 = vunpack.c.l.b16 %v6426
        %v6464 = vunpack.c.l.b16 %v6427
        %v6465 = vunpack.c.l.b16 %v6428
        %v6466 = vunpack.c.l.b16 %v6429
        %v6467 = vunpack.c.l.b16 %v6430
        %v6468 = vunpack.c.l.b16 %v6431
        %v6469 = vunpack.c.l.b16 %v6432
        %v6470 = vunpack.c.l.b16 %v6433
        %v6471 = vunpack.c.l.b16 %v6434
        %v6472 = vunpack.c.l.b16 %v6435
        %v6473 = vunpack.c.l.b16 %v6436
        %v6474 = vunpack.c.l.b16 %v6437
        %v6475 = vunpack.c.l.b16 %v6438
        %v6476 = vunpack.c.l.b16 %v6439
        %v6477 = vpack.c.b16 %v6462, %v6461
        %v6478 = vpack.c.b16 %v6464, %v6463
        %v6479 = vpack.c.b16 %v6466, %v6465
        %v6480 = vpack.c.b16 %v6468, %v6467
        %v6481 = vpack.c.b16 %v6470, %v6469
        %v6482 = vpack.c.b16 %v6472, %v6471
        %v6483 = vpack.c.b16 %v6474, %v6473
        %v6484 = vpack.c.b16 %v6476, %v6475
        %6493 = vmatpush.bf16.msra.mxu0 %v6484
        %6494 = vmatpush.bf16.msra.mxu0 %v6483
        %6495 = vmatpush.bf16.msra.mxu0 %v6482
        %6496 = vmatpush.bf16.msra.mxu0 %v6481
        %6497 = vmatpush.bf16.msra.mxu0 %v6480
        %6498 = vmatpush.bf16.msra.mxu0 %v6479
        %6499 = vmatpush.bf16.msra.mxu0 %v6478
        %6500 = vmatpush.bf16.msra.mxu0 %v6477
        %6501 = vmatmul.bf16.gmra.mxu0 %v6268
        %v6502 = vpop.f32.mrf.mxu0
        %v6503 = vadd.f32 %v6443, %v6502
        %v6504 = vpop.f32.mrf.mxu0
        %v6505 = vadd.f32 %v6443, %v6504
        %6506 = vdwg.mxu0
        %v6507 = vmax.f32 %v6503, 0.0
        %v6508 = vmax.f32 %v6505, 0.0
        %v6509 = vpack.c.bf16 %v6422, %v6421
        %6510 = vmatpush.bf16.msra.mxu0 0
        %6511 = vmatpush.bf16.msra.mxu0 0
        %6512 = vmatpush.bf16.msra.mxu0 0
        %6513 = vmatpush.bf16.msra.mxu0 0
        %6514 = vmatpush.bf16.msra.mxu0 0
        %6515 = vmatpush.bf16.msra.mxu0 0
        %6516 = vmatpush.bf16.msra.mxu0 0
        %6517 = vmatpush.bf16.msra.mxu0 %v6509
        %6518 = vmatmul.bf16.gmra.mxu0 %v5293
        %v6519 = vpop.f32.mrf.mxu0
        %v6520 = vadd.f32 0.0, %v6519
        %v6521 = vpop.f32.mrf.mxu0
        %v6522 = vadd.f32 0.0, %v6521
        %6523 = vdwg.mxu0
        %v6524 = vld [vmem:[#allocation7] sm:$0xf]
        %v6525 = vld [vmem:[#allocation7 + $0x4] sm:$0xf]
        %v6526 = vld [vmem:[#allocation7 + $0x8] sm:$0xf]
        %v6527 = vld [vmem:[#allocation7 + $0xc] sm:$0xf]
        %v6528 = vld [vmem:[#allocation7 + $0x10] sm:$0xf]
        %v6529 = vld [vmem:[#allocation7 + $0x14] sm:$0xf]
        %v6530 = vld [vmem:[#allocation7 + $0x18] sm:$0xf]
        %v6531 = vld [vmem:[#allocation7 + $0x1c] sm:$0xf]
        %v6532 = vpack.c.bf16 %v6522, %v6520
        %6533 = vmatpush.bf16.msra.mxu0 0
        %6534 = vmatpush.bf16.msra.mxu0 0
        %6535 = vmatpush.bf16.msra.mxu0 0
        %6536 = vmatpush.bf16.msra.mxu0 0
        %6537 = vmatpush.bf16.msra.mxu0 0
        %6538 = vmatpush.bf16.msra.mxu0 0
        %6539 = vmatpush.bf16.msra.mxu0 0
        %6540 = vmatpush.bf16.msra.mxu0 %v6509
        %6541 = vmatmul.bf16.gmra.mxu0 %v5335
        %v6542 = vpop.f32.mrf.mxu0
        %v6543 = vadd.f32 0.0, %v6542
        %v6544 = vpop.f32.mrf.mxu0
        %v6545 = vadd.f32 0.0, %v6544
        %6546 = vdwg.mxu0
        %s6547 = scalar_lea.vmem [#allocation7], 32
        %v6548 = vld [vmem:[%s6547] sm:$0xf]
        %v6549 = vld [vmem:[%s6547 + $0x4] sm:$0xf]
        %v6550 = vld [vmem:[%s6547 + $0x8] sm:$0xf]
        %v6551 = vld [vmem:[%s6547 + $0xc] sm:$0xf]
        %v6552 = vld [vmem:[%s6547 + $0x10] sm:$0xf]
        %v6553 = vld [vmem:[%s6547 + $0x14] sm:$0xf]
        %v6554 = vld [vmem:[%s6547 + $0x18] sm:$0xf]
        %v6555 = vld [vmem:[%s6547 + $0x1c] sm:$0xf]
        %v6556 = vpack.c.bf16 %v6545, %v6543
        %v6565 = vunpack.c.l.b16 %v6548
        %v6566 = vunpack.c.l.b16 %v6549
        %v6567 = vunpack.c.l.b16 %v6550
        %v6568 = vunpack.c.l.b16 %v6551
        %v6569 = vunpack.c.l.b16 %v6552
        %v6570 = vunpack.c.l.b16 %v6553
        %v6571 = vunpack.c.l.b16 %v6554
        %v6572 = vunpack.c.l.b16 %v6555
        %v6573 = vpack.c.b16 %v6566, %v6565
        %v6574 = vpack.c.b16 %v6568, %v6567
        %v6575 = vpack.c.b16 %v6570, %v6569
        %v6576 = vpack.c.b16 %v6572, %v6571
        %v6582 = vsel %vm3139, %v6556, 0
        %6584 = vmatpush.bf16.msra.mxu0 0
        %6585 = vmatpush.bf16.msra.mxu0 0
        %6586 = vmatpush.bf16.msra.mxu0 0
        %6587 = vmatpush.bf16.msra.mxu0 0
        %6588 = vmatpush.bf16.msra.mxu0 %v6576
        %6589 = vmatpush.bf16.msra.mxu0 %v6575
        %6590 = vmatpush.bf16.msra.mxu0 %v6574
        %6591 = vmatpush.bf16.msra.mxu0 %v6573
        %6592 = vmatmul.bf16.gmra.mxu0 %v6582
        %v6593 = vpop.f32.mrf.mxu0
        %v6594 = vadd.f32 0.0, %v6593
        %v6595 = vpop.f32.mrf.mxu0
        %v6596 = vadd.f32 0.0, %v6595
        %6597 = vdwg.mxu0
        %v6606 = vunpack.c.l.b16 %v6524
        %v6607 = vunpack.c.l.b16 %v6525
        %v6608 = vunpack.c.l.b16 %v6526
        %v6609 = vunpack.c.l.b16 %v6527
        %v6610 = vunpack.c.l.b16 %v6528
        %v6611 = vunpack.c.l.b16 %v6529
        %v6612 = vunpack.c.l.b16 %v6530
        %v6613 = vunpack.c.l.b16 %v6531
        %v6614 = vpack.c.b16 %v6607, %v6606
        %v6615 = vpack.c.b16 %v6609, %v6608
        %v6616 = vpack.c.b16 %v6611, %v6610
        %v6617 = vpack.c.b16 %v6613, %v6612
        %v6623 = vsel %vm3139, %v6532, 0
        %6625 = vmatpush.bf16.msra.mxu0 0
        %6626 = vmatpush.bf16.msra.mxu0 0
        %6627 = vmatpush.bf16.msra.mxu0 0
        %6628 = vmatpush.bf16.msra.mxu0 0
        %6629 = vmatpush.bf16.msra.mxu0 %v6617
        %6630 = vmatpush.bf16.msra.mxu0 %v6616
        %6631 = vmatpush.bf16.msra.mxu0 %v6615
        %6632 = vmatpush.bf16.msra.mxu0 %v6614
        %6633 = vmatmul.bf16.gmra.mxu0 %v6623
        %v6634 = vpop.f32.mrf.mxu0
        %v6635 = vadd.f32 %v6594, %v6634
        %v6636 = vpop.f32.mrf.mxu0
        %v6637 = vadd.f32 %v6596, %v6636
        %6638 = vdwg.mxu0
        %6639 = vmatpush.bf16.msra.mxu0 0
        %6640 = vmatpush.bf16.msra.mxu0 0
        %6641 = vmatpush.bf16.msra.mxu0 0
        %6642 = vmatpush.bf16.msra.mxu0 0
        %6643 = vmatpush.bf16.msra.mxu0 0
        %6644 = vmatpush.bf16.msra.mxu0 0
        %6645 = vmatpush.bf16.msra.mxu0 0
        %6646 = vmatpush.bf16.msra.mxu0 %v6509
        %6647 = vmatmul.bf16.gmra.mxu0 %v5502
        %v6648 = vpop.f32.mrf.mxu0
        %v6649 = vadd.f32 0.0, %v6648
        %v6650 = vpop.f32.mrf.mxu0
        %v6651 = vadd.f32 0.0, %v6650
        %6652 = vdwg.mxu0
        %s6653 = scalar_lea.vmem [#allocation7], 64
        %v6654 = vld [vmem:[%s6653] sm:$0xf]
        %v6655 = vld [vmem:[%s6653 + $0x4] sm:$0xf]
        %v6656 = vld [vmem:[%s6653 + $0x8] sm:$0xf]
        %v6657 = vld [vmem:[%s6653 + $0xc] sm:$0xf]
        %v6658 = vld [vmem:[%s6653 + $0x10] sm:$0xf]
        %v6659 = vld [vmem:[%s6653 + $0x14] sm:$0xf]
        %v6660 = vld [vmem:[%s6653 + $0x18] sm:$0xf]
        %v6661 = vld [vmem:[%s6653 + $0x1c] sm:$0xf]
        %v6662 = vpack.c.bf16 %v6651, %v6649
        %v6671 = vunpack.c.l.b16 %v6654
        %v6672 = vunpack.c.l.b16 %v6655
        %v6673 = vunpack.c.l.b16 %v6656
        %v6674 = vunpack.c.l.b16 %v6657
        %v6675 = vunpack.c.l.b16 %v6658
        %v6676 = vunpack.c.l.b16 %v6659
        %v6677 = vunpack.c.l.b16 %v6660
        %v6678 = vunpack.c.l.b16 %v6661
        %v6679 = vpack.c.b16 %v6672, %v6671
        %v6680 = vpack.c.b16 %v6674, %v6673
        %v6681 = vpack.c.b16 %v6676, %v6675
        %v6682 = vpack.c.b16 %v6678, %v6677
        %v6688 = vsel %vm3139, %v6662, 0
        %6690 = vmatpush.bf16.msra.mxu0 0
        %6691 = vmatpush.bf16.msra.mxu0 0
        %6692 = vmatpush.bf16.msra.mxu0 0
        %6693 = vmatpush.bf16.msra.mxu0 0
        %6694 = vmatpush.bf16.msra.mxu0 %v6682
        %6695 = vmatpush.bf16.msra.mxu0 %v6681
        %6696 = vmatpush.bf16.msra.mxu0 %v6680
        %6697 = vmatpush.bf16.msra.mxu0 %v6679
        %6698 = vmatmul.bf16.gmra.mxu0 %v6688
        %v6699 = vpop.f32.mrf.mxu0
        %v6700 = vadd.f32 0.0, %v6699
        %v6701 = vpop.f32.mrf.mxu0
        %v6702 = vadd.f32 0.0, %v6701
        %6703 = vdwg.mxu0
        %v6704 = vadd.f32 %v6635, %v6700
        %v6705 = vadd.f32 %v6637, %v6702
        %6706 = vmatpush.bf16.msra.mxu0 0
        %6707 = vmatpush.bf16.msra.mxu0 0
        %6708 = vmatpush.bf16.msra.mxu0 0
        %6709 = vmatpush.bf16.msra.mxu0 0
        %6710 = vmatpush.bf16.msra.mxu0 0
        %6711 = vmatpush.bf16.msra.mxu0 0
        %6712 = vmatpush.bf16.msra.mxu0 0
        %6713 = vmatpush.bf16.msra.mxu0 %v6509
        %6714 = vmatmul.bf16.gmra.mxu0 %v5609
        %v6715 = vpop.f32.mrf.mxu0
        %v6716 = vadd.f32 0.0, %v6715
        %v6717 = vpop.f32.mrf.mxu0
        %v6718 = vadd.f32 0.0, %v6717
        %6719 = vdwg.mxu0
        %s6720 = scalar_lea.vmem [#allocation7], 96
        %v6721 = vld [vmem:[%s6720] sm:$0xf]
        %v6722 = vld [vmem:[%s6720 + $0x4] sm:$0xf]
        %v6723 = vld [vmem:[%s6720 + $0x8] sm:$0xf]
        %v6724 = vld [vmem:[%s6720 + $0xc] sm:$0xf]
        %v6725 = vld [vmem:[%s6720 + $0x10] sm:$0xf]
        %v6726 = vld [vmem:[%s6720 + $0x14] sm:$0xf]
        %v6727 = vld [vmem:[%s6720 + $0x18] sm:$0xf]
        %v6728 = vld [vmem:[%s6720 + $0x1c] sm:$0xf]
        %v6729 = vpack.c.bf16 %v6718, %v6716
        %v6738 = vunpack.c.l.b16 %v6721
        %v6739 = vunpack.c.l.b16 %v6722
        %v6740 = vunpack.c.l.b16 %v6723
        %v6741 = vunpack.c.l.b16 %v6724
        %v6742 = vunpack.c.l.b16 %v6725
        %v6743 = vunpack.c.l.b16 %v6726
        %v6744 = vunpack.c.l.b16 %v6727
        %v6745 = vunpack.c.l.b16 %v6728
        %v6746 = vpack.c.b16 %v6739, %v6738
        %v6747 = vpack.c.b16 %v6741, %v6740
        %v6748 = vpack.c.b16 %v6743, %v6742
        %v6749 = vpack.c.b16 %v6745, %v6744
        %v6755 = vsel %vm3139, %v6729, 0
        %6757 = vmatpush.bf16.msra.mxu0 0
        %6758 = vmatpush.bf16.msra.mxu0 0
        %6759 = vmatpush.bf16.msra.mxu0 0
        %6760 = vmatpush.bf16.msra.mxu0 0
        %6761 = vmatpush.bf16.msra.mxu0 %v6749
        %6762 = vmatpush.bf16.msra.mxu0 %v6748
        %6763 = vmatpush.bf16.msra.mxu0 %v6747
        %6764 = vmatpush.bf16.msra.mxu0 %v6746
        %6765 = vmatmul.bf16.gmra.mxu0 %v6755
        %v6766 = vpop.f32.mrf.mxu0
        %v6767 = vadd.f32 0.0, %v6766
        %v6768 = vpop.f32.mrf.mxu0
        %v6769 = vadd.f32 0.0, %v6768
        %6770 = vdwg.mxu0
        %v6771 = vadd.f32 %v6704, %v6767
        %v6772 = vadd.f32 %v6705, %v6769
        %6773 = vmatpush.bf16.msra.mxu0 0
        %6774 = vmatpush.bf16.msra.mxu0 0
        %6775 = vmatpush.bf16.msra.mxu0 0
        %6776 = vmatpush.bf16.msra.mxu0 0
        %6777 = vmatpush.bf16.msra.mxu0 0
        %6778 = vmatpush.bf16.msra.mxu0 0
        %6779 = vmatpush.bf16.msra.mxu0 0
        %6780 = vmatpush.bf16.msra.mxu0 %v6509
        %6781 = vmatmul.bf16.gmra.mxu0 %v5716
        %v6782 = vpop.f32.mrf.mxu0
        %v6783 = vadd.f32 0.0, %v6782
        %v6784 = vpop.f32.mrf.mxu0
        %v6785 = vadd.f32 0.0, %v6784
        %6786 = vdwg.mxu0
        %s6787 = scalar_lea.vmem [#allocation7], 128
        %v6788 = vld [vmem:[%s6787] sm:$0xf]
        %v6789 = vld [vmem:[%s6787 + $0x4] sm:$0xf]
        %v6790 = vld [vmem:[%s6787 + $0x8] sm:$0xf]
        %v6791 = vld [vmem:[%s6787 + $0xc] sm:$0xf]
        %v6792 = vld [vmem:[%s6787 + $0x10] sm:$0xf]
        %v6793 = vld [vmem:[%s6787 + $0x14] sm:$0xf]
        %v6794 = vld [vmem:[%s6787 + $0x18] sm:$0xf]
        %v6795 = vld [vmem:[%s6787 + $0x1c] sm:$0xf]
        %v6796 = vpack.c.bf16 %v6785, %v6783
        %v6805 = vunpack.c.l.b16 %v6788
        %v6806 = vunpack.c.l.b16 %v6789
        %v6807 = vunpack.c.l.b16 %v6790
        %v6808 = vunpack.c.l.b16 %v6791
        %v6809 = vunpack.c.l.b16 %v6792
        %v6810 = vunpack.c.l.b16 %v6793
        %v6811 = vunpack.c.l.b16 %v6794
        %v6812 = vunpack.c.l.b16 %v6795
        %v6813 = vpack.c.b16 %v6806, %v6805
        %v6814 = vpack.c.b16 %v6808, %v6807
        %v6815 = vpack.c.b16 %v6810, %v6809
        %v6816 = vpack.c.b16 %v6812, %v6811
        %v6822 = vsel %vm3139, %v6796, 0
        %6824 = vmatpush.bf16.msra.mxu0 0
        %6825 = vmatpush.bf16.msra.mxu0 0
        %6826 = vmatpush.bf16.msra.mxu0 0
        %6827 = vmatpush.bf16.msra.mxu0 0
        %6828 = vmatpush.bf16.msra.mxu0 %v6816
        %6829 = vmatpush.bf16.msra.mxu0 %v6815
        %6830 = vmatpush.bf16.msra.mxu0 %v6814
        %6831 = vmatpush.bf16.msra.mxu0 %v6813
        %6832 = vmatmul.bf16.gmra.mxu0 %v6822
        %v6833 = vpop.f32.mrf.mxu0
        %v6834 = vadd.f32 0.0, %v6833
        %v6835 = vpop.f32.mrf.mxu0
        %v6836 = vadd.f32 0.0, %v6835
        %6837 = vdwg.mxu0
        %v6838 = vadd.f32 %v6771, %v6834
        %v6839 = vadd.f32 %v6772, %v6836
        %6840 = vmatpush.bf16.msra.mxu0 0
        %6841 = vmatpush.bf16.msra.mxu0 0
        %6842 = vmatpush.bf16.msra.mxu0 0
        %6843 = vmatpush.bf16.msra.mxu0 0
        %6844 = vmatpush.bf16.msra.mxu0 0
        %6845 = vmatpush.bf16.msra.mxu0 0
        %6846 = vmatpush.bf16.msra.mxu0 0
        %6847 = vmatpush.bf16.msra.mxu0 %v6509
        %6848 = vmatmul.bf16.gmra.mxu0 %v5823
        %v6849 = vpop.f32.mrf.mxu0
        %v6850 = vadd.f32 0.0, %v6849
        %v6851 = vpop.f32.mrf.mxu0
        %v6852 = vadd.f32 0.0, %v6851
        %6853 = vdwg.mxu0
        %s6854 = scalar_lea.vmem [#allocation7], 160
        %v6855 = vld [vmem:[%s6854] sm:$0xf]
        %v6856 = vld [vmem:[%s6854 + $0x4] sm:$0xf]
        %v6857 = vld [vmem:[%s6854 + $0x8] sm:$0xf]
        %v6858 = vld [vmem:[%s6854 + $0xc] sm:$0xf]
        %v6859 = vld [vmem:[%s6854 + $0x10] sm:$0xf]
        %v6860 = vld [vmem:[%s6854 + $0x14] sm:$0xf]
        %v6861 = vld [vmem:[%s6854 + $0x18] sm:$0xf]
        %v6862 = vld [vmem:[%s6854 + $0x1c] sm:$0xf]
        %v6863 = vpack.c.bf16 %v6852, %v6850
        %v6872 = vunpack.c.l.b16 %v6855
        %v6873 = vunpack.c.l.b16 %v6856
        %v6874 = vunpack.c.l.b16 %v6857
        %v6875 = vunpack.c.l.b16 %v6858
        %v6876 = vunpack.c.l.b16 %v6859
        %v6877 = vunpack.c.l.b16 %v6860
        %v6878 = vunpack.c.l.b16 %v6861
        %v6879 = vunpack.c.l.b16 %v6862
        %v6880 = vpack.c.b16 %v6873, %v6872
        %v6881 = vpack.c.b16 %v6875, %v6874
        %v6882 = vpack.c.b16 %v6877, %v6876
        %v6883 = vpack.c.b16 %v6879, %v6878
        %v6889 = vsel %vm3139, %v6863, 0
        %6891 = vmatpush.bf16.msra.mxu0 0
        %6892 = vmatpush.bf16.msra.mxu0 0
        %6893 = vmatpush.bf16.msra.mxu0 0
        %6894 = vmatpush.bf16.msra.mxu0 0
        %6895 = vmatpush.bf16.msra.mxu0 %v6883
        %6896 = vmatpush.bf16.msra.mxu0 %v6882
        %6897 = vmatpush.bf16.msra.mxu0 %v6881
        %6898 = vmatpush.bf16.msra.mxu0 %v6880
        %6899 = vmatmul.bf16.gmra.mxu0 %v6889
        %v6900 = vpop.f32.mrf.mxu0
        %v6901 = vadd.f32 0.0, %v6900
        %v6902 = vpop.f32.mrf.mxu0
        %v6903 = vadd.f32 0.0, %v6902
        %6904 = vdwg.mxu0
        %v6905 = vadd.f32 %v6838, %v6901
        %v6906 = vadd.f32 %v6839, %v6903
        %6907 = vmatpush.bf16.msra.mxu0 0
        %6908 = vmatpush.bf16.msra.mxu0 0
        %6909 = vmatpush.bf16.msra.mxu0 0
        %6910 = vmatpush.bf16.msra.mxu0 0
        %6911 = vmatpush.bf16.msra.mxu0 0
        %6912 = vmatpush.bf16.msra.mxu0 0
        %6913 = vmatpush.bf16.msra.mxu0 0
        %6914 = vmatpush.bf16.msra.mxu0 %v6509
        %6915 = vmatmul.bf16.gmra.mxu0 %v5930
        %v6916 = vpop.f32.mrf.mxu0
        %v6917 = vadd.f32 0.0, %v6916
        %v6918 = vpop.f32.mrf.mxu0
        %v6919 = vadd.f32 0.0, %v6918
        %6920 = vdwg.mxu0
        %s6921 = scalar_lea.vmem [#allocation7], 192
        %v6922 = vld [vmem:[%s6921] sm:$0xf]
        %v6923 = vld [vmem:[%s6921 + $0x4] sm:$0xf]
        %v6924 = vld [vmem:[%s6921 + $0x8] sm:$0xf]
        %v6925 = vld [vmem:[%s6921 + $0xc] sm:$0xf]
        %v6926 = vld [vmem:[%s6921 + $0x10] sm:$0xf]
        %v6927 = vld [vmem:[%s6921 + $0x14] sm:$0xf]
        %v6928 = vld [vmem:[%s6921 + $0x18] sm:$0xf]
        %v6929 = vld [vmem:[%s6921 + $0x1c] sm:$0xf]
        %v6930 = vpack.c.bf16 %v6919, %v6917
        %v6939 = vunpack.c.l.b16 %v6922
        %v6940 = vunpack.c.l.b16 %v6923
        %v6941 = vunpack.c.l.b16 %v6924
        %v6942 = vunpack.c.l.b16 %v6925
        %v6943 = vunpack.c.l.b16 %v6926
        %v6944 = vunpack.c.l.b16 %v6927
        %v6945 = vunpack.c.l.b16 %v6928
        %v6946 = vunpack.c.l.b16 %v6929
        %v6947 = vpack.c.b16 %v6940, %v6939
        %v6948 = vpack.c.b16 %v6942, %v6941
        %v6949 = vpack.c.b16 %v6944, %v6943
        %v6950 = vpack.c.b16 %v6946, %v6945
        %v6956 = vsel %vm3139, %v6930, 0
        %6958 = vmatpush.bf16.msra.mxu0 0
        %6959 = vmatpush.bf16.msra.mxu0 0
        %6960 = vmatpush.bf16.msra.mxu0 0
        %6961 = vmatpush.bf16.msra.mxu0 0
        %6962 = vmatpush.bf16.msra.mxu0 %v6950
        %6963 = vmatpush.bf16.msra.mxu0 %v6949
        %6964 = vmatpush.bf16.msra.mxu0 %v6948
        %6965 = vmatpush.bf16.msra.mxu0 %v6947
        %6966 = vmatmul.bf16.gmra.mxu0 %v6956
        %v6967 = vpop.f32.mrf.mxu0
        %v6968 = vadd.f32 0.0, %v6967
        %v6969 = vpop.f32.mrf.mxu0
        %v6970 = vadd.f32 0.0, %v6969
        %6971 = vdwg.mxu0
        %v6972 = vadd.f32 %v6905, %v6968
        %v6973 = vadd.f32 %v6906, %v6970
        %6974 = vmatpush.bf16.msra.mxu0 0
        %6975 = vmatpush.bf16.msra.mxu0 0
        %6976 = vmatpush.bf16.msra.mxu0 0
        %6977 = vmatpush.bf16.msra.mxu0 0
        %6978 = vmatpush.bf16.msra.mxu0 0
        %6979 = vmatpush.bf16.msra.mxu0 0
        %6980 = vmatpush.bf16.msra.mxu0 0
        %6981 = vmatpush.bf16.msra.mxu0 %v6509
        %6982 = vmatmul.bf16.gmra.mxu0 %v6037
        %v6983 = vpop.f32.mrf.mxu0
        %v6984 = vadd.f32 0.0, %v6983
        %v6985 = vpop.f32.mrf.mxu0
        %v6986 = vadd.f32 0.0, %v6985
        %6987 = vdwg.mxu0
        %s6988 = scalar_lea.vmem [#allocation7], 224
        %v6989 = vld [vmem:[%s6988] sm:$0xf]
        %v6990 = vld [vmem:[%s6988 + $0x4] sm:$0xf]
        %v6991 = vld [vmem:[%s6988 + $0x8] sm:$0xf]
        %v6992 = vld [vmem:[%s6988 + $0xc] sm:$0xf]
        %v6993 = vld [vmem:[%s6988 + $0x10] sm:$0xf]
        %v6994 = vld [vmem:[%s6988 + $0x14] sm:$0xf]
        %v6995 = vld [vmem:[%s6988 + $0x18] sm:$0xf]
        %v6996 = vld [vmem:[%s6988 + $0x1c] sm:$0xf]
        %v6997 = vpack.c.bf16 %v6986, %v6984
        %v7006 = vunpack.c.l.b16 %v6989
        %v7007 = vunpack.c.l.b16 %v6990
        %v7008 = vunpack.c.l.b16 %v6991
        %v7009 = vunpack.c.l.b16 %v6992
        %v7010 = vunpack.c.l.b16 %v6993
        %v7011 = vunpack.c.l.b16 %v6994
        %v7012 = vunpack.c.l.b16 %v6995
        %v7013 = vunpack.c.l.b16 %v6996
        %v7014 = vpack.c.b16 %v7007, %v7006
        %v7015 = vpack.c.b16 %v7009, %v7008
        %v7016 = vpack.c.b16 %v7011, %v7010
        %v7017 = vpack.c.b16 %v7013, %v7012
        %v7023 = vsel %vm3139, %v6997, 0
        %7025 = vmatpush.bf16.msra.mxu0 0
        %7026 = vmatpush.bf16.msra.mxu0 0
        %7027 = vmatpush.bf16.msra.mxu0 0
        %7028 = vmatpush.bf16.msra.mxu0 0
        %7029 = vmatpush.bf16.msra.mxu0 %v7017
        %7030 = vmatpush.bf16.msra.mxu0 %v7016
        %7031 = vmatpush.bf16.msra.mxu0 %v7015
        %7032 = vmatpush.bf16.msra.mxu0 %v7014
        %7033 = vmatmul.bf16.gmra.mxu0 %v7023
        %v7034 = vpop.f32.mrf.mxu0
        %v7035 = vadd.f32 0.0, %v7034
        %v7036 = vpop.f32.mrf.mxu0
        %v7037 = vadd.f32 0.0, %v7036
        %7038 = vdwg.mxu0
        %v7039 = vadd.f32 %v6972, %v7035
        %v7040 = vadd.f32 %v6973, %v7037
        %7041 = vmatpush.bf16.msra.mxu0 0
        %7042 = vmatpush.bf16.msra.mxu0 0
        %7043 = vmatpush.bf16.msra.mxu0 0
        %7044 = vmatpush.bf16.msra.mxu0 0
        %7045 = vmatpush.bf16.msra.mxu0 0
        %7046 = vmatpush.bf16.msra.mxu0 0
        %7047 = vmatpush.bf16.msra.mxu0 0
        %7048 = vmatpush.bf16.msra.mxu0 %v6509
        %7049 = vmatmul.bf16.gmra.mxu0 %v6144
        %v7050 = vpop.f32.mrf.mxu0
        %v7051 = vadd.f32 0.0, %v7050
        %v7052 = vpop.f32.mrf.mxu0
        %v7053 = vadd.f32 0.0, %v7052
        %7054 = vdwg.mxu0
        %s7055 = scalar_lea.vmem [#allocation7], 256
        %v7056 = vld [vmem:[%s7055] sm:$0xf]
        %v7057 = vld [vmem:[%s7055 + $0x4] sm:$0xf]
        %v7058 = vld [vmem:[%s7055 + $0x8] sm:$0xf]
        %v7059 = vld [vmem:[%s7055 + $0xc] sm:$0xf]
        %v7060 = vld [vmem:[%s7055 + $0x10] sm:$0xf]
        %v7061 = vld [vmem:[%s7055 + $0x14] sm:$0xf]
        %v7062 = vld [vmem:[%s7055 + $0x18] sm:$0xf]
        %v7063 = vld [vmem:[%s7055 + $0x1c] sm:$0xf]
        %v7064 = vpack.c.bf16 %v7053, %v7051
        %v7073 = vunpack.c.l.b16 %v7056
        %v7074 = vunpack.c.l.b16 %v7057
        %v7075 = vunpack.c.l.b16 %v7058
        %v7076 = vunpack.c.l.b16 %v7059
        %v7077 = vunpack.c.l.b16 %v7060
        %v7078 = vunpack.c.l.b16 %v7061
        %v7079 = vunpack.c.l.b16 %v7062
        %v7080 = vunpack.c.l.b16 %v7063
        %v7081 = vpack.c.b16 %v7074, %v7073
        %v7082 = vpack.c.b16 %v7076, %v7075
        %v7083 = vpack.c.b16 %v7078, %v7077
        %v7084 = vpack.c.b16 %v7080, %v7079
        %v7090 = vsel %vm3139, %v7064, 0
        %7092 = vmatpush.bf16.msra.mxu0 0
        %7093 = vmatpush.bf16.msra.mxu0 0
        %7094 = vmatpush.bf16.msra.mxu0 0
        %7095 = vmatpush.bf16.msra.mxu0 0
        %7096 = vmatpush.bf16.msra.mxu0 %v7084
        %7097 = vmatpush.bf16.msra.mxu0 %v7083
        %7098 = vmatpush.bf16.msra.mxu0 %v7082
        %7099 = vmatpush.bf16.msra.mxu0 %v7081
        %7100 = vmatmul.bf16.gmra.mxu0 %v7090
        %v7101 = vpop.f32.mrf.mxu0
        %v7102 = vadd.f32 0.0, %v7101
        %v7103 = vpop.f32.mrf.mxu0
        %v7104 = vadd.f32 0.0, %v7103
        %7105 = vdwg.mxu0
        %v7106 = vadd.f32 %v7039, %v7102
        %v7107 = vadd.f32 %v7040, %v7104
        %v7108 = vld [vmem:[%s45] sm:$0x1]
        %v7110 = vperm.slane %v7108, 0
        %v7112 = vadd.f32 %v7106, %v7110
        %v7113 = vadd.f32 %v7107, %v7110
        %v7114 = vmax.f32 %v7112, 0.0
        %v7115 = vmax.f32 %v7113, 0.0
        %v7116 = vpack.c.bf16 %v6508, %v6507
        %7117 = vmatpush.bf16.msra.mxu0 0
        %7118 = vmatpush.bf16.msra.mxu0 0
        %7119 = vmatpush.bf16.msra.mxu0 0
        %7120 = vmatpush.bf16.msra.mxu0 0
        %7121 = vmatpush.bf16.msra.mxu0 0
        %7122 = vmatpush.bf16.msra.mxu0 0
        %7123 = vmatpush.bf16.msra.mxu0 0
        %7124 = vmatpush.bf16.msra.mxu0 %v7116
        %7125 = vmatmul.bf16.gmra.mxu0 %v5293
        %v7126 = vpop.f32.mrf.mxu0
        %v7127 = vadd.f32 0.0, %v7126
        %v7128 = vpop.f32.mrf.mxu0
        %v7129 = vadd.f32 0.0, %v7128
        %7130 = vdwg.mxu0
        %v7131 = vld [vmem:[#allocation8] sm:$0xf]
        %v7132 = vld [vmem:[#allocation8 + $0x4] sm:$0xf]
        %v7133 = vld [vmem:[#allocation8 + $0x8] sm:$0xf]
        %v7134 = vld [vmem:[#allocation8 + $0xc] sm:$0xf]
        %v7135 = vld [vmem:[#allocation8 + $0x10] sm:$0xf]
        %v7136 = vld [vmem:[#allocation8 + $0x14] sm:$0xf]
        %v7137 = vld [vmem:[#allocation8 + $0x18] sm:$0xf]
        %v7138 = vld [vmem:[#allocation8 + $0x1c] sm:$0xf]
        %v7139 = vpack.c.bf16 %v7129, %v7127
        %7140 = vmatpush.bf16.msra.mxu0 0
        %7141 = vmatpush.bf16.msra.mxu0 0
        %7142 = vmatpush.bf16.msra.mxu0 0
        %7143 = vmatpush.bf16.msra.mxu0 0
        %7144 = vmatpush.bf16.msra.mxu0 0
        %7145 = vmatpush.bf16.msra.mxu0 0
        %7146 = vmatpush.bf16.msra.mxu0 0
        %7147 = vmatpush.bf16.msra.mxu0 %v7116
        %7148 = vmatmul.bf16.gmra.mxu0 %v5335
        %v7149 = vpop.f32.mrf.mxu0
        %v7150 = vadd.f32 0.0, %v7149
        %v7151 = vpop.f32.mrf.mxu0
        %v7152 = vadd.f32 0.0, %v7151
        %7153 = vdwg.mxu0
        %s7154 = scalar_lea.vmem [#allocation8], 32
        %v7155 = vld [vmem:[%s7154] sm:$0xf]
        %v7156 = vld [vmem:[%s7154 + $0x4] sm:$0xf]
        %v7157 = vld [vmem:[%s7154 + $0x8] sm:$0xf]
        %v7158 = vld [vmem:[%s7154 + $0xc] sm:$0xf]
        %v7159 = vld [vmem:[%s7154 + $0x10] sm:$0xf]
        %v7160 = vld [vmem:[%s7154 + $0x14] sm:$0xf]
        %v7161 = vld [vmem:[%s7154 + $0x18] sm:$0xf]
        %v7162 = vld [vmem:[%s7154 + $0x1c] sm:$0xf]
        %v7163 = vpack.c.bf16 %v7152, %v7150
        %v7172 = vunpack.c.l.b16 %v7155
        %v7173 = vunpack.c.l.b16 %v7156
        %v7174 = vunpack.c.l.b16 %v7157
        %v7175 = vunpack.c.l.b16 %v7158
        %v7176 = vunpack.c.l.b16 %v7159
        %v7177 = vunpack.c.l.b16 %v7160
        %v7178 = vunpack.c.l.b16 %v7161
        %v7179 = vunpack.c.l.b16 %v7162
        %v7180 = vpack.c.b16 %v7173, %v7172
        %v7181 = vpack.c.b16 %v7175, %v7174
        %v7182 = vpack.c.b16 %v7177, %v7176
        %v7183 = vpack.c.b16 %v7179, %v7178
        %v7189 = vsel %vm3139, %v7163, 0
        %7191 = vmatpush.bf16.msra.mxu0 0
        %7192 = vmatpush.bf16.msra.mxu0 0
        %7193 = vmatpush.bf16.msra.mxu0 0
        %7194 = vmatpush.bf16.msra.mxu0 0
        %7195 = vmatpush.bf16.msra.mxu0 %v7183
        %7196 = vmatpush.bf16.msra.mxu0 %v7182
        %7197 = vmatpush.bf16.msra.mxu0 %v7181
        %7198 = vmatpush.bf16.msra.mxu0 %v7180
        %7199 = vmatmul.bf16.gmra.mxu0 %v7189
        %v7200 = vpop.f32.mrf.mxu0
        %v7201 = vadd.f32 0.0, %v7200
        %v7202 = vpop.f32.mrf.mxu0
        %v7203 = vadd.f32 0.0, %v7202
        %7204 = vdwg.mxu0
        %v7213 = vunpack.c.l.b16 %v7131
        %v7214 = vunpack.c.l.b16 %v7132
        %v7215 = vunpack.c.l.b16 %v7133
        %v7216 = vunpack.c.l.b16 %v7134
        %v7217 = vunpack.c.l.b16 %v7135
        %v7218 = vunpack.c.l.b16 %v7136
        %v7219 = vunpack.c.l.b16 %v7137
        %v7220 = vunpack.c.l.b16 %v7138
        %v7221 = vpack.c.b16 %v7214, %v7213
        %v7222 = vpack.c.b16 %v7216, %v7215
        %v7223 = vpack.c.b16 %v7218, %v7217
        %v7224 = vpack.c.b16 %v7220, %v7219
        %v7230 = vsel %vm3139, %v7139, 0
        %7232 = vmatpush.bf16.msra.mxu0 0
        %7233 = vmatpush.bf16.msra.mxu0 0
        %7234 = vmatpush.bf16.msra.mxu0 0
        %7235 = vmatpush.bf16.msra.mxu0 0
        %7236 = vmatpush.bf16.msra.mxu0 %v7224
        %7237 = vmatpush.bf16.msra.mxu0 %v7223
        %7238 = vmatpush.bf16.msra.mxu0 %v7222
        %7239 = vmatpush.bf16.msra.mxu0 %v7221
        %7240 = vmatmul.bf16.gmra.mxu0 %v7230
        %v7241 = vpop.f32.mrf.mxu0
        %v7242 = vadd.f32 %v7201, %v7241
        %v7243 = vpop.f32.mrf.mxu0
        %v7244 = vadd.f32 %v7203, %v7243
        %7245 = vdwg.mxu0
        %7246 = vmatpush.bf16.msra.mxu0 0
        %7247 = vmatpush.bf16.msra.mxu0 0
        %7248 = vmatpush.bf16.msra.mxu0 0
        %7249 = vmatpush.bf16.msra.mxu0 0
        %7250 = vmatpush.bf16.msra.mxu0 0
        %7251 = vmatpush.bf16.msra.mxu0 0
        %7252 = vmatpush.bf16.msra.mxu0 0
        %7253 = vmatpush.bf16.msra.mxu0 %v7116
        %7254 = vmatmul.bf16.gmra.mxu0 %v5502
        %v7255 = vpop.f32.mrf.mxu0
        %v7256 = vadd.f32 0.0, %v7255
        %v7257 = vpop.f32.mrf.mxu0
        %v7258 = vadd.f32 0.0, %v7257
        %7259 = vdwg.mxu0
        %s7260 = scalar_lea.vmem [#allocation8], 64
        %v7261 = vld [vmem:[%s7260] sm:$0xf]
        %v7262 = vld [vmem:[%s7260 + $0x4] sm:$0xf]
        %v7263 = vld [vmem:[%s7260 + $0x8] sm:$0xf]
        %v7264 = vld [vmem:[%s7260 + $0xc] sm:$0xf]
        %v7265 = vld [vmem:[%s7260 + $0x10] sm:$0xf]
        %v7266 = vld [vmem:[%s7260 + $0x14] sm:$0xf]
        %v7267 = vld [vmem:[%s7260 + $0x18] sm:$0xf]
        %v7268 = vld [vmem:[%s7260 + $0x1c] sm:$0xf]
        %v7269 = vpack.c.bf16 %v7258, %v7256
        %v7278 = vunpack.c.l.b16 %v7261
        %v7279 = vunpack.c.l.b16 %v7262
        %v7280 = vunpack.c.l.b16 %v7263
        %v7281 = vunpack.c.l.b16 %v7264
        %v7282 = vunpack.c.l.b16 %v7265
        %v7283 = vunpack.c.l.b16 %v7266
        %v7284 = vunpack.c.l.b16 %v7267
        %v7285 = vunpack.c.l.b16 %v7268
        %v7286 = vpack.c.b16 %v7279, %v7278
        %v7287 = vpack.c.b16 %v7281, %v7280
        %v7288 = vpack.c.b16 %v7283, %v7282
        %v7289 = vpack.c.b16 %v7285, %v7284
        %v7295 = vsel %vm3139, %v7269, 0
        %7297 = vmatpush.bf16.msra.mxu0 0
        %7298 = vmatpush.bf16.msra.mxu0 0
        %7299 = vmatpush.bf16.msra.mxu0 0
        %7300 = vmatpush.bf16.msra.mxu0 0
        %7301 = vmatpush.bf16.msra.mxu0 %v7289
        %7302 = vmatpush.bf16.msra.mxu0 %v7288
        %7303 = vmatpush.bf16.msra.mxu0 %v7287
        %7304 = vmatpush.bf16.msra.mxu0 %v7286
        %7305 = vmatmul.bf16.gmra.mxu0 %v7295
        %v7306 = vpop.f32.mrf.mxu0
        %v7307 = vadd.f32 0.0, %v7306
        %v7308 = vpop.f32.mrf.mxu0
        %v7309 = vadd.f32 0.0, %v7308
        %7310 = vdwg.mxu0
        %v7311 = vadd.f32 %v7242, %v7307
        %v7312 = vadd.f32 %v7244, %v7309
        %7313 = vmatpush.bf16.msra.mxu0 0
        %7314 = vmatpush.bf16.msra.mxu0 0
        %7315 = vmatpush.bf16.msra.mxu0 0
        %7316 = vmatpush.bf16.msra.mxu0 0
        %7317 = vmatpush.bf16.msra.mxu0 0
        %7318 = vmatpush.bf16.msra.mxu0 0
        %7319 = vmatpush.bf16.msra.mxu0 0
        %7320 = vmatpush.bf16.msra.mxu0 %v7116
        %7321 = vmatmul.bf16.gmra.mxu0 %v5609
        %v7322 = vpop.f32.mrf.mxu0
        %v7323 = vadd.f32 0.0, %v7322
        %v7324 = vpop.f32.mrf.mxu0
        %v7325 = vadd.f32 0.0, %v7324
        %7326 = vdwg.mxu0
        %s7327 = scalar_lea.vmem [#allocation8], 96
        %v7328 = vld [vmem:[%s7327] sm:$0xf]
        %v7329 = vld [vmem:[%s7327 + $0x4] sm:$0xf]
        %v7330 = vld [vmem:[%s7327 + $0x8] sm:$0xf]
        %v7331 = vld [vmem:[%s7327 + $0xc] sm:$0xf]
        %v7332 = vld [vmem:[%s7327 + $0x10] sm:$0xf]
        %v7333 = vld [vmem:[%s7327 + $0x14] sm:$0xf]
        %v7334 = vld [vmem:[%s7327 + $0x18] sm:$0xf]
        %v7335 = vld [vmem:[%s7327 + $0x1c] sm:$0xf]
        %v7336 = vpack.c.bf16 %v7325, %v7323
        %v7345 = vunpack.c.l.b16 %v7328
        %v7346 = vunpack.c.l.b16 %v7329
        %v7347 = vunpack.c.l.b16 %v7330
        %v7348 = vunpack.c.l.b16 %v7331
        %v7349 = vunpack.c.l.b16 %v7332
        %v7350 = vunpack.c.l.b16 %v7333
        %v7351 = vunpack.c.l.b16 %v7334
        %v7352 = vunpack.c.l.b16 %v7335
        %v7353 = vpack.c.b16 %v7346, %v7345
        %v7354 = vpack.c.b16 %v7348, %v7347
        %v7355 = vpack.c.b16 %v7350, %v7349
        %v7356 = vpack.c.b16 %v7352, %v7351
        %v7362 = vsel %vm3139, %v7336, 0
        %7364 = vmatpush.bf16.msra.mxu0 0
        %7365 = vmatpush.bf16.msra.mxu0 0
        %7366 = vmatpush.bf16.msra.mxu0 0
        %7367 = vmatpush.bf16.msra.mxu0 0
        %7368 = vmatpush.bf16.msra.mxu0 %v7356
        %7369 = vmatpush.bf16.msra.mxu0 %v7355
        %7370 = vmatpush.bf16.msra.mxu0 %v7354
        %7371 = vmatpush.bf16.msra.mxu0 %v7353
        %7372 = vmatmul.bf16.gmra.mxu0 %v7362
        %v7373 = vpop.f32.mrf.mxu0
        %v7374 = vadd.f32 0.0, %v7373
        %v7375 = vpop.f32.mrf.mxu0
        %v7376 = vadd.f32 0.0, %v7375
        %7377 = vdwg.mxu0
        %v7378 = vadd.f32 %v7311, %v7374
        %v7379 = vadd.f32 %v7312, %v7376
        %7380 = vmatpush.bf16.msra.mxu0 0
        %7381 = vmatpush.bf16.msra.mxu0 0
        %7382 = vmatpush.bf16.msra.mxu0 0
        %7383 = vmatpush.bf16.msra.mxu0 0
        %7384 = vmatpush.bf16.msra.mxu0 0
        %7385 = vmatpush.bf16.msra.mxu0 0
        %7386 = vmatpush.bf16.msra.mxu0 0
        %7387 = vmatpush.bf16.msra.mxu0 %v7116
        %7388 = vmatmul.bf16.gmra.mxu0 %v5716
        %v7389 = vpop.f32.mrf.mxu0
        %v7390 = vadd.f32 0.0, %v7389
        %v7391 = vpop.f32.mrf.mxu0
        %v7392 = vadd.f32 0.0, %v7391
        %7393 = vdwg.mxu0
        %s7394 = scalar_lea.vmem [#allocation8], 128
        %v7395 = vld [vmem:[%s7394] sm:$0xf]
        %v7396 = vld [vmem:[%s7394 + $0x4] sm:$0xf]
        %v7397 = vld [vmem:[%s7394 + $0x8] sm:$0xf]
        %v7398 = vld [vmem:[%s7394 + $0xc] sm:$0xf]
        %v7399 = vld [vmem:[%s7394 + $0x10] sm:$0xf]
        %v7400 = vld [vmem:[%s7394 + $0x14] sm:$0xf]
        %v7401 = vld [vmem:[%s7394 + $0x18] sm:$0xf]
        %v7402 = vld [vmem:[%s7394 + $0x1c] sm:$0xf]
        %v7403 = vpack.c.bf16 %v7392, %v7390
        %v7412 = vunpack.c.l.b16 %v7395
        %v7413 = vunpack.c.l.b16 %v7396
        %v7414 = vunpack.c.l.b16 %v7397
        %v7415 = vunpack.c.l.b16 %v7398
        %v7416 = vunpack.c.l.b16 %v7399
        %v7417 = vunpack.c.l.b16 %v7400
        %v7418 = vunpack.c.l.b16 %v7401
        %v7419 = vunpack.c.l.b16 %v7402
        %v7420 = vpack.c.b16 %v7413, %v7412
        %v7421 = vpack.c.b16 %v7415, %v7414
        %v7422 = vpack.c.b16 %v7417, %v7416
        %v7423 = vpack.c.b16 %v7419, %v7418
        %v7429 = vsel %vm3139, %v7403, 0
        %7431 = vmatpush.bf16.msra.mxu0 0
        %7432 = vmatpush.bf16.msra.mxu0 0
        %7433 = vmatpush.bf16.msra.mxu0 0
        %7434 = vmatpush.bf16.msra.mxu0 0
        %7435 = vmatpush.bf16.msra.mxu0 %v7423
        %7436 = vmatpush.bf16.msra.mxu0 %v7422
        %7437 = vmatpush.bf16.msra.mxu0 %v7421
        %7438 = vmatpush.bf16.msra.mxu0 %v7420
        %7439 = vmatmul.bf16.gmra.mxu0 %v7429
        %v7440 = vpop.f32.mrf.mxu0
        %v7441 = vadd.f32 0.0, %v7440
        %v7442 = vpop.f32.mrf.mxu0
        %v7443 = vadd.f32 0.0, %v7442
        %7444 = vdwg.mxu0
        %v7445 = vadd.f32 %v7378, %v7441
        %v7446 = vadd.f32 %v7379, %v7443
        %7447 = vmatpush.bf16.msra.mxu0 0
        %7448 = vmatpush.bf16.msra.mxu0 0
        %7449 = vmatpush.bf16.msra.mxu0 0
        %7450 = vmatpush.bf16.msra.mxu0 0
        %7451 = vmatpush.bf16.msra.mxu0 0
        %7452 = vmatpush.bf16.msra.mxu0 0
        %7453 = vmatpush.bf16.msra.mxu0 0
        %7454 = vmatpush.bf16.msra.mxu0 %v7116
        %7455 = vmatmul.bf16.gmra.mxu0 %v5823
        %v7456 = vpop.f32.mrf.mxu0
        %v7457 = vadd.f32 0.0, %v7456
        %v7458 = vpop.f32.mrf.mxu0
        %v7459 = vadd.f32 0.0, %v7458
        %7460 = vdwg.mxu0
        %s7461 = scalar_lea.vmem [#allocation8], 160
        %v7462 = vld [vmem:[%s7461] sm:$0xf]
        %v7463 = vld [vmem:[%s7461 + $0x4] sm:$0xf]
        %v7464 = vld [vmem:[%s7461 + $0x8] sm:$0xf]
        %v7465 = vld [vmem:[%s7461 + $0xc] sm:$0xf]
        %v7466 = vld [vmem:[%s7461 + $0x10] sm:$0xf]
        %v7467 = vld [vmem:[%s7461 + $0x14] sm:$0xf]
        %v7468 = vld [vmem:[%s7461 + $0x18] sm:$0xf]
        %v7469 = vld [vmem:[%s7461 + $0x1c] sm:$0xf]
        %v7470 = vpack.c.bf16 %v7459, %v7457
        %v7479 = vunpack.c.l.b16 %v7462
        %v7480 = vunpack.c.l.b16 %v7463
        %v7481 = vunpack.c.l.b16 %v7464
        %v7482 = vunpack.c.l.b16 %v7465
        %v7483 = vunpack.c.l.b16 %v7466
        %v7484 = vunpack.c.l.b16 %v7467
        %v7485 = vunpack.c.l.b16 %v7468
        %v7486 = vunpack.c.l.b16 %v7469
        %v7487 = vpack.c.b16 %v7480, %v7479
        %v7488 = vpack.c.b16 %v7482, %v7481
        %v7489 = vpack.c.b16 %v7484, %v7483
        %v7490 = vpack.c.b16 %v7486, %v7485
        %v7496 = vsel %vm3139, %v7470, 0
        %7498 = vmatpush.bf16.msra.mxu0 0
        %7499 = vmatpush.bf16.msra.mxu0 0
        %7500 = vmatpush.bf16.msra.mxu0 0
        %7501 = vmatpush.bf16.msra.mxu0 0
        %7502 = vmatpush.bf16.msra.mxu0 %v7490
        %7503 = vmatpush.bf16.msra.mxu0 %v7489
        %7504 = vmatpush.bf16.msra.mxu0 %v7488
        %7505 = vmatpush.bf16.msra.mxu0 %v7487
        %7506 = vmatmul.bf16.gmra.mxu0 %v7496
        %v7507 = vpop.f32.mrf.mxu0
        %v7508 = vadd.f32 0.0, %v7507
        %v7509 = vpop.f32.mrf.mxu0
        %v7510 = vadd.f32 0.0, %v7509
        %7511 = vdwg.mxu0
        %v7512 = vadd.f32 %v7445, %v7508
        %v7513 = vadd.f32 %v7446, %v7510
        %7514 = vmatpush.bf16.msra.mxu0 0
        %7515 = vmatpush.bf16.msra.mxu0 0
        %7516 = vmatpush.bf16.msra.mxu0 0
        %7517 = vmatpush.bf16.msra.mxu0 0
        %7518 = vmatpush.bf16.msra.mxu0 0
        %7519 = vmatpush.bf16.msra.mxu0 0
        %7520 = vmatpush.bf16.msra.mxu0 0
        %7521 = vmatpush.bf16.msra.mxu0 %v7116
        %7522 = vmatmul.bf16.gmra.mxu0 %v5930
        %v7523 = vpop.f32.mrf.mxu0
        %v7524 = vadd.f32 0.0, %v7523
        %v7525 = vpop.f32.mrf.mxu0
        %v7526 = vadd.f32 0.0, %v7525
        %7527 = vdwg.mxu0
        %s7528 = scalar_lea.vmem [#allocation8], 192
        %v7529 = vld [vmem:[%s7528] sm:$0xf]
        %v7530 = vld [vmem:[%s7528 + $0x4] sm:$0xf]
        %v7531 = vld [vmem:[%s7528 + $0x8] sm:$0xf]
        %v7532 = vld [vmem:[%s7528 + $0xc] sm:$0xf]
        %v7533 = vld [vmem:[%s7528 + $0x10] sm:$0xf]
        %v7534 = vld [vmem:[%s7528 + $0x14] sm:$0xf]
        %v7535 = vld [vmem:[%s7528 + $0x18] sm:$0xf]
        %v7536 = vld [vmem:[%s7528 + $0x1c] sm:$0xf]
        %v7537 = vpack.c.bf16 %v7526, %v7524
        %v7546 = vunpack.c.l.b16 %v7529
        %v7547 = vunpack.c.l.b16 %v7530
        %v7548 = vunpack.c.l.b16 %v7531
        %v7549 = vunpack.c.l.b16 %v7532
        %v7550 = vunpack.c.l.b16 %v7533
        %v7551 = vunpack.c.l.b16 %v7534
        %v7552 = vunpack.c.l.b16 %v7535
        %v7553 = vunpack.c.l.b16 %v7536
        %v7554 = vpack.c.b16 %v7547, %v7546
        %v7555 = vpack.c.b16 %v7549, %v7548
        %v7556 = vpack.c.b16 %v7551, %v7550
        %v7557 = vpack.c.b16 %v7553, %v7552
        %v7563 = vsel %vm3139, %v7537, 0
        %7565 = vmatpush.bf16.msra.mxu0 0
        %7566 = vmatpush.bf16.msra.mxu0 0
        %7567 = vmatpush.bf16.msra.mxu0 0
        %7568 = vmatpush.bf16.msra.mxu0 0
        %7569 = vmatpush.bf16.msra.mxu0 %v7557
        %7570 = vmatpush.bf16.msra.mxu0 %v7556
        %7571 = vmatpush.bf16.msra.mxu0 %v7555
        %7572 = vmatpush.bf16.msra.mxu0 %v7554
        %7573 = vmatmul.bf16.gmra.mxu0 %v7563
        %v7574 = vpop.f32.mrf.mxu0
        %v7575 = vadd.f32 0.0, %v7574
        %v7576 = vpop.f32.mrf.mxu0
        %v7577 = vadd.f32 0.0, %v7576
        %7578 = vdwg.mxu0
        %v7579 = vadd.f32 %v7512, %v7575
        %v7580 = vadd.f32 %v7513, %v7577
        %7581 = vmatpush.bf16.msra.mxu0 0
        %7582 = vmatpush.bf16.msra.mxu0 0
        %7583 = vmatpush.bf16.msra.mxu0 0
        %7584 = vmatpush.bf16.msra.mxu0 0
        %7585 = vmatpush.bf16.msra.mxu0 0
        %7586 = vmatpush.bf16.msra.mxu0 0
        %7587 = vmatpush.bf16.msra.mxu0 0
        %7588 = vmatpush.bf16.msra.mxu0 %v7116
        %7589 = vmatmul.bf16.gmra.mxu0 %v6037
        %v7590 = vpop.f32.mrf.mxu0
        %v7591 = vadd.f32 0.0, %v7590
        %v7592 = vpop.f32.mrf.mxu0
        %v7593 = vadd.f32 0.0, %v7592
        %7594 = vdwg.mxu0
        %s7595 = scalar_lea.vmem [#allocation8], 224
        %v7596 = vld [vmem:[%s7595] sm:$0xf]
        %v7597 = vld [vmem:[%s7595 + $0x4] sm:$0xf]
        %v7598 = vld [vmem:[%s7595 + $0x8] sm:$0xf]
        %v7599 = vld [vmem:[%s7595 + $0xc] sm:$0xf]
        %v7600 = vld [vmem:[%s7595 + $0x10] sm:$0xf]
        %v7601 = vld [vmem:[%s7595 + $0x14] sm:$0xf]
        %v7602 = vld [vmem:[%s7595 + $0x18] sm:$0xf]
        %v7603 = vld [vmem:[%s7595 + $0x1c] sm:$0xf]
        %v7604 = vpack.c.bf16 %v7593, %v7591
        %v7613 = vunpack.c.l.b16 %v7596
        %v7614 = vunpack.c.l.b16 %v7597
        %v7615 = vunpack.c.l.b16 %v7598
        %v7616 = vunpack.c.l.b16 %v7599
        %v7617 = vunpack.c.l.b16 %v7600
        %v7618 = vunpack.c.l.b16 %v7601
        %v7619 = vunpack.c.l.b16 %v7602
        %v7620 = vunpack.c.l.b16 %v7603
        %v7621 = vpack.c.b16 %v7614, %v7613
        %v7622 = vpack.c.b16 %v7616, %v7615
        %v7623 = vpack.c.b16 %v7618, %v7617
        %v7624 = vpack.c.b16 %v7620, %v7619
        %v7630 = vsel %vm3139, %v7604, 0
        %7632 = vmatpush.bf16.msra.mxu0 0
        %7633 = vmatpush.bf16.msra.mxu0 0
        %7634 = vmatpush.bf16.msra.mxu0 0
        %7635 = vmatpush.bf16.msra.mxu0 0
        %7636 = vmatpush.bf16.msra.mxu0 %v7624
        %7637 = vmatpush.bf16.msra.mxu0 %v7623
        %7638 = vmatpush.bf16.msra.mxu0 %v7622
        %7639 = vmatpush.bf16.msra.mxu0 %v7621
        %7640 = vmatmul.bf16.gmra.mxu0 %v7630
        %v7641 = vpop.f32.mrf.mxu0
        %v7642 = vadd.f32 0.0, %v7641
        %v7643 = vpop.f32.mrf.mxu0
        %v7644 = vadd.f32 0.0, %v7643
        %7645 = vdwg.mxu0
        %v7646 = vadd.f32 %v7579, %v7642
        %v7647 = vadd.f32 %v7580, %v7644
        %7648 = vmatpush.bf16.msra.mxu0 0
        %7649 = vmatpush.bf16.msra.mxu0 0
        %7650 = vmatpush.bf16.msra.mxu0 0
        %7651 = vmatpush.bf16.msra.mxu0 0
        %7652 = vmatpush.bf16.msra.mxu0 0
        %7653 = vmatpush.bf16.msra.mxu0 0
        %7654 = vmatpush.bf16.msra.mxu0 0
        %7655 = vmatpush.bf16.msra.mxu0 %v7116
        %7656 = vmatmul.bf16.gmra.mxu0 %v6144
        %v7657 = vpop.f32.mrf.mxu0
        %v7658 = vadd.f32 0.0, %v7657
        %v7659 = vpop.f32.mrf.mxu0
        %v7660 = vadd.f32 0.0, %v7659
        %7661 = vdwg.mxu0
        %s7662 = scalar_lea.vmem [#allocation8], 256
        %v7663 = vld [vmem:[%s7662] sm:$0xf]
        %v7664 = vld [vmem:[%s7662 + $0x4] sm:$0xf]
        %v7665 = vld [vmem:[%s7662 + $0x8] sm:$0xf]
        %v7666 = vld [vmem:[%s7662 + $0xc] sm:$0xf]
        %v7667 = vld [vmem:[%s7662 + $0x10] sm:$0xf]
        %v7668 = vld [vmem:[%s7662 + $0x14] sm:$0xf]
        %v7669 = vld [vmem:[%s7662 + $0x18] sm:$0xf]
        %v7670 = vld [vmem:[%s7662 + $0x1c] sm:$0xf]
        %v7671 = vpack.c.bf16 %v7660, %v7658
        %v7680 = vunpack.c.l.b16 %v7663
        %v7681 = vunpack.c.l.b16 %v7664
        %v7682 = vunpack.c.l.b16 %v7665
        %v7683 = vunpack.c.l.b16 %v7666
        %v7684 = vunpack.c.l.b16 %v7667
        %v7685 = vunpack.c.l.b16 %v7668
        %v7686 = vunpack.c.l.b16 %v7669
        %v7687 = vunpack.c.l.b16 %v7670
        %v7688 = vpack.c.b16 %v7681, %v7680
        %v7689 = vpack.c.b16 %v7683, %v7682
        %v7690 = vpack.c.b16 %v7685, %v7684
        %v7691 = vpack.c.b16 %v7687, %v7686
        %v7697 = vsel %vm3139, %v7671, 0
        %7699 = vmatpush.bf16.msra.mxu0 0
        %7700 = vmatpush.bf16.msra.mxu0 0
        %7701 = vmatpush.bf16.msra.mxu0 0
        %7702 = vmatpush.bf16.msra.mxu0 0
        %7703 = vmatpush.bf16.msra.mxu0 %v7691
        %7704 = vmatpush.bf16.msra.mxu0 %v7690
        %7705 = vmatpush.bf16.msra.mxu0 %v7689
        %7706 = vmatpush.bf16.msra.mxu0 %v7688
        %7707 = vmatmul.bf16.gmra.mxu0 %v7697
        %v7708 = vpop.f32.mrf.mxu0
        %v7709 = vadd.f32 0.0, %v7708
        %v7710 = vpop.f32.mrf.mxu0
        %v7711 = vadd.f32 0.0, %v7710
        %7712 = vdwg.mxu0
        %v7713 = vadd.f32 %v7646, %v7709
        %v7714 = vadd.f32 %v7647, %v7711
        %v7715 = vld [vmem:[%s49] sm:$0x1]
        %v7717 = vperm.slane %v7715, 0
        %v7719 = vadd.f32 %v7713, %v7717
        %v7720 = vadd.f32 %v7714, %v7717
        %v7721 = vmax.f32 %v7719, 0.0
        %v7722 = vmax.f32 %v7720, 0.0
        %v7723 = vpack.c.bf16 %v7722, %v7721
        %7724 = vmatpush.bf16.msra.mxu0 0
        %7725 = vmatpush.bf16.msra.mxu0 0
        %7726 = vmatpush.bf16.msra.mxu0 0
        %7727 = vmatpush.bf16.msra.mxu0 0
        %7728 = vmatpush.bf16.msra.mxu0 0
        %7729 = vmatpush.bf16.msra.mxu0 0
        %7730 = vmatpush.bf16.msra.mxu0 0
        %7731 = vmatpush.bf16.msra.mxu0 %v7723
        %7732 = vmatmul.bf16.gmra.mxu0 %v5293
        %v7733 = vpop.f32.mrf.mxu0
        %v7734 = vadd.f32 0.0, %v7733
        %v7735 = vpop.f32.mrf.mxu0
        %v7736 = vadd.f32 0.0, %v7735
        %7737 = vdwg.mxu0
        %v7738 = vld [vmem:[#allocation10] sm:$0xf]
        %v7739 = vld [vmem:[#allocation10 + $0x4] sm:$0xf]
        %v7740 = vld [vmem:[#allocation10 + $0x8] sm:$0xf]
        %v7741 = vld [vmem:[#allocation10 + $0xc] sm:$0xf]
        %v7742 = vld [vmem:[#allocation10 + $0x10] sm:$0xf]
        %v7743 = vld [vmem:[#allocation10 + $0x14] sm:$0xf]
        %v7744 = vld [vmem:[#allocation10 + $0x18] sm:$0xf]
        %v7745 = vld [vmem:[#allocation10 + $0x1c] sm:$0xf]
        %v7746 = vpack.c.bf16 %v7736, %v7734
        %7747 = vmatpush.bf16.msra.mxu0 0
        %7748 = vmatpush.bf16.msra.mxu0 0
        %7749 = vmatpush.bf16.msra.mxu0 0
        %7750 = vmatpush.bf16.msra.mxu0 0
        %7751 = vmatpush.bf16.msra.mxu0 0
        %7752 = vmatpush.bf16.msra.mxu0 0
        %7753 = vmatpush.bf16.msra.mxu0 0
        %7754 = vmatpush.bf16.msra.mxu0 %v7723
        %7755 = vmatmul.bf16.gmra.mxu0 %v5335
        %v7756 = vpop.f32.mrf.mxu0
        %v7757 = vadd.f32 0.0, %v7756
        %v7758 = vpop.f32.mrf.mxu0
        %v7759 = vadd.f32 0.0, %v7758
        %7760 = vdwg.mxu0
        %s7761 = scalar_lea.vmem [#allocation10], 32
        %v7762 = vld [vmem:[%s7761] sm:$0xf]
        %v7763 = vld [vmem:[%s7761 + $0x4] sm:$0xf]
        %v7764 = vld [vmem:[%s7761 + $0x8] sm:$0xf]
        %v7765 = vld [vmem:[%s7761 + $0xc] sm:$0xf]
        %v7766 = vld [vmem:[%s7761 + $0x10] sm:$0xf]
        %v7767 = vld [vmem:[%s7761 + $0x14] sm:$0xf]
        %v7768 = vld [vmem:[%s7761 + $0x18] sm:$0xf]
        %v7769 = vld [vmem:[%s7761 + $0x1c] sm:$0xf]
        %v7770 = vpack.c.bf16 %v7759, %v7757
        %v7779 = vunpack.c.l.b16 %v7762
        %v7780 = vunpack.c.l.b16 %v7763
        %v7781 = vunpack.c.l.b16 %v7764
        %v7782 = vunpack.c.l.b16 %v7765
        %v7783 = vunpack.c.l.b16 %v7766
        %v7784 = vunpack.c.l.b16 %v7767
        %v7785 = vunpack.c.l.b16 %v7768
        %v7786 = vunpack.c.l.b16 %v7769
        %v7787 = vpack.c.b16 %v7780, %v7779
        %v7788 = vpack.c.b16 %v7782, %v7781
        %v7789 = vpack.c.b16 %v7784, %v7783
        %v7790 = vpack.c.b16 %v7786, %v7785
        %v7796 = vsel %vm3139, %v7770, 0
        %7798 = vmatpush.bf16.msra.mxu0 0
        %7799 = vmatpush.bf16.msra.mxu0 0
        %7800 = vmatpush.bf16.msra.mxu0 0
        %7801 = vmatpush.bf16.msra.mxu0 0
        %7802 = vmatpush.bf16.msra.mxu0 %v7790
        %7803 = vmatpush.bf16.msra.mxu0 %v7789
        %7804 = vmatpush.bf16.msra.mxu0 %v7788
        %7805 = vmatpush.bf16.msra.mxu0 %v7787
        %7806 = vmatmul.bf16.gmra.mxu0 %v7796
        %v7807 = vpop.f32.mrf.mxu0
        %v7808 = vadd.f32 0.0, %v7807
        %v7809 = vpop.f32.mrf.mxu0
        %v7810 = vadd.f32 0.0, %v7809
        %7811 = vdwg.mxu0
        %v7820 = vunpack.c.l.b16 %v7738
        %v7821 = vunpack.c.l.b16 %v7739
        %v7822 = vunpack.c.l.b16 %v7740
        %v7823 = vunpack.c.l.b16 %v7741
        %v7824 = vunpack.c.l.b16 %v7742
        %v7825 = vunpack.c.l.b16 %v7743
        %v7826 = vunpack.c.l.b16 %v7744
        %v7827 = vunpack.c.l.b16 %v7745
        %v7828 = vpack.c.b16 %v7821, %v7820
        %v7829 = vpack.c.b16 %v7823, %v7822
        %v7830 = vpack.c.b16 %v7825, %v7824
        %v7831 = vpack.c.b16 %v7827, %v7826
        %v7837 = vsel %vm3139, %v7746, 0
        %7839 = vmatpush.bf16.msra.mxu0 0
        %7840 = vmatpush.bf16.msra.mxu0 0
        %7841 = vmatpush.bf16.msra.mxu0 0
        %7842 = vmatpush.bf16.msra.mxu0 0
        %7843 = vmatpush.bf16.msra.mxu0 %v7831
        %7844 = vmatpush.bf16.msra.mxu0 %v7830
        %7845 = vmatpush.bf16.msra.mxu0 %v7829
        %7846 = vmatpush.bf16.msra.mxu0 %v7828
        %7847 = vmatmul.bf16.gmra.mxu0 %v7837
        %v7848 = vpop.f32.mrf.mxu0
        %v7849 = vadd.f32 %v7808, %v7848
        %v7850 = vpop.f32.mrf.mxu0
        %v7851 = vadd.f32 %v7810, %v7850
        %7852 = vdwg.mxu0
        %7853 = vmatpush.bf16.msra.mxu0 0
        %7854 = vmatpush.bf16.msra.mxu0 0
        %7855 = vmatpush.bf16.msra.mxu0 0
        %7856 = vmatpush.bf16.msra.mxu0 0
        %7857 = vmatpush.bf16.msra.mxu0 0
        %7858 = vmatpush.bf16.msra.mxu0 0
        %7859 = vmatpush.bf16.msra.mxu0 0
        %7860 = vmatpush.bf16.msra.mxu0 %v7723
        %7861 = vmatmul.bf16.gmra.mxu0 %v5502
        %v7862 = vpop.f32.mrf.mxu0
        %v7863 = vadd.f32 0.0, %v7862
        %v7864 = vpop.f32.mrf.mxu0
        %v7865 = vadd.f32 0.0, %v7864
        %7866 = vdwg.mxu0
        %s7867 = scalar_lea.vmem [#allocation10], 64
        %v7868 = vld [vmem:[%s7867] sm:$0xf]
        %v7869 = vld [vmem:[%s7867 + $0x4] sm:$0xf]
        %v7870 = vld [vmem:[%s7867 + $0x8] sm:$0xf]
        %v7871 = vld [vmem:[%s7867 + $0xc] sm:$0xf]
        %v7872 = vld [vmem:[%s7867 + $0x10] sm:$0xf]
        %v7873 = vld [vmem:[%s7867 + $0x14] sm:$0xf]
        %v7874 = vld [vmem:[%s7867 + $0x18] sm:$0xf]
        %v7875 = vld [vmem:[%s7867 + $0x1c] sm:$0xf]
        %v7876 = vpack.c.bf16 %v7865, %v7863
        %v7885 = vunpack.c.l.b16 %v7868
        %v7886 = vunpack.c.l.b16 %v7869
        %v7887 = vunpack.c.l.b16 %v7870
        %v7888 = vunpack.c.l.b16 %v7871
        %v7889 = vunpack.c.l.b16 %v7872
        %v7890 = vunpack.c.l.b16 %v7873
        %v7891 = vunpack.c.l.b16 %v7874
        %v7892 = vunpack.c.l.b16 %v7875
        %v7893 = vpack.c.b16 %v7886, %v7885
        %v7894 = vpack.c.b16 %v7888, %v7887
        %v7895 = vpack.c.b16 %v7890, %v7889
        %v7896 = vpack.c.b16 %v7892, %v7891
        %v7902 = vsel %vm3139, %v7876, 0
        %7904 = vmatpush.bf16.msra.mxu0 0
        %7905 = vmatpush.bf16.msra.mxu0 0
        %7906 = vmatpush.bf16.msra.mxu0 0
        %7907 = vmatpush.bf16.msra.mxu0 0
        %7908 = vmatpush.bf16.msra.mxu0 %v7896
        %7909 = vmatpush.bf16.msra.mxu0 %v7895
        %7910 = vmatpush.bf16.msra.mxu0 %v7894
        %7911 = vmatpush.bf16.msra.mxu0 %v7893
        %7912 = vmatmul.bf16.gmra.mxu0 %v7902
        %v7913 = vpop.f32.mrf.mxu0
        %v7914 = vadd.f32 0.0, %v7913
        %v7915 = vpop.f32.mrf.mxu0
        %v7916 = vadd.f32 0.0, %v7915
        %7917 = vdwg.mxu0
        %v7918 = vadd.f32 %v7849, %v7914
        %v7919 = vadd.f32 %v7851, %v7916
        %7920 = vmatpush.bf16.msra.mxu0 0
        %7921 = vmatpush.bf16.msra.mxu0 0
        %7922 = vmatpush.bf16.msra.mxu0 0
        %7923 = vmatpush.bf16.msra.mxu0 0
        %7924 = vmatpush.bf16.msra.mxu0 0
        %7925 = vmatpush.bf16.msra.mxu0 0
        %7926 = vmatpush.bf16.msra.mxu0 0
        %7927 = vmatpush.bf16.msra.mxu0 %v7723
        %7928 = vmatmul.bf16.gmra.mxu0 %v5609
        %v7929 = vpop.f32.mrf.mxu0
        %v7930 = vadd.f32 0.0, %v7929
        %v7931 = vpop.f32.mrf.mxu0
        %v7932 = vadd.f32 0.0, %v7931
        %7933 = vdwg.mxu0
        %s7934 = scalar_lea.vmem [#allocation10], 96
        %v7935 = vld [vmem:[%s7934] sm:$0xf]
        %v7936 = vld [vmem:[%s7934 + $0x4] sm:$0xf]
        %v7937 = vld [vmem:[%s7934 + $0x8] sm:$0xf]
        %v7938 = vld [vmem:[%s7934 + $0xc] sm:$0xf]
        %v7939 = vld [vmem:[%s7934 + $0x10] sm:$0xf]
        %v7940 = vld [vmem:[%s7934 + $0x14] sm:$0xf]
        %v7941 = vld [vmem:[%s7934 + $0x18] sm:$0xf]
        %v7942 = vld [vmem:[%s7934 + $0x1c] sm:$0xf]
        %v7943 = vpack.c.bf16 %v7932, %v7930
        %v7952 = vunpack.c.l.b16 %v7935
        %v7953 = vunpack.c.l.b16 %v7936
        %v7954 = vunpack.c.l.b16 %v7937
        %v7955 = vunpack.c.l.b16 %v7938
        %v7956 = vunpack.c.l.b16 %v7939
        %v7957 = vunpack.c.l.b16 %v7940
        %v7958 = vunpack.c.l.b16 %v7941
        %v7959 = vunpack.c.l.b16 %v7942
        %v7960 = vpack.c.b16 %v7953, %v7952
        %v7961 = vpack.c.b16 %v7955, %v7954
        %v7962 = vpack.c.b16 %v7957, %v7956
        %v7963 = vpack.c.b16 %v7959, %v7958
        %v7969 = vsel %vm3139, %v7943, 0
        %7971 = vmatpush.bf16.msra.mxu0 0
        %7972 = vmatpush.bf16.msra.mxu0 0
        %7973 = vmatpush.bf16.msra.mxu0 0
        %7974 = vmatpush.bf16.msra.mxu0 0
        %7975 = vmatpush.bf16.msra.mxu0 %v7963
        %7976 = vmatpush.bf16.msra.mxu0 %v7962
        %7977 = vmatpush.bf16.msra.mxu0 %v7961
        %7978 = vmatpush.bf16.msra.mxu0 %v7960
        %7979 = vmatmul.bf16.gmra.mxu0 %v7969
        %v7980 = vpop.f32.mrf.mxu0
        %v7981 = vadd.f32 0.0, %v7980
        %v7982 = vpop.f32.mrf.mxu0
        %v7983 = vadd.f32 0.0, %v7982
        %7984 = vdwg.mxu0
        %v7985 = vadd.f32 %v7918, %v7981
        %v7986 = vadd.f32 %v7919, %v7983
        %7987 = vmatpush.bf16.msra.mxu0 0
        %7988 = vmatpush.bf16.msra.mxu0 0
        %7989 = vmatpush.bf16.msra.mxu0 0
        %7990 = vmatpush.bf16.msra.mxu0 0
        %7991 = vmatpush.bf16.msra.mxu0 0
        %7992 = vmatpush.bf16.msra.mxu0 0
        %7993 = vmatpush.bf16.msra.mxu0 0
        %7994 = vmatpush.bf16.msra.mxu0 %v7723
        %7995 = vmatmul.bf16.gmra.mxu0 %v5716
        %v7996 = vpop.f32.mrf.mxu0
        %v7997 = vadd.f32 0.0, %v7996
        %v7998 = vpop.f32.mrf.mxu0
        %v7999 = vadd.f32 0.0, %v7998
        %8000 = vdwg.mxu0
        %s8001 = scalar_lea.vmem [#allocation10], 128
        %v8002 = vld [vmem:[%s8001] sm:$0xf]
        %v8003 = vld [vmem:[%s8001 + $0x4] sm:$0xf]
        %v8004 = vld [vmem:[%s8001 + $0x8] sm:$0xf]
        %v8005 = vld [vmem:[%s8001 + $0xc] sm:$0xf]
        %v8006 = vld [vmem:[%s8001 + $0x10] sm:$0xf]
        %v8007 = vld [vmem:[%s8001 + $0x14] sm:$0xf]
        %v8008 = vld [vmem:[%s8001 + $0x18] sm:$0xf]
        %v8009 = vld [vmem:[%s8001 + $0x1c] sm:$0xf]
        %v8010 = vpack.c.bf16 %v7999, %v7997
        %v8019 = vunpack.c.l.b16 %v8002
        %v8020 = vunpack.c.l.b16 %v8003
        %v8021 = vunpack.c.l.b16 %v8004
        %v8022 = vunpack.c.l.b16 %v8005
        %v8023 = vunpack.c.l.b16 %v8006
        %v8024 = vunpack.c.l.b16 %v8007
        %v8025 = vunpack.c.l.b16 %v8008
        %v8026 = vunpack.c.l.b16 %v8009
        %v8027 = vpack.c.b16 %v8020, %v8019
        %v8028 = vpack.c.b16 %v8022, %v8021
        %v8029 = vpack.c.b16 %v8024, %v8023
        %v8030 = vpack.c.b16 %v8026, %v8025
        %v8036 = vsel %vm3139, %v8010, 0
        %8038 = vmatpush.bf16.msra.mxu0 0
        %8039 = vmatpush.bf16.msra.mxu0 0
        %8040 = vmatpush.bf16.msra.mxu0 0
        %8041 = vmatpush.bf16.msra.mxu0 0
        %8042 = vmatpush.bf16.msra.mxu0 %v8030
        %8043 = vmatpush.bf16.msra.mxu0 %v8029
        %8044 = vmatpush.bf16.msra.mxu0 %v8028
        %8045 = vmatpush.bf16.msra.mxu0 %v8027
        %8046 = vmatmul.bf16.gmra.mxu0 %v8036
        %v8047 = vpop.f32.mrf.mxu0
        %v8048 = vadd.f32 0.0, %v8047
        %v8049 = vpop.f32.mrf.mxu0
        %v8050 = vadd.f32 0.0, %v8049
        %8051 = vdwg.mxu0
        %v8052 = vadd.f32 %v7985, %v8048
        %v8053 = vadd.f32 %v7986, %v8050
        %8054 = vmatpush.bf16.msra.mxu0 0
        %8055 = vmatpush.bf16.msra.mxu0 0
        %8056 = vmatpush.bf16.msra.mxu0 0
        %8057 = vmatpush.bf16.msra.mxu0 0
        %8058 = vmatpush.bf16.msra.mxu0 0
        %8059 = vmatpush.bf16.msra.mxu0 0
        %8060 = vmatpush.bf16.msra.mxu0 0
        %8061 = vmatpush.bf16.msra.mxu0 %v7723
        %8062 = vmatmul.bf16.gmra.mxu0 %v5823
        %v8063 = vpop.f32.mrf.mxu0
        %v8064 = vadd.f32 0.0, %v8063
        %v8065 = vpop.f32.mrf.mxu0
        %v8066 = vadd.f32 0.0, %v8065
        %8067 = vdwg.mxu0
        %s8068 = scalar_lea.vmem [#allocation10], 160
        %v8069 = vld [vmem:[%s8068] sm:$0xf]
        %v8070 = vld [vmem:[%s8068 + $0x4] sm:$0xf]
        %v8071 = vld [vmem:[%s8068 + $0x8] sm:$0xf]
        %v8072 = vld [vmem:[%s8068 + $0xc] sm:$0xf]
        %v8073 = vld [vmem:[%s8068 + $0x10] sm:$0xf]
        %v8074 = vld [vmem:[%s8068 + $0x14] sm:$0xf]
        %v8075 = vld [vmem:[%s8068 + $0x18] sm:$0xf]
        %v8076 = vld [vmem:[%s8068 + $0x1c] sm:$0xf]
        %v8077 = vpack.c.bf16 %v8066, %v8064
        %v8086 = vunpack.c.l.b16 %v8069
        %v8087 = vunpack.c.l.b16 %v8070
        %v8088 = vunpack.c.l.b16 %v8071
        %v8089 = vunpack.c.l.b16 %v8072
        %v8090 = vunpack.c.l.b16 %v8073
        %v8091 = vunpack.c.l.b16 %v8074
        %v8092 = vunpack.c.l.b16 %v8075
        %v8093 = vunpack.c.l.b16 %v8076
        %v8094 = vpack.c.b16 %v8087, %v8086
        %v8095 = vpack.c.b16 %v8089, %v8088
        %v8096 = vpack.c.b16 %v8091, %v8090
        %v8097 = vpack.c.b16 %v8093, %v8092
        %v8103 = vsel %vm3139, %v8077, 0
        %8105 = vmatpush.bf16.msra.mxu0 0
        %8106 = vmatpush.bf16.msra.mxu0 0
        %8107 = vmatpush.bf16.msra.mxu0 0
        %8108 = vmatpush.bf16.msra.mxu0 0
        %8109 = vmatpush.bf16.msra.mxu0 %v8097
        %8110 = vmatpush.bf16.msra.mxu0 %v8096
        %8111 = vmatpush.bf16.msra.mxu0 %v8095
        %8112 = vmatpush.bf16.msra.mxu0 %v8094
        %8113 = vmatmul.bf16.gmra.mxu0 %v8103
        %v8114 = vpop.f32.mrf.mxu0
        %v8115 = vadd.f32 0.0, %v8114
        %v8116 = vpop.f32.mrf.mxu0
        %v8117 = vadd.f32 0.0, %v8116
        %8118 = vdwg.mxu0
        %v8119 = vadd.f32 %v8052, %v8115
        %v8120 = vadd.f32 %v8053, %v8117
        %8121 = vmatpush.bf16.msra.mxu0 0
        %8122 = vmatpush.bf16.msra.mxu0 0
        %8123 = vmatpush.bf16.msra.mxu0 0
        %8124 = vmatpush.bf16.msra.mxu0 0
        %8125 = vmatpush.bf16.msra.mxu0 0
        %8126 = vmatpush.bf16.msra.mxu0 0
        %8127 = vmatpush.bf16.msra.mxu0 0
        %8128 = vmatpush.bf16.msra.mxu0 %v7723
        %8129 = vmatmul.bf16.gmra.mxu0 %v5930
        %v8130 = vpop.f32.mrf.mxu0
        %v8131 = vadd.f32 0.0, %v8130
        %v8132 = vpop.f32.mrf.mxu0
        %v8133 = vadd.f32 0.0, %v8132
        %8134 = vdwg.mxu0
        %s8135 = scalar_lea.vmem [#allocation10], 192
        %v8136 = vld [vmem:[%s8135] sm:$0xf]
        %v8137 = vld [vmem:[%s8135 + $0x4] sm:$0xf]
        %v8138 = vld [vmem:[%s8135 + $0x8] sm:$0xf]
        %v8139 = vld [vmem:[%s8135 + $0xc] sm:$0xf]
        %v8140 = vld [vmem:[%s8135 + $0x10] sm:$0xf]
        %v8141 = vld [vmem:[%s8135 + $0x14] sm:$0xf]
        %v8142 = vld [vmem:[%s8135 + $0x18] sm:$0xf]
        %v8143 = vld [vmem:[%s8135 + $0x1c] sm:$0xf]
        %v8144 = vpack.c.bf16 %v8133, %v8131
        %v8153 = vunpack.c.l.b16 %v8136
        %v8154 = vunpack.c.l.b16 %v8137
        %v8155 = vunpack.c.l.b16 %v8138
        %v8156 = vunpack.c.l.b16 %v8139
        %v8157 = vunpack.c.l.b16 %v8140
        %v8158 = vunpack.c.l.b16 %v8141
        %v8159 = vunpack.c.l.b16 %v8142
        %v8160 = vunpack.c.l.b16 %v8143
        %v8161 = vpack.c.b16 %v8154, %v8153
        %v8162 = vpack.c.b16 %v8156, %v8155
        %v8163 = vpack.c.b16 %v8158, %v8157
        %v8164 = vpack.c.b16 %v8160, %v8159
        %v8170 = vsel %vm3139, %v8144, 0
        %8172 = vmatpush.bf16.msra.mxu0 0
        %8173 = vmatpush.bf16.msra.mxu0 0
        %8174 = vmatpush.bf16.msra.mxu0 0
        %8175 = vmatpush.bf16.msra.mxu0 0
        %8176 = vmatpush.bf16.msra.mxu0 %v8164
        %8177 = vmatpush.bf16.msra.mxu0 %v8163
        %8178 = vmatpush.bf16.msra.mxu0 %v8162
        %8179 = vmatpush.bf16.msra.mxu0 %v8161
        %8180 = vmatmul.bf16.gmra.mxu0 %v8170
        %v8181 = vpop.f32.mrf.mxu0
        %v8182 = vadd.f32 0.0, %v8181
        %v8183 = vpop.f32.mrf.mxu0
        %v8184 = vadd.f32 0.0, %v8183
        %8185 = vdwg.mxu0
        %v8186 = vadd.f32 %v8119, %v8182
        %v8187 = vadd.f32 %v8120, %v8184
        %8188 = vmatpush.bf16.msra.mxu0 0
        %8189 = vmatpush.bf16.msra.mxu0 0
        %8190 = vmatpush.bf16.msra.mxu0 0
        %8191 = vmatpush.bf16.msra.mxu0 0
        %8192 = vmatpush.bf16.msra.mxu0 0
        %8193 = vmatpush.bf16.msra.mxu0 0
        %8194 = vmatpush.bf16.msra.mxu0 0
        %8195 = vmatpush.bf16.msra.mxu0 %v7723
        %8196 = vmatmul.bf16.gmra.mxu0 %v6037
        %v8197 = vpop.f32.mrf.mxu0
        %v8198 = vadd.f32 0.0, %v8197
        %v8199 = vpop.f32.mrf.mxu0
        %v8200 = vadd.f32 0.0, %v8199
        %8201 = vdwg.mxu0
        %s8202 = scalar_lea.vmem [#allocation10], 224
        %v8203 = vld [vmem:[%s8202] sm:$0xf]
        %v8204 = vld [vmem:[%s8202 + $0x4] sm:$0xf]
        %v8205 = vld [vmem:[%s8202 + $0x8] sm:$0xf]
        %v8206 = vld [vmem:[%s8202 + $0xc] sm:$0xf]
        %v8207 = vld [vmem:[%s8202 + $0x10] sm:$0xf]
        %v8208 = vld [vmem:[%s8202 + $0x14] sm:$0xf]
        %v8209 = vld [vmem:[%s8202 + $0x18] sm:$0xf]
        %v8210 = vld [vmem:[%s8202 + $0x1c] sm:$0xf]
        %v8211 = vpack.c.bf16 %v8200, %v8198
        %v8220 = vunpack.c.l.b16 %v8203
        %v8221 = vunpack.c.l.b16 %v8204
        %v8222 = vunpack.c.l.b16 %v8205
        %v8223 = vunpack.c.l.b16 %v8206
        %v8224 = vunpack.c.l.b16 %v8207
        %v8225 = vunpack.c.l.b16 %v8208
        %v8226 = vunpack.c.l.b16 %v8209
        %v8227 = vunpack.c.l.b16 %v8210
        %v8228 = vpack.c.b16 %v8221, %v8220
        %v8229 = vpack.c.b16 %v8223, %v8222
        %v8230 = vpack.c.b16 %v8225, %v8224
        %v8231 = vpack.c.b16 %v8227, %v8226
        %v8237 = vsel %vm3139, %v8211, 0
        %8239 = vmatpush.bf16.msra.mxu0 0
        %8240 = vmatpush.bf16.msra.mxu0 0
        %8241 = vmatpush.bf16.msra.mxu0 0
        %8242 = vmatpush.bf16.msra.mxu0 0
        %8243 = vmatpush.bf16.msra.mxu0 %v8231
        %8244 = vmatpush.bf16.msra.mxu0 %v8230
        %8245 = vmatpush.bf16.msra.mxu0 %v8229
        %8246 = vmatpush.bf16.msra.mxu0 %v8228
        %8247 = vmatmul.bf16.gmra.mxu0 %v8237
        %v8248 = vpop.f32.mrf.mxu0
        %v8249 = vadd.f32 0.0, %v8248
        %v8250 = vpop.f32.mrf.mxu0
        %v8251 = vadd.f32 0.0, %v8250
        %8252 = vdwg.mxu0
        %v8253 = vadd.f32 %v8186, %v8249
        %v8254 = vadd.f32 %v8187, %v8251
        %8255 = vmatpush.bf16.msra.mxu0 0
        %8256 = vmatpush.bf16.msra.mxu0 0
        %8257 = vmatpush.bf16.msra.mxu0 0
        %8258 = vmatpush.bf16.msra.mxu0 0
        %8259 = vmatpush.bf16.msra.mxu0 0
        %8260 = vmatpush.bf16.msra.mxu0 0
        %8261 = vmatpush.bf16.msra.mxu0 0
        %8262 = vmatpush.bf16.msra.mxu0 %v7723
        %8263 = vmatmul.bf16.gmra.mxu0 %v6144
        %v8264 = vpop.f32.mrf.mxu0
        %v8265 = vadd.f32 0.0, %v8264
        %v8266 = vpop.f32.mrf.mxu0
        %v8267 = vadd.f32 0.0, %v8266
        %8268 = vdwg.mxu0
        %s8269 = scalar_lea.vmem [#allocation10], 256
        %v8270 = vld [vmem:[%s8269] sm:$0xf]
        %v8271 = vld [vmem:[%s8269 + $0x4] sm:$0xf]
        %v8272 = vld [vmem:[%s8269 + $0x8] sm:$0xf]
        %v8273 = vld [vmem:[%s8269 + $0xc] sm:$0xf]
        %v8274 = vld [vmem:[%s8269 + $0x10] sm:$0xf]
        %v8275 = vld [vmem:[%s8269 + $0x14] sm:$0xf]
        %v8276 = vld [vmem:[%s8269 + $0x18] sm:$0xf]
        %v8277 = vld [vmem:[%s8269 + $0x1c] sm:$0xf]
        %v8278 = vpack.c.bf16 %v8267, %v8265
        %v8287 = vunpack.c.l.b16 %v8270
        %v8288 = vunpack.c.l.b16 %v8271
        %v8289 = vunpack.c.l.b16 %v8272
        %v8290 = vunpack.c.l.b16 %v8273
        %v8291 = vunpack.c.l.b16 %v8274
        %v8292 = vunpack.c.l.b16 %v8275
        %v8293 = vunpack.c.l.b16 %v8276
        %v8294 = vunpack.c.l.b16 %v8277
        %v8295 = vpack.c.b16 %v8288, %v8287
        %v8296 = vpack.c.b16 %v8290, %v8289
        %v8297 = vpack.c.b16 %v8292, %v8291
        %v8298 = vpack.c.b16 %v8294, %v8293
        %v8304 = vsel %vm3139, %v8278, 0
        %8306 = vmatpush.bf16.msra.mxu0 0
        %8307 = vmatpush.bf16.msra.mxu0 0
        %8308 = vmatpush.bf16.msra.mxu0 0
        %8309 = vmatpush.bf16.msra.mxu0 0
        %8310 = vmatpush.bf16.msra.mxu0 %v8298
        %8311 = vmatpush.bf16.msra.mxu0 %v8297
        %8312 = vmatpush.bf16.msra.mxu0 %v8296
        %8313 = vmatpush.bf16.msra.mxu0 %v8295
        %8314 = vmatmul.bf16.gmra.mxu0 %v8304
        %v8315 = vpop.f32.mrf.mxu0
        %v8316 = vadd.f32 0.0, %v8315
        %v8317 = vpop.f32.mrf.mxu0
        %v8318 = vadd.f32 0.0, %v8317
        %8319 = vdwg.mxu0
        %v8320 = vadd.f32 %v8253, %v8316
        %v8321 = vadd.f32 %v8254, %v8318
        %v8322 = vld [vmem:[%s53] sm:$0x1]
        %v8324 = vperm.slane %v8322, 0
        %v8326 = vadd.f32 %v8320, %v8324
        %v8327 = vadd.f32 %v8321, %v8324
        %v8328 = vmax.f32 %v8326, 0.0
        %v8329 = vmax.f32 %v8327, 0.0
        %8330 = vmatpush.bf16.msra.mxu0 0
        %8331 = vmatpush.bf16.msra.mxu0 0
        %8332 = vmatpush.bf16.msra.mxu0 0
        %8333 = vmatpush.bf16.msra.mxu0 0
        %8334 = vmatpush.bf16.msra.mxu0 0
        %8335 = vmatpush.bf16.msra.mxu0 0
        %8336 = vmatpush.bf16.msra.mxu0 0
        %8337 = vmatpush.bf16.msra.mxu0 %v6268
        %8338 = vmatmul.bf16.gmra.mxu0 %v5293
        %v8339 = vpop.f32.mrf.mxu0
        %v8340 = vadd.f32 0.0, %v8339
        %v8341 = vpop.f32.mrf.mxu0
        %v8342 = vadd.f32 0.0, %v8341
        %8343 = vdwg.mxu0
        %8344 = vmatpush.bf16.msra.mxu0 0
        %8345 = vmatpush.bf16.msra.mxu0 0
        %8346 = vmatpush.bf16.msra.mxu0 0
        %8347 = vmatpush.bf16.msra.mxu0 0
        %8348 = vmatpush.bf16.msra.mxu0 0
        %8349 = vmatpush.bf16.msra.mxu0 0
        %8350 = vmatpush.bf16.msra.mxu0 0
        %8351 = vmatpush.bf16.msra.mxu0 %v6268
        %8352 = vmatmul.bf16.gmra.mxu0 %v5335
        %v8353 = vpop.f32.mrf.mxu0
        %v8354 = vadd.f32 0.0, %v8353
        %v8355 = vpop.f32.mrf.mxu0
        %v8356 = vadd.f32 0.0, %v8355
        %8357 = vdwg.mxu0
        %v8358 = vmax.f32 %v8340, %v8354
        %v8359 = vmax.f32 %v8342, %v8356
        %8360 = vmatpush.bf16.msra.mxu0 0
        %8361 = vmatpush.bf16.msra.mxu0 0
        %8362 = vmatpush.bf16.msra.mxu0 0
        %8363 = vmatpush.bf16.msra.mxu0 0
        %8364 = vmatpush.bf16.msra.mxu0 0
        %8365 = vmatpush.bf16.msra.mxu0 0
        %8366 = vmatpush.bf16.msra.mxu0 0
        %8367 = vmatpush.bf16.msra.mxu0 %v6268
        %8368 = vmatmul.bf16.gmra.mxu0 %v5502
        %v8369 = vpop.f32.mrf.mxu0
        %v8370 = vadd.f32 0.0, %v8369
        %v8371 = vpop.f32.mrf.mxu0
        %v8372 = vadd.f32 0.0, %v8371
        %8373 = vdwg.mxu0
        %v8374 = vmax.f32 %v8358, %v8370
        %v8375 = vmax.f32 %v8359, %v8372
        %8376 = vmatpush.bf16.msra.mxu0 0
        %8377 = vmatpush.bf16.msra.mxu0 0
        %8378 = vmatpush.bf16.msra.mxu0 0
        %8379 = vmatpush.bf16.msra.mxu0 0
        %8380 = vmatpush.bf16.msra.mxu0 0
        %8381 = vmatpush.bf16.msra.mxu0 0
        %8382 = vmatpush.bf16.msra.mxu0 0
        %8383 = vmatpush.bf16.msra.mxu0 %v6268
        %8384 = vmatmul.bf16.gmra.mxu0 %v5609
        %v8385 = vpop.f32.mrf.mxu0
        %v8386 = vadd.f32 0.0, %v8385
        %v8387 = vpop.f32.mrf.mxu0
        %v8388 = vadd.f32 0.0, %v8387
        %8389 = vdwg.mxu0
        %v8390 = vmax.f32 %v8374, %v8386
        %v8391 = vmax.f32 %v8375, %v8388
        %8392 = vmatpush.bf16.msra.mxu0 0
        %8393 = vmatpush.bf16.msra.mxu0 0
        %8394 = vmatpush.bf16.msra.mxu0 0
        %8395 = vmatpush.bf16.msra.mxu0 0
        %8396 = vmatpush.bf16.msra.mxu0 0
        %8397 = vmatpush.bf16.msra.mxu0 0
        %8398 = vmatpush.bf16.msra.mxu0 0
        %8399 = vmatpush.bf16.msra.mxu0 %v6268
        %8400 = vmatmul.bf16.gmra.mxu0 %v5716
        %v8401 = vpop.f32.mrf.mxu0
        %v8402 = vadd.f32 0.0, %v8401
        %v8403 = vpop.f32.mrf.mxu0
        %v8404 = vadd.f32 0.0, %v8403
        %8405 = vdwg.mxu0
        %v8406 = vmax.f32 %v8390, %v8402
        %v8407 = vmax.f32 %v8391, %v8404
        %8408 = vmatpush.bf16.msra.mxu0 0
        %8409 = vmatpush.bf16.msra.mxu0 0
        %8410 = vmatpush.bf16.msra.mxu0 0
        %8411 = vmatpush.bf16.msra.mxu0 0
        %8412 = vmatpush.bf16.msra.mxu0 0
        %8413 = vmatpush.bf16.msra.mxu0 0
        %8414 = vmatpush.bf16.msra.mxu0 0
        %8415 = vmatpush.bf16.msra.mxu0 %v6268
        %8416 = vmatmul.bf16.gmra.mxu0 %v5823
        %v8417 = vpop.f32.mrf.mxu0
        %v8418 = vadd.f32 0.0, %v8417
        %v8419 = vpop.f32.mrf.mxu0
        %v8420 = vadd.f32 0.0, %v8419
        %8421 = vdwg.mxu0
        %v8422 = vmax.f32 %v8406, %v8418
        %v8423 = vmax.f32 %v8407, %v8420
        %8424 = vmatpush.bf16.msra.mxu0 0
        %8425 = vmatpush.bf16.msra.mxu0 0
        %8426 = vmatpush.bf16.msra.mxu0 0
        %8427 = vmatpush.bf16.msra.mxu0 0
        %8428 = vmatpush.bf16.msra.mxu0 0
        %8429 = vmatpush.bf16.msra.mxu0 0
        %8430 = vmatpush.bf16.msra.mxu0 0
        %8431 = vmatpush.bf16.msra.mxu0 %v6268
        %8432 = vmatmul.bf16.gmra.mxu0 %v5930
        %v8433 = vpop.f32.mrf.mxu0
        %v8434 = vadd.f32 0.0, %v8433
        %v8435 = vpop.f32.mrf.mxu0
        %v8436 = vadd.f32 0.0, %v8435
        %8437 = vdwg.mxu0
        %v8438 = vmax.f32 %v8422, %v8434
        %v8439 = vmax.f32 %v8423, %v8436
        %8440 = vmatpush.bf16.msra.mxu0 0
        %8441 = vmatpush.bf16.msra.mxu0 0
        %8442 = vmatpush.bf16.msra.mxu0 0
        %8443 = vmatpush.bf16.msra.mxu0 0
        %8444 = vmatpush.bf16.msra.mxu0 0
        %8445 = vmatpush.bf16.msra.mxu0 0
        %8446 = vmatpush.bf16.msra.mxu0 0
        %8447 = vmatpush.bf16.msra.mxu0 %v6268
        %8448 = vmatmul.bf16.gmra.mxu0 %v6037
        %v8449 = vpop.f32.mrf.mxu0
        %v8450 = vadd.f32 0.0, %v8449
        %v8451 = vpop.f32.mrf.mxu0
        %v8452 = vadd.f32 0.0, %v8451
        %8453 = vdwg.mxu0
        %v8454 = vmax.f32 %v8438, %v8450
        %v8455 = vmax.f32 %v8439, %v8452
        %8456 = vmatpush.bf16.msra.mxu0 0
        %8457 = vmatpush.bf16.msra.mxu0 0
        %8458 = vmatpush.bf16.msra.mxu0 0
        %8459 = vmatpush.bf16.msra.mxu0 0
        %8460 = vmatpush.bf16.msra.mxu0 0
        %8461 = vmatpush.bf16.msra.mxu0 0
        %8462 = vmatpush.bf16.msra.mxu0 0
        %8463 = vmatpush.bf16.msra.mxu0 %v6268
        %8464 = vmatmul.bf16.gmra.mxu0 %v6144
        %v8465 = vpop.f32.mrf.mxu0
        %v8466 = vadd.f32 0.0, %v8465
        %v8467 = vpop.f32.mrf.mxu0
        %v8468 = vadd.f32 0.0, %v8467
        %8469 = vdwg.mxu0
        %v8470 = vmax.f32 %v8454, %v8466
        %v8471 = vmax.f32 %v8455, %v8468
        %v8472 = vld [vmem:[%s55] sm:$0xf]
        %v8473 = vld [vmem:[%s55 + $0x4] sm:$0xf]
        %v8474 = vld [vmem:[%s55 + $0x8] sm:$0xf]
        %v8475 = vld [vmem:[%s55 + $0xc] sm:$0xf]
        %v8476 = vld [vmem:[%s55 + $0x10] sm:$0xf]
        %v8477 = vld [vmem:[%s55 + $0x14] sm:$0xf]
        %v8478 = vld [vmem:[%s55 + $0x18] sm:$0xf]
        %v8479 = vld [vmem:[%s55 + $0x1c] sm:$0xf]
        %v8480 = vld [vmem:[%s55 + $0x20] sm:$0xf]
        %v8481 = vld [vmem:[%s55 + $0x24] sm:$0xf]
        %v8482 = vld [vmem:[%s55 + $0x28] sm:$0xf]
        %v8483 = vld [vmem:[%s55 + $0x2c] sm:$0xf]
        %v8484 = vld [vmem:[%s55 + $0x30] sm:$0xf]
        %v8485 = vld [vmem:[%s55 + $0x34] sm:$0xf]
        %v8486 = vld [vmem:[%s55 + $0x38] sm:$0xf]
        %v8487 = vld [vmem:[%s55 + $0x3c] sm:$0xf]
        %v8488 = vpack.c.bf16 %v8471, %v8470
        %v8489 = vld [vmem:[%s57] sm:$0x1]
        %v8491 = vperm.slane %v8489, 0
        %v8509 = vunpack.c.l.b16 %v8472
        %v8510 = vunpack.c.l.b16 %v8473
        %v8511 = vunpack.c.l.b16 %v8474
        %v8512 = vunpack.c.l.b16 %v8475
        %v8513 = vunpack.c.l.b16 %v8476
        %v8514 = vunpack.c.l.b16 %v8477
        %v8515 = vunpack.c.l.b16 %v8478
        %v8516 = vunpack.c.l.b16 %v8479
        %v8517 = vunpack.c.l.b16 %v8480
        %v8518 = vunpack.c.l.b16 %v8481
        %v8519 = vunpack.c.l.b16 %v8482
        %v8520 = vunpack.c.l.b16 %v8483
        %v8521 = vunpack.c.l.b16 %v8484
        %v8522 = vunpack.c.l.b16 %v8485
        %v8523 = vunpack.c.l.b16 %v8486
        %v8524 = vunpack.c.l.b16 %v8487
        %v8525 = vpack.c.b16 %v8510, %v8509
        %v8526 = vpack.c.b16 %v8512, %v8511
        %v8527 = vpack.c.b16 %v8514, %v8513
        %v8528 = vpack.c.b16 %v8516, %v8515
        %v8529 = vpack.c.b16 %v8518, %v8517
        %v8530 = vpack.c.b16 %v8520, %v8519
        %v8531 = vpack.c.b16 %v8522, %v8521
        %v8532 = vpack.c.b16 %v8524, %v8523
        %8541 = vmatpush.bf16.msra.mxu0 %v8532
        %8542 = vmatpush.bf16.msra.mxu0 %v8531
        %8543 = vmatpush.bf16.msra.mxu0 %v8530
        %8544 = vmatpush.bf16.msra.mxu0 %v8529
        %8545 = vmatpush.bf16.msra.mxu0 %v8528
        %8546 = vmatpush.bf16.msra.mxu0 %v8527
        %8547 = vmatpush.bf16.msra.mxu0 %v8526
        %8548 = vmatpush.bf16.msra.mxu0 %v8525
        %8549 = vmatmul.bf16.gmra.mxu0 %v8488
        %v8550 = vpop.f32.mrf.mxu0
        %v8551 = vadd.f32 %v8491, %v8550
        %v8552 = vpop.f32.mrf.mxu0
        %v8553 = vadd.f32 %v8491, %v8552
        %8554 = vdwg.mxu0
        %v8555 = vmax.f32 %v8551, 0.0
        %v8556 = vmax.f32 %v8553, 0.0
        %v8557 = vsel %vm3139, %v6335, 0.0
        %v8558 = vsel %vm3139, %v6336, 0.0
        %v8559 = vadd.f32 %v8557, %v8558
        %v8560 = vrot.slane %v8559, 4
        %v8561 = vadd.f32 %v8559, %v8560
        %v8562 = vrot.slane %v8561, 2
        %v8563 = vadd.f32 %v8561, %v8562
        %v8564 = vrot.slane %v8563, 1
        %v8565 = vadd.f32 %v8563, %v8564
        %v8566 = vrcp.pop 16.0
        %v8567 = vmul.f32 16.0, %v8566
        %v8568 = vsub.f32 1.0, %v8567
        %v8569 = vmul.f32 %v8566, %v8568
        %v8570 = vadd.f32 %v8566, %v8569
        %vm8571 = vweird.f32 %v8566
        %v8572 = vsel %vm8571, %v8566, %v8570
        %v8573 = vmul.f32 %v8565, %v8572
        %v8574 = vsel %vm3139, %v7114, 0.0
        %v8575 = vsel %vm3139, %v7115, 0.0
        %v8576 = vadd.f32 %v8574, %v8575
        %v8577 = vrot.slane %v8576, 4
        %v8578 = vadd.f32 %v8576, %v8577
        %v8579 = vrot.slane %v8578, 2
        %v8580 = vadd.f32 %v8578, %v8579
        %v8581 = vrot.slane %v8580, 1
        %v8582 = vadd.f32 %v8580, %v8581
        %v8583 = vmul.f32 %v8582, %v8572
        %v8584 = vsel %vm3139, %v8328, 0.0
        %v8585 = vsel %vm3139, %v8329, 0.0
        %v8586 = vadd.f32 %v8584, %v8585
        %v8587 = vrot.slane %v8586, 4
        %v8588 = vadd.f32 %v8586, %v8587
        %v8589 = vrot.slane %v8588, 2
        %v8590 = vadd.f32 %v8588, %v8589
        %v8591 = vrot.slane %v8590, 1
        %v8592 = vadd.f32 %v8590, %v8591
        %v8593 = vmul.f32 %v8592, %v8572
        %v8594 = vsel %vm3139, %v8555, 0.0
        %v8595 = vsel %vm3139, %v8556, 0.0
        %v8596 = vadd.f32 %v8594, %v8595
        %v8597 = vrot.slane %v8596, 4
        %v8598 = vadd.f32 %v8596, %v8597
        %v8599 = vrot.slane %v8598, 2
        %v8600 = vadd.f32 %v8598, %v8599
        %v8601 = vrot.slane %v8600, 1
        %v8602 = vadd.f32 %v8600, %v8601
        %v8603 = vmul.f32 %v8602, %v8572
        %v8604 = vld [vmem:[%s59] sm:$0xf]
        %v8605 = vld [vmem:[%s59 + $0x4] sm:$0xf]
        %v8606 = vld [vmem:[%s59 + $0x8] sm:$0xf]
        %v8607 = vld [vmem:[%s59 + $0xc] sm:$0xf]
        %v8608 = vld [vmem:[%s59 + $0x10] sm:$0xf]
        %v8609 = vld [vmem:[%s59 + $0x14] sm:$0xf]
        %v8610 = vld [vmem:[%s59 + $0x18] sm:$0xf]
        %v8611 = vld [vmem:[%s59 + $0x1c] sm:$0xf]
        %v8612 = vpack.c.bf16 %v8573, %v8573
        %s8613 = scalar_lea.vmem %s59, 32
        %v8614 = vld [vmem:[%s8613] sm:$0xf]
        %v8615 = vld [vmem:[%s8613 + $0x4] sm:$0xf]
        %v8616 = vld [vmem:[%s8613 + $0x8] sm:$0xf]
        %v8617 = vld [vmem:[%s8613 + $0xc] sm:$0xf]
        %v8618 = vld [vmem:[%s8613 + $0x10] sm:$0xf]
        %v8619 = vld [vmem:[%s8613 + $0x14] sm:$0xf]
        %v8620 = vld [vmem:[%s8613 + $0x18] sm:$0xf]
        %v8621 = vld [vmem:[%s8613 + $0x1c] sm:$0xf]
        %v8622 = vpack.c.bf16 %v8583, %v8583
        %v8631 = vunpack.c.l.b16 %v8614
        %v8632 = vunpack.c.l.b16 %v8615
        %v8633 = vunpack.c.l.b16 %v8616
        %v8634 = vunpack.c.l.b16 %v8617
        %v8635 = vunpack.c.l.b16 %v8618
        %v8636 = vunpack.c.l.b16 %v8619
        %v8637 = vunpack.c.l.b16 %v8620
        %v8638 = vunpack.c.l.b16 %v8621
        %v8639 = vpack.c.b16 %v8632, %v8631
        %v8640 = vpack.c.b16 %v8634, %v8633
        %v8641 = vpack.c.b16 %v8636, %v8635
        %v8642 = vpack.c.b16 %v8638, %v8637
        %v8648 = vsel %vm3139, %v8622, 0
        %8650 = vmatpush.bf16.msra.mxu0 0
        %8651 = vmatpush.bf16.msra.mxu0 0
        %8652 = vmatpush.bf16.msra.mxu0 0
        %8653 = vmatpush.bf16.msra.mxu0 0
        %8654 = vmatpush.bf16.msra.mxu0 %v8642
        %8655 = vmatpush.bf16.msra.mxu0 %v8641
        %8656 = vmatpush.bf16.msra.mxu0 %v8640
        %8657 = vmatpush.bf16.msra.mxu0 %v8639
        %8658 = vmatmul.bf16.gmra.mxu0 %v8648
        %v8659 = vpop.f32.mrf.mxu0
        %v8660 = vadd.f32 0.0, %v8659
        %v8661 = vpop.f32.mrf.mxu0
        %8662 = vdwg.mxu0
        %v8671 = vunpack.c.l.b16 %v8604
        %v8672 = vunpack.c.l.b16 %v8605
        %v8673 = vunpack.c.l.b16 %v8606
        %v8674 = vunpack.c.l.b16 %v8607
        %v8675 = vunpack.c.l.b16 %v8608
        %v8676 = vunpack.c.l.b16 %v8609
        %v8677 = vunpack.c.l.b16 %v8610
        %v8678 = vunpack.c.l.b16 %v8611
        %v8679 = vpack.c.b16 %v8672, %v8671
        %v8680 = vpack.c.b16 %v8674, %v8673
        %v8681 = vpack.c.b16 %v8676, %v8675
        %v8682 = vpack.c.b16 %v8678, %v8677
        %v8688 = vsel %vm3139, %v8612, 0
        %8690 = vmatpush.bf16.msra.mxu0 0
        %8691 = vmatpush.bf16.msra.mxu0 0
        %8692 = vmatpush.bf16.msra.mxu0 0
        %8693 = vmatpush.bf16.msra.mxu0 0
        %8694 = vmatpush.bf16.msra.mxu0 %v8682
        %8695 = vmatpush.bf16.msra.mxu0 %v8681
        %8696 = vmatpush.bf16.msra.mxu0 %v8680
        %8697 = vmatpush.bf16.msra.mxu0 %v8679
        %8698 = vmatmul.bf16.gmra.mxu0 %v8688
        %v8699 = vpop.f32.mrf.mxu0
        %v8700 = vadd.f32 %v8660, %v8699
        %v8701 = vpop.f32.mrf.mxu0
        %8702 = vdwg.mxu0
        %s8703 = scalar_lea.vmem %s59, 64
        %v8704 = vld [vmem:[%s8703] sm:$0xf]
        %v8705 = vld [vmem:[%s8703 + $0x4] sm:$0xf]
        %v8706 = vld [vmem:[%s8703 + $0x8] sm:$0xf]
        %v8707 = vld [vmem:[%s8703 + $0xc] sm:$0xf]
        %v8708 = vld [vmem:[%s8703 + $0x10] sm:$0xf]
        %v8709 = vld [vmem:[%s8703 + $0x14] sm:$0xf]
        %v8710 = vld [vmem:[%s8703 + $0x18] sm:$0xf]
        %v8711 = vld [vmem:[%s8703 + $0x1c] sm:$0xf]
        %v8712 = vpack.c.bf16 %v8593, %v8593
        %v8721 = vunpack.c.l.b16 %v8704
        %v8722 = vunpack.c.l.b16 %v8705
        %v8723 = vunpack.c.l.b16 %v8706
        %v8724 = vunpack.c.l.b16 %v8707
        %v8725 = vunpack.c.l.b16 %v8708
        %v8726 = vunpack.c.l.b16 %v8709
        %v8727 = vunpack.c.l.b16 %v8710
        %v8728 = vunpack.c.l.b16 %v8711
        %v8729 = vpack.c.b16 %v8722, %v8721
        %v8730 = vpack.c.b16 %v8724, %v8723
        %v8731 = vpack.c.b16 %v8726, %v8725
        %v8732 = vpack.c.b16 %v8728, %v8727
        %v8738 = vsel %vm3139, %v8712, 0
        %8740 = vmatpush.bf16.msra.mxu0 0
        %8741 = vmatpush.bf16.msra.mxu0 0
        %8742 = vmatpush.bf16.msra.mxu0 0
        %8743 = vmatpush.bf16.msra.mxu0 0
        %8744 = vmatpush.bf16.msra.mxu0 %v8732
        %8745 = vmatpush.bf16.msra.mxu0 %v8731
        %8746 = vmatpush.bf16.msra.mxu0 %v8730
        %8747 = vmatpush.bf16.msra.mxu0 %v8729
        %8748 = vmatmul.bf16.gmra.mxu0 %v8738
        %v8749 = vpop.f32.mrf.mxu0
        %v8750 = vadd.f32 0.0, %v8749
        %v8751 = vpop.f32.mrf.mxu0
        %8752 = vdwg.mxu0
        %v8753 = vadd.f32 %v8700, %v8750
        %s8754 = scalar_lea.vmem %s59, 96
        %v8755 = vld [vmem:[%s8754] sm:$0xf]
        %v8756 = vld [vmem:[%s8754 + $0x4] sm:$0xf]
        %v8757 = vld [vmem:[%s8754 + $0x8] sm:$0xf]
        %v8758 = vld [vmem:[%s8754 + $0xc] sm:$0xf]
        %v8759 = vld [vmem:[%s8754 + $0x10] sm:$0xf]
        %v8760 = vld [vmem:[%s8754 + $0x14] sm:$0xf]
        %v8761 = vld [vmem:[%s8754 + $0x18] sm:$0xf]
        %v8762 = vld [vmem:[%s8754 + $0x1c] sm:$0xf]
        %v8763 = vpack.c.bf16 %v8603, %v8603
        %v8772 = vunpack.c.l.b16 %v8755
        %v8773 = vunpack.c.l.b16 %v8756
        %v8774 = vunpack.c.l.b16 %v8757
        %v8775 = vunpack.c.l.b16 %v8758
        %v8776 = vunpack.c.l.b16 %v8759
        %v8777 = vunpack.c.l.b16 %v8760
        %v8778 = vunpack.c.l.b16 %v8761
        %v8779 = vunpack.c.l.b16 %v8762
        %v8780 = vpack.c.b16 %v8773, %v8772
        %v8781 = vpack.c.b16 %v8775, %v8774
        %v8782 = vpack.c.b16 %v8777, %v8776
        %v8783 = vpack.c.b16 %v8779, %v8778
        %v8789 = vsel %vm3139, %v8763, 0
        %8791 = vmatpush.bf16.msra.mxu0 0
        %8792 = vmatpush.bf16.msra.mxu0 0
        %8793 = vmatpush.bf16.msra.mxu0 0
        %8794 = vmatpush.bf16.msra.mxu0 0
        %8795 = vmatpush.bf16.msra.mxu0 %v8783
        %8796 = vmatpush.bf16.msra.mxu0 %v8782
        %8797 = vmatpush.bf16.msra.mxu0 %v8781
        %8798 = vmatpush.bf16.msra.mxu0 %v8780
        %8799 = vmatmul.bf16.gmra.mxu0 %v8789
        %v8800 = vpop.f32.mrf.mxu0
        %v8801 = vadd.f32 0.0, %v8800
        %v8802 = vpop.f32.mrf.mxu0
        %8803 = vdwg.mxu0
        %v8804 = vadd.f32 %v8753, %v8801
        %v8805 = vld [vmem:[%s61] sm:$0x1]
        %v8806 = vadd.f32 %v8804, %v8805
        %v8807 = vmax.f32 %v8806, 0.0
        %v8808 = vld [vmem:[%s63] sm:$0xf]
        %v8809 = vld [vmem:[%s63 + $0x4] sm:$0xf]
        %v8810 = vpack.c.bf16 %v8807, %v8807
        %v8811 = vld [vmem:[%s65] sm:$0x1]
        %v8814 = vunpack.c.l.b16 %v8808
        %v8815 = vunpack.c.l.b16 %v8809
        %v8816 = vpack.c.b16 %v8815, %v8814
        %v8819 = vsel %vm1276, %v8810, 0
        %8821 = vmatpush.bf16.msra.mxu0 0
        %8822 = vmatpush.bf16.msra.mxu0 0
        %8823 = vmatpush.bf16.msra.mxu0 0
        %8824 = vmatpush.bf16.msra.mxu0 0
        %8825 = vmatpush.bf16.msra.mxu0 0
        %8826 = vmatpush.bf16.msra.mxu0 0
        %8827 = vmatpush.bf16.msra.mxu0 0
        %8828 = vmatpush.bf16.msra.mxu0 %v8816
        %8829 = vmatmul.bf16.gmra.mxu0 %v8819
        %v8830 = vpop.f32.mrf.mxu0
        %v8831 = vadd.f32 %v8811, %v8830
        %v8832 = vpop.f32.mrf.mxu0
        %8833 = vdwg.mxu0
        %v8834 = vxor.u32 %v8831, 2147483648
        %v8835 = vmul.f32 %v8834, 1.442695
        %v8836 = vpow.pop %v8835
        %v8837 = vadd.f32 %v8836, 1.0
        %v8838 = vrcp.pop %v8837
        %v8839 = vmul.f32 %v8837, %v8838
        %v8840 = vsub.f32 1.0, %v8839
        %v8841 = vmul.f32 %v8838, %v8840
        %v8842 = vadd.f32 %v8838, %v8841
        %vm8843 = vweird.f32 %v8837
        %vm8844 = vweird.f32 %v8838
        %vm8845 = vmor %vm8843, %vm8844
        %v8846 = vsel %vm8845, %v8838, %v8842
        %v8847 = vand.u32 2147483647, %v8837
        %vm8848 = vcmp.eq.f32.partialorder %v8847, 8.507059e+37
        %v8849 = vand.u32 %v8837, 2147483648
        %v8850 = vor.u32 1.1754944e-38, %v8849
        %v8851 = vsel %vm8848, %v8850, %v8846
        %v8852 = vmul.f32 1.0, %v8851
        %v8853 = vmul.f32 %v8573, %v8852
        %v8854 = vld [vmem:[%s67] sm:$0xf]
        %v8855 = vld [vmem:[%s67 + $0x4] sm:$0xf]
        %v8856 = vld [vmem:[%s67 + $0x8] sm:$0xf]
        %v8857 = vld [vmem:[%s67 + $0xc] sm:$0xf]
        %v8858 = vld [vmem:[%s67 + $0x10] sm:$0xf]
        %v8859 = vld [vmem:[%s67 + $0x14] sm:$0xf]
        %v8860 = vld [vmem:[%s67 + $0x18] sm:$0xf]
        %v8861 = vld [vmem:[%s67 + $0x1c] sm:$0xf]
        %v8862 = vpack.c.bf16 %v8853, %v8853
        %s8863 = scalar_lea.vmem %s63, 8
        %v8864 = vld [vmem:[%s8863] sm:$0xf]
        %v8865 = vld [vmem:[%s8863 + $0x4] sm:$0xf]
        %s8866 = scalar_lea.vmem %s65, 1
        %v8867 = vld [vmem:[%s8866] sm:$0x1]
        %v8870 = vunpack.c.l.b16 %v8864
        %v8871 = vunpack.c.l.b16 %v8865
        %v8872 = vpack.c.b16 %v8871, %v8870
        %8874 = vmatpush.bf16.msra.mxu0 0
        %8875 = vmatpush.bf16.msra.mxu0 0
        %8876 = vmatpush.bf16.msra.mxu0 0
        %8877 = vmatpush.bf16.msra.mxu0 0
        %8878 = vmatpush.bf16.msra.mxu0 0
        %8879 = vmatpush.bf16.msra.mxu0 0
        %8880 = vmatpush.bf16.msra.mxu0 0
        %8881 = vmatpush.bf16.msra.mxu0 %v8872
        %8882 = vmatmul.bf16.gmra.mxu0 %v8819
        %v8883 = vpop.f32.mrf.mxu0
        %v8884 = vadd.f32 %v8867, %v8883
        %v8885 = vpop.f32.mrf.mxu0
        %8886 = vdwg.mxu0
        %v8887 = vxor.u32 %v8884, 2147483648
        %v8888 = vmul.f32 %v8887, 1.442695
        %v8889 = vpow.pop %v8888
        %v8890 = vadd.f32 %v8889, 1.0
        %v8891 = vrcp.pop %v8890
        %v8892 = vmul.f32 %v8890, %v8891
        %v8893 = vsub.f32 1.0, %v8892
        %v8894 = vmul.f32 %v8891, %v8893
        %v8895 = vadd.f32 %v8891, %v8894
        %vm8896 = vweird.f32 %v8890
        %vm8897 = vweird.f32 %v8891
        %vm8898 = vmor %vm8896, %vm8897
        %v8899 = vsel %vm8898, %v8891, %v8895
        %v8900 = vand.u32 2147483647, %v8890
        %vm8901 = vcmp.eq.f32.partialorder %v8900, 8.507059e+37
        %v8902 = vand.u32 %v8890, 2147483648
        %v8903 = vor.u32 1.1754944e-38, %v8902
        %v8904 = vsel %vm8901, %v8903, %v8899
        %v8905 = vmul.f32 1.0, %v8904
        %v8906 = vmul.f32 %v8583, %v8905
        %s8907 = scalar_lea.vmem %s67, 32
        %v8908 = vld [vmem:[%s8907] sm:$0xf]
        %v8909 = vld [vmem:[%s8907 + $0x4] sm:$0xf]
        %v8910 = vld [vmem:[%s8907 + $0x8] sm:$0xf]
        %v8911 = vld [vmem:[%s8907 + $0xc] sm:$0xf]
        %v8912 = vld [vmem:[%s8907 + $0x10] sm:$0xf]
        %v8913 = vld [vmem:[%s8907 + $0x14] sm:$0xf]
        %v8914 = vld [vmem:[%s8907 + $0x18] sm:$0xf]
        %v8915 = vld [vmem:[%s8907 + $0x1c] sm:$0xf]
        %v8916 = vpack.c.bf16 %v8906, %v8906
        %v8925 = vunpack.c.l.b16 %v8908
        %v8926 = vunpack.c.l.b16 %v8909
        %v8927 = vunpack.c.l.b16 %v8910
        %v8928 = vunpack.c.l.b16 %v8911
        %v8929 = vunpack.c.l.b16 %v8912
        %v8930 = vunpack.c.l.b16 %v8913
        %v8931 = vunpack.c.l.b16 %v8914
        %v8932 = vunpack.c.l.b16 %v8915
        %v8933 = vpack.c.b16 %v8926, %v8925
        %v8934 = vpack.c.b16 %v8928, %v8927
        %v8935 = vpack.c.b16 %v8930, %v8929
        %v8936 = vpack.c.b16 %v8932, %v8931
        %v8942 = vsel %vm3139, %v8916, 0
        %8944 = vmatpush.bf16.msra.mxu0 0
        %8945 = vmatpush.bf16.msra.mxu0 0
        %8946 = vmatpush.bf16.msra.mxu0 0
        %8947 = vmatpush.bf16.msra.mxu0 0
        %8948 = vmatpush.bf16.msra.mxu0 %v8936
        %8949 = vmatpush.bf16.msra.mxu0 %v8935
        %8950 = vmatpush.bf16.msra.mxu0 %v8934
        %8951 = vmatpush.bf16.msra.mxu0 %v8933
        %8952 = vmatmul.bf16.gmra.mxu0 %v8942
        %v8953 = vpop.f32.mrf.mxu0
        %v8954 = vadd.f32 0.0, %v8953
        %v8955 = vpop.f32.mrf.mxu0
        %8956 = vdwg.mxu0
        %v8965 = vunpack.c.l.b16 %v8854
        %v8966 = vunpack.c.l.b16 %v8855
        %v8967 = vunpack.c.l.b16 %v8856
        %v8968 = vunpack.c.l.b16 %v8857
        %v8969 = vunpack.c.l.b16 %v8858
        %v8970 = vunpack.c.l.b16 %v8859
        %v8971 = vunpack.c.l.b16 %v8860
        %v8972 = vunpack.c.l.b16 %v8861
        %v8973 = vpack.c.b16 %v8966, %v8965
        %v8974 = vpack.c.b16 %v8968, %v8967
        %v8975 = vpack.c.b16 %v8970, %v8969
        %v8976 = vpack.c.b16 %v8972, %v8971
        %v8982 = vsel %vm3139, %v8862, 0
        %8984 = vmatpush.bf16.msra.mxu0 0
        %8985 = vmatpush.bf16.msra.mxu0 0
        %8986 = vmatpush.bf16.msra.mxu0 0
        %8987 = vmatpush.bf16.msra.mxu0 0
        %8988 = vmatpush.bf16.msra.mxu0 %v8976
        %8989 = vmatpush.bf16.msra.mxu0 %v8975
        %8990 = vmatpush.bf16.msra.mxu0 %v8974
        %8991 = vmatpush.bf16.msra.mxu0 %v8973
        %8992 = vmatmul.bf16.gmra.mxu0 %v8982
        %v8993 = vpop.f32.mrf.mxu0
        %v8994 = vadd.f32 %v8954, %v8993
        %v8995 = vpop.f32.mrf.mxu0
        %8996 = vdwg.mxu0
        %s8997 = scalar_lea.vmem %s63, 16
        %v8998 = vld [vmem:[%s8997] sm:$0xf]
        %v8999 = vld [vmem:[%s8997 + $0x4] sm:$0xf]
        %s9000 = scalar_lea.vmem %s65, 2
        %v9001 = vld [vmem:[%s9000] sm:$0x1]
        %v9004 = vunpack.c.l.b16 %v8998
        %v9005 = vunpack.c.l.b16 %v8999
        %v9006 = vpack.c.b16 %v9005, %v9004
        %9008 = vmatpush.bf16.msra.mxu0 0
        %9009 = vmatpush.bf16.msra.mxu0 0
        %9010 = vmatpush.bf16.msra.mxu0 0
        %9011 = vmatpush.bf16.msra.mxu0 0
        %9012 = vmatpush.bf16.msra.mxu0 0
        %9013 = vmatpush.bf16.msra.mxu0 0
        %9014 = vmatpush.bf16.msra.mxu0 0
        %9015 = vmatpush.bf16.msra.mxu0 %v9006
        %9016 = vmatmul.bf16.gmra.mxu0 %v8819
        %v9017 = vpop.f32.mrf.mxu0
        %v9018 = vadd.f32 %v9001, %v9017
        %v9019 = vpop.f32.mrf.mxu0
        %9020 = vdwg.mxu0
        %v9021 = vxor.u32 %v9018, 2147483648
        %v9022 = vmul.f32 %v9021, 1.442695
        %v9023 = vpow.pop %v9022
        %v9024 = vadd.f32 %v9023, 1.0
        %v9025 = vrcp.pop %v9024
        %v9026 = vmul.f32 %v9024, %v9025
        %v9027 = vsub.f32 1.0, %v9026
        %v9028 = vmul.f32 %v9025, %v9027
        %v9029 = vadd.f32 %v9025, %v9028
        %vm9030 = vweird.f32 %v9024
        %vm9031 = vweird.f32 %v9025
        %vm9032 = vmor %vm9030, %vm9031
        %v9033 = vsel %vm9032, %v9025, %v9029
        %v9034 = vand.u32 2147483647, %v9024
        %vm9035 = vcmp.eq.f32.partialorder %v9034, 8.507059e+37
        %v9036 = vand.u32 %v9024, 2147483648
        %v9037 = vor.u32 1.1754944e-38, %v9036
        %v9038 = vsel %vm9035, %v9037, %v9033
        %v9039 = vmul.f32 1.0, %v9038
        %v9040 = vmul.f32 %v8593, %v9039
        %s9041 = scalar_lea.vmem %s67, 64
        %v9042 = vld [vmem:[%s9041] sm:$0xf]
        %v9043 = vld [vmem:[%s9041 + $0x4] sm:$0xf]
        %v9044 = vld [vmem:[%s9041 + $0x8] sm:$0xf]
        %v9045 = vld [vmem:[%s9041 + $0xc] sm:$0xf]
        %v9046 = vld [vmem:[%s9041 + $0x10] sm:$0xf]
        %v9047 = vld [vmem:[%s9041 + $0x14] sm:$0xf]
        %v9048 = vld [vmem:[%s9041 + $0x18] sm:$0xf]
        %v9049 = vld [vmem:[%s9041 + $0x1c] sm:$0xf]
        %v9050 = vpack.c.bf16 %v9040, %v9040
        %v9059 = vunpack.c.l.b16 %v9042
        %v9060 = vunpack.c.l.b16 %v9043
        %v9061 = vunpack.c.l.b16 %v9044
        %v9062 = vunpack.c.l.b16 %v9045
        %v9063 = vunpack.c.l.b16 %v9046
        %v9064 = vunpack.c.l.b16 %v9047
        %v9065 = vunpack.c.l.b16 %v9048
        %v9066 = vunpack.c.l.b16 %v9049
        %v9067 = vpack.c.b16 %v9060, %v9059
        %v9068 = vpack.c.b16 %v9062, %v9061
        %v9069 = vpack.c.b16 %v9064, %v9063
        %v9070 = vpack.c.b16 %v9066, %v9065
        %v9076 = vsel %vm3139, %v9050, 0
        %9078 = vmatpush.bf16.msra.mxu0 0
        %9079 = vmatpush.bf16.msra.mxu0 0
        %9080 = vmatpush.bf16.msra.mxu0 0
        %9081 = vmatpush.bf16.msra.mxu0 0
        %9082 = vmatpush.bf16.msra.mxu0 %v9070
        %9083 = vmatpush.bf16.msra.mxu0 %v9069
        %9084 = vmatpush.bf16.msra.mxu0 %v9068
        %9085 = vmatpush.bf16.msra.mxu0 %v9067
        %9086 = vmatmul.bf16.gmra.mxu0 %v9076
        %v9087 = vpop.f32.mrf.mxu0
        %v9088 = vadd.f32 0.0, %v9087
        %v9089 = vpop.f32.mrf.mxu0
        %9090 = vdwg.mxu0
        %v9091 = vadd.f32 %v8994, %v9088
        %s9092 = scalar_lea.vmem %s63, 24
        %v9093 = vld [vmem:[%s9092] sm:$0xf]
        %v9094 = vld [vmem:[%s9092 + $0x4] sm:$0xf]
        %s9095 = scalar_lea.vmem %s65, 3
        %v9096 = vld [vmem:[%s9095] sm:$0x1]
        %v9099 = vunpack.c.l.b16 %v9093
        %v9100 = vunpack.c.l.b16 %v9094
        %v9101 = vpack.c.b16 %v9100, %v9099
        %9103 = vmatpush.bf16.msra.mxu0 0
        %9104 = vmatpush.bf16.msra.mxu0 0
        %9105 = vmatpush.bf16.msra.mxu0 0
        %9106 = vmatpush.bf16.msra.mxu0 0
        %9107 = vmatpush.bf16.msra.mxu0 0
        %9108 = vmatpush.bf16.msra.mxu0 0
        %9109 = vmatpush.bf16.msra.mxu0 0
        %9110 = vmatpush.bf16.msra.mxu0 %v9101
        %9111 = vmatmul.bf16.gmra.mxu0 %v8819
        %v9112 = vpop.f32.mrf.mxu0
        %v9113 = vadd.f32 %v9096, %v9112
        %v9114 = vpop.f32.mrf.mxu0
        %9115 = vdwg.mxu0
        %v9116 = vxor.u32 %v9113, 2147483648
        %v9117 = vmul.f32 %v9116, 1.442695
        %v9118 = vpow.pop %v9117
        %v9119 = vadd.f32 %v9118, 1.0
        %v9120 = vrcp.pop %v9119
        %v9121 = vmul.f32 %v9119, %v9120
        %v9122 = vsub.f32 1.0, %v9121
        %v9123 = vmul.f32 %v9120, %v9122
        %v9124 = vadd.f32 %v9120, %v9123
        %vm9125 = vweird.f32 %v9119
        %vm9126 = vweird.f32 %v9120
        %vm9127 = vmor %vm9125, %vm9126
        %v9128 = vsel %vm9127, %v9120, %v9124
        %v9129 = vand.u32 2147483647, %v9119
        %vm9130 = vcmp.eq.f32.partialorder %v9129, 8.507059e+37
        %v9131 = vand.u32 %v9119, 2147483648
        %v9132 = vor.u32 1.1754944e-38, %v9131
        %v9133 = vsel %vm9130, %v9132, %v9128
        %v9134 = vmul.f32 1.0, %v9133
        %v9135 = vmul.f32 %v8603, %v9134
        %s9136 = scalar_lea.vmem %s67, 96
        %v9137 = vld [vmem:[%s9136] sm:$0xf]
        %v9138 = vld [vmem:[%s9136 + $0x4] sm:$0xf]
        %v9139 = vld [vmem:[%s9136 + $0x8] sm:$0xf]
        %v9140 = vld [vmem:[%s9136 + $0xc] sm:$0xf]
        %v9141 = vld [vmem:[%s9136 + $0x10] sm:$0xf]
        %v9142 = vld [vmem:[%s9136 + $0x14] sm:$0xf]
        %v9143 = vld [vmem:[%s9136 + $0x18] sm:$0xf]
        %v9144 = vld [vmem:[%s9136 + $0x1c] sm:$0xf]
        %v9145 = vpack.c.bf16 %v9135, %v9135
        %v9154 = vunpack.c.l.b16 %v9137
        %v9155 = vunpack.c.l.b16 %v9138
        %v9156 = vunpack.c.l.b16 %v9139
        %v9157 = vunpack.c.l.b16 %v9140
        %v9158 = vunpack.c.l.b16 %v9141
        %v9159 = vunpack.c.l.b16 %v9142
        %v9160 = vunpack.c.l.b16 %v9143
        %v9161 = vunpack.c.l.b16 %v9144
        %v9162 = vpack.c.b16 %v9155, %v9154
        %v9163 = vpack.c.b16 %v9157, %v9156
        %v9164 = vpack.c.b16 %v9159, %v9158
        %v9165 = vpack.c.b16 %v9161, %v9160
        %v9171 = vsel %vm3139, %v9145, 0
        %9173 = vmatpush.bf16.msra.mxu0 0
        %9174 = vmatpush.bf16.msra.mxu0 0
        %9175 = vmatpush.bf16.msra.mxu0 0
        %9176 = vmatpush.bf16.msra.mxu0 0
        %9177 = vmatpush.bf16.msra.mxu0 %v9165
        %9178 = vmatpush.bf16.msra.mxu0 %v9164
        %9179 = vmatpush.bf16.msra.mxu0 %v9163
        %9180 = vmatpush.bf16.msra.mxu0 %v9162
        %9181 = vmatmul.bf16.gmra.mxu0 %v9171
        %v9182 = vpop.f32.mrf.mxu0
        %v9183 = vadd.f32 0.0, %v9182
        %v9184 = vpop.f32.mrf.mxu0
        %9185 = vdwg.mxu0
        %v9186 = vadd.f32 %v9091, %v9183
        %v9187 = vld [vmem:[%s69] sm:$0x1]
        %v9188 = vadd.f32 %v9186, %v9187
        %vm9189 = vcmask 73728
        %9190 = vst.msk [vmem:[%s1145] sm:$0x1] %vm9189, %v9188
        %s9191 = sand.u32 %s836, 1
        %s9192 = scalar_lea.sflag [#allocation4], %s9191
        %s9193 = sand.u32 %s836, 1
        %s9194 = scalar_lea.vmem [#allocation11], %s9193
        // Predicated region
        $region181: #{ms_ran_forward.1} parent=159 // pred_check
          %p9195 = pneg %p846
        $region182: #{ms_ran_forward.1} parent=159 // pred_check_branch
          %9197 = sbr.rel (%p9195) target = $region184
        $region183: #{ms_ran_forward.1} parent=159 // pred_region
          %9199 = vsyncadd %s9192, 0
          %s9200 = scalar_lea.hbm %s71, %s88
          %s9202 = sshll.u32 %s9194, 4
          %s9203 = int_to_ptr.vmem [resolvable:$true] %s9202
          %s9204 = sshll.u32 %s9200, 4
          %s9205 = int_to_ptr.hbm [resolvable:$true] %s9204
          %9207 = dma.vmem_to_hbm [thread:$0]  %s9203, 16, %s9205, %s9192
        $region184: #{ms_ran_forward.1} parent=159 // pred_fallthru
          _
      $region160: #{ms_ran_forward.1} parent=5 // pred_fallthru
        _
      %p9208 = scmp.le.s32.totalorder 2, %s83
      // Predicated region
      $region185: #{ms_ran_forward.1} parent=5 // pred_check
        %p9209 = pneg %p9208
      $region186: #{ms_ran_forward.1} parent=5 // pred_check_branch
        %9211 = sbr.rel (%p9209) target = $region188
      $region187: #{ms_ran_forward.1} parent=5 // pred_region
        %s9212 = ssub.s32 %s83, 2
        // Predicated region
        $region189: #{ms_ran_forward.1} parent=187 // pred_check
          %p9213 = pneg %p852
        $region190: #{ms_ran_forward.1} parent=187 // pred_check_branch
          %9215 = sbr.rel (%p9213) target = $region192
        $region191: #{ms_ran_forward.1} parent=187 // pred_region
          %s9216 = sand.u32 %s837, 1
          %s9217 = scalar_lea.sflag [#allocation4], %s9216
          %s9218 = sand.u32 %s837, 1
          %s9219 = scalar_lea.vmem [#allocation11], %s9218
          %9221 = dma.done %s9217, 16
        $region192: #{ms_ran_forward.1} parent=187 // pred_fallthru
          _
      $region188: #{ms_ran_forward.1} parent=5 // pred_fallthru
        _
    $region6: #{ms_ran_forward.1} parent=1 // loop_footer
      %s87 = sadd.s32 1, %s83
    $region7: #{ms_ran_forward.1} parent=1 // loop_footer_branch
      %82 = sbr.rel target = $region3
    $region8: #{ms_ran_forward.1} parent=1 // loop_exit
      _
    %9222 = vsyncpa [#allocation3], 1
    %s9223 = scalar_lea.sflag [#allocation3], 1
    %9224 = vsyncpa %s9223, 1
    %9225 = vsyncpa [#allocation6], 1
    %9226 = vsyncpa [#allocation9], 1
    %9227 = vsyncpa [#allocation4], 1
    %s9228 = scalar_lea.sflag [#allocation4], 1
    %9229 = vsyncpa %s9228, 1

</llo_original>
